<compile_context>
chip_gen: v7x
topology: tpu7x:2x2x1
jax: 0.10.0
libtpu: 0.0.40
codegen_flags: <defaults>
</compile_context>

<pallas_src>
import functools
import math

import jax
import jax.numpy as jnp
from jax import lax
from jax.experimental import pallas as pl
from jax.experimental.pallas import tpu as pltpu


def _round_up(n, m):
    return ((n + m - 1) // m) * m


def _choose_tm(M, two_wo, max_tm=1024):
    """Row tile for the fused conv+relu+pool kernel.

    Constraints: tm covers whole 2-conv-row pooling groups (multiple of 2*Wo),
    tiles M exactly, and keeps both the A block (tm) and the pooled output
    block (tm//4) sublane-aligned (tm % 32 == 0) unless the block is the full
    array.  Prefers the largest tile <= max_tm with >= 2 grid steps (megacore).
    """
    valid = [t for t in range(two_wo, M + 1, two_wo)
             if M % t == 0 and (t == M or t % 32 == 0)]
    small = [t for t in valid if t <= max_tm]
    if not small:
        return min(valid)
    par = [t for t in small if M // t >= 2]
    return max(par) if par else max(small)


# ---------------------------------------------------------------------------
# Pallas kernels
# ---------------------------------------------------------------------------
def _matmul_bias_relu_pool(a_ref, w_ref, b_ref, two_wo):
    """relu(A @ W + b) followed by a 2x2 max-pool, all on the f32 accumulator.

    Rows of the A block are (ho, wo)-ordered conv-output pixels covering whole
    pairs of conv rows (block rows = k * 2*Wo), so the pool is a reshape + max
    (cheap VPU filler under the MXU).  Returns a (tm//4, N) pooled block.
    """
    acc = jnp.dot(a_ref[...], w_ref[...], preferred_element_type=jnp.float32)
    acc = jnp.maximum(acc + b_ref[...], 0.0)
    tm, n = acc.shape
    # vertical pool: max over conv rows (ho, ho+1)
    a3 = acc.reshape(tm // two_wo, 2, two_wo // 2, n)
    v = jnp.maximum(a3[:, 0], a3[:, 1]).reshape(tm // 4, 2, n)
    # horizontal pool: max over conv cols (wo, wo+1)
    return jnp.maximum(v[:, 0], v[:, 1])                      # (tm // 4, n)


def _conv_relu_pool_kernel(a_ref, w_ref, b_ref, o_ref, *, two_wo):
    o_ref[...] = _matmul_bias_relu_pool(a_ref, w_ref, b_ref, two_wo).astype(o_ref.dtype)


def _conv_relu_pool_proj_tanh_kernel(a_ref, w_ref, b_ref, pw_ref, pb_ref, o_ref, *,
                                     two_wo):
    pooled = _matmul_bias_relu_pool(a_ref, w_ref, b_ref, two_wo)
    out = jnp.dot(pooled, pw_ref[...], preferred_element_type=jnp.float32) + pb_ref[...]
    o_ref[...] = jnp.tanh(out).astype(o_ref.dtype)


# ---------------------------------------------------------------------------
# Fused block wrapper
# ---------------------------------------------------------------------------
def conv_relu_pool_block(x_nhwc, w_oihw, bias, *, final_wb=None):
    """Conv2d(k=4, s=2, p=1) + ReLU + MaxPool2d(2,2), optionally fused with a
    trailing 1x1 conv + tanh.  x_nhwc: (B, H, W, Cin) -> (B, H//4, W//4, n_out).
    """
    stride, pad = 2, 1
    B, H, W, Cin = x_nhwc.shape
    Cout, _, kh, kw = w_oihw.shape
    Ho = (H + 2 * pad - kh) // stride + 1
    Wo = (W + 2 * pad - kw) // stride + 1
    Hp, Wp = Ho // 2, Wo // 2

    # Pad channels on the small NHWC input (3->8 for layer 1) so K = kh*kw*Cin_p
    # is a multiple of 128 -- avoids padding / copying the big im2col matrix.
    cmult = 128 // math.gcd(128, kh * kw)
    Cin_p = _round_up(Cin, cmult)
    if Cin_p != Cin:
        x_nhwc = jnp.pad(x_nhwc, ((0, 0), (0, 0), (0, 0), (0, Cin_p - Cin)))
        w_oihw = jnp.pad(w_oihw, ((0, 0), (0, Cin_p - Cin), (0, 0), (0, 0)))

    # im2col (XLA glue): rows = B*Ho*Wo conv-output pixels, cols = kh*kw*Cin_p.
    xp = jnp.pad(x_nhwc, ((0, 0), (pad, pad), (pad, pad), (0, 0)))
    patches = [xp[:, i:i + stride * Ho:stride, j:j + stride * Wo:stride, :]
               for i in range(kh) for j in range(kw)]
    a = jnp.stack(patches, axis=3).reshape(B * Ho * Wo, kh * kw * Cin_p)
    wmat = jnp.transpose(w_oihw, (2, 3, 1, 0)).reshape(kh * kw * Cin_p, Cout)
    bmat = bias.reshape(1, Cout)

    M, K = a.shape
    two_wo = 2 * Wo
    tm = _choose_tm(M, two_wo)

    a_spec = pl.BlockSpec((tm, K), lambda i: (i, 0))
    w_spec = pl.BlockSpec((K, Cout), lambda i: (0, 0))
    b_spec = pl.BlockSpec((1, Cout), lambda i: (0, 0))

    if final_wb is None:
        n_out = Cout
        kernel = functools.partial(_conv_relu_pool_kernel, two_wo=two_wo)
        in_specs = [a_spec, w_spec, b_spec]
        args = (a, wmat, bmat)
    else:
        pw, pb = final_wb                                    # (Cout, Cf), (1, Cf)
        n_out = pw.shape[1]
        kernel = functools.partial(_conv_relu_pool_proj_tanh_kernel, two_wo=two_wo)
        in_specs = [a_spec, w_spec, b_spec,
                    pl.BlockSpec((Cout, n_out), lambda i: (0, 0)),
                    pl.BlockSpec((1, n_out), lambda i: (0, 0))]
        args = (a, wmat, bmat, pw, pb)

    out = pl.pallas_call(
        kernel,
        out_shape=jax.ShapeDtypeStruct((M // 4, n_out), jnp.float32),
        grid=(M // tm,),
        in_specs=in_specs,
        out_specs=pl.BlockSpec((tm // 4, n_out), lambda i: (i, 0)),
        compiler_params=pltpu.CompilerParams(dimension_semantics=("parallel",)),
    )(*args)
    return out.reshape(B, Hp, Wp, n_out)


# ---------------------------------------------------------------------------
# Model
# ---------------------------------------------------------------------------
_LAYER_CFG = [
    # (Cin, Cout, k, stride, pad)
    (3, 8, 4, 2, 1),
    (8, 16, 4, 2, 1),
    (16, 32, 4, 2, 1),
    (32, 64, 4, 2, 1),
    (64, 128, 1, 1, 0),
]


def init_params(key):
    params = []
    for (cin, cout, k, _, _) in _LAYER_CFG:
        key, kw_, kb_ = jax.random.split(key, 3)
        bound = 1.0 / jnp.sqrt(cin * k * k)
        w = jax.random.uniform(kw_, (cout, cin, k, k), jnp.float32, -bound, bound)
        b = jax.random.uniform(kb_, (cout,), jnp.float32, -bound, bound)
        params.append((w, b))
    return params


def image_encoder_forward(x_nchw, params):
    x = jnp.transpose(x_nchw, (0, 2, 3, 1))                  # NCHW -> NHWC
    # blocks 1-3: fused conv + relu + pool
    for li in range(3):
        w, b = params[li]
        x = conv_relu_pool_block(x, w, b)
    # block 4 with the final 1x1 conv + tanh fused into its epilogue
    w4, b4 = params[3]
    w5, b5 = params[4]                                       # (128, 64, 1, 1), (128,)
    pw = jnp.transpose(w5.reshape(w5.shape[0], w5.shape[1]), (1, 0))   # (64, 128)
    pb = b5.reshape(1, -1)
    x = conv_relu_pool_block(x, w4, b4, final_wb=(pw, pb))   # (B, 1, 1, 128)
    return jnp.transpose(x, (0, 3, 1, 2))                    # NHWC -> NCHW


# ---------------------------------------------------------------------------
# Pure-JAX reference (for correctness check)
# ---------------------------------------------------------------------------
def reference_forward(x_nchw, params):
    x = x_nchw
    for li in range(4):
        w, b = params[li]
        x = lax.conv_general_dilated(
            x, w, window_strides=(2, 2), padding=((1, 1), (1, 1)),
            dimension_numbers=("NCHW", "OIHW", "NCHW"))
        x = jnp.maximum(x + b[None, :, None, None], 0.0)
        x = lax.reduce_window(x, -jnp.inf, lax.max, (1, 1, 2, 2), (1, 1, 2, 2), "VALID")
    w, b = params[4]
    x = lax.conv_general_dilated(
        x, w, window_strides=(1, 1), padding="VALID",
        dimension_numbers=("NCHW", "OIHW", "NCHW"))
    return jnp.tanh(x + b[None, :, None, None])


# ---------------------------------------------------------------------------
if __name__ == "__main__":
    key = jax.random.PRNGKey(0)
    k_in, k_par = jax.random.split(key)

    # Smallest input the module supports: 4 blocks each divide spatial by 4,
    # so H = W = 256 -> final spatial 1x1.  Batch = 2, channels = 3 (RGB).
    x = jax.random.normal(k_in, (2, 3, 256, 256), jnp.float32)
    params = init_params(k_par)

    out = jax.jit(image_encoder_forward)(x, params)
    out = jax.block_until_ready(out)

    assert out.shape == (2, 128, 1, 1), out.shape
    ref = jax.block_until_ready(jax.jit(reference_forward)(x, params))
    assert jnp.allclose(out, ref, rtol=1e-3, atol=1e-3), float(jnp.max(jnp.abs(out - ref)))

    print("KERNEL_OK")
</pallas_src>

<mosaic_0001>
module attributes {stable_mosaic.version = 11 : i64} {
  func.func @_conv_relu_pool_kernel(%arg0: i32, %arg1: memref<1024x128xf32, #tpu.memory_space<vmem>>, %arg2: memref<128x8xf32, #tpu.memory_space<vmem>>, %arg3: memref<1x8xf32, #tpu.memory_space<vmem>>, %arg4: memref<256x8xf32, #tpu.memory_space<vmem>>) attributes {dimension_semantics = [#tpu.dimension_semantics<parallel>], iteration_bounds = array<i64: 32>, scalar_prefetch = 0 : i64, scratch_operands = 0 : i64, tpu.core_type = #tpu.core_type<tc>, window_params = [{transform_indices = @transform_0, window_bounds = array<i64: 1024, 128>}, {pipeline_mode = #tpu.pipeline_mode<synchronous>, transform_indices = @transform_1, window_bounds = array<i64: 128, 8>}, {pipeline_mode = #tpu.pipeline_mode<synchronous>, transform_indices = @transform_2, window_bounds = array<i64: 1, 8>}, {transform_indices = @transform_3, window_bounds = array<i64: 256, 8>}]} {
    %c0 = arith.constant 0 : index
    %c0_0 = arith.constant 0 : index
    %0 = vector.load %arg1[%c0, %c0_0] : memref<1024x128xf32, #tpu.memory_space<vmem>>, vector<1024x128xf32>
    %c0_1 = arith.constant 0 : index
    %c0_2 = arith.constant 0 : index
    %1 = vector.load %arg2[%c0_1, %c0_2] : memref<128x8xf32, #tpu.memory_space<vmem>>, vector<128x8xf32>
    %cst = arith.constant dense<0.000000e+00> : vector<1024x8xf32>
    %2 = tpu.matmul %0, %1, %cst {dimension_numbers = #tpu.dot_dimension_numbers<[1], [0], [0], [1], [0, 0, 1, 1], [], []>} : vector<1024x128xf32>, vector<128x8xf32>, vector<1024x8xf32> -> vector<1024x8xf32>
    %c0_3 = arith.constant 0 : index
    %c0_4 = arith.constant 0 : index
    %3 = vector.load %arg3[%c0_3, %c0_4] : memref<1x8xf32, #tpu.memory_space<vmem>>, vector<1x8xf32>
    %4 = vector.broadcast %3 : vector<1x8xf32> to vector<1024x8xf32>
    %5 = arith.addf %2, %4 : vector<1024x8xf32>
    %cst_5 = arith.constant 0.000000e+00 : f32
    %6 = vector.broadcast %cst_5 : f32 to vector<1024x8xf32>
    %7 = arith.maximumf %5, %6 : vector<1024x8xf32>
    %8 = vector.shape_cast %7 : vector<1024x8xf32> to vector<4x2x128x8xf32>
    %9 = vector.extract_strided_slice %8 {offsets = [0, 0, 0, 0], sizes = [4, 1, 128, 8], strides = [1, 1, 1, 1]} : vector<4x2x128x8xf32> to vector<4x1x128x8xf32>
    %10 = vector.shape_cast %9 : vector<4x1x128x8xf32> to vector<4x128x8xf32>
    %11 = vector.extract_strided_slice %8 {offsets = [0, 1, 0, 0], sizes = [4, 1, 128, 8], strides = [1, 1, 1, 1]} : vector<4x2x128x8xf32> to vector<4x1x128x8xf32>
    %12 = vector.shape_cast %11 : vector<4x1x128x8xf32> to vector<4x128x8xf32>
    %13 = arith.maximumf %10, %12 : vector<4x128x8xf32>
    %14 = vector.shape_cast %13 : vector<4x128x8xf32> to vector<256x2x8xf32>
    %15 = vector.extract_strided_slice %14 {offsets = [0, 0, 0], sizes = [256, 1, 8], strides = [1, 1, 1]} : vector<256x2x8xf32> to vector<256x1x8xf32>
    %16 = vector.shape_cast %15 : vector<256x1x8xf32> to vector<256x8xf32>
    %17 = vector.extract_strided_slice %14 {offsets = [0, 1, 0], sizes = [256, 1, 8], strides = [1, 1, 1]} : vector<256x2x8xf32> to vector<256x1x8xf32>
    %18 = vector.shape_cast %17 : vector<256x1x8xf32> to vector<256x8xf32>
    %19 = arith.maximumf %16, %18 : vector<256x8xf32>
    %c0_6 = arith.constant 0 : index
    %c0_7 = arith.constant 0 : index
    %20 = vector.load %arg4[%c0_6, %c0_7] : memref<256x8xf32, #tpu.memory_space<vmem>>, vector<256x8xf32>
    tpu.vector_store %arg4[%c0_6, %c0_7], %19 {strides = array<i32>} : memref<256x8xf32, #tpu.memory_space<vmem>>, vector<256x8xf32>,
    return
  }
  func.func @transform_0(%arg0: i32) -> (i32, i32) {
    %c0_i32 = arith.constant 0 : i32
    %c0_i32_0 = arith.constant 0 : i32
    return %arg0, %c0_i32 : i32, i32
  }
  func.func @transform_1(%arg0: i32) -> (i32, i32) {
    %c0_i32 = arith.constant 0 : i32
    %c0_i32_0 = arith.constant 0 : i32
    %c0_i32_1 = arith.constant 0 : i32
    return %c0_i32, %c0_i32_0 : i32, i32
  }
  func.func @transform_2(%arg0: i32) -> (i32, i32) {
    %c0_i32 = arith.constant 0 : i32
    %c0_i32_0 = arith.constant 0 : i32
    %c0_i32_1 = arith.constant 0 : i32
    return %c0_i32, %c0_i32_0 : i32, i32
  }
  func.func @transform_3(%arg0: i32) -> (i32, i32) {
    %c0_i32 = arith.constant 0 : i32
    %c0_i32_0 = arith.constant 0 : i32
    return %arg0, %c0_i32 : i32, i32
  }
}

module attributes {stable_mosaic.version = 11 : i64} {
  func.func @_conv_relu_pool_kernel(%arg0: i32, %arg1: memref<1024x128xf32, #tpu.memory_space<vmem>>, %arg2: memref<128x16xf32, #tpu.memory_space<vmem>>, %arg3: memref<1x16xf32, #tpu.memory_space<vmem>>, %arg4: memref<256x16xf32, #tpu.memory_space<vmem>>) attributes {dimension_semantics = [#tpu.dimension_semantics<parallel>], iteration_bounds = array<i64: 2>, scalar_prefetch = 0 : i64, scratch_operands = 0 : i64, tpu.core_type = #tpu.core_type<tc>, window_params = [{transform_indices = @transform_0, window_bounds = array<i64: 1024, 128>}, {pipeline_mode = #tpu.pipeline_mode<synchronous>, transform_indices = @transform_1, window_bounds = array<i64: 128, 16>}, {pipeline_mode = #tpu.pipeline_mode<synchronous>, transform_indices = @transform_2, window_bounds = array<i64: 1, 16>}, {transform_indices = @transform_3, window_bounds = array<i64: 256, 16>}]} {
    %c0 = arith.constant 0 : index
    %c0_0 = arith.constant 0 : index
    %0 = vector.load %arg1[%c0, %c0_0] : memref<1024x128xf32, #tpu.memory_space<vmem>>, vector<1024x128xf32>
    %c0_1 = arith.constant 0 : index
    %c0_2 = arith.constant 0 : index
    %1 = vector.load %arg2[%c0_1, %c0_2] : memref<128x16xf32, #tpu.memory_space<vmem>>, vector<128x16xf32>
    %cst = arith.constant dense<0.000000e+00> : vector<1024x16xf32>
    %2 = tpu.matmul %0, %1, %cst {dimension_numbers = #tpu.dot_dimension_numbers<[1], [0], [0], [1], [0, 0, 1, 1], [], []>} : vector<1024x128xf32>, vector<128x16xf32>, vector<1024x16xf32> -> vector<1024x16xf32>
    %c0_3 = arith.constant 0 : index
    %c0_4 = arith.constant 0 : index
    %3 = vector.load %arg3[%c0_3, %c0_4] : memref<1x16xf32, #tpu.memory_space<vmem>>, vector<1x16xf32>
    %4 = vector.broadcast %3 : vector<1x16xf32> to vector<1024x16xf32>
    %5 = arith.addf %2, %4 : vector<1024x16xf32>
    %cst_5 = arith.constant 0.000000e+00 : f32
    %6 = vector.broadcast %cst_5 : f32 to vector<1024x16xf32>
    %7 = arith.maximumf %5, %6 : vector<1024x16xf32>
    %8 = vector.shape_cast %7 : vector<1024x16xf32> to vector<16x2x32x16xf32>
    %9 = vector.extract_strided_slice %8 {offsets = [0, 0, 0, 0], sizes = [16, 1, 32, 16], strides = [1, 1, 1, 1]} : vector<16x2x32x16xf32> to vector<16x1x32x16xf32>
    %10 = vector.shape_cast %9 : vector<16x1x32x16xf32> to vector<16x32x16xf32>
    %11 = vector.extract_strided_slice %8 {offsets = [0, 1, 0, 0], sizes = [16, 1, 32, 16], strides = [1, 1, 1, 1]} : vector<16x2x32x16xf32> to vector<16x1x32x16xf32>
    %12 = vector.shape_cast %11 : vector<16x1x32x16xf32> to vector<16x32x16xf32>
    %13 = arith.maximumf %10, %12 : vector<16x32x16xf32>
    %14 = vector.shape_cast %13 : vector<16x32x16xf32> to vector<256x2x16xf32>
    %15 = vector.extract_strided_slice %14 {offsets = [0, 0, 0], sizes = [256, 1, 16], strides = [1, 1, 1]} : vector<256x2x16xf32> to vector<256x1x16xf32>
    %16 = vector.shape_cast %15 : vector<256x1x16xf32> to vector<256x16xf32>
    %17 = vector.extract_strided_slice %14 {offsets = [0, 1, 0], sizes = [256, 1, 16], strides = [1, 1, 1]} : vector<256x2x16xf32> to vector<256x1x16xf32>
    %18 = vector.shape_cast %17 : vector<256x1x16xf32> to vector<256x16xf32>
    %19 = arith.maximumf %16, %18 : vector<256x16xf32>
    %c0_6 = arith.constant 0 : index
    %c0_7 = arith.constant 0 : index
    %20 = vector.load %arg4[%c0_6, %c0_7] : memref<256x16xf32, #tpu.memory_space<vmem>>, vector<256x16xf32>
    tpu.vector_store %arg4[%c0_6, %c0_7], %19 {strides = array<i32>} : memref<256x16xf32, #tpu.memory_space<vmem>>, vector<256x16xf32>,
    return
  }
  func.func @transform_0(%arg0: i32) -> (i32, i32) {
    %c0_i32 = arith.constant 0 : i32
    %c0_i32_0 = arith.constant 0 : i32
    return %arg0, %c0_i32 : i32, i32
  }
  func.func @transform_1(%arg0: i32) -> (i32, i32) {
    %c0_i32 = arith.constant 0 : i32
    %c0_i32_0 = arith.constant 0 : i32
    %c0_i32_1 = arith.constant 0 : i32
    return %c0_i32, %c0_i32_0 : i32, i32
  }
  func.func @transform_2(%arg0: i32) -> (i32, i32) {
    %c0_i32 = arith.constant 0 : i32
    %c0_i32_0 = arith.constant 0 : i32
    %c0_i32_1 = arith.constant 0 : i32
    return %c0_i32, %c0_i32_0 : i32, i32
  }
  func.func @transform_3(%arg0: i32) -> (i32, i32) {
    %c0_i32 = arith.constant 0 : i32
    %c0_i32_0 = arith.constant 0 : i32
    return %arg0, %c0_i32 : i32, i32
  }
}

module attributes {stable_mosaic.version = 11 : i64} {
  func.func @_conv_relu_pool_kernel(%arg0: i32, %arg1: memref<64x256xf32, #tpu.memory_space<vmem>>, %arg2: memref<256x32xf32, #tpu.memory_space<vmem>>, %arg3: memref<1x32xf32, #tpu.memory_space<vmem>>, %arg4: memref<16x32xf32, #tpu.memory_space<vmem>>) attributes {dimension_semantics = [#tpu.dimension_semantics<parallel>], iteration_bounds = array<i64: 2>, scalar_prefetch = 0 : i64, scratch_operands = 0 : i64, tpu.core_type = #tpu.core_type<tc>, window_params = [{transform_indices = @transform_0, window_bounds = array<i64: 64, 256>}, {pipeline_mode = #tpu.pipeline_mode<synchronous>, transform_indices = @transform_1, window_bounds = array<i64: 256, 32>}, {pipeline_mode = #tpu.pipeline_mode<synchronous>, transform_indices = @transform_2, window_bounds = array<i64: 1, 32>}, {transform_indices = @transform_3, window_bounds = array<i64: 16, 32>}]} {
    %c0 = arith.constant 0 : index
    %c0_0 = arith.constant 0 : index
    %0 = vector.load %arg1[%c0, %c0_0] : memref<64x256xf32, #tpu.memory_space<vmem>>, vector<64x256xf32>
    %c0_1 = arith.constant 0 : index
    %c0_2 = arith.constant 0 : index
    %1 = vector.load %arg2[%c0_1, %c0_2] : memref<256x32xf32, #tpu.memory_space<vmem>>, vector<256x32xf32>
    %cst = arith.constant dense<0.000000e+00> : vector<64x32xf32>
    %2 = tpu.matmul %0, %1, %cst {dimension_numbers = #tpu.dot_dimension_numbers<[1], [0], [0], [1], [0, 0, 1, 1], [], []>} : vector<64x256xf32>, vector<256x32xf32>, vector<64x32xf32> -> vector<64x32xf32>
    %c0_3 = arith.constant 0 : index
    %c0_4 = arith.constant 0 : index
    %3 = vector.load %arg3[%c0_3, %c0_4] : memref<1x32xf32, #tpu.memory_space<vmem>>, vector<1x32xf32>
    %4 = vector.broadcast %3 : vector<1x32xf32> to vector<64x32xf32>
    %5 = arith.addf %2, %4 : vector<64x32xf32>
    %cst_5 = arith.constant 0.000000e+00 : f32
    %6 = vector.broadcast %cst_5 : f32 to vector<64x32xf32>
    %7 = arith.maximumf %5, %6 : vector<64x32xf32>
    %8 = vector.shape_cast %7 : vector<64x32xf32> to vector<4x2x8x32xf32>
    %9 = vector.extract_strided_slice %8 {offsets = [0, 0, 0, 0], sizes = [4, 1, 8, 32], strides = [1, 1, 1, 1]} : vector<4x2x8x32xf32> to vector<4x1x8x32xf32>
    %10 = vector.shape_cast %9 : vector<4x1x8x32xf32> to vector<4x8x32xf32>
    %11 = vector.extract_strided_slice %8 {offsets = [0, 1, 0, 0], sizes = [4, 1, 8, 32], strides = [1, 1, 1, 1]} : vector<4x2x8x32xf32> to vector<4x1x8x32xf32>
    %12 = vector.shape_cast %11 : vector<4x1x8x32xf32> to vector<4x8x32xf32>
    %13 = arith.maximumf %10, %12 : vector<4x8x32xf32>
    %14 = vector.shape_cast %13 : vector<4x8x32xf32> to vector<16x2x32xf32>
    %15 = vector.extract_strided_slice %14 {offsets = [0, 0, 0], sizes = [16, 1, 32], strides = [1, 1, 1]} : vector<16x2x32xf32> to vector<16x1x32xf32>
    %16 = vector.shape_cast %15 : vector<16x1x32xf32> to vector<16x32xf32>
    %17 = vector.extract_strided_slice %14 {offsets = [0, 1, 0], sizes = [16, 1, 32], strides = [1, 1, 1]} : vector<16x2x32xf32> to vector<16x1x32xf32>
    %18 = vector.shape_cast %17 : vector<16x1x32xf32> to vector<16x32xf32>
    %19 = arith.maximumf %16, %18 : vector<16x32xf32>
    %c0_6 = arith.constant 0 : index
    %c0_7 = arith.constant 0 : index
    %20 = vector.load %arg4[%c0_6, %c0_7] : memref<16x32xf32, #tpu.memory_space<vmem>>, vector<16x32xf32>
    tpu.vector_store %arg4[%c0_6, %c0_7], %19 {strides = array<i32>} : memref<16x32xf32, #tpu.memory_space<vmem>>, vector<16x32xf32>,
    return
  }
  func.func @transform_0(%arg0: i32) -> (i32, i32) {
    %c0_i32 = arith.constant 0 : i32
    %c0_i32_0 = arith.constant 0 : i32
    return %arg0, %c0_i32 : i32, i32
  }
  func.func @transform_1(%arg0: i32) -> (i32, i32) {
    %c0_i32 = arith.constant 0 : i32
    %c0_i32_0 = arith.constant 0 : i32
    %c0_i32_1 = arith.constant 0 : i32
    return %c0_i32, %c0_i32_0 : i32, i32
  }
  func.func @transform_2(%arg0: i32) -> (i32, i32) {
    %c0_i32 = arith.constant 0 : i32
    %c0_i32_0 = arith.constant 0 : i32
    %c0_i32_1 = arith.constant 0 : i32
    return %c0_i32, %c0_i32_0 : i32, i32
  }
  func.func @transform_3(%arg0: i32) -> (i32, i32) {
    %c0_i32 = arith.constant 0 : i32
    %c0_i32_0 = arith.constant 0 : i32
    return %arg0, %c0_i32 : i32, i32
  }
}

module attributes {stable_mosaic.version = 11 : i64} {
  func.func @_conv_relu_pool_proj_tanh_kernel(%arg0: i32, %arg1: memref<8x512xf32, #tpu.memory_space<vmem>>, %arg2: memref<512x64xf32, #tpu.memory_space<vmem>>, %arg3: memref<1x64xf32, #tpu.memory_space<vmem>>, %arg4: memref<64x128xf32, #tpu.memory_space<vmem>>, %arg5: memref<1x128xf32, #tpu.memory_space<vmem>>, %arg6: memref<2x128xf32, #tpu.memory_space<vmem>>) attributes {dimension_semantics = [#tpu.dimension_semantics<parallel>], iteration_bounds = array<i64: 1>, scalar_prefetch = 0 : i64, scratch_operands = 0 : i64, tpu.core_type = #tpu.core_type<tc>, window_params = [{transform_indices = @transform_0, window_bounds = array<i64: 8, 512>}, {pipeline_mode = #tpu.pipeline_mode<synchronous>, transform_indices = @transform_1, window_bounds = array<i64: 512, 64>}, {pipeline_mode = #tpu.pipeline_mode<synchronous>, transform_indices = @transform_2, window_bounds = array<i64: 1, 64>}, {pipeline_mode = #tpu.pipeline_mode<synchronous>, transform_indices = @transform_3, window_bounds = array<i64: 64, 128>}, {pipeline_mode = #tpu.pipeline_mode<synchronous>, transform_indices = @transform_4, window_bounds = array<i64: 1, 128>}, {transform_indices = @transform_5, window_bounds = array<i64: 2, 128>}]} {
    %c0 = arith.constant 0 : index
    %c0_0 = arith.constant 0 : index
    %0 = vector.load %arg1[%c0, %c0_0] : memref<8x512xf32, #tpu.memory_space<vmem>>, vector<8x512xf32>
    %c0_1 = arith.constant 0 : index
    %c0_2 = arith.constant 0 : index
    %1 = vector.load %arg2[%c0_1, %c0_2] : memref<512x64xf32, #tpu.memory_space<vmem>>, vector<512x64xf32>
    %cst = arith.constant dense<0.000000e+00> : vector<8x64xf32>
    %2 = tpu.matmul %0, %1, %cst {dimension_numbers = #tpu.dot_dimension_numbers<[1], [0], [0], [1], [0, 0, 1, 1], [], []>} : vector<8x512xf32>, vector<512x64xf32>, vector<8x64xf32> -> vector<8x64xf32>
    %c0_3 = arith.constant 0 : index
    %c0_4 = arith.constant 0 : index
    %3 = vector.load %arg3[%c0_3, %c0_4] : memref<1x64xf32, #tpu.memory_space<vmem>>, vector<1x64xf32>
    %4 = vector.broadcast %3 : vector<1x64xf32> to vector<8x64xf32>
    %5 = arith.addf %2, %4 : vector<8x64xf32>
    %cst_5 = arith.constant 0.000000e+00 : f32
    %6 = vector.broadcast %cst_5 : f32 to vector<8x64xf32>
    %7 = arith.maximumf %5, %6 : vector<8x64xf32>
    %8 = vector.shape_cast %7 : vector<8x64xf32> to vector<2x2x2x64xf32>
    %9 = vector.extract_strided_slice %8 {offsets = [0, 0, 0, 0], sizes = [2, 1, 2, 64], strides = [1, 1, 1, 1]} : vector<2x2x2x64xf32> to vector<2x1x2x64xf32>
    %10 = vector.shape_cast %9 : vector<2x1x2x64xf32> to vector<2x2x64xf32>
    %11 = vector.extract_strided_slice %8 {offsets = [0, 1, 0, 0], sizes = [2, 1, 2, 64], strides = [1, 1, 1, 1]} : vector<2x2x2x64xf32> to vector<2x1x2x64xf32>
    %12 = vector.shape_cast %11 : vector<2x1x2x64xf32> to vector<2x2x64xf32>
    %13 = arith.maximumf %10, %12 : vector<2x2x64xf32>
    %14 = vector.extract_strided_slice %13 {offsets = [0, 0, 0], sizes = [2, 1, 64], strides = [1, 1, 1]} : vector<2x2x64xf32> to vector<2x1x64xf32>
    %15 = vector.shape_cast %14 : vector<2x1x64xf32> to vector<2x64xf32>
    %16 = vector.extract_strided_slice %13 {offsets = [0, 1, 0], sizes = [2, 1, 64], strides = [1, 1, 1]} : vector<2x2x64xf32> to vector<2x1x64xf32>
    %17 = vector.shape_cast %16 : vector<2x1x64xf32> to vector<2x64xf32>
    %18 = arith.maximumf %15, %17 : vector<2x64xf32>
    %c0_6 = arith.constant 0 : index
    %c0_7 = arith.constant 0 : index
    %19 = vector.load %arg4[%c0_6, %c0_7] : memref<64x128xf32, #tpu.memory_space<vmem>>, vector<64x128xf32>
    %cst_8 = arith.constant dense<0.000000e+00> : vector<2x128xf32>
    %20 = tpu.matmul %18, %19, %cst_8 {dimension_numbers = #tpu.dot_dimension_numbers<[1], [0], [0], [1], [0, 0, 1, 1], [], []>} : vector<2x64xf32>, vector<64x128xf32>, vector<2x128xf32> -> vector<2x128xf32>
    %c0_9 = arith.constant 0 : index
    %c0_10 = arith.constant 0 : index
    %21 = vector.load %arg5[%c0_9, %c0_10] : memref<1x128xf32, #tpu.memory_space<vmem>>, vector<1x128xf32>
    %22 = vector.broadcast %21 : vector<1x128xf32> to vector<2x128xf32>
    %23 = arith.addf %20, %22 : vector<2x128xf32>
    %24 = math.tanh %23 : vector<2x128xf32>
    %c0_11 = arith.constant 0 : index
    %c0_12 = arith.constant 0 : index
    %25 = vector.load %arg6[%c0_11, %c0_12] : memref<2x128xf32, #tpu.memory_space<vmem>>, vector<2x128xf32>
    tpu.vector_store %arg6[%c0_11, %c0_12], %24 {strides = array<i32>} : memref<2x128xf32, #tpu.memory_space<vmem>>, vector<2x128xf32>,
    return
  }
  func.func @transform_0(%arg0: i32) -> (i32, i32) {
    %c0_i32 = arith.constant 0 : i32
    %c0_i32_0 = arith.constant 0 : i32
    return %arg0, %c0_i32 : i32, i32
  }
  func.func @transform_1(%arg0: i32) -> (i32, i32) {
    %c0_i32 = arith.constant 0 : i32
    %c0_i32_0 = arith.constant 0 : i32
    %c0_i32_1 = arith.constant 0 : i32
    return %c0_i32, %c0_i32_0 : i32, i32
  }
  func.func @transform_2(%arg0: i32) -> (i32, i32) {
    %c0_i32 = arith.constant 0 : i32
    %c0_i32_0 = arith.constant 0 : i32
    %c0_i32_1 = arith.constant 0 : i32
    return %c0_i32, %c0_i32_0 : i32, i32
  }
  func.func @transform_3(%arg0: i32) -> (i32, i32) {
    %c0_i32 = arith.constant 0 : i32
    %c0_i32_0 = arith.constant 0 : i32
    %c0_i32_1 = arith.constant 0 : i32
    return %c0_i32, %c0_i32_0 : i32, i32
  }
  func.func @transform_4(%arg0: i32) -> (i32, i32) {
    %c0_i32 = arith.constant 0 : i32
    %c0_i32_0 = arith.constant 0 : i32
    %c0_i32_1 = arith.constant 0 : i32
    return %c0_i32, %c0_i32_0 : i32, i32
  }
  func.func @transform_5(%arg0: i32) -> (i32, i32) {
    %c0_i32 = arith.constant 0 : i32
    %c0_i32_0 = arith.constant 0 : i32
    return %arg0, %c0_i32 : i32, i32
  }
}

</mosaic_0001>

<llo_original>
// kernel: image_encoder_forward.4
$region0: #{image_encoder_forward.4}
  #allocation0 [shape = 'u32[]', space=smem, size = 0x4, offset = 0x4, fixed_abs, tag = 'smem constant byte address 0x4 - core index']
  #allocation1 [shape = 'u32[144,128]{1,0:T(1,128)}', space=vmem, size = 0x12000, scoped, tag = 'internal scratch']
  %s0 = inlined_call_operand.vmem [shape: f32[32768,128], index: 0, kind: input, shape index: {}]
  %s1 = inlined_call_operand.vmem [shape: f32[128,8], index: 1, kind: input, shape index: {}]
  %s2 = inlined_call_operand.hbm [shape: f32[1,8], index: 2, kind: input, shape index: {}]
  %s3 = inlined_call_operand.vmem [shape: f32[8192,8], index: 3, kind: output, shape index: {}]
  %s4 = sld [smem:[#allocation0]]
  $region49: #{image_encoder_forward.4} parent=0
    _
  %s6 = ssub.s32 1, %s4
  %s7 = scalar_select 0, %s6, %s4
  $region1: #{image_encoder_forward.4} parent=0
    #allocation2 [shape = 'u8[512]{0}', space=vmem, size = 0x400, scoped, tag = 'input window, operand 2, single buffered']
    #allocation3 [shape = 's32[2]{0}', space=sflag, size = 0x8, scoped, tag = 'scoped memory for image_encoder_forward.4']
    %8 = vsyncpa [#allocation3], 0
    loop: start=0, step=1, limit=34
    $region2: #{image_encoder_forward.4} parent=1 // loop_pre_header
      _
    $region3: #{image_encoder_forward.4} parent=1 // loop_header
      %s10 = sphi 0, %s14
      %p11 = scmp.ge.s32.totalorder %s10, 34
      %s20 = sphi 0, %s22
      %s23 = sphi 0, %s20
      %s24 = sphi 0, %s23
      %s40 = sphi 0, %s24
      %s44 = sphi 0, %s44
      %s46 = sphi 0, %s44
      %s47 = sphi 0, %s46
      %s61 = sphi 0, %s47
      %s65 = sphi 0, %s65
      %s67 = sphi 0, %s65
      %s68 = sphi 0, %s67
      %s82 = sphi 0, %s68
      %s88 = sphi 0, %s90
      %s91 = sphi 0, %s88
      %s92 = sphi 0, %s91
      %s108 = sphi 0, %s92
    $region4: #{image_encoder_forward.4} parent=1 // loop_header_branch
      %13 = sbr.rel (%p11) target = $region8
    $region5: #{image_encoder_forward.4} parent=1 // loop_body
      %s15 = ssub.s32 %s10, 1
      %s16 = ssub.s32 %s10, 2
      %s17 = sadd.s32 %s10, 1
      %s18 = ssub.s32 %s10, %s17
      %p19 = scmp.eq.s32.totalorder %s18, 0
      %s21 = sadd.s32 %s20, 1
      %s22 = scalar_select %p19, %s20, %s21
      %p25 = pneg %p19
      %p26 = scmp.eq.s32.totalorder %s10, 31
      %p27 = por %p25, %p26
      %p28 = scmp.ne.s32.totalorder %s20, %s23
      %p29 = scmp.eq.s32.totalorder %s10, 0
      %p30 = por %p28, %p29
      %p31 = scmp.ne.s32.totalorder %s20, %s23
      %p32 = scmp.eq.s32.totalorder %s15, 31
      %p33 = por %p31, %p32
      %p34 = scmp.ne.s32.totalorder %s23, %s24
      %p35 = scmp.eq.s32.totalorder %s15, 0
      %p36 = por %p34, %p35
      %p37 = scmp.ne.s32.totalorder %s23, %s24
      %p38 = scmp.eq.s32.totalorder %s16, 31
      %p39 = por %p37, %p38
      %p41 = scmp.ne.s32.totalorder %s24, %s40
      %p42 = scmp.eq.s32.totalorder %s16, 0
      %p43 = por %p41, %p42
      %s45 = sadd.s32 %s44, 1
      %p48 = scmp.eq.s32.totalorder %s10, 31
      %p49 = scmp.ne.s32.totalorder %s44, %s46
      %p50 = scmp.eq.s32.totalorder %s10, 0
      %p51 = por %p49, %p50
      %p52 = scmp.ne.s32.totalorder %s44, %s46
      %p53 = scmp.eq.s32.totalorder %s15, 31
      %p54 = por %p52, %p53
      %p55 = scmp.ne.s32.totalorder %s46, %s47
      %p56 = scmp.eq.s32.totalorder %s15, 0
      %p57 = por %p55, %p56
      %p58 = scmp.ne.s32.totalorder %s46, %s47
      %p59 = scmp.eq.s32.totalorder %s16, 31
      %p60 = por %p58, %p59
      %p62 = scmp.ne.s32.totalorder %s47, %s61
      %p63 = scmp.eq.s32.totalorder %s16, 0
      %p64 = por %p62, %p63
      %s66 = sadd.s32 %s65, 1
      %p69 = scmp.eq.s32.totalorder %s10, 31
      %p70 = scmp.ne.s32.totalorder %s65, %s67
      %p71 = scmp.eq.s32.totalorder %s10, 0
      %p72 = por %p70, %p71
      %p73 = scmp.ne.s32.totalorder %s65, %s67
      %p74 = scmp.eq.s32.totalorder %s15, 31
      %p75 = por %p73, %p74
      %p76 = scmp.ne.s32.totalorder %s67, %s68
      %p77 = scmp.eq.s32.totalorder %s15, 0
      %p78 = por %p76, %p77
      %p79 = scmp.ne.s32.totalorder %s67, %s68
      %p80 = scmp.eq.s32.totalorder %s16, 31
      %p81 = por %p79, %p80
      %p83 = scmp.ne.s32.totalorder %s68, %s82
      %p84 = scmp.eq.s32.totalorder %s16, 0
      %p85 = por %p83, %p84
      %s86 = ssub.s32 %s10, %s17
      %p87 = scmp.eq.s32.totalorder %s86, 0
      %s89 = sadd.s32 %s88, 1
      %s90 = scalar_select %p87, %s88, %s89
      %p93 = pneg %p87
      %p94 = scmp.eq.s32.totalorder %s10, 31
      %p95 = por %p93, %p94
      %p96 = scmp.ne.s32.totalorder %s88, %s91
      %p97 = scmp.eq.s32.totalorder %s10, 0
      %p98 = por %p96, %p97
      %p99 = scmp.ne.s32.totalorder %s88, %s91
      %p100 = scmp.eq.s32.totalorder %s15, 31
      %p101 = por %p99, %p100
      %p102 = scmp.ne.s32.totalorder %s91, %s92
      %p103 = scmp.eq.s32.totalorder %s15, 0
      %p104 = por %p102, %p103
      %p105 = scmp.ne.s32.totalorder %s91, %s92
      %p106 = scmp.eq.s32.totalorder %s16, 31
      %p107 = por %p105, %p106
      %p109 = scmp.ne.s32.totalorder %s92, %s108
      %p110 = scmp.eq.s32.totalorder %s16, 0
      %p111 = por %p109, %p110
      %p112 = scmp.le.s32.totalorder 1, %s10
      %p113 = scmp.lt.s32.totalorder %s10, 33
      %p114 = pnand %p112, %p113
      %p115 = pneg %p114
      // Predicated region
      $region9: #{image_encoder_forward.4} parent=5 // pred_check
        _
      $region10: #{image_encoder_forward.4} parent=5 // pred_check_branch
        %117 = sbr.rel (%p114) target = $region12
      $region11: #{image_encoder_forward.4} parent=5 // pred_region
        %s118 = ssub.s32 %s10, 1
        // Predicated region
        $region13: #{image_encoder_forward.4} parent=11 // pred_check
          %p119 = pneg %p57
        $region14: #{image_encoder_forward.4} parent=11 // pred_check_branch
          %121 = sbr.rel (%p119) target = $region16
        $region15: #{image_encoder_forward.4} parent=11 // pred_region
          _
        $region16: #{image_encoder_forward.4} parent=11 // pred_fallthru
          _
        // Predicated region
        $region17: #{image_encoder_forward.4} parent=11 // pred_check
          %p122 = pneg %p78
        $region18: #{image_encoder_forward.4} parent=11 // pred_check_branch
          %124 = sbr.rel (%p122) target = $region20
        $region19: #{image_encoder_forward.4} parent=11 // pred_region
          %s126 = ssub.s32 16, 16
          %127 = vsyncadd [#allocation3], %s126
          %s129 = sshll.u32 [#allocation2], 4
          %s130 = int_to_ptr.vmem [resolvable:$true] %s129
          %132 = dma.hbm_to_vmem [thread:$0]  %s2, 16, %s130, [#allocation3]
        $region20: #{image_encoder_forward.4} parent=11 // pred_fallthru
          _
      $region12: #{image_encoder_forward.4} parent=5 // pred_fallthru
        _
      %p133 = scmp.lt.s32.totalorder %s10, 32
      // Predicated region
      $region21: #{image_encoder_forward.4} parent=5 // pred_check
        %p134 = pneg %p133
      $region22: #{image_encoder_forward.4} parent=5 // pred_check_branch
        %136 = sbr.rel (%p134) target = $region24
      $region23: #{image_encoder_forward.4} parent=5 // pred_region
        // Predicated region
        $region25: #{image_encoder_forward.4} parent=23 // pred_check
          %p137 = pneg %p30
        $region26: #{image_encoder_forward.4} parent=23 // pred_check_branch
          %139 = sbr.rel (%p137) target = $region28
        $region27: #{image_encoder_forward.4} parent=23 // pred_region
          %s140 = smul.u32 128, %s10
          %p141 = scmp.lt.s32.totalorder %s140, 4095
          %s142 = scalar_select %p141, %s140, 4095
          %s143 = smul.addr %s142, 8
          %s144 = scalar_lea.vmem %s0, %s143
          %s145 = smul.u32 128, %s10
        $region28: #{image_encoder_forward.4} parent=23 // pred_fallthru
          _
      $region24: #{image_encoder_forward.4} parent=5 // pred_fallthru
        _
      %p146 = scmp.le.s32.totalorder 1, %s10
      %p147 = scmp.lt.s32.totalorder %s10, 33
      %p148 = pnand %p146, %p147
      %p149 = pneg %p148
      // Predicated region
      $region29: #{image_encoder_forward.4} parent=5 // pred_check
        _
      $region30: #{image_encoder_forward.4} parent=5 // pred_check_branch
        %151 = sbr.rel (%p148) target = $region32
      $region31: #{image_encoder_forward.4} parent=5 // pred_region
        %s152 = ssub.s32 %s10, 1
        // Predicated region
        $region33: #{image_encoder_forward.4} parent=31 // pred_check
          %p153 = pneg %p78
        $region34: #{image_encoder_forward.4} parent=31 // pred_check_branch
          %155 = sbr.rel (%p153) target = $region36
        $region35: #{image_encoder_forward.4} parent=31 // pred_region
          %156 = dma.done [#allocation3], 16
        $region36: #{image_encoder_forward.4} parent=31 // pred_fallthru
          _
        %s157 = smul.u32 128, %s15
        %p158 = scmp.lt.s32.totalorder %s157, 4095
        %s159 = scalar_select %p158, %s157, 4095
        %s160 = smul.addr %s159, 8
        %s161 = scalar_lea.vmem %s0, %s160
        %p162 = pneg %p36
        %p163 = pneg %p33
        %p164 = pneg %p57
        %p165 = pneg %p54
        %p166 = pneg %p78
        %p167 = pneg %p75
        %p168 = pneg %p104
        %p169 = pneg %p101
        %s170 = smul.u32 32, %s15
        %p171 = scmp.lt.s32.totalorder %s170, 1023
        %s172 = scalar_select %p171, %s170, 1023
        %s173 = smul.addr %s172, 8
        %s174 = scalar_lea.vmem %s3, %s173
        %s175 = smul.u32 128, %s15
        %p176 = scmp.lt.s32.totalorder %s175, 4095
        %s177 = scalar_select %p176, %s175, 4095
        %s178 = smul.addr %s177, 8
        %s179 = scalar_lea.vmem %s0, %s178
        %s180 = smul.u32 128, %s15
        %s181 = smul.u32 32, %s15
        %p182 = scmp.lt.s32.totalorder %s181, 1023
        %s183 = scalar_select %p182, %s181, 1023
        %s184 = smul.addr %s183, 8
        %s185 = scalar_lea.vmem %s3, %s184
        %s186 = smul.u32 32, %s15
        %v187 = vld [vmem:[%s179] sm:$0xff]
        %v188 = vld [vmem:[%s179 + $0x8] sm:$0xff]
        %v189 = vld [vmem:[%s179 + $0x10] sm:$0xff]
        %v190 = vld [vmem:[%s179 + $0x18] sm:$0xff]
        %v191 = vld [vmem:[%s179 + $0x20] sm:$0xff]
        %v192 = vld [vmem:[%s179 + $0x28] sm:$0xff]
        %v193 = vld [vmem:[%s179 + $0x30] sm:$0xff]
        %v194 = vld [vmem:[%s179 + $0x38] sm:$0xff]
        %v195 = vld [vmem:[%s179 + $0x40] sm:$0xff]
        %v196 = vld [vmem:[%s179 + $0x48] sm:$0xff]
        %v197 = vld [vmem:[%s179 + $0x50] sm:$0xff]
        %v198 = vld [vmem:[%s179 + $0x58] sm:$0xff]
        %v199 = vld [vmem:[%s179 + $0x60] sm:$0xff]
        %v200 = vld [vmem:[%s179 + $0x68] sm:$0xff]
        %v201 = vld [vmem:[%s179 + $0x70] sm:$0xff]
        %v202 = vld [vmem:[%s179 + $0x78] sm:$0xff]
        %v203 = vld [vmem:[%s179 + $0x80] sm:$0xff]
        %v204 = vld [vmem:[%s179 + $0x88] sm:$0xff]
        %v205 = vld [vmem:[%s179 + $0x90] sm:$0xff]
        %v206 = vld [vmem:[%s179 + $0x98] sm:$0xff]
        %v207 = vld [vmem:[%s179 + $0xa0] sm:$0xff]
        %v208 = vld [vmem:[%s179 + $0xa8] sm:$0xff]
        %v209 = vld [vmem:[%s179 + $0xb0] sm:$0xff]
        %v210 = vld [vmem:[%s179 + $0xb8] sm:$0xff]
        %v211 = vld [vmem:[%s179 + $0xc0] sm:$0xff]
        %v212 = vld [vmem:[%s179 + $0xc8] sm:$0xff]
        %v213 = vld [vmem:[%s179 + $0xd0] sm:$0xff]
        %v214 = vld [vmem:[%s179 + $0xd8] sm:$0xff]
        %v215 = vld [vmem:[%s179 + $0xe0] sm:$0xff]
        %v216 = vld [vmem:[%s179 + $0xe8] sm:$0xff]
        %v217 = vld [vmem:[%s179 + $0xf0] sm:$0xff]
        %v218 = vld [vmem:[%s179 + $0xf8] sm:$0xff]
        %v219 = vld [vmem:[%s179 + $0x100] sm:$0xff]
        %v220 = vld [vmem:[%s179 + $0x108] sm:$0xff]
        %v221 = vld [vmem:[%s179 + $0x110] sm:$0xff]
        %v222 = vld [vmem:[%s179 + $0x118] sm:$0xff]
        %v223 = vld [vmem:[%s179 + $0x120] sm:$0xff]
        %v224 = vld [vmem:[%s179 + $0x128] sm:$0xff]
        %v225 = vld [vmem:[%s179 + $0x130] sm:$0xff]
        %v226 = vld [vmem:[%s179 + $0x138] sm:$0xff]
        %v227 = vld [vmem:[%s179 + $0x140] sm:$0xff]
        %v228 = vld [vmem:[%s179 + $0x148] sm:$0xff]
        %v229 = vld [vmem:[%s179 + $0x150] sm:$0xff]
        %v230 = vld [vmem:[%s179 + $0x158] sm:$0xff]
        %v231 = vld [vmem:[%s179 + $0x160] sm:$0xff]
        %v232 = vld [vmem:[%s179 + $0x168] sm:$0xff]
        %v233 = vld [vmem:[%s179 + $0x170] sm:$0xff]
        %v234 = vld [vmem:[%s179 + $0x178] sm:$0xff]
        %v235 = vld [vmem:[%s179 + $0x180] sm:$0xff]
        %v236 = vld [vmem:[%s179 + $0x188] sm:$0xff]
        %v237 = vld [vmem:[%s179 + $0x190] sm:$0xff]
        %v238 = vld [vmem:[%s179 + $0x198] sm:$0xff]
        %v239 = vld [vmem:[%s179 + $0x1a0] sm:$0xff]
        %v240 = vld [vmem:[%s179 + $0x1a8] sm:$0xff]
        %v241 = vld [vmem:[%s179 + $0x1b0] sm:$0xff]
        %v242 = vld [vmem:[%s179 + $0x1b8] sm:$0xff]
        %v243 = vld [vmem:[%s179 + $0x1c0] sm:$0xff]
        %v244 = vld [vmem:[%s179 + $0x1c8] sm:$0xff]
        %v245 = vld [vmem:[%s179 + $0x1d0] sm:$0xff]
        %v246 = vld [vmem:[%s179 + $0x1d8] sm:$0xff]
        %v247 = vld [vmem:[%s179 + $0x1e0] sm:$0xff]
        %v248 = vld [vmem:[%s179 + $0x1e8] sm:$0xff]
        %v249 = vld [vmem:[%s179 + $0x1f0] sm:$0xff]
        %v250 = vld [vmem:[%s179 + $0x1f8] sm:$0xff]
        %v251 = vld [vmem:[%s179 + $0x200] sm:$0xff]
        %v252 = vld [vmem:[%s179 + $0x208] sm:$0xff]
        %v253 = vld [vmem:[%s179 + $0x210] sm:$0xff]
        %v254 = vld [vmem:[%s179 + $0x218] sm:$0xff]
        %v255 = vld [vmem:[%s179 + $0x220] sm:$0xff]
        %v256 = vld [vmem:[%s179 + $0x228] sm:$0xff]
        %v257 = vld [vmem:[%s179 + $0x230] sm:$0xff]
        %v258 = vld [vmem:[%s179 + $0x238] sm:$0xff]
        %v259 = vld [vmem:[%s179 + $0x240] sm:$0xff]
        %v260 = vld [vmem:[%s179 + $0x248] sm:$0xff]
        %v261 = vld [vmem:[%s179 + $0x250] sm:$0xff]
        %v262 = vld [vmem:[%s179 + $0x258] sm:$0xff]
        %v263 = vld [vmem:[%s179 + $0x260] sm:$0xff]
        %v264 = vld [vmem:[%s179 + $0x268] sm:$0xff]
        %v265 = vld [vmem:[%s179 + $0x270] sm:$0xff]
        %v266 = vld [vmem:[%s179 + $0x278] sm:$0xff]
        %v267 = vld [vmem:[%s179 + $0x280] sm:$0xff]
        %v268 = vld [vmem:[%s179 + $0x288] sm:$0xff]
        %v269 = vld [vmem:[%s179 + $0x290] sm:$0xff]
        %v270 = vld [vmem:[%s179 + $0x298] sm:$0xff]
        %v271 = vld [vmem:[%s179 + $0x2a0] sm:$0xff]
        %v272 = vld [vmem:[%s179 + $0x2a8] sm:$0xff]
        %v273 = vld [vmem:[%s179 + $0x2b0] sm:$0xff]
        %v274 = vld [vmem:[%s179 + $0x2b8] sm:$0xff]
        %v275 = vld [vmem:[%s179 + $0x2c0] sm:$0xff]
        %v276 = vld [vmem:[%s179 + $0x2c8] sm:$0xff]
        %v277 = vld [vmem:[%s179 + $0x2d0] sm:$0xff]
        %v278 = vld [vmem:[%s179 + $0x2d8] sm:$0xff]
        %v279 = vld [vmem:[%s179 + $0x2e0] sm:$0xff]
        %v280 = vld [vmem:[%s179 + $0x2e8] sm:$0xff]
        %v281 = vld [vmem:[%s179 + $0x2f0] sm:$0xff]
        %v282 = vld [vmem:[%s179 + $0x2f8] sm:$0xff]
        %v283 = vld [vmem:[%s179 + $0x300] sm:$0xff]
        %v284 = vld [vmem:[%s179 + $0x308] sm:$0xff]
        %v285 = vld [vmem:[%s179 + $0x310] sm:$0xff]
        %v286 = vld [vmem:[%s179 + $0x318] sm:$0xff]
        %v287 = vld [vmem:[%s179 + $0x320] sm:$0xff]
        %v288 = vld [vmem:[%s179 + $0x328] sm:$0xff]
        %v289 = vld [vmem:[%s179 + $0x330] sm:$0xff]
        %v290 = vld [vmem:[%s179 + $0x338] sm:$0xff]
        %v291 = vld [vmem:[%s179 + $0x340] sm:$0xff]
        %v292 = vld [vmem:[%s179 + $0x348] sm:$0xff]
        %v293 = vld [vmem:[%s179 + $0x350] sm:$0xff]
        %v294 = vld [vmem:[%s179 + $0x358] sm:$0xff]
        %v295 = vld [vmem:[%s179 + $0x360] sm:$0xff]
        %v296 = vld [vmem:[%s179 + $0x368] sm:$0xff]
        %v297 = vld [vmem:[%s179 + $0x370] sm:$0xff]
        %v298 = vld [vmem:[%s179 + $0x378] sm:$0xff]
        %v299 = vld [vmem:[%s179 + $0x380] sm:$0xff]
        %v300 = vld [vmem:[%s179 + $0x388] sm:$0xff]
        %v301 = vld [vmem:[%s179 + $0x390] sm:$0xff]
        %v302 = vld [vmem:[%s179 + $0x398] sm:$0xff]
        %v303 = vld [vmem:[%s179 + $0x3a0] sm:$0xff]
        %v304 = vld [vmem:[%s179 + $0x3a8] sm:$0xff]
        %v305 = vld [vmem:[%s179 + $0x3b0] sm:$0xff]
        %v306 = vld [vmem:[%s179 + $0x3b8] sm:$0xff]
        %v307 = vld [vmem:[%s179 + $0x3c0] sm:$0xff]
        %v308 = vld [vmem:[%s179 + $0x3c8] sm:$0xff]
        %v309 = vld [vmem:[%s179 + $0x3d0] sm:$0xff]
        %v310 = vld [vmem:[%s179 + $0x3d8] sm:$0xff]
        %v311 = vld [vmem:[%s179 + $0x3e0] sm:$0xff]
        %v312 = vld [vmem:[%s179 + $0x3e8] sm:$0xff]
        %v313 = vld [vmem:[%s179 + $0x3f0] sm:$0xff]
        %v314 = vld [vmem:[%s179 + $0x3f8] sm:$0xff]
        %v315 = vld [vmem:[%s1] sm:$0xff]
        %v316 = vld [vmem:[%s1 + $0x8] sm:$0xff]
        %v317 = vld [vmem:[%s1 + $0x10] sm:$0xff]
        %v318 = vld [vmem:[%s1 + $0x18] sm:$0xff]
        %v319 = vld [vmem:[%s1 + $0x20] sm:$0xff]
        %v320 = vld [vmem:[%s1 + $0x28] sm:$0xff]
        %v321 = vld [vmem:[%s1 + $0x30] sm:$0xff]
        %v322 = vld [vmem:[%s1 + $0x38] sm:$0xff]
        %v323 = vld [vmem:[%s1 + $0x40] sm:$0xff]
        %v324 = vld [vmem:[%s1 + $0x48] sm:$0xff]
        %v325 = vld [vmem:[%s1 + $0x50] sm:$0xff]
        %v326 = vld [vmem:[%s1 + $0x58] sm:$0xff]
        %v327 = vld [vmem:[%s1 + $0x60] sm:$0xff]
        %v328 = vld [vmem:[%s1 + $0x68] sm:$0xff]
        %v329 = vld [vmem:[%s1 + $0x70] sm:$0xff]
        %v330 = vld [vmem:[%s1 + $0x78] sm:$0xff]
        %v331 = vld [vmem:[#allocation2] sm:$0x1]
        %v333 = vlaneseq
        %v334 = vshrl.u32 %v333, 7
        %v335 = vsub.s32 0, %v334
        %v336 = vrot.slane %v331, %v335
        %338 = vmatprep.subr.mxu0 0.0
        %339 = vmatpush1.msra.mxu0 %v315
        %340 = vmatprep.subr.mxu0 0.0
        %341 = vmatpush1.msra.mxu0 %v316
        %342 = vmatprep.subr.mxu0 0.0
        %343 = vmatpush1.msra.mxu0 %v317
        %344 = vmatprep.subr.mxu0 0.0
        %345 = vmatpush1.msra.mxu0 %v318
        %346 = vmatprep.subr.mxu0 0.0
        %347 = vmatpush1.msra.mxu0 %v319
        %348 = vmatprep.subr.mxu0 0.0
        %349 = vmatpush1.msra.mxu0 %v320
        %350 = vmatprep.subr.mxu0 0.0
        %351 = vmatpush1.msra.mxu0 %v321
        %352 = vmatprep.subr.mxu0 0.0
        %353 = vmatpush1.msra.mxu0 %v322
        %354 = vmatprep.subr.mxu0 0.0
        %355 = vmatpush1.msra.mxu0 %v323
        %356 = vmatprep.subr.mxu0 0.0
        %357 = vmatpush1.msra.mxu0 %v324
        %358 = vmatprep.subr.mxu0 0.0
        %359 = vmatpush1.msra.mxu0 %v325
        %360 = vmatprep.subr.mxu0 0.0
        %361 = vmatpush1.msra.mxu0 %v326
        %362 = vmatprep.subr.mxu0 0.0
        %363 = vmatpush1.msra.mxu0 %v327
        %364 = vmatprep.subr.mxu0 0.0
        %365 = vmatpush1.msra.mxu0 %v328
        %366 = vmatprep.subr.mxu0 0.0
        %367 = vmatpush1.msra.mxu0 %v329
        %368 = vmatprep.subr.mxu0 0.0
        %369 = vmatpush1.msra.mxu0 %v330
        %370 = vmatprep.subr.mxu0 0.0
        %371 = vmatpush1.msra.mxu0 0.0
        %372 = vmatprep.subr.mxu0 0.0
        %373 = vmatpush1.msra.mxu0 0.0
        %374 = vmatprep.subr.mxu0 0.0
        %375 = vmatpush1.msra.mxu0 0.0
        %376 = vmatprep.subr.mxu0 0.0
        %377 = vmatpush1.msra.mxu0 0.0
        %378 = vmatprep.subr.mxu0 0.0
        %379 = vmatpush1.msra.mxu0 0.0
        %380 = vmatprep.subr.mxu0 0.0
        %381 = vmatpush1.msra.mxu0 0.0
        %382 = vmatprep.subr.mxu0 0.0
        %383 = vmatpush1.msra.mxu0 0.0
        %384 = vmatprep.subr.mxu0 0.0
        %385 = vmatpush1.msra.mxu0 0.0
        %386 = vmatprep.subr.mxu0 0.0
        %387 = vmatpush1.msra.mxu0 0.0
        %388 = vmatprep.subr.mxu0 0.0
        %389 = vmatpush1.msra.mxu0 0.0
        %390 = vmatprep.subr.mxu0 0.0
        %391 = vmatpush1.msra.mxu0 0.0
        %392 = vmatprep.subr.mxu0 0.0
        %393 = vmatpush1.msra.mxu0 0.0
        %394 = vmatprep.subr.mxu0 0.0
        %395 = vmatpush1.msra.mxu0 0.0
        %396 = vmatprep.subr.mxu0 0.0
        %397 = vmatpush1.msra.mxu0 0.0
        %398 = vmatprep.subr.mxu0 0.0
        %399 = vmatpush1.msra.mxu0 0.0
        %400 = vmatprep.subr.mxu0 0.0
        %401 = vmatpush1.msra.mxu0 0.0
        %402 = vmatprep.mubr.f32.mxu0 0.0
        %403 = vmatmul.mubr.f32.gmra.mrb[0].mxu0 %v187
        %v404 = vpop.f32.mrb[0].mxu0
        %v405 = vadd.f32 %v336, %v404
        %v406 = vpop.f32.mrb[0].mxu0
        %407 = vmatprep.mubr.f32.mxu0 0.0
        %408 = vmatmul.mubr.f32.gmra.mrb[0].mxu0 %v188
        %v409 = vpop.f32.mrb[0].mxu0
        %v410 = vadd.f32 %v336, %v409
        %v411 = vpop.f32.mrb[0].mxu0
        %412 = vmatprep.mubr.f32.mxu0 0.0
        %413 = vmatmul.mubr.f32.gmra.mrb[0].mxu0 %v189
        %v414 = vpop.f32.mrb[0].mxu0
        %v415 = vadd.f32 %v336, %v414
        %v416 = vpop.f32.mrb[0].mxu0
        %417 = vmatprep.mubr.f32.mxu0 0.0
        %418 = vmatmul.mubr.f32.gmra.mrb[0].mxu0 %v190
        %v419 = vpop.f32.mrb[0].mxu0
        %v420 = vadd.f32 %v336, %v419
        %v421 = vpop.f32.mrb[0].mxu0
        %422 = vmatprep.mubr.f32.mxu0 0.0
        %423 = vmatmul.mubr.f32.gmra.mrb[0].mxu0 %v191
        %v424 = vpop.f32.mrb[0].mxu0
        %v425 = vadd.f32 %v336, %v424
        %v426 = vpop.f32.mrb[0].mxu0
        %427 = vmatprep.mubr.f32.mxu0 0.0
        %428 = vmatmul.mubr.f32.gmra.mrb[0].mxu0 %v192
        %v429 = vpop.f32.mrb[0].mxu0
        %v430 = vadd.f32 %v336, %v429
        %v431 = vpop.f32.mrb[0].mxu0
        %432 = vmatprep.mubr.f32.mxu0 0.0
        %433 = vmatmul.mubr.f32.gmra.mrb[0].mxu0 %v193
        %v434 = vpop.f32.mrb[0].mxu0
        %v435 = vadd.f32 %v336, %v434
        %v436 = vpop.f32.mrb[0].mxu0
        %437 = vmatprep.mubr.f32.mxu0 0.0
        %438 = vmatmul.mubr.f32.gmra.mrb[0].mxu0 %v194
        %v439 = vpop.f32.mrb[0].mxu0
        %v440 = vadd.f32 %v336, %v439
        %v441 = vpop.f32.mrb[0].mxu0
        %442 = vmatprep.mubr.f32.mxu0 0.0
        %443 = vmatmul.mubr.f32.gmra.mrb[0].mxu0 %v195
        %v444 = vpop.f32.mrb[0].mxu0
        %v445 = vadd.f32 %v336, %v444
        %v446 = vpop.f32.mrb[0].mxu0
        %447 = vmatprep.mubr.f32.mxu0 0.0
        %448 = vmatmul.mubr.f32.gmra.mrb[0].mxu0 %v196
        %v449 = vpop.f32.mrb[0].mxu0
        %v450 = vadd.f32 %v336, %v449
        %v451 = vpop.f32.mrb[0].mxu0
        %452 = vmatprep.mubr.f32.mxu0 0.0
        %453 = vmatmul.mubr.f32.gmra.mrb[0].mxu0 %v197
        %v454 = vpop.f32.mrb[0].mxu0
        %v455 = vadd.f32 %v336, %v454
        %v456 = vpop.f32.mrb[0].mxu0
        %457 = vmatprep.mubr.f32.mxu0 0.0
        %458 = vmatmul.mubr.f32.gmra.mrb[0].mxu0 %v198
        %v459 = vpop.f32.mrb[0].mxu0
        %v460 = vadd.f32 %v336, %v459
        %v461 = vpop.f32.mrb[0].mxu0
        %462 = vmatprep.mubr.f32.mxu0 0.0
        %463 = vmatmul.mubr.f32.gmra.mrb[0].mxu0 %v199
        %v464 = vpop.f32.mrb[0].mxu0
        %v465 = vadd.f32 %v336, %v464
        %v466 = vpop.f32.mrb[0].mxu0
        %467 = vmatprep.mubr.f32.mxu0 0.0
        %468 = vmatmul.mubr.f32.gmra.mrb[0].mxu0 %v200
        %v469 = vpop.f32.mrb[0].mxu0
        %v470 = vadd.f32 %v336, %v469
        %v471 = vpop.f32.mrb[0].mxu0
        %472 = vmatprep.mubr.f32.mxu0 0.0
        %473 = vmatmul.mubr.f32.gmra.mrb[0].mxu0 %v201
        %v474 = vpop.f32.mrb[0].mxu0
        %v475 = vadd.f32 %v336, %v474
        %v476 = vpop.f32.mrb[0].mxu0
        %477 = vmatprep.mubr.f32.mxu0 0.0
        %478 = vmatmul.mubr.f32.gmra.mrb[0].mxu0 %v202
        %v479 = vpop.f32.mrb[0].mxu0
        %v480 = vadd.f32 %v336, %v479
        %v481 = vpop.f32.mrb[0].mxu0
        %482 = vmatprep.mubr.f32.mxu0 0.0
        %483 = vmatmul.mubr.f32.gmra.mrb[0].mxu0 %v203
        %v484 = vpop.f32.mrb[0].mxu0
        %v485 = vadd.f32 %v336, %v484
        %v486 = vpop.f32.mrb[0].mxu0
        %487 = vmatprep.mubr.f32.mxu0 0.0
        %488 = vmatmul.mubr.f32.gmra.mrb[0].mxu0 %v204
        %v489 = vpop.f32.mrb[0].mxu0
        %v490 = vadd.f32 %v336, %v489
        %v491 = vpop.f32.mrb[0].mxu0
        %492 = vmatprep.mubr.f32.mxu0 0.0
        %493 = vmatmul.mubr.f32.gmra.mrb[0].mxu0 %v205
        %v494 = vpop.f32.mrb[0].mxu0
        %v495 = vadd.f32 %v336, %v494
        %v496 = vpop.f32.mrb[0].mxu0
        %497 = vmatprep.mubr.f32.mxu0 0.0
        %498 = vmatmul.mubr.f32.gmra.mrb[0].mxu0 %v206
        %v499 = vpop.f32.mrb[0].mxu0
        %v500 = vadd.f32 %v336, %v499
        %v501 = vpop.f32.mrb[0].mxu0
        %502 = vmatprep.mubr.f32.mxu0 0.0
        %503 = vmatmul.mubr.f32.gmra.mrb[0].mxu0 %v207
        %v504 = vpop.f32.mrb[0].mxu0
        %v505 = vadd.f32 %v336, %v504
        %v506 = vpop.f32.mrb[0].mxu0
        %507 = vmatprep.mubr.f32.mxu0 0.0
        %508 = vmatmul.mubr.f32.gmra.mrb[0].mxu0 %v208
        %v509 = vpop.f32.mrb[0].mxu0
        %v510 = vadd.f32 %v336, %v509
        %v511 = vpop.f32.mrb[0].mxu0
        %512 = vmatprep.mubr.f32.mxu0 0.0
        %513 = vmatmul.mubr.f32.gmra.mrb[0].mxu0 %v209
        %v514 = vpop.f32.mrb[0].mxu0
        %v515 = vadd.f32 %v336, %v514
        %v516 = vpop.f32.mrb[0].mxu0
        %517 = vmatprep.mubr.f32.mxu0 0.0
        %518 = vmatmul.mubr.f32.gmra.mrb[0].mxu0 %v210
        %v519 = vpop.f32.mrb[0].mxu0
        %v520 = vadd.f32 %v336, %v519
        %v521 = vpop.f32.mrb[0].mxu0
        %522 = vmatprep.mubr.f32.mxu0 0.0
        %523 = vmatmul.mubr.f32.gmra.mrb[0].mxu0 %v211
        %v524 = vpop.f32.mrb[0].mxu0
        %v525 = vadd.f32 %v336, %v524
        %v526 = vpop.f32.mrb[0].mxu0
        %527 = vmatprep.mubr.f32.mxu0 0.0
        %528 = vmatmul.mubr.f32.gmra.mrb[0].mxu0 %v212
        %v529 = vpop.f32.mrb[0].mxu0
        %v530 = vadd.f32 %v336, %v529
        %v531 = vpop.f32.mrb[0].mxu0
        %532 = vmatprep.mubr.f32.mxu0 0.0
        %533 = vmatmul.mubr.f32.gmra.mrb[0].mxu0 %v213
        %v534 = vpop.f32.mrb[0].mxu0
        %v535 = vadd.f32 %v336, %v534
        %v536 = vpop.f32.mrb[0].mxu0
        %537 = vmatprep.mubr.f32.mxu0 0.0
        %538 = vmatmul.mubr.f32.gmra.mrb[0].mxu0 %v214
        %v539 = vpop.f32.mrb[0].mxu0
        %v540 = vadd.f32 %v336, %v539
        %v541 = vpop.f32.mrb[0].mxu0
        %542 = vmatprep.mubr.f32.mxu0 0.0
        %543 = vmatmul.mubr.f32.gmra.mrb[0].mxu0 %v215
        %v544 = vpop.f32.mrb[0].mxu0
        %v545 = vadd.f32 %v336, %v544
        %v546 = vpop.f32.mrb[0].mxu0
        %547 = vmatprep.mubr.f32.mxu0 0.0
        %548 = vmatmul.mubr.f32.gmra.mrb[0].mxu0 %v216
        %v549 = vpop.f32.mrb[0].mxu0
        %v550 = vadd.f32 %v336, %v549
        %v551 = vpop.f32.mrb[0].mxu0
        %552 = vmatprep.mubr.f32.mxu0 0.0
        %553 = vmatmul.mubr.f32.gmra.mrb[0].mxu0 %v217
        %v554 = vpop.f32.mrb[0].mxu0
        %v555 = vadd.f32 %v336, %v554
        %v556 = vpop.f32.mrb[0].mxu0
        %557 = vmatprep.mubr.f32.mxu0 0.0
        %558 = vmatmul.mubr.f32.gmra.mrb[0].mxu0 %v218
        %v559 = vpop.f32.mrb[0].mxu0
        %v560 = vadd.f32 %v336, %v559
        %v561 = vpop.f32.mrb[0].mxu0
        %562 = vmatprep.mubr.f32.mxu0 0.0
        %563 = vmatmul.mubr.f32.gmra.mrb[0].mxu0 %v219
        %v564 = vpop.f32.mrb[0].mxu0
        %v565 = vadd.f32 %v336, %v564
        %v566 = vpop.f32.mrb[0].mxu0
        %567 = vmatprep.mubr.f32.mxu0 0.0
        %568 = vmatmul.mubr.f32.gmra.mrb[0].mxu0 %v220
        %v569 = vpop.f32.mrb[0].mxu0
        %v570 = vadd.f32 %v336, %v569
        %v571 = vpop.f32.mrb[0].mxu0
        %572 = vmatprep.mubr.f32.mxu0 0.0
        %573 = vmatmul.mubr.f32.gmra.mrb[0].mxu0 %v221
        %v574 = vpop.f32.mrb[0].mxu0
        %v575 = vadd.f32 %v336, %v574
        %v576 = vpop.f32.mrb[0].mxu0
        %577 = vmatprep.mubr.f32.mxu0 0.0
        %578 = vmatmul.mubr.f32.gmra.mrb[0].mxu0 %v222
        %v579 = vpop.f32.mrb[0].mxu0
        %v580 = vadd.f32 %v336, %v579
        %v581 = vpop.f32.mrb[0].mxu0
        %582 = vmatprep.mubr.f32.mxu0 0.0
        %583 = vmatmul.mubr.f32.gmra.mrb[0].mxu0 %v223
        %v584 = vpop.f32.mrb[0].mxu0
        %v585 = vadd.f32 %v336, %v584
        %v586 = vpop.f32.mrb[0].mxu0
        %587 = vmatprep.mubr.f32.mxu0 0.0
        %588 = vmatmul.mubr.f32.gmra.mrb[0].mxu0 %v224
        %v589 = vpop.f32.mrb[0].mxu0
        %v590 = vadd.f32 %v336, %v589
        %v591 = vpop.f32.mrb[0].mxu0
        %592 = vmatprep.mubr.f32.mxu0 0.0
        %593 = vmatmul.mubr.f32.gmra.mrb[0].mxu0 %v225
        %v594 = vpop.f32.mrb[0].mxu0
        %v595 = vadd.f32 %v336, %v594
        %v596 = vpop.f32.mrb[0].mxu0
        %597 = vmatprep.mubr.f32.mxu0 0.0
        %598 = vmatmul.mubr.f32.gmra.mrb[0].mxu0 %v226
        %v599 = vpop.f32.mrb[0].mxu0
        %v600 = vadd.f32 %v336, %v599
        %v601 = vpop.f32.mrb[0].mxu0
        %602 = vmatprep.mubr.f32.mxu0 0.0
        %603 = vmatmul.mubr.f32.gmra.mrb[0].mxu0 %v227
        %v604 = vpop.f32.mrb[0].mxu0
        %v605 = vadd.f32 %v336, %v604
        %v606 = vpop.f32.mrb[0].mxu0
        %607 = vmatprep.mubr.f32.mxu0 0.0
        %608 = vmatmul.mubr.f32.gmra.mrb[0].mxu0 %v228
        %v609 = vpop.f32.mrb[0].mxu0
        %v610 = vadd.f32 %v336, %v609
        %v611 = vpop.f32.mrb[0].mxu0
        %612 = vmatprep.mubr.f32.mxu0 0.0
        %613 = vmatmul.mubr.f32.gmra.mrb[0].mxu0 %v229
        %v614 = vpop.f32.mrb[0].mxu0
        %v615 = vadd.f32 %v336, %v614
        %v616 = vpop.f32.mrb[0].mxu0
        %617 = vmatprep.mubr.f32.mxu0 0.0
        %618 = vmatmul.mubr.f32.gmra.mrb[0].mxu0 %v230
        %v619 = vpop.f32.mrb[0].mxu0
        %v620 = vadd.f32 %v336, %v619
        %v621 = vpop.f32.mrb[0].mxu0
        %622 = vmatprep.mubr.f32.mxu0 0.0
        %623 = vmatmul.mubr.f32.gmra.mrb[0].mxu0 %v231
        %v624 = vpop.f32.mrb[0].mxu0
        %v625 = vadd.f32 %v336, %v624
        %v626 = vpop.f32.mrb[0].mxu0
        %627 = vmatprep.mubr.f32.mxu0 0.0
        %628 = vmatmul.mubr.f32.gmra.mrb[0].mxu0 %v232
        %v629 = vpop.f32.mrb[0].mxu0
        %v630 = vadd.f32 %v336, %v629
        %v631 = vpop.f32.mrb[0].mxu0
        %632 = vmatprep.mubr.f32.mxu0 0.0
        %633 = vmatmul.mubr.f32.gmra.mrb[0].mxu0 %v233
        %v634 = vpop.f32.mrb[0].mxu0
        %v635 = vadd.f32 %v336, %v634
        %v636 = vpop.f32.mrb[0].mxu0
        %637 = vmatprep.mubr.f32.mxu0 0.0
        %638 = vmatmul.mubr.f32.gmra.mrb[0].mxu0 %v234
        %v639 = vpop.f32.mrb[0].mxu0
        %v640 = vadd.f32 %v336, %v639
        %v641 = vpop.f32.mrb[0].mxu0
        %642 = vmatprep.mubr.f32.mxu0 0.0
        %643 = vmatmul.mubr.f32.gmra.mrb[0].mxu0 %v235
        %v644 = vpop.f32.mrb[0].mxu0
        %v645 = vadd.f32 %v336, %v644
        %v646 = vpop.f32.mrb[0].mxu0
        %647 = vmatprep.mubr.f32.mxu0 0.0
        %648 = vmatmul.mubr.f32.gmra.mrb[0].mxu0 %v236
        %v649 = vpop.f32.mrb[0].mxu0
        %v650 = vadd.f32 %v336, %v649
        %v651 = vpop.f32.mrb[0].mxu0
        %652 = vmatprep.mubr.f32.mxu0 0.0
        %653 = vmatmul.mubr.f32.gmra.mrb[0].mxu0 %v237
        %v654 = vpop.f32.mrb[0].mxu0
        %v655 = vadd.f32 %v336, %v654
        %v656 = vpop.f32.mrb[0].mxu0
        %657 = vmatprep.mubr.f32.mxu0 0.0
        %658 = vmatmul.mubr.f32.gmra.mrb[0].mxu0 %v238
        %v659 = vpop.f32.mrb[0].mxu0
        %v660 = vadd.f32 %v336, %v659
        %v661 = vpop.f32.mrb[0].mxu0
        %662 = vmatprep.mubr.f32.mxu0 0.0
        %663 = vmatmul.mubr.f32.gmra.mrb[0].mxu0 %v239
        %v664 = vpop.f32.mrb[0].mxu0
        %v665 = vadd.f32 %v336, %v664
        %v666 = vpop.f32.mrb[0].mxu0
        %667 = vmatprep.mubr.f32.mxu0 0.0
        %668 = vmatmul.mubr.f32.gmra.mrb[0].mxu0 %v240
        %v669 = vpop.f32.mrb[0].mxu0
        %v670 = vadd.f32 %v336, %v669
        %v671 = vpop.f32.mrb[0].mxu0
        %672 = vmatprep.mubr.f32.mxu0 0.0
        %673 = vmatmul.mubr.f32.gmra.mrb[0].mxu0 %v241
        %v674 = vpop.f32.mrb[0].mxu0
        %v675 = vadd.f32 %v336, %v674
        %v676 = vpop.f32.mrb[0].mxu0
        %677 = vmatprep.mubr.f32.mxu0 0.0
        %678 = vmatmul.mubr.f32.gmra.mrb[0].mxu0 %v242
        %v679 = vpop.f32.mrb[0].mxu0
        %v680 = vadd.f32 %v336, %v679
        %v681 = vpop.f32.mrb[0].mxu0
        %682 = vmatprep.mubr.f32.mxu0 0.0
        %683 = vmatmul.mubr.f32.gmra.mrb[0].mxu0 %v243
        %v684 = vpop.f32.mrb[0].mxu0
        %v685 = vadd.f32 %v336, %v684
        %v686 = vpop.f32.mrb[0].mxu0
        %687 = vmatprep.mubr.f32.mxu0 0.0
        %688 = vmatmul.mubr.f32.gmra.mrb[0].mxu0 %v244
        %v689 = vpop.f32.mrb[0].mxu0
        %v690 = vadd.f32 %v336, %v689
        %v691 = vpop.f32.mrb[0].mxu0
        %692 = vmatprep.mubr.f32.mxu0 0.0
        %693 = vmatmul.mubr.f32.gmra.mrb[0].mxu0 %v245
        %v694 = vpop.f32.mrb[0].mxu0
        %v695 = vadd.f32 %v336, %v694
        %v696 = vpop.f32.mrb[0].mxu0
        %697 = vmatprep.mubr.f32.mxu0 0.0
        %698 = vmatmul.mubr.f32.gmra.mrb[0].mxu0 %v246
        %v699 = vpop.f32.mrb[0].mxu0
        %v700 = vadd.f32 %v336, %v699
        %v701 = vpop.f32.mrb[0].mxu0
        %702 = vmatprep.mubr.f32.mxu0 0.0
        %703 = vmatmul.mubr.f32.gmra.mrb[0].mxu0 %v247
        %v704 = vpop.f32.mrb[0].mxu0
        %v705 = vadd.f32 %v336, %v704
        %v706 = vpop.f32.mrb[0].mxu0
        %707 = vmatprep.mubr.f32.mxu0 0.0
        %708 = vmatmul.mubr.f32.gmra.mrb[0].mxu0 %v248
        %v709 = vpop.f32.mrb[0].mxu0
        %v710 = vadd.f32 %v336, %v709
        %v711 = vpop.f32.mrb[0].mxu0
        %712 = vmatprep.mubr.f32.mxu0 0.0
        %713 = vmatmul.mubr.f32.gmra.mrb[0].mxu0 %v249
        %v714 = vpop.f32.mrb[0].mxu0
        %v715 = vadd.f32 %v336, %v714
        %v716 = vpop.f32.mrb[0].mxu0
        %717 = vmatprep.mubr.f32.mxu0 0.0
        %718 = vmatmul.mubr.f32.gmra.mrb[0].mxu0 %v250
        %v719 = vpop.f32.mrb[0].mxu0
        %v720 = vadd.f32 %v336, %v719
        %v721 = vpop.f32.mrb[0].mxu0
        %722 = vmatprep.mubr.f32.mxu0 0.0
        %723 = vmatmul.mubr.f32.gmra.mrb[0].mxu0 %v251
        %v724 = vpop.f32.mrb[0].mxu0
        %v725 = vadd.f32 %v336, %v724
        %v726 = vpop.f32.mrb[0].mxu0
        %727 = vmatprep.mubr.f32.mxu0 0.0
        %728 = vmatmul.mubr.f32.gmra.mrb[0].mxu0 %v252
        %v729 = vpop.f32.mrb[0].mxu0
        %v730 = vadd.f32 %v336, %v729
        %v731 = vpop.f32.mrb[0].mxu0
        %732 = vmatprep.mubr.f32.mxu0 0.0
        %733 = vmatmul.mubr.f32.gmra.mrb[0].mxu0 %v253
        %v734 = vpop.f32.mrb[0].mxu0
        %v735 = vadd.f32 %v336, %v734
        %v736 = vpop.f32.mrb[0].mxu0
        %737 = vmatprep.mubr.f32.mxu0 0.0
        %738 = vmatmul.mubr.f32.gmra.mrb[0].mxu0 %v254
        %v739 = vpop.f32.mrb[0].mxu0
        %v740 = vadd.f32 %v336, %v739
        %v741 = vpop.f32.mrb[0].mxu0
        %742 = vmatprep.mubr.f32.mxu0 0.0
        %743 = vmatmul.mubr.f32.gmra.mrb[0].mxu0 %v255
        %v744 = vpop.f32.mrb[0].mxu0
        %v745 = vadd.f32 %v336, %v744
        %v746 = vpop.f32.mrb[0].mxu0
        %747 = vmatprep.mubr.f32.mxu0 0.0
        %748 = vmatmul.mubr.f32.gmra.mrb[0].mxu0 %v256
        %v749 = vpop.f32.mrb[0].mxu0
        %v750 = vadd.f32 %v336, %v749
        %v751 = vpop.f32.mrb[0].mxu0
        %752 = vmatprep.mubr.f32.mxu0 0.0
        %753 = vmatmul.mubr.f32.gmra.mrb[0].mxu0 %v257
        %v754 = vpop.f32.mrb[0].mxu0
        %v755 = vadd.f32 %v336, %v754
        %v756 = vpop.f32.mrb[0].mxu0
        %757 = vmatprep.mubr.f32.mxu0 0.0
        %758 = vmatmul.mubr.f32.gmra.mrb[0].mxu0 %v258
        %v759 = vpop.f32.mrb[0].mxu0
        %v760 = vadd.f32 %v336, %v759
        %v761 = vpop.f32.mrb[0].mxu0
        %762 = vmatprep.mubr.f32.mxu0 0.0
        %763 = vmatmul.mubr.f32.gmra.mrb[0].mxu0 %v259
        %v764 = vpop.f32.mrb[0].mxu0
        %v765 = vadd.f32 %v336, %v764
        %v766 = vpop.f32.mrb[0].mxu0
        %767 = vmatprep.mubr.f32.mxu0 0.0
        %768 = vmatmul.mubr.f32.gmra.mrb[0].mxu0 %v260
        %v769 = vpop.f32.mrb[0].mxu0
        %v770 = vadd.f32 %v336, %v769
        %v771 = vpop.f32.mrb[0].mxu0
        %772 = vmatprep.mubr.f32.mxu0 0.0
        %773 = vmatmul.mubr.f32.gmra.mrb[0].mxu0 %v261
        %v774 = vpop.f32.mrb[0].mxu0
        %v775 = vadd.f32 %v336, %v774
        %v776 = vpop.f32.mrb[0].mxu0
        %777 = vmatprep.mubr.f32.mxu0 0.0
        %778 = vmatmul.mubr.f32.gmra.mrb[0].mxu0 %v262
        %v779 = vpop.f32.mrb[0].mxu0
        %v780 = vadd.f32 %v336, %v779
        %v781 = vpop.f32.mrb[0].mxu0
        %782 = vmatprep.mubr.f32.mxu0 0.0
        %783 = vmatmul.mubr.f32.gmra.mrb[0].mxu0 %v263
        %v784 = vpop.f32.mrb[0].mxu0
        %v785 = vadd.f32 %v336, %v784
        %v786 = vpop.f32.mrb[0].mxu0
        %787 = vmatprep.mubr.f32.mxu0 0.0
        %788 = vmatmul.mubr.f32.gmra.mrb[0].mxu0 %v264
        %v789 = vpop.f32.mrb[0].mxu0
        %v790 = vadd.f32 %v336, %v789
        %v791 = vpop.f32.mrb[0].mxu0
        %792 = vmatprep.mubr.f32.mxu0 0.0
        %793 = vmatmul.mubr.f32.gmra.mrb[0].mxu0 %v265
        %v794 = vpop.f32.mrb[0].mxu0
        %v795 = vadd.f32 %v336, %v794
        %v796 = vpop.f32.mrb[0].mxu0
        %797 = vmatprep.mubr.f32.mxu0 0.0
        %798 = vmatmul.mubr.f32.gmra.mrb[0].mxu0 %v266
        %v799 = vpop.f32.mrb[0].mxu0
        %v800 = vadd.f32 %v336, %v799
        %v801 = vpop.f32.mrb[0].mxu0
        %802 = vmatprep.mubr.f32.mxu0 0.0
        %803 = vmatmul.mubr.f32.gmra.mrb[0].mxu0 %v267
        %v804 = vpop.f32.mrb[0].mxu0
        %v805 = vadd.f32 %v336, %v804
        %v806 = vpop.f32.mrb[0].mxu0
        %807 = vmatprep.mubr.f32.mxu0 0.0
        %808 = vmatmul.mubr.f32.gmra.mrb[0].mxu0 %v268
        %v809 = vpop.f32.mrb[0].mxu0
        %v810 = vadd.f32 %v336, %v809
        %v811 = vpop.f32.mrb[0].mxu0
        %812 = vmatprep.mubr.f32.mxu0 0.0
        %813 = vmatmul.mubr.f32.gmra.mrb[0].mxu0 %v269
        %v814 = vpop.f32.mrb[0].mxu0
        %v815 = vadd.f32 %v336, %v814
        %v816 = vpop.f32.mrb[0].mxu0
        %817 = vmatprep.mubr.f32.mxu0 0.0
        %818 = vmatmul.mubr.f32.gmra.mrb[0].mxu0 %v270
        %v819 = vpop.f32.mrb[0].mxu0
        %v820 = vadd.f32 %v336, %v819
        %v821 = vpop.f32.mrb[0].mxu0
        %822 = vmatprep.mubr.f32.mxu0 0.0
        %823 = vmatmul.mubr.f32.gmra.mrb[0].mxu0 %v271
        %v824 = vpop.f32.mrb[0].mxu0
        %v825 = vadd.f32 %v336, %v824
        %v826 = vpop.f32.mrb[0].mxu0
        %827 = vmatprep.mubr.f32.mxu0 0.0
        %828 = vmatmul.mubr.f32.gmra.mrb[0].mxu0 %v272
        %v829 = vpop.f32.mrb[0].mxu0
        %v830 = vadd.f32 %v336, %v829
        %v831 = vpop.f32.mrb[0].mxu0
        %832 = vmatprep.mubr.f32.mxu0 0.0
        %833 = vmatmul.mubr.f32.gmra.mrb[0].mxu0 %v273
        %v834 = vpop.f32.mrb[0].mxu0
        %v835 = vadd.f32 %v336, %v834
        %v836 = vpop.f32.mrb[0].mxu0
        %837 = vmatprep.mubr.f32.mxu0 0.0
        %838 = vmatmul.mubr.f32.gmra.mrb[0].mxu0 %v274
        %v839 = vpop.f32.mrb[0].mxu0
        %v840 = vadd.f32 %v336, %v839
        %v841 = vpop.f32.mrb[0].mxu0
        %842 = vmatprep.mubr.f32.mxu0 0.0
        %843 = vmatmul.mubr.f32.gmra.mrb[0].mxu0 %v275
        %v844 = vpop.f32.mrb[0].mxu0
        %v845 = vadd.f32 %v336, %v844
        %v846 = vpop.f32.mrb[0].mxu0
        %847 = vmatprep.mubr.f32.mxu0 0.0
        %848 = vmatmul.mubr.f32.gmra.mrb[0].mxu0 %v276
        %v849 = vpop.f32.mrb[0].mxu0
        %v850 = vadd.f32 %v336, %v849
        %v851 = vpop.f32.mrb[0].mxu0
        %852 = vmatprep.mubr.f32.mxu0 0.0
        %853 = vmatmul.mubr.f32.gmra.mrb[0].mxu0 %v277
        %v854 = vpop.f32.mrb[0].mxu0
        %v855 = vadd.f32 %v336, %v854
        %v856 = vpop.f32.mrb[0].mxu0
        %857 = vmatprep.mubr.f32.mxu0 0.0
        %858 = vmatmul.mubr.f32.gmra.mrb[0].mxu0 %v278
        %v859 = vpop.f32.mrb[0].mxu0
        %v860 = vadd.f32 %v336, %v859
        %v861 = vpop.f32.mrb[0].mxu0
        %862 = vmatprep.mubr.f32.mxu0 0.0
        %863 = vmatmul.mubr.f32.gmra.mrb[0].mxu0 %v279
        %v864 = vpop.f32.mrb[0].mxu0
        %v865 = vadd.f32 %v336, %v864
        %v866 = vpop.f32.mrb[0].mxu0
        %867 = vmatprep.mubr.f32.mxu0 0.0
        %868 = vmatmul.mubr.f32.gmra.mrb[0].mxu0 %v280
        %v869 = vpop.f32.mrb[0].mxu0
        %v870 = vadd.f32 %v336, %v869
        %v871 = vpop.f32.mrb[0].mxu0
        %872 = vmatprep.mubr.f32.mxu0 0.0
        %873 = vmatmul.mubr.f32.gmra.mrb[0].mxu0 %v281
        %v874 = vpop.f32.mrb[0].mxu0
        %v875 = vadd.f32 %v336, %v874
        %v876 = vpop.f32.mrb[0].mxu0
        %877 = vmatprep.mubr.f32.mxu0 0.0
        %878 = vmatmul.mubr.f32.gmra.mrb[0].mxu0 %v282
        %v879 = vpop.f32.mrb[0].mxu0
        %v880 = vadd.f32 %v336, %v879
        %v881 = vpop.f32.mrb[0].mxu0
        %882 = vmatprep.mubr.f32.mxu0 0.0
        %883 = vmatmul.mubr.f32.gmra.mrb[0].mxu0 %v283
        %v884 = vpop.f32.mrb[0].mxu0
        %v885 = vadd.f32 %v336, %v884
        %v886 = vpop.f32.mrb[0].mxu0
        %887 = vmatprep.mubr.f32.mxu0 0.0
        %888 = vmatmul.mubr.f32.gmra.mrb[0].mxu0 %v284
        %v889 = vpop.f32.mrb[0].mxu0
        %v890 = vadd.f32 %v336, %v889
        %v891 = vpop.f32.mrb[0].mxu0
        %892 = vmatprep.mubr.f32.mxu0 0.0
        %893 = vmatmul.mubr.f32.gmra.mrb[0].mxu0 %v285
        %v894 = vpop.f32.mrb[0].mxu0
        %v895 = vadd.f32 %v336, %v894
        %v896 = vpop.f32.mrb[0].mxu0
        %897 = vmatprep.mubr.f32.mxu0 0.0
        %898 = vmatmul.mubr.f32.gmra.mrb[0].mxu0 %v286
        %v899 = vpop.f32.mrb[0].mxu0
        %v900 = vadd.f32 %v336, %v899
        %v901 = vpop.f32.mrb[0].mxu0
        %902 = vmatprep.mubr.f32.mxu0 0.0
        %903 = vmatmul.mubr.f32.gmra.mrb[0].mxu0 %v287
        %v904 = vpop.f32.mrb[0].mxu0
        %v905 = vadd.f32 %v336, %v904
        %v906 = vpop.f32.mrb[0].mxu0
        %907 = vmatprep.mubr.f32.mxu0 0.0
        %908 = vmatmul.mubr.f32.gmra.mrb[0].mxu0 %v288
        %v909 = vpop.f32.mrb[0].mxu0
        %v910 = vadd.f32 %v336, %v909
        %v911 = vpop.f32.mrb[0].mxu0
        %912 = vmatprep.mubr.f32.mxu0 0.0
        %913 = vmatmul.mubr.f32.gmra.mrb[0].mxu0 %v289
        %v914 = vpop.f32.mrb[0].mxu0
        %v915 = vadd.f32 %v336, %v914
        %v916 = vpop.f32.mrb[0].mxu0
        %917 = vmatprep.mubr.f32.mxu0 0.0
        %918 = vmatmul.mubr.f32.gmra.mrb[0].mxu0 %v290
        %v919 = vpop.f32.mrb[0].mxu0
        %v920 = vadd.f32 %v336, %v919
        %v921 = vpop.f32.mrb[0].mxu0
        %922 = vmatprep.mubr.f32.mxu0 0.0
        %923 = vmatmul.mubr.f32.gmra.mrb[0].mxu0 %v291
        %v924 = vpop.f32.mrb[0].mxu0
        %v925 = vadd.f32 %v336, %v924
        %v926 = vpop.f32.mrb[0].mxu0
        %927 = vmatprep.mubr.f32.mxu0 0.0
        %928 = vmatmul.mubr.f32.gmra.mrb[0].mxu0 %v292
        %v929 = vpop.f32.mrb[0].mxu0
        %v930 = vadd.f32 %v336, %v929
        %v931 = vpop.f32.mrb[0].mxu0
        %932 = vmatprep.mubr.f32.mxu0 0.0
        %933 = vmatmul.mubr.f32.gmra.mrb[0].mxu0 %v293
        %v934 = vpop.f32.mrb[0].mxu0
        %v935 = vadd.f32 %v336, %v934
        %v936 = vpop.f32.mrb[0].mxu0
        %937 = vmatprep.mubr.f32.mxu0 0.0
        %938 = vmatmul.mubr.f32.gmra.mrb[0].mxu0 %v294
        %v939 = vpop.f32.mrb[0].mxu0
        %v940 = vadd.f32 %v336, %v939
        %v941 = vpop.f32.mrb[0].mxu0
        %942 = vmatprep.mubr.f32.mxu0 0.0
        %943 = vmatmul.mubr.f32.gmra.mrb[0].mxu0 %v295
        %v944 = vpop.f32.mrb[0].mxu0
        %v945 = vadd.f32 %v336, %v944
        %v946 = vpop.f32.mrb[0].mxu0
        %947 = vmatprep.mubr.f32.mxu0 0.0
        %948 = vmatmul.mubr.f32.gmra.mrb[0].mxu0 %v296
        %v949 = vpop.f32.mrb[0].mxu0
        %v950 = vadd.f32 %v336, %v949
        %v951 = vpop.f32.mrb[0].mxu0
        %952 = vmatprep.mubr.f32.mxu0 0.0
        %953 = vmatmul.mubr.f32.gmra.mrb[0].mxu0 %v297
        %v954 = vpop.f32.mrb[0].mxu0
        %v955 = vadd.f32 %v336, %v954
        %v956 = vpop.f32.mrb[0].mxu0
        %957 = vmatprep.mubr.f32.mxu0 0.0
        %958 = vmatmul.mubr.f32.gmra.mrb[0].mxu0 %v298
        %v959 = vpop.f32.mrb[0].mxu0
        %v960 = vadd.f32 %v336, %v959
        %v961 = vpop.f32.mrb[0].mxu0
        %962 = vmatprep.mubr.f32.mxu0 0.0
        %963 = vmatmul.mubr.f32.gmra.mrb[0].mxu0 %v299
        %v964 = vpop.f32.mrb[0].mxu0
        %v965 = vadd.f32 %v336, %v964
        %v966 = vpop.f32.mrb[0].mxu0
        %967 = vmatprep.mubr.f32.mxu0 0.0
        %968 = vmatmul.mubr.f32.gmra.mrb[0].mxu0 %v300
        %v969 = vpop.f32.mrb[0].mxu0
        %v970 = vadd.f32 %v336, %v969
        %v971 = vpop.f32.mrb[0].mxu0
        %972 = vmatprep.mubr.f32.mxu0 0.0
        %973 = vmatmul.mubr.f32.gmra.mrb[0].mxu0 %v301
        %v974 = vpop.f32.mrb[0].mxu0
        %v975 = vadd.f32 %v336, %v974
        %v976 = vpop.f32.mrb[0].mxu0
        %977 = vmatprep.mubr.f32.mxu0 0.0
        %978 = vmatmul.mubr.f32.gmra.mrb[0].mxu0 %v302
        %v979 = vpop.f32.mrb[0].mxu0
        %v980 = vadd.f32 %v336, %v979
        %v981 = vpop.f32.mrb[0].mxu0
        %982 = vmatprep.mubr.f32.mxu0 0.0
        %983 = vmatmul.mubr.f32.gmra.mrb[0].mxu0 %v303
        %v984 = vpop.f32.mrb[0].mxu0
        %v985 = vadd.f32 %v336, %v984
        %v986 = vpop.f32.mrb[0].mxu0
        %987 = vmatprep.mubr.f32.mxu0 0.0
        %988 = vmatmul.mubr.f32.gmra.mrb[0].mxu0 %v304
        %v989 = vpop.f32.mrb[0].mxu0
        %v990 = vadd.f32 %v336, %v989
        %v991 = vpop.f32.mrb[0].mxu0
        %992 = vmatprep.mubr.f32.mxu0 0.0
        %993 = vmatmul.mubr.f32.gmra.mrb[0].mxu0 %v305
        %v994 = vpop.f32.mrb[0].mxu0
        %v995 = vadd.f32 %v336, %v994
        %v996 = vpop.f32.mrb[0].mxu0
        %997 = vmatprep.mubr.f32.mxu0 0.0
        %998 = vmatmul.mubr.f32.gmra.mrb[0].mxu0 %v306
        %v999 = vpop.f32.mrb[0].mxu0
        %v1000 = vadd.f32 %v336, %v999
        %v1001 = vpop.f32.mrb[0].mxu0
        %1002 = vmatprep.mubr.f32.mxu0 0.0
        %1003 = vmatmul.mubr.f32.gmra.mrb[0].mxu0 %v307
        %v1004 = vpop.f32.mrb[0].mxu0
        %v1005 = vadd.f32 %v336, %v1004
        %v1006 = vpop.f32.mrb[0].mxu0
        %1007 = vmatprep.mubr.f32.mxu0 0.0
        %1008 = vmatmul.mubr.f32.gmra.mrb[0].mxu0 %v308
        %v1009 = vpop.f32.mrb[0].mxu0
        %v1010 = vadd.f32 %v336, %v1009
        %v1011 = vpop.f32.mrb[0].mxu0
        %1012 = vmatprep.mubr.f32.mxu0 0.0
        %1013 = vmatmul.mubr.f32.gmra.mrb[0].mxu0 %v309
        %v1014 = vpop.f32.mrb[0].mxu0
        %v1015 = vadd.f32 %v336, %v1014
        %v1016 = vpop.f32.mrb[0].mxu0
        %1017 = vmatprep.mubr.f32.mxu0 0.0
        %1018 = vmatmul.mubr.f32.gmra.mrb[0].mxu0 %v310
        %v1019 = vpop.f32.mrb[0].mxu0
        %v1020 = vadd.f32 %v336, %v1019
        %v1021 = vpop.f32.mrb[0].mxu0
        %1022 = vmatprep.mubr.f32.mxu0 0.0
        %1023 = vmatmul.mubr.f32.gmra.mrb[0].mxu0 %v311
        %v1024 = vpop.f32.mrb[0].mxu0
        %v1025 = vadd.f32 %v336, %v1024
        %v1026 = vpop.f32.mrb[0].mxu0
        %1027 = vmatprep.mubr.f32.mxu0 0.0
        %1028 = vmatmul.mubr.f32.gmra.mrb[0].mxu0 %v312
        %v1029 = vpop.f32.mrb[0].mxu0
        %v1030 = vadd.f32 %v336, %v1029
        %v1031 = vpop.f32.mrb[0].mxu0
        %1032 = vmatprep.mubr.f32.mxu0 0.0
        %1033 = vmatmul.mubr.f32.gmra.mrb[0].mxu0 %v313
        %v1034 = vpop.f32.mrb[0].mxu0
        %v1035 = vadd.f32 %v336, %v1034
        %v1036 = vpop.f32.mrb[0].mxu0
        %1037 = vmatprep.mubr.f32.mxu0 0.0
        %1038 = vmatmul.mubr.f32.gmra.mrb[0].mxu0 %v314
        %v1039 = vpop.f32.mrb[0].mxu0
        %v1040 = vadd.f32 %v336, %v1039
        %v1041 = vpop.f32.mrb[0].mxu0
        %1042 = vdwg.mxu0
        %v1043 = vmax.f32 %v405, 0.0
        %v1044 = vmax.f32 %v410, 0.0
        %v1045 = vmax.f32 %v415, 0.0
        %v1046 = vmax.f32 %v420, 0.0
        %v1047 = vmax.f32 %v425, 0.0
        %v1048 = vmax.f32 %v430, 0.0
        %v1049 = vmax.f32 %v435, 0.0
        %v1050 = vmax.f32 %v440, 0.0
        %v1051 = vmax.f32 %v445, 0.0
        %v1052 = vmax.f32 %v450, 0.0
        %v1053 = vmax.f32 %v455, 0.0
        %v1054 = vmax.f32 %v460, 0.0
        %v1055 = vmax.f32 %v465, 0.0
        %v1056 = vmax.f32 %v470, 0.0
        %v1057 = vmax.f32 %v475, 0.0
        %v1058 = vmax.f32 %v480, 0.0
        %v1059 = vmax.f32 %v485, 0.0
        %v1060 = vmax.f32 %v490, 0.0
        %v1061 = vmax.f32 %v495, 0.0
        %v1062 = vmax.f32 %v500, 0.0
        %v1063 = vmax.f32 %v505, 0.0
        %v1064 = vmax.f32 %v510, 0.0
        %v1065 = vmax.f32 %v515, 0.0
        %v1066 = vmax.f32 %v520, 0.0
        %v1067 = vmax.f32 %v525, 0.0
        %v1068 = vmax.f32 %v530, 0.0
        %v1069 = vmax.f32 %v535, 0.0
        %v1070 = vmax.f32 %v540, 0.0
        %v1071 = vmax.f32 %v545, 0.0
        %v1072 = vmax.f32 %v550, 0.0
        %v1073 = vmax.f32 %v555, 0.0
        %v1074 = vmax.f32 %v560, 0.0
        %v1075 = vmax.f32 %v565, 0.0
        %v1076 = vmax.f32 %v570, 0.0
        %v1077 = vmax.f32 %v575, 0.0
        %v1078 = vmax.f32 %v580, 0.0
        %v1079 = vmax.f32 %v585, 0.0
        %v1080 = vmax.f32 %v590, 0.0
        %v1081 = vmax.f32 %v595, 0.0
        %v1082 = vmax.f32 %v600, 0.0
        %v1083 = vmax.f32 %v605, 0.0
        %v1084 = vmax.f32 %v610, 0.0
        %v1085 = vmax.f32 %v615, 0.0
        %v1086 = vmax.f32 %v620, 0.0
        %v1087 = vmax.f32 %v625, 0.0
        %v1088 = vmax.f32 %v630, 0.0
        %v1089 = vmax.f32 %v635, 0.0
        %v1090 = vmax.f32 %v640, 0.0
        %v1091 = vmax.f32 %v645, 0.0
        %v1092 = vmax.f32 %v650, 0.0
        %v1093 = vmax.f32 %v655, 0.0
        %v1094 = vmax.f32 %v660, 0.0
        %v1095 = vmax.f32 %v665, 0.0
        %v1096 = vmax.f32 %v670, 0.0
        %v1097 = vmax.f32 %v675, 0.0
        %v1098 = vmax.f32 %v680, 0.0
        %v1099 = vmax.f32 %v685, 0.0
        %v1100 = vmax.f32 %v690, 0.0
        %v1101 = vmax.f32 %v695, 0.0
        %v1102 = vmax.f32 %v700, 0.0
        %v1103 = vmax.f32 %v705, 0.0
        %v1104 = vmax.f32 %v710, 0.0
        %v1105 = vmax.f32 %v715, 0.0
        %v1106 = vmax.f32 %v720, 0.0
        %v1107 = vmax.f32 %v725, 0.0
        %v1108 = vmax.f32 %v730, 0.0
        %v1109 = vmax.f32 %v735, 0.0
        %v1110 = vmax.f32 %v740, 0.0
        %v1111 = vmax.f32 %v745, 0.0
        %v1112 = vmax.f32 %v750, 0.0
        %v1113 = vmax.f32 %v755, 0.0
        %v1114 = vmax.f32 %v760, 0.0
        %v1115 = vmax.f32 %v765, 0.0
        %v1116 = vmax.f32 %v770, 0.0
        %v1117 = vmax.f32 %v775, 0.0
        %v1118 = vmax.f32 %v780, 0.0
        %v1119 = vmax.f32 %v785, 0.0
        %v1120 = vmax.f32 %v790, 0.0
        %v1121 = vmax.f32 %v795, 0.0
        %v1122 = vmax.f32 %v800, 0.0
        %v1123 = vmax.f32 %v805, 0.0
        %v1124 = vmax.f32 %v810, 0.0
        %v1125 = vmax.f32 %v815, 0.0
        %v1126 = vmax.f32 %v820, 0.0
        %v1127 = vmax.f32 %v825, 0.0
        %v1128 = vmax.f32 %v830, 0.0
        %v1129 = vmax.f32 %v835, 0.0
        %v1130 = vmax.f32 %v840, 0.0
        %v1131 = vmax.f32 %v845, 0.0
        %v1132 = vmax.f32 %v850, 0.0
        %v1133 = vmax.f32 %v855, 0.0
        %v1134 = vmax.f32 %v860, 0.0
        %v1135 = vmax.f32 %v865, 0.0
        %v1136 = vmax.f32 %v870, 0.0
        %v1137 = vmax.f32 %v875, 0.0
        %v1138 = vmax.f32 %v880, 0.0
        %v1139 = vmax.f32 %v885, 0.0
        %v1140 = vmax.f32 %v890, 0.0
        %v1141 = vmax.f32 %v895, 0.0
        %v1142 = vmax.f32 %v900, 0.0
        %v1143 = vmax.f32 %v905, 0.0
        %v1144 = vmax.f32 %v910, 0.0
        %v1145 = vmax.f32 %v915, 0.0
        %v1146 = vmax.f32 %v920, 0.0
        %v1147 = vmax.f32 %v925, 0.0
        %v1148 = vmax.f32 %v930, 0.0
        %v1149 = vmax.f32 %v935, 0.0
        %v1150 = vmax.f32 %v940, 0.0
        %v1151 = vmax.f32 %v945, 0.0
        %v1152 = vmax.f32 %v950, 0.0
        %v1153 = vmax.f32 %v955, 0.0
        %v1154 = vmax.f32 %v960, 0.0
        %v1155 = vmax.f32 %v965, 0.0
        %v1156 = vmax.f32 %v970, 0.0
        %v1157 = vmax.f32 %v975, 0.0
        %v1158 = vmax.f32 %v980, 0.0
        %v1159 = vmax.f32 %v985, 0.0
        %v1160 = vmax.f32 %v990, 0.0
        %v1161 = vmax.f32 %v995, 0.0
        %v1162 = vmax.f32 %v1000, 0.0
        %v1163 = vmax.f32 %v1005, 0.0
        %v1164 = vmax.f32 %v1010, 0.0
        %v1165 = vmax.f32 %v1015, 0.0
        %v1166 = vmax.f32 %v1020, 0.0
        %v1167 = vmax.f32 %v1025, 0.0
        %v1168 = vmax.f32 %v1030, 0.0
        %v1169 = vmax.f32 %v1035, 0.0
        %v1170 = vmax.f32 %v1040, 0.0
        %v1171 = vmax.f32 %v1043, %v1059
        %v1172 = vmax.f32 %v1044, %v1060
        %v1173 = vmax.f32 %v1045, %v1061
        %v1174 = vmax.f32 %v1046, %v1062
        %v1175 = vmax.f32 %v1047, %v1063
        %v1176 = vmax.f32 %v1048, %v1064
        %v1177 = vmax.f32 %v1049, %v1065
        %v1178 = vmax.f32 %v1050, %v1066
        %v1179 = vmax.f32 %v1051, %v1067
        %v1180 = vmax.f32 %v1052, %v1068
        %v1181 = vmax.f32 %v1053, %v1069
        %v1182 = vmax.f32 %v1054, %v1070
        %v1183 = vmax.f32 %v1055, %v1071
        %v1184 = vmax.f32 %v1056, %v1072
        %v1185 = vmax.f32 %v1057, %v1073
        %v1186 = vmax.f32 %v1058, %v1074
        %v1187 = vmax.f32 %v1075, %v1091
        %v1188 = vmax.f32 %v1076, %v1092
        %v1189 = vmax.f32 %v1077, %v1093
        %v1190 = vmax.f32 %v1078, %v1094
        %v1191 = vmax.f32 %v1079, %v1095
        %v1192 = vmax.f32 %v1080, %v1096
        %v1193 = vmax.f32 %v1081, %v1097
        %v1194 = vmax.f32 %v1082, %v1098
        %v1195 = vmax.f32 %v1083, %v1099
        %v1196 = vmax.f32 %v1084, %v1100
        %v1197 = vmax.f32 %v1085, %v1101
        %v1198 = vmax.f32 %v1086, %v1102
        %v1199 = vmax.f32 %v1087, %v1103
        %v1200 = vmax.f32 %v1088, %v1104
        %v1201 = vmax.f32 %v1089, %v1105
        %v1202 = vmax.f32 %v1090, %v1106
        %v1203 = vmax.f32 %v1107, %v1123
        %v1204 = vmax.f32 %v1108, %v1124
        %v1205 = vmax.f32 %v1109, %v1125
        %v1206 = vmax.f32 %v1110, %v1126
        %v1207 = vmax.f32 %v1111, %v1127
        %v1208 = vmax.f32 %v1112, %v1128
        %v1209 = vmax.f32 %v1113, %v1129
        %v1210 = vmax.f32 %v1114, %v1130
        %v1211 = vmax.f32 %v1115, %v1131
        %v1212 = vmax.f32 %v1116, %v1132
        %v1213 = vmax.f32 %v1117, %v1133
        %v1214 = vmax.f32 %v1118, %v1134
        %v1215 = vmax.f32 %v1119, %v1135
        %v1216 = vmax.f32 %v1120, %v1136
        %v1217 = vmax.f32 %v1121, %v1137
        %v1218 = vmax.f32 %v1122, %v1138
        %v1219 = vmax.f32 %v1139, %v1155
        %v1220 = vmax.f32 %v1140, %v1156
        %v1221 = vmax.f32 %v1141, %v1157
        %v1222 = vmax.f32 %v1142, %v1158
        %v1223 = vmax.f32 %v1143, %v1159
        %v1224 = vmax.f32 %v1144, %v1160
        %v1225 = vmax.f32 %v1145, %v1161
        %v1226 = vmax.f32 %v1146, %v1162
        %v1227 = vmax.f32 %v1147, %v1163
        %v1228 = vmax.f32 %v1148, %v1164
        %v1229 = vmax.f32 %v1149, %v1165
        %v1230 = vmax.f32 %v1150, %v1166
        %v1231 = vmax.f32 %v1151, %v1167
        %v1232 = vmax.f32 %v1152, %v1168
        %v1233 = vmax.f32 %v1153, %v1169
        %v1234 = vmax.f32 %v1154, %v1170
        %v1299 = vcombine.high %v1171, %v1171
        %v1301 = vunpack.c.l.s4 1983009808
        %v1302 = vunpack.c.0.s8 %v1301
        %v1303 = vlaneseq
        %v1304 = vshrl.u32 %v1303, 7
        %v1305 = vsub.s32 %v1302, %v1304
        %v1306 = vrot.slane %v1171, %v1305
        %v1308 = vunpack.c.l.s4 1983009808
        %v1309 = vunpack.c.0.s8 %v1308
        %v1310 = vlaneseq
        %v1311 = vshrl.u32 %v1310, 7
        %v1312 = vsub.s32 %v1309, %v1311
        %v1313 = vrot.slane %v1299, %v1312
        %v1314 = vcombine.high %v1306, %v1306
        %v1315 = vcombine.high %v1313, %v1313
        %v1316 = vcombine.high %v1172, %v1172
        %v1318 = vunpack.c.l.s4 1983009808
        %v1319 = vunpack.c.0.s8 %v1318
        %v1320 = vlaneseq
        %v1321 = vshrl.u32 %v1320, 7
        %v1322 = vsub.s32 %v1319, %v1321
        %v1323 = vrot.slane %v1172, %v1322
        %v1325 = vunpack.c.l.s4 1983009808
        %v1326 = vunpack.c.0.s8 %v1325
        %v1327 = vlaneseq
        %v1328 = vshrl.u32 %v1327, 7
        %v1329 = vsub.s32 %v1326, %v1328
        %v1330 = vrot.slane %v1316, %v1329
        %v1331 = vcombine.high %v1323, %v1323
        %v1332 = vcombine.high %v1330, %v1330
        %v1333 = vcombine.high %v1173, %v1173
        %v1335 = vunpack.c.l.s4 1983009808
        %v1336 = vunpack.c.0.s8 %v1335
        %v1337 = vlaneseq
        %v1338 = vshrl.u32 %v1337, 7
        %v1339 = vsub.s32 %v1336, %v1338
        %v1340 = vrot.slane %v1173, %v1339
        %v1342 = vunpack.c.l.s4 1983009808
        %v1343 = vunpack.c.0.s8 %v1342
        %v1344 = vlaneseq
        %v1345 = vshrl.u32 %v1344, 7
        %v1346 = vsub.s32 %v1343, %v1345
        %v1347 = vrot.slane %v1333, %v1346
        %v1348 = vcombine.high %v1340, %v1340
        %v1349 = vcombine.high %v1347, %v1347
        %v1350 = vcombine.high %v1174, %v1174
        %v1352 = vunpack.c.l.s4 1983009808
        %v1353 = vunpack.c.0.s8 %v1352
        %v1354 = vlaneseq
        %v1355 = vshrl.u32 %v1354, 7
        %v1356 = vsub.s32 %v1353, %v1355
        %v1357 = vrot.slane %v1174, %v1356
        %v1359 = vunpack.c.l.s4 1983009808
        %v1360 = vunpack.c.0.s8 %v1359
        %v1361 = vlaneseq
        %v1362 = vshrl.u32 %v1361, 7
        %v1363 = vsub.s32 %v1360, %v1362
        %v1364 = vrot.slane %v1350, %v1363
        %v1365 = vcombine.high %v1357, %v1357
        %v1366 = vcombine.high %v1364, %v1364
        %v1367 = vcombine.high %v1175, %v1175
        %v1369 = vunpack.c.l.s4 1983009808
        %v1370 = vunpack.c.0.s8 %v1369
        %v1371 = vlaneseq
        %v1372 = vshrl.u32 %v1371, 7
        %v1373 = vsub.s32 %v1370, %v1372
        %v1374 = vrot.slane %v1175, %v1373
        %v1376 = vunpack.c.l.s4 1983009808
        %v1377 = vunpack.c.0.s8 %v1376
        %v1378 = vlaneseq
        %v1379 = vshrl.u32 %v1378, 7
        %v1380 = vsub.s32 %v1377, %v1379
        %v1381 = vrot.slane %v1367, %v1380
        %v1382 = vcombine.high %v1374, %v1374
        %v1383 = vcombine.high %v1381, %v1381
        %v1384 = vcombine.high %v1176, %v1176
        %v1386 = vunpack.c.l.s4 1983009808
        %v1387 = vunpack.c.0.s8 %v1386
        %v1388 = vlaneseq
        %v1389 = vshrl.u32 %v1388, 7
        %v1390 = vsub.s32 %v1387, %v1389
        %v1391 = vrot.slane %v1176, %v1390
        %v1393 = vunpack.c.l.s4 1983009808
        %v1394 = vunpack.c.0.s8 %v1393
        %v1395 = vlaneseq
        %v1396 = vshrl.u32 %v1395, 7
        %v1397 = vsub.s32 %v1394, %v1396
        %v1398 = vrot.slane %v1384, %v1397
        %v1399 = vcombine.high %v1391, %v1391
        %v1400 = vcombine.high %v1398, %v1398
        %v1401 = vcombine.high %v1177, %v1177
        %v1403 = vunpack.c.l.s4 1983009808
        %v1404 = vunpack.c.0.s8 %v1403
        %v1405 = vlaneseq
        %v1406 = vshrl.u32 %v1405, 7
        %v1407 = vsub.s32 %v1404, %v1406
        %v1408 = vrot.slane %v1177, %v1407
        %v1410 = vunpack.c.l.s4 1983009808
        %v1411 = vunpack.c.0.s8 %v1410
        %v1412 = vlaneseq
        %v1413 = vshrl.u32 %v1412, 7
        %v1414 = vsub.s32 %v1411, %v1413
        %v1415 = vrot.slane %v1401, %v1414
        %v1416 = vcombine.high %v1408, %v1408
        %v1417 = vcombine.high %v1415, %v1415
        %v1418 = vcombine.high %v1178, %v1178
        %v1420 = vunpack.c.l.s4 1983009808
        %v1421 = vunpack.c.0.s8 %v1420
        %v1422 = vlaneseq
        %v1423 = vshrl.u32 %v1422, 7
        %v1424 = vsub.s32 %v1421, %v1423
        %v1425 = vrot.slane %v1178, %v1424
        %v1427 = vunpack.c.l.s4 1983009808
        %v1428 = vunpack.c.0.s8 %v1427
        %v1429 = vlaneseq
        %v1430 = vshrl.u32 %v1429, 7
        %v1431 = vsub.s32 %v1428, %v1430
        %v1432 = vrot.slane %v1418, %v1431
        %v1433 = vcombine.high %v1425, %v1425
        %v1434 = vcombine.high %v1432, %v1432
        %v1435 = vcombine.high %v1179, %v1179
        %v1437 = vunpack.c.l.s4 1983009808
        %v1438 = vunpack.c.0.s8 %v1437
        %v1439 = vlaneseq
        %v1440 = vshrl.u32 %v1439, 7
        %v1441 = vsub.s32 %v1438, %v1440
        %v1442 = vrot.slane %v1179, %v1441
        %v1444 = vunpack.c.l.s4 1983009808
        %v1445 = vunpack.c.0.s8 %v1444
        %v1446 = vlaneseq
        %v1447 = vshrl.u32 %v1446, 7
        %v1448 = vsub.s32 %v1445, %v1447
        %v1449 = vrot.slane %v1435, %v1448
        %v1450 = vcombine.high %v1442, %v1442
        %v1451 = vcombine.high %v1449, %v1449
        %v1452 = vcombine.high %v1180, %v1180
        %v1454 = vunpack.c.l.s4 1983009808
        %v1455 = vunpack.c.0.s8 %v1454
        %v1456 = vlaneseq
        %v1457 = vshrl.u32 %v1456, 7
        %v1458 = vsub.s32 %v1455, %v1457
        %v1459 = vrot.slane %v1180, %v1458
        %v1461 = vunpack.c.l.s4 1983009808
        %v1462 = vunpack.c.0.s8 %v1461
        %v1463 = vlaneseq
        %v1464 = vshrl.u32 %v1463, 7
        %v1465 = vsub.s32 %v1462, %v1464
        %v1466 = vrot.slane %v1452, %v1465
        %v1467 = vcombine.high %v1459, %v1459
        %v1468 = vcombine.high %v1466, %v1466
        %v1469 = vcombine.high %v1181, %v1181
        %v1471 = vunpack.c.l.s4 1983009808
        %v1472 = vunpack.c.0.s8 %v1471
        %v1473 = vlaneseq
        %v1474 = vshrl.u32 %v1473, 7
        %v1475 = vsub.s32 %v1472, %v1474
        %v1476 = vrot.slane %v1181, %v1475
        %v1478 = vunpack.c.l.s4 1983009808
        %v1479 = vunpack.c.0.s8 %v1478
        %v1480 = vlaneseq
        %v1481 = vshrl.u32 %v1480, 7
        %v1482 = vsub.s32 %v1479, %v1481
        %v1483 = vrot.slane %v1469, %v1482
        %v1484 = vcombine.high %v1476, %v1476
        %v1485 = vcombine.high %v1483, %v1483
        %v1486 = vcombine.high %v1182, %v1182
        %v1488 = vunpack.c.l.s4 1983009808
        %v1489 = vunpack.c.0.s8 %v1488
        %v1490 = vlaneseq
        %v1491 = vshrl.u32 %v1490, 7
        %v1492 = vsub.s32 %v1489, %v1491
        %v1493 = vrot.slane %v1182, %v1492
        %v1495 = vunpack.c.l.s4 1983009808
        %v1496 = vunpack.c.0.s8 %v1495
        %v1497 = vlaneseq
        %v1498 = vshrl.u32 %v1497, 7
        %v1499 = vsub.s32 %v1496, %v1498
        %v1500 = vrot.slane %v1486, %v1499
        %v1501 = vcombine.high %v1493, %v1493
        %v1502 = vcombine.high %v1500, %v1500
        %v1503 = vcombine.high %v1183, %v1183
        %v1505 = vunpack.c.l.s4 1983009808
        %v1506 = vunpack.c.0.s8 %v1505
        %v1507 = vlaneseq
        %v1508 = vshrl.u32 %v1507, 7
        %v1509 = vsub.s32 %v1506, %v1508
        %v1510 = vrot.slane %v1183, %v1509
        %v1512 = vunpack.c.l.s4 1983009808
        %v1513 = vunpack.c.0.s8 %v1512
        %v1514 = vlaneseq
        %v1515 = vshrl.u32 %v1514, 7
        %v1516 = vsub.s32 %v1513, %v1515
        %v1517 = vrot.slane %v1503, %v1516
        %v1518 = vcombine.high %v1510, %v1510
        %v1519 = vcombine.high %v1517, %v1517
        %v1520 = vcombine.high %v1184, %v1184
        %v1522 = vunpack.c.l.s4 1983009808
        %v1523 = vunpack.c.0.s8 %v1522
        %v1524 = vlaneseq
        %v1525 = vshrl.u32 %v1524, 7
        %v1526 = vsub.s32 %v1523, %v1525
        %v1527 = vrot.slane %v1184, %v1526
        %v1529 = vunpack.c.l.s4 1983009808
        %v1530 = vunpack.c.0.s8 %v1529
        %v1531 = vlaneseq
        %v1532 = vshrl.u32 %v1531, 7
        %v1533 = vsub.s32 %v1530, %v1532
        %v1534 = vrot.slane %v1520, %v1533
        %v1535 = vcombine.high %v1527, %v1527
        %v1536 = vcombine.high %v1534, %v1534
        %v1537 = vcombine.high %v1185, %v1185
        %v1539 = vunpack.c.l.s4 1983009808
        %v1540 = vunpack.c.0.s8 %v1539
        %v1541 = vlaneseq
        %v1542 = vshrl.u32 %v1541, 7
        %v1543 = vsub.s32 %v1540, %v1542
        %v1544 = vrot.slane %v1185, %v1543
        %v1546 = vunpack.c.l.s4 1983009808
        %v1547 = vunpack.c.0.s8 %v1546
        %v1548 = vlaneseq
        %v1549 = vshrl.u32 %v1548, 7
        %v1550 = vsub.s32 %v1547, %v1549
        %v1551 = vrot.slane %v1537, %v1550
        %v1552 = vcombine.high %v1544, %v1544
        %v1553 = vcombine.high %v1551, %v1551
        %v1554 = vcombine.high %v1186, %v1186
        %v1556 = vunpack.c.l.s4 1983009808
        %v1557 = vunpack.c.0.s8 %v1556
        %v1558 = vlaneseq
        %v1559 = vshrl.u32 %v1558, 7
        %v1560 = vsub.s32 %v1557, %v1559
        %v1561 = vrot.slane %v1186, %v1560
        %v1563 = vunpack.c.l.s4 1983009808
        %v1564 = vunpack.c.0.s8 %v1563
        %v1565 = vlaneseq
        %v1566 = vshrl.u32 %v1565, 7
        %v1567 = vsub.s32 %v1564, %v1566
        %v1568 = vrot.slane %v1554, %v1567
        %v1569 = vcombine.high %v1561, %v1561
        %v1570 = vcombine.high %v1568, %v1568
        %v1571 = vcombine.high %v1187, %v1187
        %v1573 = vunpack.c.l.s4 1983009808
        %v1574 = vunpack.c.0.s8 %v1573
        %v1575 = vlaneseq
        %v1576 = vshrl.u32 %v1575, 7
        %v1577 = vsub.s32 %v1574, %v1576
        %v1578 = vrot.slane %v1187, %v1577
        %v1580 = vunpack.c.l.s4 1983009808
        %v1581 = vunpack.c.0.s8 %v1580
        %v1582 = vlaneseq
        %v1583 = vshrl.u32 %v1582, 7
        %v1584 = vsub.s32 %v1581, %v1583
        %v1585 = vrot.slane %v1571, %v1584
        %v1586 = vcombine.high %v1578, %v1578
        %v1587 = vcombine.high %v1585, %v1585
        %v1588 = vcombine.high %v1188, %v1188
        %v1590 = vunpack.c.l.s4 1983009808
        %v1591 = vunpack.c.0.s8 %v1590
        %v1592 = vlaneseq
        %v1593 = vshrl.u32 %v1592, 7
        %v1594 = vsub.s32 %v1591, %v1593
        %v1595 = vrot.slane %v1188, %v1594
        %v1597 = vunpack.c.l.s4 1983009808
        %v1598 = vunpack.c.0.s8 %v1597
        %v1599 = vlaneseq
        %v1600 = vshrl.u32 %v1599, 7
        %v1601 = vsub.s32 %v1598, %v1600
        %v1602 = vrot.slane %v1588, %v1601
        %v1603 = vcombine.high %v1595, %v1595
        %v1604 = vcombine.high %v1602, %v1602
        %v1605 = vcombine.high %v1189, %v1189
        %v1607 = vunpack.c.l.s4 1983009808
        %v1608 = vunpack.c.0.s8 %v1607
        %v1609 = vlaneseq
        %v1610 = vshrl.u32 %v1609, 7
        %v1611 = vsub.s32 %v1608, %v1610
        %v1612 = vrot.slane %v1189, %v1611
        %v1614 = vunpack.c.l.s4 1983009808
        %v1615 = vunpack.c.0.s8 %v1614
        %v1616 = vlaneseq
        %v1617 = vshrl.u32 %v1616, 7
        %v1618 = vsub.s32 %v1615, %v1617
        %v1619 = vrot.slane %v1605, %v1618
        %v1620 = vcombine.high %v1612, %v1612
        %v1621 = vcombine.high %v1619, %v1619
        %v1622 = vcombine.high %v1190, %v1190
        %v1624 = vunpack.c.l.s4 1983009808
        %v1625 = vunpack.c.0.s8 %v1624
        %v1626 = vlaneseq
        %v1627 = vshrl.u32 %v1626, 7
        %v1628 = vsub.s32 %v1625, %v1627
        %v1629 = vrot.slane %v1190, %v1628
        %v1631 = vunpack.c.l.s4 1983009808
        %v1632 = vunpack.c.0.s8 %v1631
        %v1633 = vlaneseq
        %v1634 = vshrl.u32 %v1633, 7
        %v1635 = vsub.s32 %v1632, %v1634
        %v1636 = vrot.slane %v1622, %v1635
        %v1637 = vcombine.high %v1629, %v1629
        %v1638 = vcombine.high %v1636, %v1636
        %v1639 = vcombine.high %v1191, %v1191
        %v1641 = vunpack.c.l.s4 1983009808
        %v1642 = vunpack.c.0.s8 %v1641
        %v1643 = vlaneseq
        %v1644 = vshrl.u32 %v1643, 7
        %v1645 = vsub.s32 %v1642, %v1644
        %v1646 = vrot.slane %v1191, %v1645
        %v1648 = vunpack.c.l.s4 1983009808
        %v1649 = vunpack.c.0.s8 %v1648
        %v1650 = vlaneseq
        %v1651 = vshrl.u32 %v1650, 7
        %v1652 = vsub.s32 %v1649, %v1651
        %v1653 = vrot.slane %v1639, %v1652
        %v1654 = vcombine.high %v1646, %v1646
        %v1655 = vcombine.high %v1653, %v1653
        %v1656 = vcombine.high %v1192, %v1192
        %v1658 = vunpack.c.l.s4 1983009808
        %v1659 = vunpack.c.0.s8 %v1658
        %v1660 = vlaneseq
        %v1661 = vshrl.u32 %v1660, 7
        %v1662 = vsub.s32 %v1659, %v1661
        %v1663 = vrot.slane %v1192, %v1662
        %v1665 = vunpack.c.l.s4 1983009808
        %v1666 = vunpack.c.0.s8 %v1665
        %v1667 = vlaneseq
        %v1668 = vshrl.u32 %v1667, 7
        %v1669 = vsub.s32 %v1666, %v1668
        %v1670 = vrot.slane %v1656, %v1669
        %v1671 = vcombine.high %v1663, %v1663
        %v1672 = vcombine.high %v1670, %v1670
        %v1673 = vcombine.high %v1193, %v1193
        %v1675 = vunpack.c.l.s4 1983009808
        %v1676 = vunpack.c.0.s8 %v1675
        %v1677 = vlaneseq
        %v1678 = vshrl.u32 %v1677, 7
        %v1679 = vsub.s32 %v1676, %v1678
        %v1680 = vrot.slane %v1193, %v1679
        %v1682 = vunpack.c.l.s4 1983009808
        %v1683 = vunpack.c.0.s8 %v1682
        %v1684 = vlaneseq
        %v1685 = vshrl.u32 %v1684, 7
        %v1686 = vsub.s32 %v1683, %v1685
        %v1687 = vrot.slane %v1673, %v1686
        %v1688 = vcombine.high %v1680, %v1680
        %v1689 = vcombine.high %v1687, %v1687
        %v1690 = vcombine.high %v1194, %v1194
        %v1692 = vunpack.c.l.s4 1983009808
        %v1693 = vunpack.c.0.s8 %v1692
        %v1694 = vlaneseq
        %v1695 = vshrl.u32 %v1694, 7
        %v1696 = vsub.s32 %v1693, %v1695
        %v1697 = vrot.slane %v1194, %v1696
        %v1699 = vunpack.c.l.s4 1983009808
        %v1700 = vunpack.c.0.s8 %v1699
        %v1701 = vlaneseq
        %v1702 = vshrl.u32 %v1701, 7
        %v1703 = vsub.s32 %v1700, %v1702
        %v1704 = vrot.slane %v1690, %v1703
        %v1705 = vcombine.high %v1697, %v1697
        %v1706 = vcombine.high %v1704, %v1704
        %v1707 = vcombine.high %v1195, %v1195
        %v1709 = vunpack.c.l.s4 1983009808
        %v1710 = vunpack.c.0.s8 %v1709
        %v1711 = vlaneseq
        %v1712 = vshrl.u32 %v1711, 7
        %v1713 = vsub.s32 %v1710, %v1712
        %v1714 = vrot.slane %v1195, %v1713
        %v1716 = vunpack.c.l.s4 1983009808
        %v1717 = vunpack.c.0.s8 %v1716
        %v1718 = vlaneseq
        %v1719 = vshrl.u32 %v1718, 7
        %v1720 = vsub.s32 %v1717, %v1719
        %v1721 = vrot.slane %v1707, %v1720
        %v1722 = vcombine.high %v1714, %v1714
        %v1723 = vcombine.high %v1721, %v1721
        %v1724 = vcombine.high %v1196, %v1196
        %v1726 = vunpack.c.l.s4 1983009808
        %v1727 = vunpack.c.0.s8 %v1726
        %v1728 = vlaneseq
        %v1729 = vshrl.u32 %v1728, 7
        %v1730 = vsub.s32 %v1727, %v1729
        %v1731 = vrot.slane %v1196, %v1730
        %v1733 = vunpack.c.l.s4 1983009808
        %v1734 = vunpack.c.0.s8 %v1733
        %v1735 = vlaneseq
        %v1736 = vshrl.u32 %v1735, 7
        %v1737 = vsub.s32 %v1734, %v1736
        %v1738 = vrot.slane %v1724, %v1737
        %v1739 = vcombine.high %v1731, %v1731
        %v1740 = vcombine.high %v1738, %v1738
        %v1741 = vcombine.high %v1197, %v1197
        %v1743 = vunpack.c.l.s4 1983009808
        %v1744 = vunpack.c.0.s8 %v1743
        %v1745 = vlaneseq
        %v1746 = vshrl.u32 %v1745, 7
        %v1747 = vsub.s32 %v1744, %v1746
        %v1748 = vrot.slane %v1197, %v1747
        %v1750 = vunpack.c.l.s4 1983009808
        %v1751 = vunpack.c.0.s8 %v1750
        %v1752 = vlaneseq
        %v1753 = vshrl.u32 %v1752, 7
        %v1754 = vsub.s32 %v1751, %v1753
        %v1755 = vrot.slane %v1741, %v1754
        %v1756 = vcombine.high %v1748, %v1748
        %v1757 = vcombine.high %v1755, %v1755
        %v1758 = vcombine.high %v1198, %v1198
        %v1760 = vunpack.c.l.s4 1983009808
        %v1761 = vunpack.c.0.s8 %v1760
        %v1762 = vlaneseq
        %v1763 = vshrl.u32 %v1762, 7
        %v1764 = vsub.s32 %v1761, %v1763
        %v1765 = vrot.slane %v1198, %v1764
        %v1767 = vunpack.c.l.s4 1983009808
        %v1768 = vunpack.c.0.s8 %v1767
        %v1769 = vlaneseq
        %v1770 = vshrl.u32 %v1769, 7
        %v1771 = vsub.s32 %v1768, %v1770
        %v1772 = vrot.slane %v1758, %v1771
        %v1773 = vcombine.high %v1765, %v1765
        %v1774 = vcombine.high %v1772, %v1772
        %v1775 = vcombine.high %v1199, %v1199
        %v1777 = vunpack.c.l.s4 1983009808
        %v1778 = vunpack.c.0.s8 %v1777
        %v1779 = vlaneseq
        %v1780 = vshrl.u32 %v1779, 7
        %v1781 = vsub.s32 %v1778, %v1780
        %v1782 = vrot.slane %v1199, %v1781
        %v1784 = vunpack.c.l.s4 1983009808
        %v1785 = vunpack.c.0.s8 %v1784
        %v1786 = vlaneseq
        %v1787 = vshrl.u32 %v1786, 7
        %v1788 = vsub.s32 %v1785, %v1787
        %v1789 = vrot.slane %v1775, %v1788
        %v1790 = vcombine.high %v1782, %v1782
        %v1791 = vcombine.high %v1789, %v1789
        %v1792 = vcombine.high %v1200, %v1200
        %v1794 = vunpack.c.l.s4 1983009808
        %v1795 = vunpack.c.0.s8 %v1794
        %v1796 = vlaneseq
        %v1797 = vshrl.u32 %v1796, 7
        %v1798 = vsub.s32 %v1795, %v1797
        %v1799 = vrot.slane %v1200, %v1798
        %v1801 = vunpack.c.l.s4 1983009808
        %v1802 = vunpack.c.0.s8 %v1801
        %v1803 = vlaneseq
        %v1804 = vshrl.u32 %v1803, 7
        %v1805 = vsub.s32 %v1802, %v1804
        %v1806 = vrot.slane %v1792, %v1805
        %v1807 = vcombine.high %v1799, %v1799
        %v1808 = vcombine.high %v1806, %v1806
        %v1809 = vcombine.high %v1201, %v1201
        %v1811 = vunpack.c.l.s4 1983009808
        %v1812 = vunpack.c.0.s8 %v1811
        %v1813 = vlaneseq
        %v1814 = vshrl.u32 %v1813, 7
        %v1815 = vsub.s32 %v1812, %v1814
        %v1816 = vrot.slane %v1201, %v1815
        %v1818 = vunpack.c.l.s4 1983009808
        %v1819 = vunpack.c.0.s8 %v1818
        %v1820 = vlaneseq
        %v1821 = vshrl.u32 %v1820, 7
        %v1822 = vsub.s32 %v1819, %v1821
        %v1823 = vrot.slane %v1809, %v1822
        %v1824 = vcombine.high %v1816, %v1816
        %v1825 = vcombine.high %v1823, %v1823
        %v1826 = vcombine.high %v1202, %v1202
        %v1828 = vunpack.c.l.s4 1983009808
        %v1829 = vunpack.c.0.s8 %v1828
        %v1830 = vlaneseq
        %v1831 = vshrl.u32 %v1830, 7
        %v1832 = vsub.s32 %v1829, %v1831
        %v1833 = vrot.slane %v1202, %v1832
        %v1835 = vunpack.c.l.s4 1983009808
        %v1836 = vunpack.c.0.s8 %v1835
        %v1837 = vlaneseq
        %v1838 = vshrl.u32 %v1837, 7
        %v1839 = vsub.s32 %v1836, %v1838
        %v1840 = vrot.slane %v1826, %v1839
        %v1841 = vcombine.high %v1833, %v1833
        %v1842 = vcombine.high %v1840, %v1840
        %v1843 = vcombine.high %v1203, %v1203
        %v1845 = vunpack.c.l.s4 1983009808
        %v1846 = vunpack.c.0.s8 %v1845
        %v1847 = vlaneseq
        %v1848 = vshrl.u32 %v1847, 7
        %v1849 = vsub.s32 %v1846, %v1848
        %v1850 = vrot.slane %v1203, %v1849
        %v1852 = vunpack.c.l.s4 1983009808
        %v1853 = vunpack.c.0.s8 %v1852
        %v1854 = vlaneseq
        %v1855 = vshrl.u32 %v1854, 7
        %v1856 = vsub.s32 %v1853, %v1855
        %v1857 = vrot.slane %v1843, %v1856
        %v1858 = vcombine.high %v1850, %v1850
        %v1859 = vcombine.high %v1857, %v1857
        %v1860 = vcombine.high %v1204, %v1204
        %v1862 = vunpack.c.l.s4 1983009808
        %v1863 = vunpack.c.0.s8 %v1862
        %v1864 = vlaneseq
        %v1865 = vshrl.u32 %v1864, 7
        %v1866 = vsub.s32 %v1863, %v1865
        %v1867 = vrot.slane %v1204, %v1866
        %v1869 = vunpack.c.l.s4 1983009808
        %v1870 = vunpack.c.0.s8 %v1869
        %v1871 = vlaneseq
        %v1872 = vshrl.u32 %v1871, 7
        %v1873 = vsub.s32 %v1870, %v1872
        %v1874 = vrot.slane %v1860, %v1873
        %v1875 = vcombine.high %v1867, %v1867
        %v1876 = vcombine.high %v1874, %v1874
        %v1877 = vcombine.high %v1205, %v1205
        %v1879 = vunpack.c.l.s4 1983009808
        %v1880 = vunpack.c.0.s8 %v1879
        %v1881 = vlaneseq
        %v1882 = vshrl.u32 %v1881, 7
        %v1883 = vsub.s32 %v1880, %v1882
        %v1884 = vrot.slane %v1205, %v1883
        %v1886 = vunpack.c.l.s4 1983009808
        %v1887 = vunpack.c.0.s8 %v1886
        %v1888 = vlaneseq
        %v1889 = vshrl.u32 %v1888, 7
        %v1890 = vsub.s32 %v1887, %v1889
        %v1891 = vrot.slane %v1877, %v1890
        %v1892 = vcombine.high %v1884, %v1884
        %v1893 = vcombine.high %v1891, %v1891
        %v1894 = vcombine.high %v1206, %v1206
        %v1896 = vunpack.c.l.s4 1983009808
        %v1897 = vunpack.c.0.s8 %v1896
        %v1898 = vlaneseq
        %v1899 = vshrl.u32 %v1898, 7
        %v1900 = vsub.s32 %v1897, %v1899
        %v1901 = vrot.slane %v1206, %v1900
        %v1903 = vunpack.c.l.s4 1983009808
        %v1904 = vunpack.c.0.s8 %v1903
        %v1905 = vlaneseq
        %v1906 = vshrl.u32 %v1905, 7
        %v1907 = vsub.s32 %v1904, %v1906
        %v1908 = vrot.slane %v1894, %v1907
        %v1909 = vcombine.high %v1901, %v1901
        %v1910 = vcombine.high %v1908, %v1908
        %v1911 = vcombine.high %v1207, %v1207
        %v1913 = vunpack.c.l.s4 1983009808
        %v1914 = vunpack.c.0.s8 %v1913
        %v1915 = vlaneseq
        %v1916 = vshrl.u32 %v1915, 7
        %v1917 = vsub.s32 %v1914, %v1916
        %v1918 = vrot.slane %v1207, %v1917
        %v1920 = vunpack.c.l.s4 1983009808
        %v1921 = vunpack.c.0.s8 %v1920
        %v1922 = vlaneseq
        %v1923 = vshrl.u32 %v1922, 7
        %v1924 = vsub.s32 %v1921, %v1923
        %v1925 = vrot.slane %v1911, %v1924
        %v1926 = vcombine.high %v1918, %v1918
        %v1927 = vcombine.high %v1925, %v1925
        %v1928 = vcombine.high %v1208, %v1208
        %v1930 = vunpack.c.l.s4 1983009808
        %v1931 = vunpack.c.0.s8 %v1930
        %v1932 = vlaneseq
        %v1933 = vshrl.u32 %v1932, 7
        %v1934 = vsub.s32 %v1931, %v1933
        %v1935 = vrot.slane %v1208, %v1934
        %v1937 = vunpack.c.l.s4 1983009808
        %v1938 = vunpack.c.0.s8 %v1937
        %v1939 = vlaneseq
        %v1940 = vshrl.u32 %v1939, 7
        %v1941 = vsub.s32 %v1938, %v1940
        %v1942 = vrot.slane %v1928, %v1941
        %v1943 = vcombine.high %v1935, %v1935
        %v1944 = vcombine.high %v1942, %v1942
        %v1945 = vcombine.high %v1209, %v1209
        %v1947 = vunpack.c.l.s4 1983009808
        %v1948 = vunpack.c.0.s8 %v1947
        %v1949 = vlaneseq
        %v1950 = vshrl.u32 %v1949, 7
        %v1951 = vsub.s32 %v1948, %v1950
        %v1952 = vrot.slane %v1209, %v1951
        %v1954 = vunpack.c.l.s4 1983009808
        %v1955 = vunpack.c.0.s8 %v1954
        %v1956 = vlaneseq
        %v1957 = vshrl.u32 %v1956, 7
        %v1958 = vsub.s32 %v1955, %v1957
        %v1959 = vrot.slane %v1945, %v1958
        %v1960 = vcombine.high %v1952, %v1952
        %v1961 = vcombine.high %v1959, %v1959
        %v1962 = vcombine.high %v1210, %v1210
        %v1964 = vunpack.c.l.s4 1983009808
        %v1965 = vunpack.c.0.s8 %v1964
        %v1966 = vlaneseq
        %v1967 = vshrl.u32 %v1966, 7
        %v1968 = vsub.s32 %v1965, %v1967
        %v1969 = vrot.slane %v1210, %v1968
        %v1971 = vunpack.c.l.s4 1983009808
        %v1972 = vunpack.c.0.s8 %v1971
        %v1973 = vlaneseq
        %v1974 = vshrl.u32 %v1973, 7
        %v1975 = vsub.s32 %v1972, %v1974
        %v1976 = vrot.slane %v1962, %v1975
        %v1977 = vcombine.high %v1969, %v1969
        %v1978 = vcombine.high %v1976, %v1976
        %v1979 = vcombine.high %v1211, %v1211
        %v1981 = vunpack.c.l.s4 1983009808
        %v1982 = vunpack.c.0.s8 %v1981
        %v1983 = vlaneseq
        %v1984 = vshrl.u32 %v1983, 7
        %v1985 = vsub.s32 %v1982, %v1984
        %v1986 = vrot.slane %v1211, %v1985
        %v1988 = vunpack.c.l.s4 1983009808
        %v1989 = vunpack.c.0.s8 %v1988
        %v1990 = vlaneseq
        %v1991 = vshrl.u32 %v1990, 7
        %v1992 = vsub.s32 %v1989, %v1991
        %v1993 = vrot.slane %v1979, %v1992
        %v1994 = vcombine.high %v1986, %v1986
        %v1995 = vcombine.high %v1993, %v1993
        %v1996 = vcombine.high %v1212, %v1212
        %v1998 = vunpack.c.l.s4 1983009808
        %v1999 = vunpack.c.0.s8 %v1998
        %v2000 = vlaneseq
        %v2001 = vshrl.u32 %v2000, 7
        %v2002 = vsub.s32 %v1999, %v2001
        %v2003 = vrot.slane %v1212, %v2002
        %v2005 = vunpack.c.l.s4 1983009808
        %v2006 = vunpack.c.0.s8 %v2005
        %v2007 = vlaneseq
        %v2008 = vshrl.u32 %v2007, 7
        %v2009 = vsub.s32 %v2006, %v2008
        %v2010 = vrot.slane %v1996, %v2009
        %v2011 = vcombine.high %v2003, %v2003
        %v2012 = vcombine.high %v2010, %v2010
        %v2013 = vcombine.high %v1213, %v1213
        %v2015 = vunpack.c.l.s4 1983009808
        %v2016 = vunpack.c.0.s8 %v2015
        %v2017 = vlaneseq
        %v2018 = vshrl.u32 %v2017, 7
        %v2019 = vsub.s32 %v2016, %v2018
        %v2020 = vrot.slane %v1213, %v2019
        %v2022 = vunpack.c.l.s4 1983009808
        %v2023 = vunpack.c.0.s8 %v2022
        %v2024 = vlaneseq
        %v2025 = vshrl.u32 %v2024, 7
        %v2026 = vsub.s32 %v2023, %v2025
        %v2027 = vrot.slane %v2013, %v2026
        %v2028 = vcombine.high %v2020, %v2020
        %v2029 = vcombine.high %v2027, %v2027
        %v2030 = vcombine.high %v1214, %v1214
        %v2032 = vunpack.c.l.s4 1983009808
        %v2033 = vunpack.c.0.s8 %v2032
        %v2034 = vlaneseq
        %v2035 = vshrl.u32 %v2034, 7
        %v2036 = vsub.s32 %v2033, %v2035
        %v2037 = vrot.slane %v1214, %v2036
        %v2039 = vunpack.c.l.s4 1983009808
        %v2040 = vunpack.c.0.s8 %v2039
        %v2041 = vlaneseq
        %v2042 = vshrl.u32 %v2041, 7
        %v2043 = vsub.s32 %v2040, %v2042
        %v2044 = vrot.slane %v2030, %v2043
        %v2045 = vcombine.high %v2037, %v2037
        %v2046 = vcombine.high %v2044, %v2044
        %v2047 = vcombine.high %v1215, %v1215
        %v2049 = vunpack.c.l.s4 1983009808
        %v2050 = vunpack.c.0.s8 %v2049
        %v2051 = vlaneseq
        %v2052 = vshrl.u32 %v2051, 7
        %v2053 = vsub.s32 %v2050, %v2052
        %v2054 = vrot.slane %v1215, %v2053
        %v2056 = vunpack.c.l.s4 1983009808
        %v2057 = vunpack.c.0.s8 %v2056
        %v2058 = vlaneseq
        %v2059 = vshrl.u32 %v2058, 7
        %v2060 = vsub.s32 %v2057, %v2059
        %v2061 = vrot.slane %v2047, %v2060
        %v2062 = vcombine.high %v2054, %v2054
        %v2063 = vcombine.high %v2061, %v2061
        %v2064 = vcombine.high %v1216, %v1216
        %v2066 = vunpack.c.l.s4 1983009808
        %v2067 = vunpack.c.0.s8 %v2066
        %v2068 = vlaneseq
        %v2069 = vshrl.u32 %v2068, 7
        %v2070 = vsub.s32 %v2067, %v2069
        %v2071 = vrot.slane %v1216, %v2070
        %v2073 = vunpack.c.l.s4 1983009808
        %v2074 = vunpack.c.0.s8 %v2073
        %v2075 = vlaneseq
        %v2076 = vshrl.u32 %v2075, 7
        %v2077 = vsub.s32 %v2074, %v2076
        %v2078 = vrot.slane %v2064, %v2077
        %v2079 = vcombine.high %v2071, %v2071
        %v2080 = vcombine.high %v2078, %v2078
        %v2081 = vcombine.high %v1217, %v1217
        %v2083 = vunpack.c.l.s4 1983009808
        %v2084 = vunpack.c.0.s8 %v2083
        %v2085 = vlaneseq
        %v2086 = vshrl.u32 %v2085, 7
        %v2087 = vsub.s32 %v2084, %v2086
        %v2088 = vrot.slane %v1217, %v2087
        %v2090 = vunpack.c.l.s4 1983009808
        %v2091 = vunpack.c.0.s8 %v2090
        %v2092 = vlaneseq
        %v2093 = vshrl.u32 %v2092, 7
        %v2094 = vsub.s32 %v2091, %v2093
        %v2095 = vrot.slane %v2081, %v2094
        %v2096 = vcombine.high %v2088, %v2088
        %v2097 = vcombine.high %v2095, %v2095
        %v2098 = vcombine.high %v1218, %v1218
        %v2100 = vunpack.c.l.s4 1983009808
        %v2101 = vunpack.c.0.s8 %v2100
        %v2102 = vlaneseq
        %v2103 = vshrl.u32 %v2102, 7
        %v2104 = vsub.s32 %v2101, %v2103
        %v2105 = vrot.slane %v1218, %v2104
        %v2107 = vunpack.c.l.s4 1983009808
        %v2108 = vunpack.c.0.s8 %v2107
        %v2109 = vlaneseq
        %v2110 = vshrl.u32 %v2109, 7
        %v2111 = vsub.s32 %v2108, %v2110
        %v2112 = vrot.slane %v2098, %v2111
        %v2113 = vcombine.high %v2105, %v2105
        %v2114 = vcombine.high %v2112, %v2112
        %v2115 = vcombine.high %v1219, %v1219
        %v2117 = vunpack.c.l.s4 1983009808
        %v2118 = vunpack.c.0.s8 %v2117
        %v2119 = vlaneseq
        %v2120 = vshrl.u32 %v2119, 7
        %v2121 = vsub.s32 %v2118, %v2120
        %v2122 = vrot.slane %v1219, %v2121
        %v2124 = vunpack.c.l.s4 1983009808
        %v2125 = vunpack.c.0.s8 %v2124
        %v2126 = vlaneseq
        %v2127 = vshrl.u32 %v2126, 7
        %v2128 = vsub.s32 %v2125, %v2127
        %v2129 = vrot.slane %v2115, %v2128
        %v2130 = vcombine.high %v2122, %v2122
        %v2131 = vcombine.high %v2129, %v2129
        %v2132 = vcombine.high %v1220, %v1220
        %v2134 = vunpack.c.l.s4 1983009808
        %v2135 = vunpack.c.0.s8 %v2134
        %v2136 = vlaneseq
        %v2137 = vshrl.u32 %v2136, 7
        %v2138 = vsub.s32 %v2135, %v2137
        %v2139 = vrot.slane %v1220, %v2138
        %v2141 = vunpack.c.l.s4 1983009808
        %v2142 = vunpack.c.0.s8 %v2141
        %v2143 = vlaneseq
        %v2144 = vshrl.u32 %v2143, 7
        %v2145 = vsub.s32 %v2142, %v2144
        %v2146 = vrot.slane %v2132, %v2145
        %v2147 = vcombine.high %v2139, %v2139
        %v2148 = vcombine.high %v2146, %v2146
        %v2149 = vcombine.high %v1221, %v1221
        %v2151 = vunpack.c.l.s4 1983009808
        %v2152 = vunpack.c.0.s8 %v2151
        %v2153 = vlaneseq
        %v2154 = vshrl.u32 %v2153, 7
        %v2155 = vsub.s32 %v2152, %v2154
        %v2156 = vrot.slane %v1221, %v2155
        %v2158 = vunpack.c.l.s4 1983009808
        %v2159 = vunpack.c.0.s8 %v2158
        %v2160 = vlaneseq
        %v2161 = vshrl.u32 %v2160, 7
        %v2162 = vsub.s32 %v2159, %v2161
        %v2163 = vrot.slane %v2149, %v2162
        %v2164 = vcombine.high %v2156, %v2156
        %v2165 = vcombine.high %v2163, %v2163
        %v2166 = vcombine.high %v1222, %v1222
        %v2168 = vunpack.c.l.s4 1983009808
        %v2169 = vunpack.c.0.s8 %v2168
        %v2170 = vlaneseq
        %v2171 = vshrl.u32 %v2170, 7
        %v2172 = vsub.s32 %v2169, %v2171
        %v2173 = vrot.slane %v1222, %v2172
        %v2175 = vunpack.c.l.s4 1983009808
        %v2176 = vunpack.c.0.s8 %v2175
        %v2177 = vlaneseq
        %v2178 = vshrl.u32 %v2177, 7
        %v2179 = vsub.s32 %v2176, %v2178
        %v2180 = vrot.slane %v2166, %v2179
        %v2181 = vcombine.high %v2173, %v2173
        %v2182 = vcombine.high %v2180, %v2180
        %v2183 = vcombine.high %v1223, %v1223
        %v2185 = vunpack.c.l.s4 1983009808
        %v2186 = vunpack.c.0.s8 %v2185
        %v2187 = vlaneseq
        %v2188 = vshrl.u32 %v2187, 7
        %v2189 = vsub.s32 %v2186, %v2188
        %v2190 = vrot.slane %v1223, %v2189
        %v2192 = vunpack.c.l.s4 1983009808
        %v2193 = vunpack.c.0.s8 %v2192
        %v2194 = vlaneseq
        %v2195 = vshrl.u32 %v2194, 7
        %v2196 = vsub.s32 %v2193, %v2195
        %v2197 = vrot.slane %v2183, %v2196
        %v2198 = vcombine.high %v2190, %v2190
        %v2199 = vcombine.high %v2197, %v2197
        %v2200 = vcombine.high %v1224, %v1224
        %v2202 = vunpack.c.l.s4 1983009808
        %v2203 = vunpack.c.0.s8 %v2202
        %v2204 = vlaneseq
        %v2205 = vshrl.u32 %v2204, 7
        %v2206 = vsub.s32 %v2203, %v2205
        %v2207 = vrot.slane %v1224, %v2206
        %v2209 = vunpack.c.l.s4 1983009808
        %v2210 = vunpack.c.0.s8 %v2209
        %v2211 = vlaneseq
        %v2212 = vshrl.u32 %v2211, 7
        %v2213 = vsub.s32 %v2210, %v2212
        %v2214 = vrot.slane %v2200, %v2213
        %v2215 = vcombine.high %v2207, %v2207
        %v2216 = vcombine.high %v2214, %v2214
        %v2217 = vcombine.high %v1225, %v1225
        %v2219 = vunpack.c.l.s4 1983009808
        %v2220 = vunpack.c.0.s8 %v2219
        %v2221 = vlaneseq
        %v2222 = vshrl.u32 %v2221, 7
        %v2223 = vsub.s32 %v2220, %v2222
        %v2224 = vrot.slane %v1225, %v2223
        %v2226 = vunpack.c.l.s4 1983009808
        %v2227 = vunpack.c.0.s8 %v2226
        %v2228 = vlaneseq
        %v2229 = vshrl.u32 %v2228, 7
        %v2230 = vsub.s32 %v2227, %v2229
        %v2231 = vrot.slane %v2217, %v2230
        %v2232 = vcombine.high %v2224, %v2224
        %v2233 = vcombine.high %v2231, %v2231
        %v2234 = vcombine.high %v1226, %v1226
        %v2236 = vunpack.c.l.s4 1983009808
        %v2237 = vunpack.c.0.s8 %v2236
        %v2238 = vlaneseq
        %v2239 = vshrl.u32 %v2238, 7
        %v2240 = vsub.s32 %v2237, %v2239
        %v2241 = vrot.slane %v1226, %v2240
        %v2243 = vunpack.c.l.s4 1983009808
        %v2244 = vunpack.c.0.s8 %v2243
        %v2245 = vlaneseq
        %v2246 = vshrl.u32 %v2245, 7
        %v2247 = vsub.s32 %v2244, %v2246
        %v2248 = vrot.slane %v2234, %v2247
        %v2249 = vcombine.high %v2241, %v2241
        %v2250 = vcombine.high %v2248, %v2248
        %v2251 = vcombine.high %v1227, %v1227
        %v2253 = vunpack.c.l.s4 1983009808
        %v2254 = vunpack.c.0.s8 %v2253
        %v2255 = vlaneseq
        %v2256 = vshrl.u32 %v2255, 7
        %v2257 = vsub.s32 %v2254, %v2256
        %v2258 = vrot.slane %v1227, %v2257
        %v2260 = vunpack.c.l.s4 1983009808
        %v2261 = vunpack.c.0.s8 %v2260
        %v2262 = vlaneseq
        %v2263 = vshrl.u32 %v2262, 7
        %v2264 = vsub.s32 %v2261, %v2263
        %v2265 = vrot.slane %v2251, %v2264
        %v2266 = vcombine.high %v2258, %v2258
        %v2267 = vcombine.high %v2265, %v2265
        %v2268 = vcombine.high %v1228, %v1228
        %v2270 = vunpack.c.l.s4 1983009808
        %v2271 = vunpack.c.0.s8 %v2270
        %v2272 = vlaneseq
        %v2273 = vshrl.u32 %v2272, 7
        %v2274 = vsub.s32 %v2271, %v2273
        %v2275 = vrot.slane %v1228, %v2274
        %v2277 = vunpack.c.l.s4 1983009808
        %v2278 = vunpack.c.0.s8 %v2277
        %v2279 = vlaneseq
        %v2280 = vshrl.u32 %v2279, 7
        %v2281 = vsub.s32 %v2278, %v2280
        %v2282 = vrot.slane %v2268, %v2281
        %v2283 = vcombine.high %v2275, %v2275
        %v2284 = vcombine.high %v2282, %v2282
        %v2285 = vcombine.high %v1229, %v1229
        %v2287 = vunpack.c.l.s4 1983009808
        %v2288 = vunpack.c.0.s8 %v2287
        %v2289 = vlaneseq
        %v2290 = vshrl.u32 %v2289, 7
        %v2291 = vsub.s32 %v2288, %v2290
        %v2292 = vrot.slane %v1229, %v2291
        %v2294 = vunpack.c.l.s4 1983009808
        %v2295 = vunpack.c.0.s8 %v2294
        %v2296 = vlaneseq
        %v2297 = vshrl.u32 %v2296, 7
        %v2298 = vsub.s32 %v2295, %v2297
        %v2299 = vrot.slane %v2285, %v2298
        %v2300 = vcombine.high %v2292, %v2292
        %v2301 = vcombine.high %v2299, %v2299
        %v2302 = vcombine.high %v1230, %v1230
        %v2304 = vunpack.c.l.s4 1983009808
        %v2305 = vunpack.c.0.s8 %v2304
        %v2306 = vlaneseq
        %v2307 = vshrl.u32 %v2306, 7
        %v2308 = vsub.s32 %v2305, %v2307
        %v2309 = vrot.slane %v1230, %v2308
        %v2311 = vunpack.c.l.s4 1983009808
        %v2312 = vunpack.c.0.s8 %v2311
        %v2313 = vlaneseq
        %v2314 = vshrl.u32 %v2313, 7
        %v2315 = vsub.s32 %v2312, %v2314
        %v2316 = vrot.slane %v2302, %v2315
        %v2317 = vcombine.high %v2309, %v2309
        %v2318 = vcombine.high %v2316, %v2316
        %v2319 = vcombine.high %v1231, %v1231
        %v2321 = vunpack.c.l.s4 1983009808
        %v2322 = vunpack.c.0.s8 %v2321
        %v2323 = vlaneseq
        %v2324 = vshrl.u32 %v2323, 7
        %v2325 = vsub.s32 %v2322, %v2324
        %v2326 = vrot.slane %v1231, %v2325
        %v2328 = vunpack.c.l.s4 1983009808
        %v2329 = vunpack.c.0.s8 %v2328
        %v2330 = vlaneseq
        %v2331 = vshrl.u32 %v2330, 7
        %v2332 = vsub.s32 %v2329, %v2331
        %v2333 = vrot.slane %v2319, %v2332
        %v2334 = vcombine.high %v2326, %v2326
        %v2335 = vcombine.high %v2333, %v2333
        %v2336 = vcombine.high %v1232, %v1232
        %v2338 = vunpack.c.l.s4 1983009808
        %v2339 = vunpack.c.0.s8 %v2338
        %v2340 = vlaneseq
        %v2341 = vshrl.u32 %v2340, 7
        %v2342 = vsub.s32 %v2339, %v2341
        %v2343 = vrot.slane %v1232, %v2342
        %v2345 = vunpack.c.l.s4 1983009808
        %v2346 = vunpack.c.0.s8 %v2345
        %v2347 = vlaneseq
        %v2348 = vshrl.u32 %v2347, 7
        %v2349 = vsub.s32 %v2346, %v2348
        %v2350 = vrot.slane %v2336, %v2349
        %v2351 = vcombine.high %v2343, %v2343
        %v2352 = vcombine.high %v2350, %v2350
        %v2353 = vcombine.high %v1233, %v1233
        %v2355 = vunpack.c.l.s4 1983009808
        %v2356 = vunpack.c.0.s8 %v2355
        %v2357 = vlaneseq
        %v2358 = vshrl.u32 %v2357, 7
        %v2359 = vsub.s32 %v2356, %v2358
        %v2360 = vrot.slane %v1233, %v2359
        %v2362 = vunpack.c.l.s4 1983009808
        %v2363 = vunpack.c.0.s8 %v2362
        %v2364 = vlaneseq
        %v2365 = vshrl.u32 %v2364, 7
        %v2366 = vsub.s32 %v2363, %v2365
        %v2367 = vrot.slane %v2353, %v2366
        %v2368 = vcombine.high %v2360, %v2360
        %v2369 = vcombine.high %v2367, %v2367
        %v2370 = vcombine.high %v1234, %v1234
        %v2372 = vunpack.c.l.s4 1983009808
        %v2373 = vunpack.c.0.s8 %v2372
        %v2374 = vlaneseq
        %v2375 = vshrl.u32 %v2374, 7
        %v2376 = vsub.s32 %v2373, %v2375
        %v2377 = vrot.slane %v1234, %v2376
        %v2379 = vunpack.c.l.s4 1983009808
        %v2380 = vunpack.c.0.s8 %v2379
        %v2381 = vlaneseq
        %v2382 = vshrl.u32 %v2381, 7
        %v2383 = vsub.s32 %v2380, %v2382
        %v2384 = vrot.slane %v2370, %v2383
        %v2385 = vcombine.high %v2377, %v2377
        %v2386 = vcombine.high %v2384, %v2384
        %v2643 = vrot.slane %v1306, 7
        %v2644 = vrot.slane %v2643, 2
        %v2645 = vrot.slane %v1314, 7
        %v2646 = vrot.slane %v2645, 2
        %v2647 = vrot.slane %v1313, 7
        %v2648 = vrot.slane %v2647, 2
        %v2649 = vrot.slane %v1315, 7
        %v2650 = vrot.slane %v2649, 2
        %v2651 = vrot.slane %v1323, 7
        %v2652 = vrot.slane %v2651, 2
        %v2653 = vrot.slane %v1331, 7
        %v2654 = vrot.slane %v2653, 2
        %v2655 = vrot.slane %v1330, 7
        %v2656 = vrot.slane %v2655, 2
        %v2657 = vrot.slane %v1332, 7
        %v2658 = vrot.slane %v2657, 2
        %v2659 = vrot.slane %v1340, 7
        %v2660 = vrot.slane %v2659, 2
        %v2661 = vrot.slane %v1348, 7
        %v2662 = vrot.slane %v2661, 2
        %v2663 = vrot.slane %v1347, 7
        %v2664 = vrot.slane %v2663, 2
        %v2665 = vrot.slane %v1349, 7
        %v2666 = vrot.slane %v2665, 2
        %v2667 = vrot.slane %v1357, 7
        %v2668 = vrot.slane %v2667, 2
        %v2669 = vrot.slane %v1365, 7
        %v2670 = vrot.slane %v2669, 2
        %v2671 = vrot.slane %v1364, 7
        %v2672 = vrot.slane %v2671, 2
        %v2673 = vrot.slane %v1366, 7
        %v2674 = vrot.slane %v2673, 2
        %v2675 = vrot.slane %v1374, 7
        %v2676 = vrot.slane %v2675, 2
        %v2677 = vrot.slane %v1382, 7
        %v2678 = vrot.slane %v2677, 2
        %v2679 = vrot.slane %v1381, 7
        %v2680 = vrot.slane %v2679, 2
        %v2681 = vrot.slane %v1383, 7
        %v2682 = vrot.slane %v2681, 2
        %v2683 = vrot.slane %v1391, 7
        %v2684 = vrot.slane %v2683, 2
        %v2685 = vrot.slane %v1399, 7
        %v2686 = vrot.slane %v2685, 2
        %v2687 = vrot.slane %v1398, 7
        %v2688 = vrot.slane %v2687, 2
        %v2689 = vrot.slane %v1400, 7
        %v2690 = vrot.slane %v2689, 2
        %v2691 = vrot.slane %v1408, 7
        %v2692 = vrot.slane %v2691, 2
        %v2693 = vrot.slane %v1416, 7
        %v2694 = vrot.slane %v2693, 2
        %v2695 = vrot.slane %v1415, 7
        %v2696 = vrot.slane %v2695, 2
        %v2697 = vrot.slane %v1417, 7
        %v2698 = vrot.slane %v2697, 2
        %v2699 = vrot.slane %v1425, 7
        %v2700 = vrot.slane %v2699, 2
        %v2701 = vrot.slane %v1433, 7
        %v2702 = vrot.slane %v2701, 2
        %v2703 = vrot.slane %v1432, 7
        %v2704 = vrot.slane %v2703, 2
        %v2705 = vrot.slane %v1434, 7
        %v2706 = vrot.slane %v2705, 2
        %v2707 = vrot.slane %v1442, 7
        %v2708 = vrot.slane %v2707, 2
        %v2709 = vrot.slane %v1450, 7
        %v2710 = vrot.slane %v2709, 2
        %v2711 = vrot.slane %v1449, 7
        %v2712 = vrot.slane %v2711, 2
        %v2713 = vrot.slane %v1451, 7
        %v2714 = vrot.slane %v2713, 2
        %v2715 = vrot.slane %v1459, 7
        %v2716 = vrot.slane %v2715, 2
        %v2717 = vrot.slane %v1467, 7
        %v2718 = vrot.slane %v2717, 2
        %v2719 = vrot.slane %v1466, 7
        %v2720 = vrot.slane %v2719, 2
        %v2721 = vrot.slane %v1468, 7
        %v2722 = vrot.slane %v2721, 2
        %v2723 = vrot.slane %v1476, 7
        %v2724 = vrot.slane %v2723, 2
        %v2725 = vrot.slane %v1484, 7
        %v2726 = vrot.slane %v2725, 2
        %v2727 = vrot.slane %v1483, 7
        %v2728 = vrot.slane %v2727, 2
        %v2729 = vrot.slane %v1485, 7
        %v2730 = vrot.slane %v2729, 2
        %v2731 = vrot.slane %v1493, 7
        %v2732 = vrot.slane %v2731, 2
        %v2733 = vrot.slane %v1501, 7
        %v2734 = vrot.slane %v2733, 2
        %v2735 = vrot.slane %v1500, 7
        %v2736 = vrot.slane %v2735, 2
        %v2737 = vrot.slane %v1502, 7
        %v2738 = vrot.slane %v2737, 2
        %v2739 = vrot.slane %v1510, 7
        %v2740 = vrot.slane %v2739, 2
        %v2741 = vrot.slane %v1518, 7
        %v2742 = vrot.slane %v2741, 2
        %v2743 = vrot.slane %v1517, 7
        %v2744 = vrot.slane %v2743, 2
        %v2745 = vrot.slane %v1519, 7
        %v2746 = vrot.slane %v2745, 2
        %v2747 = vrot.slane %v1527, 7
        %v2748 = vrot.slane %v2747, 2
        %v2749 = vrot.slane %v1535, 7
        %v2750 = vrot.slane %v2749, 2
        %v2751 = vrot.slane %v1534, 7
        %v2752 = vrot.slane %v2751, 2
        %v2753 = vrot.slane %v1536, 7
        %v2754 = vrot.slane %v2753, 2
        %v2755 = vrot.slane %v1544, 7
        %v2756 = vrot.slane %v2755, 2
        %v2757 = vrot.slane %v1552, 7
        %v2758 = vrot.slane %v2757, 2
        %v2759 = vrot.slane %v1551, 7
        %v2760 = vrot.slane %v2759, 2
        %v2761 = vrot.slane %v1553, 7
        %v2762 = vrot.slane %v2761, 2
        %v2763 = vrot.slane %v1561, 7
        %v2764 = vrot.slane %v2763, 2
        %v2765 = vrot.slane %v1569, 7
        %v2766 = vrot.slane %v2765, 2
        %v2767 = vrot.slane %v1568, 7
        %v2768 = vrot.slane %v2767, 2
        %v2769 = vrot.slane %v1570, 7
        %v2770 = vrot.slane %v2769, 2
        %v2771 = vrot.slane %v1578, 7
        %v2772 = vrot.slane %v2771, 2
        %v2773 = vrot.slane %v1586, 7
        %v2774 = vrot.slane %v2773, 2
        %v2775 = vrot.slane %v1585, 7
        %v2776 = vrot.slane %v2775, 2
        %v2777 = vrot.slane %v1587, 7
        %v2778 = vrot.slane %v2777, 2
        %v2779 = vrot.slane %v1595, 7
        %v2780 = vrot.slane %v2779, 2
        %v2781 = vrot.slane %v1603, 7
        %v2782 = vrot.slane %v2781, 2
        %v2783 = vrot.slane %v1602, 7
        %v2784 = vrot.slane %v2783, 2
        %v2785 = vrot.slane %v1604, 7
        %v2786 = vrot.slane %v2785, 2
        %v2787 = vrot.slane %v1612, 7
        %v2788 = vrot.slane %v2787, 2
        %v2789 = vrot.slane %v1620, 7
        %v2790 = vrot.slane %v2789, 2
        %v2791 = vrot.slane %v1619, 7
        %v2792 = vrot.slane %v2791, 2
        %v2793 = vrot.slane %v1621, 7
        %v2794 = vrot.slane %v2793, 2
        %v2795 = vrot.slane %v1629, 7
        %v2796 = vrot.slane %v2795, 2
        %v2797 = vrot.slane %v1637, 7
        %v2798 = vrot.slane %v2797, 2
        %v2799 = vrot.slane %v1636, 7
        %v2800 = vrot.slane %v2799, 2
        %v2801 = vrot.slane %v1638, 7
        %v2802 = vrot.slane %v2801, 2
        %v2803 = vrot.slane %v1646, 7
        %v2804 = vrot.slane %v2803, 2
        %v2805 = vrot.slane %v1654, 7
        %v2806 = vrot.slane %v2805, 2
        %v2807 = vrot.slane %v1653, 7
        %v2808 = vrot.slane %v2807, 2
        %v2809 = vrot.slane %v1655, 7
        %v2810 = vrot.slane %v2809, 2
        %v2811 = vrot.slane %v1663, 7
        %v2812 = vrot.slane %v2811, 2
        %v2813 = vrot.slane %v1671, 7
        %v2814 = vrot.slane %v2813, 2
        %v2815 = vrot.slane %v1670, 7
        %v2816 = vrot.slane %v2815, 2
        %v2817 = vrot.slane %v1672, 7
        %v2818 = vrot.slane %v2817, 2
        %v2819 = vrot.slane %v1680, 7
        %v2820 = vrot.slane %v2819, 2
        %v2821 = vrot.slane %v1688, 7
        %v2822 = vrot.slane %v2821, 2
        %v2823 = vrot.slane %v1687, 7
        %v2824 = vrot.slane %v2823, 2
        %v2825 = vrot.slane %v1689, 7
        %v2826 = vrot.slane %v2825, 2
        %v2827 = vrot.slane %v1697, 7
        %v2828 = vrot.slane %v2827, 2
        %v2829 = vrot.slane %v1705, 7
        %v2830 = vrot.slane %v2829, 2
        %v2831 = vrot.slane %v1704, 7
        %v2832 = vrot.slane %v2831, 2
        %v2833 = vrot.slane %v1706, 7
        %v2834 = vrot.slane %v2833, 2
        %v2835 = vrot.slane %v1714, 7
        %v2836 = vrot.slane %v2835, 2
        %v2837 = vrot.slane %v1722, 7
        %v2838 = vrot.slane %v2837, 2
        %v2839 = vrot.slane %v1721, 7
        %v2840 = vrot.slane %v2839, 2
        %v2841 = vrot.slane %v1723, 7
        %v2842 = vrot.slane %v2841, 2
        %v2843 = vrot.slane %v1731, 7
        %v2844 = vrot.slane %v2843, 2
        %v2845 = vrot.slane %v1739, 7
        %v2846 = vrot.slane %v2845, 2
        %v2847 = vrot.slane %v1738, 7
        %v2848 = vrot.slane %v2847, 2
        %v2849 = vrot.slane %v1740, 7
        %v2850 = vrot.slane %v2849, 2
        %v2851 = vrot.slane %v1748, 7
        %v2852 = vrot.slane %v2851, 2
        %v2853 = vrot.slane %v1756, 7
        %v2854 = vrot.slane %v2853, 2
        %v2855 = vrot.slane %v1755, 7
        %v2856 = vrot.slane %v2855, 2
        %v2857 = vrot.slane %v1757, 7
        %v2858 = vrot.slane %v2857, 2
        %v2859 = vrot.slane %v1765, 7
        %v2860 = vrot.slane %v2859, 2
        %v2861 = vrot.slane %v1773, 7
        %v2862 = vrot.slane %v2861, 2
        %v2863 = vrot.slane %v1772, 7
        %v2864 = vrot.slane %v2863, 2
        %v2865 = vrot.slane %v1774, 7
        %v2866 = vrot.slane %v2865, 2
        %v2867 = vrot.slane %v1782, 7
        %v2868 = vrot.slane %v2867, 2
        %v2869 = vrot.slane %v1790, 7
        %v2870 = vrot.slane %v2869, 2
        %v2871 = vrot.slane %v1789, 7
        %v2872 = vrot.slane %v2871, 2
        %v2873 = vrot.slane %v1791, 7
        %v2874 = vrot.slane %v2873, 2
        %v2875 = vrot.slane %v1799, 7
        %v2876 = vrot.slane %v2875, 2
        %v2877 = vrot.slane %v1807, 7
        %v2878 = vrot.slane %v2877, 2
        %v2879 = vrot.slane %v1806, 7
        %v2880 = vrot.slane %v2879, 2
        %v2881 = vrot.slane %v1808, 7
        %v2882 = vrot.slane %v2881, 2
        %v2883 = vrot.slane %v1816, 7
        %v2884 = vrot.slane %v2883, 2
        %v2885 = vrot.slane %v1824, 7
        %v2886 = vrot.slane %v2885, 2
        %v2887 = vrot.slane %v1823, 7
        %v2888 = vrot.slane %v2887, 2
        %v2889 = vrot.slane %v1825, 7
        %v2890 = vrot.slane %v2889, 2
        %v2891 = vrot.slane %v1833, 7
        %v2892 = vrot.slane %v2891, 2
        %v2893 = vrot.slane %v1841, 7
        %v2894 = vrot.slane %v2893, 2
        %v2895 = vrot.slane %v1840, 7
        %v2896 = vrot.slane %v2895, 2
        %v2897 = vrot.slane %v1842, 7
        %v2898 = vrot.slane %v2897, 2
        %v2899 = vrot.slane %v1850, 7
        %v2900 = vrot.slane %v2899, 2
        %v2901 = vrot.slane %v1858, 7
        %v2902 = vrot.slane %v2901, 2
        %v2903 = vrot.slane %v1857, 7
        %v2904 = vrot.slane %v2903, 2
        %v2905 = vrot.slane %v1859, 7
        %v2906 = vrot.slane %v2905, 2
        %v2907 = vrot.slane %v1867, 7
        %v2908 = vrot.slane %v2907, 2
        %v2909 = vrot.slane %v1875, 7
        %v2910 = vrot.slane %v2909, 2
        %v2911 = vrot.slane %v1874, 7
        %v2912 = vrot.slane %v2911, 2
        %v2913 = vrot.slane %v1876, 7
        %v2914 = vrot.slane %v2913, 2
        %v2915 = vrot.slane %v1884, 7
        %v2916 = vrot.slane %v2915, 2
        %v2917 = vrot.slane %v1892, 7
        %v2918 = vrot.slane %v2917, 2
        %v2919 = vrot.slane %v1891, 7
        %v2920 = vrot.slane %v2919, 2
        %v2921 = vrot.slane %v1893, 7
        %v2922 = vrot.slane %v2921, 2
        %v2923 = vrot.slane %v1901, 7
        %v2924 = vrot.slane %v2923, 2
        %v2925 = vrot.slane %v1909, 7
        %v2926 = vrot.slane %v2925, 2
        %v2927 = vrot.slane %v1908, 7
        %v2928 = vrot.slane %v2927, 2
        %v2929 = vrot.slane %v1910, 7
        %v2930 = vrot.slane %v2929, 2
        %v2931 = vrot.slane %v1918, 7
        %v2932 = vrot.slane %v2931, 2
        %v2933 = vrot.slane %v1926, 7
        %v2934 = vrot.slane %v2933, 2
        %v2935 = vrot.slane %v1925, 7
        %v2936 = vrot.slane %v2935, 2
        %v2937 = vrot.slane %v1927, 7
        %v2938 = vrot.slane %v2937, 2
        %v2939 = vrot.slane %v1935, 7
        %v2940 = vrot.slane %v2939, 2
        %v2941 = vrot.slane %v1943, 7
        %v2942 = vrot.slane %v2941, 2
        %v2943 = vrot.slane %v1942, 7
        %v2944 = vrot.slane %v2943, 2
        %v2945 = vrot.slane %v1944, 7
        %v2946 = vrot.slane %v2945, 2
        %v2947 = vrot.slane %v1952, 7
        %v2948 = vrot.slane %v2947, 2
        %v2949 = vrot.slane %v1960, 7
        %v2950 = vrot.slane %v2949, 2
        %v2951 = vrot.slane %v1959, 7
        %v2952 = vrot.slane %v2951, 2
        %v2953 = vrot.slane %v1961, 7
        %v2954 = vrot.slane %v2953, 2
        %v2955 = vrot.slane %v1969, 7
        %v2956 = vrot.slane %v2955, 2
        %v2957 = vrot.slane %v1977, 7
        %v2958 = vrot.slane %v2957, 2
        %v2959 = vrot.slane %v1976, 7
        %v2960 = vrot.slane %v2959, 2
        %v2961 = vrot.slane %v1978, 7
        %v2962 = vrot.slane %v2961, 2
        %v2963 = vrot.slane %v1986, 7
        %v2964 = vrot.slane %v2963, 2
        %v2965 = vrot.slane %v1994, 7
        %v2966 = vrot.slane %v2965, 2
        %v2967 = vrot.slane %v1993, 7
        %v2968 = vrot.slane %v2967, 2
        %v2969 = vrot.slane %v1995, 7
        %v2970 = vrot.slane %v2969, 2
        %v2971 = vrot.slane %v2003, 7
        %v2972 = vrot.slane %v2971, 2
        %v2973 = vrot.slane %v2011, 7
        %v2974 = vrot.slane %v2973, 2
        %v2975 = vrot.slane %v2010, 7
        %v2976 = vrot.slane %v2975, 2
        %v2977 = vrot.slane %v2012, 7
        %v2978 = vrot.slane %v2977, 2
        %v2979 = vrot.slane %v2020, 7
        %v2980 = vrot.slane %v2979, 2
        %v2981 = vrot.slane %v2028, 7
        %v2982 = vrot.slane %v2981, 2
        %v2983 = vrot.slane %v2027, 7
        %v2984 = vrot.slane %v2983, 2
        %v2985 = vrot.slane %v2029, 7
        %v2986 = vrot.slane %v2985, 2
        %v2987 = vrot.slane %v2037, 7
        %v2988 = vrot.slane %v2987, 2
        %v2989 = vrot.slane %v2045, 7
        %v2990 = vrot.slane %v2989, 2
        %v2991 = vrot.slane %v2044, 7
        %v2992 = vrot.slane %v2991, 2
        %v2993 = vrot.slane %v2046, 7
        %v2994 = vrot.slane %v2993, 2
        %v2995 = vrot.slane %v2054, 7
        %v2996 = vrot.slane %v2995, 2
        %v2997 = vrot.slane %v2062, 7
        %v2998 = vrot.slane %v2997, 2
        %v2999 = vrot.slane %v2061, 7
        %v3000 = vrot.slane %v2999, 2
        %v3001 = vrot.slane %v2063, 7
        %v3002 = vrot.slane %v3001, 2
        %v3003 = vrot.slane %v2071, 7
        %v3004 = vrot.slane %v3003, 2
        %v3005 = vrot.slane %v2079, 7
        %v3006 = vrot.slane %v3005, 2
        %v3007 = vrot.slane %v2078, 7
        %v3008 = vrot.slane %v3007, 2
        %v3009 = vrot.slane %v2080, 7
        %v3010 = vrot.slane %v3009, 2
        %v3011 = vrot.slane %v2088, 7
        %v3012 = vrot.slane %v3011, 2
        %v3013 = vrot.slane %v2096, 7
        %v3014 = vrot.slane %v3013, 2
        %v3015 = vrot.slane %v2095, 7
        %v3016 = vrot.slane %v3015, 2
        %v3017 = vrot.slane %v2097, 7
        %v3018 = vrot.slane %v3017, 2
        %v3019 = vrot.slane %v2105, 7
        %v3020 = vrot.slane %v3019, 2
        %v3021 = vrot.slane %v2113, 7
        %v3022 = vrot.slane %v3021, 2
        %v3023 = vrot.slane %v2112, 7
        %v3024 = vrot.slane %v3023, 2
        %v3025 = vrot.slane %v2114, 7
        %v3026 = vrot.slane %v3025, 2
        %v3027 = vrot.slane %v2122, 7
        %v3028 = vrot.slane %v3027, 2
        %v3029 = vrot.slane %v2130, 7
        %v3030 = vrot.slane %v3029, 2
        %v3031 = vrot.slane %v2129, 7
        %v3032 = vrot.slane %v3031, 2
        %v3033 = vrot.slane %v2131, 7
        %v3034 = vrot.slane %v3033, 2
        %v3035 = vrot.slane %v2139, 7
        %v3036 = vrot.slane %v3035, 2
        %v3037 = vrot.slane %v2147, 7
        %v3038 = vrot.slane %v3037, 2
        %v3039 = vrot.slane %v2146, 7
        %v3040 = vrot.slane %v3039, 2
        %v3041 = vrot.slane %v2148, 7
        %v3042 = vrot.slane %v3041, 2
        %v3043 = vrot.slane %v2156, 7
        %v3044 = vrot.slane %v3043, 2
        %v3045 = vrot.slane %v2164, 7
        %v3046 = vrot.slane %v3045, 2
        %v3047 = vrot.slane %v2163, 7
        %v3048 = vrot.slane %v3047, 2
        %v3049 = vrot.slane %v2165, 7
        %v3050 = vrot.slane %v3049, 2
        %v3051 = vrot.slane %v2173, 7
        %v3052 = vrot.slane %v3051, 2
        %v3053 = vrot.slane %v2181, 7
        %v3054 = vrot.slane %v3053, 2
        %v3055 = vrot.slane %v2180, 7
        %v3056 = vrot.slane %v3055, 2
        %v3057 = vrot.slane %v2182, 7
        %v3058 = vrot.slane %v3057, 2
        %v3059 = vrot.slane %v2190, 7
        %v3060 = vrot.slane %v3059, 2
        %v3061 = vrot.slane %v2198, 7
        %v3062 = vrot.slane %v3061, 2
        %v3063 = vrot.slane %v2197, 7
        %v3064 = vrot.slane %v3063, 2
        %v3065 = vrot.slane %v2199, 7
        %v3066 = vrot.slane %v3065, 2
        %v3067 = vrot.slane %v2207, 7
        %v3068 = vrot.slane %v3067, 2
        %v3069 = vrot.slane %v2215, 7
        %v3070 = vrot.slane %v3069, 2
        %v3071 = vrot.slane %v2214, 7
        %v3072 = vrot.slane %v3071, 2
        %v3073 = vrot.slane %v2216, 7
        %v3074 = vrot.slane %v3073, 2
        %v3075 = vrot.slane %v2224, 7
        %v3076 = vrot.slane %v3075, 2
        %v3077 = vrot.slane %v2232, 7
        %v3078 = vrot.slane %v3077, 2
        %v3079 = vrot.slane %v2231, 7
        %v3080 = vrot.slane %v3079, 2
        %v3081 = vrot.slane %v2233, 7
        %v3082 = vrot.slane %v3081, 2
        %v3083 = vrot.slane %v2241, 7
        %v3084 = vrot.slane %v3083, 2
        %v3085 = vrot.slane %v2249, 7
        %v3086 = vrot.slane %v3085, 2
        %v3087 = vrot.slane %v2248, 7
        %v3088 = vrot.slane %v3087, 2
        %v3089 = vrot.slane %v2250, 7
        %v3090 = vrot.slane %v3089, 2
        %v3091 = vrot.slane %v2258, 7
        %v3092 = vrot.slane %v3091, 2
        %v3093 = vrot.slane %v2266, 7
        %v3094 = vrot.slane %v3093, 2
        %v3095 = vrot.slane %v2265, 7
        %v3096 = vrot.slane %v3095, 2
        %v3097 = vrot.slane %v2267, 7
        %v3098 = vrot.slane %v3097, 2
        %v3099 = vrot.slane %v2275, 7
        %v3100 = vrot.slane %v3099, 2
        %v3101 = vrot.slane %v2283, 7
        %v3102 = vrot.slane %v3101, 2
        %v3103 = vrot.slane %v2282, 7
        %v3104 = vrot.slane %v3103, 2
        %v3105 = vrot.slane %v2284, 7
        %v3106 = vrot.slane %v3105, 2
        %v3107 = vrot.slane %v2292, 7
        %v3108 = vrot.slane %v3107, 2
        %v3109 = vrot.slane %v2300, 7
        %v3110 = vrot.slane %v3109, 2
        %v3111 = vrot.slane %v2299, 7
        %v3112 = vrot.slane %v3111, 2
        %v3113 = vrot.slane %v2301, 7
        %v3114 = vrot.slane %v3113, 2
        %v3115 = vrot.slane %v2309, 7
        %v3116 = vrot.slane %v3115, 2
        %v3117 = vrot.slane %v2317, 7
        %v3118 = vrot.slane %v3117, 2
        %v3119 = vrot.slane %v2316, 7
        %v3120 = vrot.slane %v3119, 2
        %v3121 = vrot.slane %v2318, 7
        %v3122 = vrot.slane %v3121, 2
        %v3123 = vrot.slane %v2326, 7
        %v3124 = vrot.slane %v3123, 2
        %v3125 = vrot.slane %v2334, 7
        %v3126 = vrot.slane %v3125, 2
        %v3127 = vrot.slane %v2333, 7
        %v3128 = vrot.slane %v3127, 2
        %v3129 = vrot.slane %v2335, 7
        %v3130 = vrot.slane %v3129, 2
        %v3131 = vrot.slane %v2343, 7
        %v3132 = vrot.slane %v3131, 2
        %v3133 = vrot.slane %v2351, 7
        %v3134 = vrot.slane %v3133, 2
        %v3135 = vrot.slane %v2350, 7
        %v3136 = vrot.slane %v3135, 2
        %v3137 = vrot.slane %v2352, 7
        %v3138 = vrot.slane %v3137, 2
        %v3139 = vrot.slane %v2360, 7
        %v3140 = vrot.slane %v3139, 2
        %v3141 = vrot.slane %v2368, 7
        %v3142 = vrot.slane %v3141, 2
        %v3143 = vrot.slane %v2367, 7
        %v3144 = vrot.slane %v3143, 2
        %v3145 = vrot.slane %v2369, 7
        %v3146 = vrot.slane %v3145, 2
        %v3147 = vrot.slane %v2377, 7
        %v3148 = vrot.slane %v3147, 2
        %v3149 = vrot.slane %v2385, 7
        %v3150 = vrot.slane %v3149, 2
        %v3151 = vrot.slane %v2384, 7
        %v3152 = vrot.slane %v3151, 2
        %v3153 = vrot.slane %v2386, 7
        %v3154 = vrot.slane %v3153, 2
        %v3411 = vmax.f32 %v1306, %v2644
        %v3412 = vmax.f32 %v1314, %v2646
        %v3413 = vmax.f32 %v1313, %v2648
        %v3414 = vmax.f32 %v1315, %v2650
        %v3415 = vmax.f32 %v1323, %v2652
        %v3416 = vmax.f32 %v1331, %v2654
        %v3417 = vmax.f32 %v1330, %v2656
        %v3418 = vmax.f32 %v1332, %v2658
        %v3419 = vmax.f32 %v1340, %v2660
        %v3420 = vmax.f32 %v1348, %v2662
        %v3421 = vmax.f32 %v1347, %v2664
        %v3422 = vmax.f32 %v1349, %v2666
        %v3423 = vmax.f32 %v1357, %v2668
        %v3424 = vmax.f32 %v1365, %v2670
        %v3425 = vmax.f32 %v1364, %v2672
        %v3426 = vmax.f32 %v1366, %v2674
        %v3427 = vmax.f32 %v1374, %v2676
        %v3428 = vmax.f32 %v1382, %v2678
        %v3429 = vmax.f32 %v1381, %v2680
        %v3430 = vmax.f32 %v1383, %v2682
        %v3431 = vmax.f32 %v1391, %v2684
        %v3432 = vmax.f32 %v1399, %v2686
        %v3433 = vmax.f32 %v1398, %v2688
        %v3434 = vmax.f32 %v1400, %v2690
        %v3435 = vmax.f32 %v1408, %v2692
        %v3436 = vmax.f32 %v1416, %v2694
        %v3437 = vmax.f32 %v1415, %v2696
        %v3438 = vmax.f32 %v1417, %v2698
        %v3439 = vmax.f32 %v1425, %v2700
        %v3440 = vmax.f32 %v1433, %v2702
        %v3441 = vmax.f32 %v1432, %v2704
        %v3442 = vmax.f32 %v1434, %v2706
        %v3443 = vmax.f32 %v1442, %v2708
        %v3444 = vmax.f32 %v1450, %v2710
        %v3445 = vmax.f32 %v1449, %v2712
        %v3446 = vmax.f32 %v1451, %v2714
        %v3447 = vmax.f32 %v1459, %v2716
        %v3448 = vmax.f32 %v1467, %v2718
        %v3449 = vmax.f32 %v1466, %v2720
        %v3450 = vmax.f32 %v1468, %v2722
        %v3451 = vmax.f32 %v1476, %v2724
        %v3452 = vmax.f32 %v1484, %v2726
        %v3453 = vmax.f32 %v1483, %v2728
        %v3454 = vmax.f32 %v1485, %v2730
        %v3455 = vmax.f32 %v1493, %v2732
        %v3456 = vmax.f32 %v1501, %v2734
        %v3457 = vmax.f32 %v1500, %v2736
        %v3458 = vmax.f32 %v1502, %v2738
        %v3459 = vmax.f32 %v1510, %v2740
        %v3460 = vmax.f32 %v1518, %v2742
        %v3461 = vmax.f32 %v1517, %v2744
        %v3462 = vmax.f32 %v1519, %v2746
        %v3463 = vmax.f32 %v1527, %v2748
        %v3464 = vmax.f32 %v1535, %v2750
        %v3465 = vmax.f32 %v1534, %v2752
        %v3466 = vmax.f32 %v1536, %v2754
        %v3467 = vmax.f32 %v1544, %v2756
        %v3468 = vmax.f32 %v1552, %v2758
        %v3469 = vmax.f32 %v1551, %v2760
        %v3470 = vmax.f32 %v1553, %v2762
        %v3471 = vmax.f32 %v1561, %v2764
        %v3472 = vmax.f32 %v1569, %v2766
        %v3473 = vmax.f32 %v1568, %v2768
        %v3474 = vmax.f32 %v1570, %v2770
        %v3475 = vmax.f32 %v1578, %v2772
        %v3476 = vmax.f32 %v1586, %v2774
        %v3477 = vmax.f32 %v1585, %v2776
        %v3478 = vmax.f32 %v1587, %v2778
        %v3479 = vmax.f32 %v1595, %v2780
        %v3480 = vmax.f32 %v1603, %v2782
        %v3481 = vmax.f32 %v1602, %v2784
        %v3482 = vmax.f32 %v1604, %v2786
        %v3483 = vmax.f32 %v1612, %v2788
        %v3484 = vmax.f32 %v1620, %v2790
        %v3485 = vmax.f32 %v1619, %v2792
        %v3486 = vmax.f32 %v1621, %v2794
        %v3487 = vmax.f32 %v1629, %v2796
        %v3488 = vmax.f32 %v1637, %v2798
        %v3489 = vmax.f32 %v1636, %v2800
        %v3490 = vmax.f32 %v1638, %v2802
        %v3491 = vmax.f32 %v1646, %v2804
        %v3492 = vmax.f32 %v1654, %v2806
        %v3493 = vmax.f32 %v1653, %v2808
        %v3494 = vmax.f32 %v1655, %v2810
        %v3495 = vmax.f32 %v1663, %v2812
        %v3496 = vmax.f32 %v1671, %v2814
        %v3497 = vmax.f32 %v1670, %v2816
        %v3498 = vmax.f32 %v1672, %v2818
        %v3499 = vmax.f32 %v1680, %v2820
        %v3500 = vmax.f32 %v1688, %v2822
        %v3501 = vmax.f32 %v1687, %v2824
        %v3502 = vmax.f32 %v1689, %v2826
        %v3503 = vmax.f32 %v1697, %v2828
        %v3504 = vmax.f32 %v1705, %v2830
        %v3505 = vmax.f32 %v1704, %v2832
        %v3506 = vmax.f32 %v1706, %v2834
        %v3507 = vmax.f32 %v1714, %v2836
        %v3508 = vmax.f32 %v1722, %v2838
        %v3509 = vmax.f32 %v1721, %v2840
        %v3510 = vmax.f32 %v1723, %v2842
        %v3511 = vmax.f32 %v1731, %v2844
        %v3512 = vmax.f32 %v1739, %v2846
        %v3513 = vmax.f32 %v1738, %v2848
        %v3514 = vmax.f32 %v1740, %v2850
        %v3515 = vmax.f32 %v1748, %v2852
        %v3516 = vmax.f32 %v1756, %v2854
        %v3517 = vmax.f32 %v1755, %v2856
        %v3518 = vmax.f32 %v1757, %v2858
        %v3519 = vmax.f32 %v1765, %v2860
        %v3520 = vmax.f32 %v1773, %v2862
        %v3521 = vmax.f32 %v1772, %v2864
        %v3522 = vmax.f32 %v1774, %v2866
        %v3523 = vmax.f32 %v1782, %v2868
        %v3524 = vmax.f32 %v1790, %v2870
        %v3525 = vmax.f32 %v1789, %v2872
        %v3526 = vmax.f32 %v1791, %v2874
        %v3527 = vmax.f32 %v1799, %v2876
        %v3528 = vmax.f32 %v1807, %v2878
        %v3529 = vmax.f32 %v1806, %v2880
        %v3530 = vmax.f32 %v1808, %v2882
        %v3531 = vmax.f32 %v1816, %v2884
        %v3532 = vmax.f32 %v1824, %v2886
        %v3533 = vmax.f32 %v1823, %v2888
        %v3534 = vmax.f32 %v1825, %v2890
        %v3535 = vmax.f32 %v1833, %v2892
        %v3536 = vmax.f32 %v1841, %v2894
        %v3537 = vmax.f32 %v1840, %v2896
        %v3538 = vmax.f32 %v1842, %v2898
        %v3539 = vmax.f32 %v1850, %v2900
        %v3540 = vmax.f32 %v1858, %v2902
        %v3541 = vmax.f32 %v1857, %v2904
        %v3542 = vmax.f32 %v1859, %v2906
        %v3543 = vmax.f32 %v1867, %v2908
        %v3544 = vmax.f32 %v1875, %v2910
        %v3545 = vmax.f32 %v1874, %v2912
        %v3546 = vmax.f32 %v1876, %v2914
        %v3547 = vmax.f32 %v1884, %v2916
        %v3548 = vmax.f32 %v1892, %v2918
        %v3549 = vmax.f32 %v1891, %v2920
        %v3550 = vmax.f32 %v1893, %v2922
        %v3551 = vmax.f32 %v1901, %v2924
        %v3552 = vmax.f32 %v1909, %v2926
        %v3553 = vmax.f32 %v1908, %v2928
        %v3554 = vmax.f32 %v1910, %v2930
        %v3555 = vmax.f32 %v1918, %v2932
        %v3556 = vmax.f32 %v1926, %v2934
        %v3557 = vmax.f32 %v1925, %v2936
        %v3558 = vmax.f32 %v1927, %v2938
        %v3559 = vmax.f32 %v1935, %v2940
        %v3560 = vmax.f32 %v1943, %v2942
        %v3561 = vmax.f32 %v1942, %v2944
        %v3562 = vmax.f32 %v1944, %v2946
        %v3563 = vmax.f32 %v1952, %v2948
        %v3564 = vmax.f32 %v1960, %v2950
        %v3565 = vmax.f32 %v1959, %v2952
        %v3566 = vmax.f32 %v1961, %v2954
        %v3567 = vmax.f32 %v1969, %v2956
        %v3568 = vmax.f32 %v1977, %v2958
        %v3569 = vmax.f32 %v1976, %v2960
        %v3570 = vmax.f32 %v1978, %v2962
        %v3571 = vmax.f32 %v1986, %v2964
        %v3572 = vmax.f32 %v1994, %v2966
        %v3573 = vmax.f32 %v1993, %v2968
        %v3574 = vmax.f32 %v1995, %v2970
        %v3575 = vmax.f32 %v2003, %v2972
        %v3576 = vmax.f32 %v2011, %v2974
        %v3577 = vmax.f32 %v2010, %v2976
        %v3578 = vmax.f32 %v2012, %v2978
        %v3579 = vmax.f32 %v2020, %v2980
        %v3580 = vmax.f32 %v2028, %v2982
        %v3581 = vmax.f32 %v2027, %v2984
        %v3582 = vmax.f32 %v2029, %v2986
        %v3583 = vmax.f32 %v2037, %v2988
        %v3584 = vmax.f32 %v2045, %v2990
        %v3585 = vmax.f32 %v2044, %v2992
        %v3586 = vmax.f32 %v2046, %v2994
        %v3587 = vmax.f32 %v2054, %v2996
        %v3588 = vmax.f32 %v2062, %v2998
        %v3589 = vmax.f32 %v2061, %v3000
        %v3590 = vmax.f32 %v2063, %v3002
        %v3591 = vmax.f32 %v2071, %v3004
        %v3592 = vmax.f32 %v2079, %v3006
        %v3593 = vmax.f32 %v2078, %v3008
        %v3594 = vmax.f32 %v2080, %v3010
        %v3595 = vmax.f32 %v2088, %v3012
        %v3596 = vmax.f32 %v2096, %v3014
        %v3597 = vmax.f32 %v2095, %v3016
        %v3598 = vmax.f32 %v2097, %v3018
        %v3599 = vmax.f32 %v2105, %v3020
        %v3600 = vmax.f32 %v2113, %v3022
        %v3601 = vmax.f32 %v2112, %v3024
        %v3602 = vmax.f32 %v2114, %v3026
        %v3603 = vmax.f32 %v2122, %v3028
        %v3604 = vmax.f32 %v2130, %v3030
        %v3605 = vmax.f32 %v2129, %v3032
        %v3606 = vmax.f32 %v2131, %v3034
        %v3607 = vmax.f32 %v2139, %v3036
        %v3608 = vmax.f32 %v2147, %v3038
        %v3609 = vmax.f32 %v2146, %v3040
        %v3610 = vmax.f32 %v2148, %v3042
        %v3611 = vmax.f32 %v2156, %v3044
        %v3612 = vmax.f32 %v2164, %v3046
        %v3613 = vmax.f32 %v2163, %v3048
        %v3614 = vmax.f32 %v2165, %v3050
        %v3615 = vmax.f32 %v2173, %v3052
        %v3616 = vmax.f32 %v2181, %v3054
        %v3617 = vmax.f32 %v2180, %v3056
        %v3618 = vmax.f32 %v2182, %v3058
        %v3619 = vmax.f32 %v2190, %v3060
        %v3620 = vmax.f32 %v2198, %v3062
        %v3621 = vmax.f32 %v2197, %v3064
        %v3622 = vmax.f32 %v2199, %v3066
        %v3623 = vmax.f32 %v2207, %v3068
        %v3624 = vmax.f32 %v2215, %v3070
        %v3625 = vmax.f32 %v2214, %v3072
        %v3626 = vmax.f32 %v2216, %v3074
        %v3627 = vmax.f32 %v2224, %v3076
        %v3628 = vmax.f32 %v2232, %v3078
        %v3629 = vmax.f32 %v2231, %v3080
        %v3630 = vmax.f32 %v2233, %v3082
        %v3631 = vmax.f32 %v2241, %v3084
        %v3632 = vmax.f32 %v2249, %v3086
        %v3633 = vmax.f32 %v2248, %v3088
        %v3634 = vmax.f32 %v2250, %v3090
        %v3635 = vmax.f32 %v2258, %v3092
        %v3636 = vmax.f32 %v2266, %v3094
        %v3637 = vmax.f32 %v2265, %v3096
        %v3638 = vmax.f32 %v2267, %v3098
        %v3639 = vmax.f32 %v2275, %v3100
        %v3640 = vmax.f32 %v2283, %v3102
        %v3641 = vmax.f32 %v2282, %v3104
        %v3642 = vmax.f32 %v2284, %v3106
        %v3643 = vmax.f32 %v2292, %v3108
        %v3644 = vmax.f32 %v2300, %v3110
        %v3645 = vmax.f32 %v2299, %v3112
        %v3646 = vmax.f32 %v2301, %v3114
        %v3647 = vmax.f32 %v2309, %v3116
        %v3648 = vmax.f32 %v2317, %v3118
        %v3649 = vmax.f32 %v2316, %v3120
        %v3650 = vmax.f32 %v2318, %v3122
        %v3651 = vmax.f32 %v2326, %v3124
        %v3652 = vmax.f32 %v2334, %v3126
        %v3653 = vmax.f32 %v2333, %v3128
        %v3654 = vmax.f32 %v2335, %v3130
        %v3655 = vmax.f32 %v2343, %v3132
        %v3656 = vmax.f32 %v2351, %v3134
        %v3657 = vmax.f32 %v2350, %v3136
        %v3658 = vmax.f32 %v2352, %v3138
        %v3659 = vmax.f32 %v2360, %v3140
        %v3660 = vmax.f32 %v2368, %v3142
        %v3661 = vmax.f32 %v2367, %v3144
        %v3662 = vmax.f32 %v2369, %v3146
        %v3663 = vmax.f32 %v2377, %v3148
        %v3664 = vmax.f32 %v2385, %v3150
        %v3665 = vmax.f32 %v2384, %v3152
        %v3666 = vmax.f32 %v2386, %v3154
        %v3923 = vlaneseq
        %v3924 = vshrl.u32 %v3923, 7
        %v3925 = vsub.s32 0, %v3924
        %v3926 = vrot.slane %v3411, %v3925
        %v3927 = vlaneseq
        %v3928 = vshrl.u32 %v3927, 7
        %v3929 = vsub.s32 0, %v3928
        %v3930 = vrot.slane %v3412, %v3929
        %v3931 = vlaneseq
        %v3932 = vshrl.u32 %v3931, 7
        %v3933 = vsub.s32 0, %v3932
        %v3934 = vrot.slane %v3413, %v3933
        %v3935 = vlaneseq
        %v3936 = vshrl.u32 %v3935, 7
        %v3937 = vsub.s32 0, %v3936
        %v3938 = vrot.slane %v3414, %v3937
        %v3939 = vlaneseq
        %v3940 = vshrl.u32 %v3939, 7
        %v3941 = vsub.s32 0, %v3940
        %v3942 = vrot.slane %v3415, %v3941
        %v3943 = vlaneseq
        %v3944 = vshrl.u32 %v3943, 7
        %v3945 = vsub.s32 0, %v3944
        %v3946 = vrot.slane %v3416, %v3945
        %v3947 = vlaneseq
        %v3948 = vshrl.u32 %v3947, 7
        %v3949 = vsub.s32 0, %v3948
        %v3950 = vrot.slane %v3417, %v3949
        %v3951 = vlaneseq
        %v3952 = vshrl.u32 %v3951, 7
        %v3953 = vsub.s32 0, %v3952
        %v3954 = vrot.slane %v3418, %v3953
        %v3955 = vlaneseq
        %v3956 = vshrl.u32 %v3955, 7
        %v3957 = vsub.s32 0, %v3956
        %v3958 = vrot.slane %v3419, %v3957
        %v3959 = vlaneseq
        %v3960 = vshrl.u32 %v3959, 7
        %v3961 = vsub.s32 0, %v3960
        %v3962 = vrot.slane %v3420, %v3961
        %v3963 = vlaneseq
        %v3964 = vshrl.u32 %v3963, 7
        %v3965 = vsub.s32 0, %v3964
        %v3966 = vrot.slane %v3421, %v3965
        %v3967 = vlaneseq
        %v3968 = vshrl.u32 %v3967, 7
        %v3969 = vsub.s32 0, %v3968
        %v3970 = vrot.slane %v3422, %v3969
        %v3971 = vlaneseq
        %v3972 = vshrl.u32 %v3971, 7
        %v3973 = vsub.s32 0, %v3972
        %v3974 = vrot.slane %v3423, %v3973
        %v3975 = vlaneseq
        %v3976 = vshrl.u32 %v3975, 7
        %v3977 = vsub.s32 0, %v3976
        %v3978 = vrot.slane %v3424, %v3977
        %v3979 = vlaneseq
        %v3980 = vshrl.u32 %v3979, 7
        %v3981 = vsub.s32 0, %v3980
        %v3982 = vrot.slane %v3425, %v3981
        %v3983 = vlaneseq
        %v3984 = vshrl.u32 %v3983, 7
        %v3985 = vsub.s32 0, %v3984
        %v3986 = vrot.slane %v3426, %v3985
        %v3987 = vlaneseq
        %v3988 = vshrl.u32 %v3987, 7
        %v3989 = vsub.s32 0, %v3988
        %v3990 = vrot.slane %v3427, %v3989
        %v3991 = vlaneseq
        %v3992 = vshrl.u32 %v3991, 7
        %v3993 = vsub.s32 0, %v3992
        %v3994 = vrot.slane %v3428, %v3993
        %v3995 = vlaneseq
        %v3996 = vshrl.u32 %v3995, 7
        %v3997 = vsub.s32 0, %v3996
        %v3998 = vrot.slane %v3429, %v3997
        %v3999 = vlaneseq
        %v4000 = vshrl.u32 %v3999, 7
        %v4001 = vsub.s32 0, %v4000
        %v4002 = vrot.slane %v3430, %v4001
        %v4003 = vlaneseq
        %v4004 = vshrl.u32 %v4003, 7
        %v4005 = vsub.s32 0, %v4004
        %v4006 = vrot.slane %v3431, %v4005
        %v4007 = vlaneseq
        %v4008 = vshrl.u32 %v4007, 7
        %v4009 = vsub.s32 0, %v4008
        %v4010 = vrot.slane %v3432, %v4009
        %v4011 = vlaneseq
        %v4012 = vshrl.u32 %v4011, 7
        %v4013 = vsub.s32 0, %v4012
        %v4014 = vrot.slane %v3433, %v4013
        %v4015 = vlaneseq
        %v4016 = vshrl.u32 %v4015, 7
        %v4017 = vsub.s32 0, %v4016
        %v4018 = vrot.slane %v3434, %v4017
        %v4019 = vlaneseq
        %v4020 = vshrl.u32 %v4019, 7
        %v4021 = vsub.s32 0, %v4020
        %v4022 = vrot.slane %v3435, %v4021
        %v4023 = vlaneseq
        %v4024 = vshrl.u32 %v4023, 7
        %v4025 = vsub.s32 0, %v4024
        %v4026 = vrot.slane %v3436, %v4025
        %v4027 = vlaneseq
        %v4028 = vshrl.u32 %v4027, 7
        %v4029 = vsub.s32 0, %v4028
        %v4030 = vrot.slane %v3437, %v4029
        %v4031 = vlaneseq
        %v4032 = vshrl.u32 %v4031, 7
        %v4033 = vsub.s32 0, %v4032
        %v4034 = vrot.slane %v3438, %v4033
        %v4035 = vlaneseq
        %v4036 = vshrl.u32 %v4035, 7
        %v4037 = vsub.s32 0, %v4036
        %v4038 = vrot.slane %v3439, %v4037
        %v4039 = vlaneseq
        %v4040 = vshrl.u32 %v4039, 7
        %v4041 = vsub.s32 0, %v4040
        %v4042 = vrot.slane %v3440, %v4041
        %v4043 = vlaneseq
        %v4044 = vshrl.u32 %v4043, 7
        %v4045 = vsub.s32 0, %v4044
        %v4046 = vrot.slane %v3441, %v4045
        %v4047 = vlaneseq
        %v4048 = vshrl.u32 %v4047, 7
        %v4049 = vsub.s32 0, %v4048
        %v4050 = vrot.slane %v3442, %v4049
        %v4051 = vlaneseq
        %v4052 = vshrl.u32 %v4051, 7
        %v4053 = vsub.s32 0, %v4052
        %v4054 = vrot.slane %v3443, %v4053
        %v4055 = vlaneseq
        %v4056 = vshrl.u32 %v4055, 7
        %v4057 = vsub.s32 0, %v4056
        %v4058 = vrot.slane %v3444, %v4057
        %v4059 = vlaneseq
        %v4060 = vshrl.u32 %v4059, 7
        %v4061 = vsub.s32 0, %v4060
        %v4062 = vrot.slane %v3445, %v4061
        %v4063 = vlaneseq
        %v4064 = vshrl.u32 %v4063, 7
        %v4065 = vsub.s32 0, %v4064
        %v4066 = vrot.slane %v3446, %v4065
        %v4067 = vlaneseq
        %v4068 = vshrl.u32 %v4067, 7
        %v4069 = vsub.s32 0, %v4068
        %v4070 = vrot.slane %v3447, %v4069
        %v4071 = vlaneseq
        %v4072 = vshrl.u32 %v4071, 7
        %v4073 = vsub.s32 0, %v4072
        %v4074 = vrot.slane %v3448, %v4073
        %v4075 = vlaneseq
        %v4076 = vshrl.u32 %v4075, 7
        %v4077 = vsub.s32 0, %v4076
        %v4078 = vrot.slane %v3449, %v4077
        %v4079 = vlaneseq
        %v4080 = vshrl.u32 %v4079, 7
        %v4081 = vsub.s32 0, %v4080
        %v4082 = vrot.slane %v3450, %v4081
        %v4083 = vlaneseq
        %v4084 = vshrl.u32 %v4083, 7
        %v4085 = vsub.s32 0, %v4084
        %v4086 = vrot.slane %v3451, %v4085
        %v4087 = vlaneseq
        %v4088 = vshrl.u32 %v4087, 7
        %v4089 = vsub.s32 0, %v4088
        %v4090 = vrot.slane %v3452, %v4089
        %v4091 = vlaneseq
        %v4092 = vshrl.u32 %v4091, 7
        %v4093 = vsub.s32 0, %v4092
        %v4094 = vrot.slane %v3453, %v4093
        %v4095 = vlaneseq
        %v4096 = vshrl.u32 %v4095, 7
        %v4097 = vsub.s32 0, %v4096
        %v4098 = vrot.slane %v3454, %v4097
        %v4099 = vlaneseq
        %v4100 = vshrl.u32 %v4099, 7
        %v4101 = vsub.s32 0, %v4100
        %v4102 = vrot.slane %v3455, %v4101
        %v4103 = vlaneseq
        %v4104 = vshrl.u32 %v4103, 7
        %v4105 = vsub.s32 0, %v4104
        %v4106 = vrot.slane %v3456, %v4105
        %v4107 = vlaneseq
        %v4108 = vshrl.u32 %v4107, 7
        %v4109 = vsub.s32 0, %v4108
        %v4110 = vrot.slane %v3457, %v4109
        %v4111 = vlaneseq
        %v4112 = vshrl.u32 %v4111, 7
        %v4113 = vsub.s32 0, %v4112
        %v4114 = vrot.slane %v3458, %v4113
        %v4115 = vlaneseq
        %v4116 = vshrl.u32 %v4115, 7
        %v4117 = vsub.s32 0, %v4116
        %v4118 = vrot.slane %v3459, %v4117
        %v4119 = vlaneseq
        %v4120 = vshrl.u32 %v4119, 7
        %v4121 = vsub.s32 0, %v4120
        %v4122 = vrot.slane %v3460, %v4121
        %v4123 = vlaneseq
        %v4124 = vshrl.u32 %v4123, 7
        %v4125 = vsub.s32 0, %v4124
        %v4126 = vrot.slane %v3461, %v4125
        %v4127 = vlaneseq
        %v4128 = vshrl.u32 %v4127, 7
        %v4129 = vsub.s32 0, %v4128
        %v4130 = vrot.slane %v3462, %v4129
        %v4131 = vlaneseq
        %v4132 = vshrl.u32 %v4131, 7
        %v4133 = vsub.s32 0, %v4132
        %v4134 = vrot.slane %v3463, %v4133
        %v4135 = vlaneseq
        %v4136 = vshrl.u32 %v4135, 7
        %v4137 = vsub.s32 0, %v4136
        %v4138 = vrot.slane %v3464, %v4137
        %v4139 = vlaneseq
        %v4140 = vshrl.u32 %v4139, 7
        %v4141 = vsub.s32 0, %v4140
        %v4142 = vrot.slane %v3465, %v4141
        %v4143 = vlaneseq
        %v4144 = vshrl.u32 %v4143, 7
        %v4145 = vsub.s32 0, %v4144
        %v4146 = vrot.slane %v3466, %v4145
        %v4147 = vlaneseq
        %v4148 = vshrl.u32 %v4147, 7
        %v4149 = vsub.s32 0, %v4148
        %v4150 = vrot.slane %v3467, %v4149
        %v4151 = vlaneseq
        %v4152 = vshrl.u32 %v4151, 7
        %v4153 = vsub.s32 0, %v4152
        %v4154 = vrot.slane %v3468, %v4153
        %v4155 = vlaneseq
        %v4156 = vshrl.u32 %v4155, 7
        %v4157 = vsub.s32 0, %v4156
        %v4158 = vrot.slane %v3469, %v4157
        %v4159 = vlaneseq
        %v4160 = vshrl.u32 %v4159, 7
        %v4161 = vsub.s32 0, %v4160
        %v4162 = vrot.slane %v3470, %v4161
        %v4163 = vlaneseq
        %v4164 = vshrl.u32 %v4163, 7
        %v4165 = vsub.s32 0, %v4164
        %v4166 = vrot.slane %v3471, %v4165
        %v4167 = vlaneseq
        %v4168 = vshrl.u32 %v4167, 7
        %v4169 = vsub.s32 0, %v4168
        %v4170 = vrot.slane %v3472, %v4169
        %v4171 = vlaneseq
        %v4172 = vshrl.u32 %v4171, 7
        %v4173 = vsub.s32 0, %v4172
        %v4174 = vrot.slane %v3473, %v4173
        %v4175 = vlaneseq
        %v4176 = vshrl.u32 %v4175, 7
        %v4177 = vsub.s32 0, %v4176
        %v4178 = vrot.slane %v3474, %v4177
        %v4179 = vlaneseq
        %v4180 = vshrl.u32 %v4179, 7
        %v4181 = vsub.s32 0, %v4180
        %v4182 = vrot.slane %v3475, %v4181
        %v4183 = vlaneseq
        %v4184 = vshrl.u32 %v4183, 7
        %v4185 = vsub.s32 0, %v4184
        %v4186 = vrot.slane %v3476, %v4185
        %v4187 = vlaneseq
        %v4188 = vshrl.u32 %v4187, 7
        %v4189 = vsub.s32 0, %v4188
        %v4190 = vrot.slane %v3477, %v4189
        %v4191 = vlaneseq
        %v4192 = vshrl.u32 %v4191, 7
        %v4193 = vsub.s32 0, %v4192
        %v4194 = vrot.slane %v3478, %v4193
        %v4195 = vlaneseq
        %v4196 = vshrl.u32 %v4195, 7
        %v4197 = vsub.s32 0, %v4196
        %v4198 = vrot.slane %v3479, %v4197
        %v4199 = vlaneseq
        %v4200 = vshrl.u32 %v4199, 7
        %v4201 = vsub.s32 0, %v4200
        %v4202 = vrot.slane %v3480, %v4201
        %v4203 = vlaneseq
        %v4204 = vshrl.u32 %v4203, 7
        %v4205 = vsub.s32 0, %v4204
        %v4206 = vrot.slane %v3481, %v4205
        %v4207 = vlaneseq
        %v4208 = vshrl.u32 %v4207, 7
        %v4209 = vsub.s32 0, %v4208
        %v4210 = vrot.slane %v3482, %v4209
        %v4211 = vlaneseq
        %v4212 = vshrl.u32 %v4211, 7
        %v4213 = vsub.s32 0, %v4212
        %v4214 = vrot.slane %v3483, %v4213
        %v4215 = vlaneseq
        %v4216 = vshrl.u32 %v4215, 7
        %v4217 = vsub.s32 0, %v4216
        %v4218 = vrot.slane %v3484, %v4217
        %v4219 = vlaneseq
        %v4220 = vshrl.u32 %v4219, 7
        %v4221 = vsub.s32 0, %v4220
        %v4222 = vrot.slane %v3485, %v4221
        %v4223 = vlaneseq
        %v4224 = vshrl.u32 %v4223, 7
        %v4225 = vsub.s32 0, %v4224
        %v4226 = vrot.slane %v3486, %v4225
        %v4227 = vlaneseq
        %v4228 = vshrl.u32 %v4227, 7
        %v4229 = vsub.s32 0, %v4228
        %v4230 = vrot.slane %v3487, %v4229
        %v4231 = vlaneseq
        %v4232 = vshrl.u32 %v4231, 7
        %v4233 = vsub.s32 0, %v4232
        %v4234 = vrot.slane %v3488, %v4233
        %v4235 = vlaneseq
        %v4236 = vshrl.u32 %v4235, 7
        %v4237 = vsub.s32 0, %v4236
        %v4238 = vrot.slane %v3489, %v4237
        %v4239 = vlaneseq
        %v4240 = vshrl.u32 %v4239, 7
        %v4241 = vsub.s32 0, %v4240
        %v4242 = vrot.slane %v3490, %v4241
        %v4243 = vlaneseq
        %v4244 = vshrl.u32 %v4243, 7
        %v4245 = vsub.s32 0, %v4244
        %v4246 = vrot.slane %v3491, %v4245
        %v4247 = vlaneseq
        %v4248 = vshrl.u32 %v4247, 7
        %v4249 = vsub.s32 0, %v4248
        %v4250 = vrot.slane %v3492, %v4249
        %v4251 = vlaneseq
        %v4252 = vshrl.u32 %v4251, 7
        %v4253 = vsub.s32 0, %v4252
        %v4254 = vrot.slane %v3493, %v4253
        %v4255 = vlaneseq
        %v4256 = vshrl.u32 %v4255, 7
        %v4257 = vsub.s32 0, %v4256
        %v4258 = vrot.slane %v3494, %v4257
        %v4259 = vlaneseq
        %v4260 = vshrl.u32 %v4259, 7
        %v4261 = vsub.s32 0, %v4260
        %v4262 = vrot.slane %v3495, %v4261
        %v4263 = vlaneseq
        %v4264 = vshrl.u32 %v4263, 7
        %v4265 = vsub.s32 0, %v4264
        %v4266 = vrot.slane %v3496, %v4265
        %v4267 = vlaneseq
        %v4268 = vshrl.u32 %v4267, 7
        %v4269 = vsub.s32 0, %v4268
        %v4270 = vrot.slane %v3497, %v4269
        %v4271 = vlaneseq
        %v4272 = vshrl.u32 %v4271, 7
        %v4273 = vsub.s32 0, %v4272
        %v4274 = vrot.slane %v3498, %v4273
        %v4275 = vlaneseq
        %v4276 = vshrl.u32 %v4275, 7
        %v4277 = vsub.s32 0, %v4276
        %v4278 = vrot.slane %v3499, %v4277
        %v4279 = vlaneseq
        %v4280 = vshrl.u32 %v4279, 7
        %v4281 = vsub.s32 0, %v4280
        %v4282 = vrot.slane %v3500, %v4281
        %v4283 = vlaneseq
        %v4284 = vshrl.u32 %v4283, 7
        %v4285 = vsub.s32 0, %v4284
        %v4286 = vrot.slane %v3501, %v4285
        %v4287 = vlaneseq
        %v4288 = vshrl.u32 %v4287, 7
        %v4289 = vsub.s32 0, %v4288
        %v4290 = vrot.slane %v3502, %v4289
        %v4291 = vlaneseq
        %v4292 = vshrl.u32 %v4291, 7
        %v4293 = vsub.s32 0, %v4292
        %v4294 = vrot.slane %v3503, %v4293
        %v4295 = vlaneseq
        %v4296 = vshrl.u32 %v4295, 7
        %v4297 = vsub.s32 0, %v4296
        %v4298 = vrot.slane %v3504, %v4297
        %v4299 = vlaneseq
        %v4300 = vshrl.u32 %v4299, 7
        %v4301 = vsub.s32 0, %v4300
        %v4302 = vrot.slane %v3505, %v4301
        %v4303 = vlaneseq
        %v4304 = vshrl.u32 %v4303, 7
        %v4305 = vsub.s32 0, %v4304
        %v4306 = vrot.slane %v3506, %v4305
        %v4307 = vlaneseq
        %v4308 = vshrl.u32 %v4307, 7
        %v4309 = vsub.s32 0, %v4308
        %v4310 = vrot.slane %v3507, %v4309
        %v4311 = vlaneseq
        %v4312 = vshrl.u32 %v4311, 7
        %v4313 = vsub.s32 0, %v4312
        %v4314 = vrot.slane %v3508, %v4313
        %v4315 = vlaneseq
        %v4316 = vshrl.u32 %v4315, 7
        %v4317 = vsub.s32 0, %v4316
        %v4318 = vrot.slane %v3509, %v4317
        %v4319 = vlaneseq
        %v4320 = vshrl.u32 %v4319, 7
        %v4321 = vsub.s32 0, %v4320
        %v4322 = vrot.slane %v3510, %v4321
        %v4323 = vlaneseq
        %v4324 = vshrl.u32 %v4323, 7
        %v4325 = vsub.s32 0, %v4324
        %v4326 = vrot.slane %v3511, %v4325
        %v4327 = vlaneseq
        %v4328 = vshrl.u32 %v4327, 7
        %v4329 = vsub.s32 0, %v4328
        %v4330 = vrot.slane %v3512, %v4329
        %v4331 = vlaneseq
        %v4332 = vshrl.u32 %v4331, 7
        %v4333 = vsub.s32 0, %v4332
        %v4334 = vrot.slane %v3513, %v4333
        %v4335 = vlaneseq
        %v4336 = vshrl.u32 %v4335, 7
        %v4337 = vsub.s32 0, %v4336
        %v4338 = vrot.slane %v3514, %v4337
        %v4339 = vlaneseq
        %v4340 = vshrl.u32 %v4339, 7
        %v4341 = vsub.s32 0, %v4340
        %v4342 = vrot.slane %v3515, %v4341
        %v4343 = vlaneseq
        %v4344 = vshrl.u32 %v4343, 7
        %v4345 = vsub.s32 0, %v4344
        %v4346 = vrot.slane %v3516, %v4345
        %v4347 = vlaneseq
        %v4348 = vshrl.u32 %v4347, 7
        %v4349 = vsub.s32 0, %v4348
        %v4350 = vrot.slane %v3517, %v4349
        %v4351 = vlaneseq
        %v4352 = vshrl.u32 %v4351, 7
        %v4353 = vsub.s32 0, %v4352
        %v4354 = vrot.slane %v3518, %v4353
        %v4355 = vlaneseq
        %v4356 = vshrl.u32 %v4355, 7
        %v4357 = vsub.s32 0, %v4356
        %v4358 = vrot.slane %v3519, %v4357
        %v4359 = vlaneseq
        %v4360 = vshrl.u32 %v4359, 7
        %v4361 = vsub.s32 0, %v4360
        %v4362 = vrot.slane %v3520, %v4361
        %v4363 = vlaneseq
        %v4364 = vshrl.u32 %v4363, 7
        %v4365 = vsub.s32 0, %v4364
        %v4366 = vrot.slane %v3521, %v4365
        %v4367 = vlaneseq
        %v4368 = vshrl.u32 %v4367, 7
        %v4369 = vsub.s32 0, %v4368
        %v4370 = vrot.slane %v3522, %v4369
        %v4371 = vlaneseq
        %v4372 = vshrl.u32 %v4371, 7
        %v4373 = vsub.s32 0, %v4372
        %v4374 = vrot.slane %v3523, %v4373
        %v4375 = vlaneseq
        %v4376 = vshrl.u32 %v4375, 7
        %v4377 = vsub.s32 0, %v4376
        %v4378 = vrot.slane %v3524, %v4377
        %v4379 = vlaneseq
        %v4380 = vshrl.u32 %v4379, 7
        %v4381 = vsub.s32 0, %v4380
        %v4382 = vrot.slane %v3525, %v4381
        %v4383 = vlaneseq
        %v4384 = vshrl.u32 %v4383, 7
        %v4385 = vsub.s32 0, %v4384
        %v4386 = vrot.slane %v3526, %v4385
        %v4387 = vlaneseq
        %v4388 = vshrl.u32 %v4387, 7
        %v4389 = vsub.s32 0, %v4388
        %v4390 = vrot.slane %v3527, %v4389
        %v4391 = vlaneseq
        %v4392 = vshrl.u32 %v4391, 7
        %v4393 = vsub.s32 0, %v4392
        %v4394 = vrot.slane %v3528, %v4393
        %v4395 = vlaneseq
        %v4396 = vshrl.u32 %v4395, 7
        %v4397 = vsub.s32 0, %v4396
        %v4398 = vrot.slane %v3529, %v4397
        %v4399 = vlaneseq
        %v4400 = vshrl.u32 %v4399, 7
        %v4401 = vsub.s32 0, %v4400
        %v4402 = vrot.slane %v3530, %v4401
        %v4403 = vlaneseq
        %v4404 = vshrl.u32 %v4403, 7
        %v4405 = vsub.s32 0, %v4404
        %v4406 = vrot.slane %v3531, %v4405
        %v4407 = vlaneseq
        %v4408 = vshrl.u32 %v4407, 7
        %v4409 = vsub.s32 0, %v4408
        %v4410 = vrot.slane %v3532, %v4409
        %v4411 = vlaneseq
        %v4412 = vshrl.u32 %v4411, 7
        %v4413 = vsub.s32 0, %v4412
        %v4414 = vrot.slane %v3533, %v4413
        %v4415 = vlaneseq
        %v4416 = vshrl.u32 %v4415, 7
        %v4417 = vsub.s32 0, %v4416
        %v4418 = vrot.slane %v3534, %v4417
        %v4419 = vlaneseq
        %v4420 = vshrl.u32 %v4419, 7
        %v4421 = vsub.s32 0, %v4420
        %v4422 = vrot.slane %v3535, %v4421
        %v4423 = vlaneseq
        %v4424 = vshrl.u32 %v4423, 7
        %v4425 = vsub.s32 0, %v4424
        %v4426 = vrot.slane %v3536, %v4425
        %v4427 = vlaneseq
        %v4428 = vshrl.u32 %v4427, 7
        %v4429 = vsub.s32 0, %v4428
        %v4430 = vrot.slane %v3537, %v4429
        %v4431 = vlaneseq
        %v4432 = vshrl.u32 %v4431, 7
        %v4433 = vsub.s32 0, %v4432
        %v4434 = vrot.slane %v3538, %v4433
        %v4435 = vlaneseq
        %v4436 = vshrl.u32 %v4435, 7
        %v4437 = vsub.s32 0, %v4436
        %v4438 = vrot.slane %v3539, %v4437
        %v4439 = vlaneseq
        %v4440 = vshrl.u32 %v4439, 7
        %v4441 = vsub.s32 0, %v4440
        %v4442 = vrot.slane %v3540, %v4441
        %v4443 = vlaneseq
        %v4444 = vshrl.u32 %v4443, 7
        %v4445 = vsub.s32 0, %v4444
        %v4446 = vrot.slane %v3541, %v4445
        %v4447 = vlaneseq
        %v4448 = vshrl.u32 %v4447, 7
        %v4449 = vsub.s32 0, %v4448
        %v4450 = vrot.slane %v3542, %v4449
        %v4451 = vlaneseq
        %v4452 = vshrl.u32 %v4451, 7
        %v4453 = vsub.s32 0, %v4452
        %v4454 = vrot.slane %v3543, %v4453
        %v4455 = vlaneseq
        %v4456 = vshrl.u32 %v4455, 7
        %v4457 = vsub.s32 0, %v4456
        %v4458 = vrot.slane %v3544, %v4457
        %v4459 = vlaneseq
        %v4460 = vshrl.u32 %v4459, 7
        %v4461 = vsub.s32 0, %v4460
        %v4462 = vrot.slane %v3545, %v4461
        %v4463 = vlaneseq
        %v4464 = vshrl.u32 %v4463, 7
        %v4465 = vsub.s32 0, %v4464
        %v4466 = vrot.slane %v3546, %v4465
        %v4467 = vlaneseq
        %v4468 = vshrl.u32 %v4467, 7
        %v4469 = vsub.s32 0, %v4468
        %v4470 = vrot.slane %v3547, %v4469
        %v4471 = vlaneseq
        %v4472 = vshrl.u32 %v4471, 7
        %v4473 = vsub.s32 0, %v4472
        %v4474 = vrot.slane %v3548, %v4473
        %v4475 = vlaneseq
        %v4476 = vshrl.u32 %v4475, 7
        %v4477 = vsub.s32 0, %v4476
        %v4478 = vrot.slane %v3549, %v4477
        %v4479 = vlaneseq
        %v4480 = vshrl.u32 %v4479, 7
        %v4481 = vsub.s32 0, %v4480
        %v4482 = vrot.slane %v3550, %v4481
        %v4483 = vlaneseq
        %v4484 = vshrl.u32 %v4483, 7
        %v4485 = vsub.s32 0, %v4484
        %v4486 = vrot.slane %v3551, %v4485
        %v4487 = vlaneseq
        %v4488 = vshrl.u32 %v4487, 7
        %v4489 = vsub.s32 0, %v4488
        %v4490 = vrot.slane %v3552, %v4489
        %v4491 = vlaneseq
        %v4492 = vshrl.u32 %v4491, 7
        %v4493 = vsub.s32 0, %v4492
        %v4494 = vrot.slane %v3553, %v4493
        %v4495 = vlaneseq
        %v4496 = vshrl.u32 %v4495, 7
        %v4497 = vsub.s32 0, %v4496
        %v4498 = vrot.slane %v3554, %v4497
        %v4499 = vlaneseq
        %v4500 = vshrl.u32 %v4499, 7
        %v4501 = vsub.s32 0, %v4500
        %v4502 = vrot.slane %v3555, %v4501
        %v4503 = vlaneseq
        %v4504 = vshrl.u32 %v4503, 7
        %v4505 = vsub.s32 0, %v4504
        %v4506 = vrot.slane %v3556, %v4505
        %v4507 = vlaneseq
        %v4508 = vshrl.u32 %v4507, 7
        %v4509 = vsub.s32 0, %v4508
        %v4510 = vrot.slane %v3557, %v4509
        %v4511 = vlaneseq
        %v4512 = vshrl.u32 %v4511, 7
        %v4513 = vsub.s32 0, %v4512
        %v4514 = vrot.slane %v3558, %v4513
        %v4515 = vlaneseq
        %v4516 = vshrl.u32 %v4515, 7
        %v4517 = vsub.s32 0, %v4516
        %v4518 = vrot.slane %v3559, %v4517
        %v4519 = vlaneseq
        %v4520 = vshrl.u32 %v4519, 7
        %v4521 = vsub.s32 0, %v4520
        %v4522 = vrot.slane %v3560, %v4521
        %v4523 = vlaneseq
        %v4524 = vshrl.u32 %v4523, 7
        %v4525 = vsub.s32 0, %v4524
        %v4526 = vrot.slane %v3561, %v4525
        %v4527 = vlaneseq
        %v4528 = vshrl.u32 %v4527, 7
        %v4529 = vsub.s32 0, %v4528
        %v4530 = vrot.slane %v3562, %v4529
        %v4531 = vlaneseq
        %v4532 = vshrl.u32 %v4531, 7
        %v4533 = vsub.s32 0, %v4532
        %v4534 = vrot.slane %v3563, %v4533
        %v4535 = vlaneseq
        %v4536 = vshrl.u32 %v4535, 7
        %v4537 = vsub.s32 0, %v4536
        %v4538 = vrot.slane %v3564, %v4537
        %v4539 = vlaneseq
        %v4540 = vshrl.u32 %v4539, 7
        %v4541 = vsub.s32 0, %v4540
        %v4542 = vrot.slane %v3565, %v4541
        %v4543 = vlaneseq
        %v4544 = vshrl.u32 %v4543, 7
        %v4545 = vsub.s32 0, %v4544
        %v4546 = vrot.slane %v3566, %v4545
        %v4547 = vlaneseq
        %v4548 = vshrl.u32 %v4547, 7
        %v4549 = vsub.s32 0, %v4548
        %v4550 = vrot.slane %v3567, %v4549
        %v4551 = vlaneseq
        %v4552 = vshrl.u32 %v4551, 7
        %v4553 = vsub.s32 0, %v4552
        %v4554 = vrot.slane %v3568, %v4553
        %v4555 = vlaneseq
        %v4556 = vshrl.u32 %v4555, 7
        %v4557 = vsub.s32 0, %v4556
        %v4558 = vrot.slane %v3569, %v4557
        %v4559 = vlaneseq
        %v4560 = vshrl.u32 %v4559, 7
        %v4561 = vsub.s32 0, %v4560
        %v4562 = vrot.slane %v3570, %v4561
        %v4563 = vlaneseq
        %v4564 = vshrl.u32 %v4563, 7
        %v4565 = vsub.s32 0, %v4564
        %v4566 = vrot.slane %v3571, %v4565
        %v4567 = vlaneseq
        %v4568 = vshrl.u32 %v4567, 7
        %v4569 = vsub.s32 0, %v4568
        %v4570 = vrot.slane %v3572, %v4569
        %v4571 = vlaneseq
        %v4572 = vshrl.u32 %v4571, 7
        %v4573 = vsub.s32 0, %v4572
        %v4574 = vrot.slane %v3573, %v4573
        %v4575 = vlaneseq
        %v4576 = vshrl.u32 %v4575, 7
        %v4577 = vsub.s32 0, %v4576
        %v4578 = vrot.slane %v3574, %v4577
        %v4579 = vlaneseq
        %v4580 = vshrl.u32 %v4579, 7
        %v4581 = vsub.s32 0, %v4580
        %v4582 = vrot.slane %v3575, %v4581
        %v4583 = vlaneseq
        %v4584 = vshrl.u32 %v4583, 7
        %v4585 = vsub.s32 0, %v4584
        %v4586 = vrot.slane %v3576, %v4585
        %v4587 = vlaneseq
        %v4588 = vshrl.u32 %v4587, 7
        %v4589 = vsub.s32 0, %v4588
        %v4590 = vrot.slane %v3577, %v4589
        %v4591 = vlaneseq
        %v4592 = vshrl.u32 %v4591, 7
        %v4593 = vsub.s32 0, %v4592
        %v4594 = vrot.slane %v3578, %v4593
        %v4595 = vlaneseq
        %v4596 = vshrl.u32 %v4595, 7
        %v4597 = vsub.s32 0, %v4596
        %v4598 = vrot.slane %v3579, %v4597
        %v4599 = vlaneseq
        %v4600 = vshrl.u32 %v4599, 7
        %v4601 = vsub.s32 0, %v4600
        %v4602 = vrot.slane %v3580, %v4601
        %v4603 = vlaneseq
        %v4604 = vshrl.u32 %v4603, 7
        %v4605 = vsub.s32 0, %v4604
        %v4606 = vrot.slane %v3581, %v4605
        %v4607 = vlaneseq
        %v4608 = vshrl.u32 %v4607, 7
        %v4609 = vsub.s32 0, %v4608
        %v4610 = vrot.slane %v3582, %v4609
        %v4611 = vlaneseq
        %v4612 = vshrl.u32 %v4611, 7
        %v4613 = vsub.s32 0, %v4612
        %v4614 = vrot.slane %v3583, %v4613
        %v4615 = vlaneseq
        %v4616 = vshrl.u32 %v4615, 7
        %v4617 = vsub.s32 0, %v4616
        %v4618 = vrot.slane %v3584, %v4617
        %v4619 = vlaneseq
        %v4620 = vshrl.u32 %v4619, 7
        %v4621 = vsub.s32 0, %v4620
        %v4622 = vrot.slane %v3585, %v4621
        %v4623 = vlaneseq
        %v4624 = vshrl.u32 %v4623, 7
        %v4625 = vsub.s32 0, %v4624
        %v4626 = vrot.slane %v3586, %v4625
        %v4627 = vlaneseq
        %v4628 = vshrl.u32 %v4627, 7
        %v4629 = vsub.s32 0, %v4628
        %v4630 = vrot.slane %v3587, %v4629
        %v4631 = vlaneseq
        %v4632 = vshrl.u32 %v4631, 7
        %v4633 = vsub.s32 0, %v4632
        %v4634 = vrot.slane %v3588, %v4633
        %v4635 = vlaneseq
        %v4636 = vshrl.u32 %v4635, 7
        %v4637 = vsub.s32 0, %v4636
        %v4638 = vrot.slane %v3589, %v4637
        %v4639 = vlaneseq
        %v4640 = vshrl.u32 %v4639, 7
        %v4641 = vsub.s32 0, %v4640
        %v4642 = vrot.slane %v3590, %v4641
        %v4643 = vlaneseq
        %v4644 = vshrl.u32 %v4643, 7
        %v4645 = vsub.s32 0, %v4644
        %v4646 = vrot.slane %v3591, %v4645
        %v4647 = vlaneseq
        %v4648 = vshrl.u32 %v4647, 7
        %v4649 = vsub.s32 0, %v4648
        %v4650 = vrot.slane %v3592, %v4649
        %v4651 = vlaneseq
        %v4652 = vshrl.u32 %v4651, 7
        %v4653 = vsub.s32 0, %v4652
        %v4654 = vrot.slane %v3593, %v4653
        %v4655 = vlaneseq
        %v4656 = vshrl.u32 %v4655, 7
        %v4657 = vsub.s32 0, %v4656
        %v4658 = vrot.slane %v3594, %v4657
        %v4659 = vlaneseq
        %v4660 = vshrl.u32 %v4659, 7
        %v4661 = vsub.s32 0, %v4660
        %v4662 = vrot.slane %v3595, %v4661
        %v4663 = vlaneseq
        %v4664 = vshrl.u32 %v4663, 7
        %v4665 = vsub.s32 0, %v4664
        %v4666 = vrot.slane %v3596, %v4665
        %v4667 = vlaneseq
        %v4668 = vshrl.u32 %v4667, 7
        %v4669 = vsub.s32 0, %v4668
        %v4670 = vrot.slane %v3597, %v4669
        %v4671 = vlaneseq
        %v4672 = vshrl.u32 %v4671, 7
        %v4673 = vsub.s32 0, %v4672
        %v4674 = vrot.slane %v3598, %v4673
        %v4675 = vlaneseq
        %v4676 = vshrl.u32 %v4675, 7
        %v4677 = vsub.s32 0, %v4676
        %v4678 = vrot.slane %v3599, %v4677
        %v4679 = vlaneseq
        %v4680 = vshrl.u32 %v4679, 7
        %v4681 = vsub.s32 0, %v4680
        %v4682 = vrot.slane %v3600, %v4681
        %v4683 = vlaneseq
        %v4684 = vshrl.u32 %v4683, 7
        %v4685 = vsub.s32 0, %v4684
        %v4686 = vrot.slane %v3601, %v4685
        %v4687 = vlaneseq
        %v4688 = vshrl.u32 %v4687, 7
        %v4689 = vsub.s32 0, %v4688
        %v4690 = vrot.slane %v3602, %v4689
        %v4691 = vlaneseq
        %v4692 = vshrl.u32 %v4691, 7
        %v4693 = vsub.s32 0, %v4692
        %v4694 = vrot.slane %v3603, %v4693
        %v4695 = vlaneseq
        %v4696 = vshrl.u32 %v4695, 7
        %v4697 = vsub.s32 0, %v4696
        %v4698 = vrot.slane %v3604, %v4697
        %v4699 = vlaneseq
        %v4700 = vshrl.u32 %v4699, 7
        %v4701 = vsub.s32 0, %v4700
        %v4702 = vrot.slane %v3605, %v4701
        %v4703 = vlaneseq
        %v4704 = vshrl.u32 %v4703, 7
        %v4705 = vsub.s32 0, %v4704
        %v4706 = vrot.slane %v3606, %v4705
        %v4707 = vlaneseq
        %v4708 = vshrl.u32 %v4707, 7
        %v4709 = vsub.s32 0, %v4708
        %v4710 = vrot.slane %v3607, %v4709
        %v4711 = vlaneseq
        %v4712 = vshrl.u32 %v4711, 7
        %v4713 = vsub.s32 0, %v4712
        %v4714 = vrot.slane %v3608, %v4713
        %v4715 = vlaneseq
        %v4716 = vshrl.u32 %v4715, 7
        %v4717 = vsub.s32 0, %v4716
        %v4718 = vrot.slane %v3609, %v4717
        %v4719 = vlaneseq
        %v4720 = vshrl.u32 %v4719, 7
        %v4721 = vsub.s32 0, %v4720
        %v4722 = vrot.slane %v3610, %v4721
        %v4723 = vlaneseq
        %v4724 = vshrl.u32 %v4723, 7
        %v4725 = vsub.s32 0, %v4724
        %v4726 = vrot.slane %v3611, %v4725
        %v4727 = vlaneseq
        %v4728 = vshrl.u32 %v4727, 7
        %v4729 = vsub.s32 0, %v4728
        %v4730 = vrot.slane %v3612, %v4729
        %v4731 = vlaneseq
        %v4732 = vshrl.u32 %v4731, 7
        %v4733 = vsub.s32 0, %v4732
        %v4734 = vrot.slane %v3613, %v4733
        %v4735 = vlaneseq
        %v4736 = vshrl.u32 %v4735, 7
        %v4737 = vsub.s32 0, %v4736
        %v4738 = vrot.slane %v3614, %v4737
        %v4739 = vlaneseq
        %v4740 = vshrl.u32 %v4739, 7
        %v4741 = vsub.s32 0, %v4740
        %v4742 = vrot.slane %v3615, %v4741
        %v4743 = vlaneseq
        %v4744 = vshrl.u32 %v4743, 7
        %v4745 = vsub.s32 0, %v4744
        %v4746 = vrot.slane %v3616, %v4745
        %v4747 = vlaneseq
        %v4748 = vshrl.u32 %v4747, 7
        %v4749 = vsub.s32 0, %v4748
        %v4750 = vrot.slane %v3617, %v4749
        %v4751 = vlaneseq
        %v4752 = vshrl.u32 %v4751, 7
        %v4753 = vsub.s32 0, %v4752
        %v4754 = vrot.slane %v3618, %v4753
        %v4755 = vlaneseq
        %v4756 = vshrl.u32 %v4755, 7
        %v4757 = vsub.s32 0, %v4756
        %v4758 = vrot.slane %v3619, %v4757
        %v4759 = vlaneseq
        %v4760 = vshrl.u32 %v4759, 7
        %v4761 = vsub.s32 0, %v4760
        %v4762 = vrot.slane %v3620, %v4761
        %v4763 = vlaneseq
        %v4764 = vshrl.u32 %v4763, 7
        %v4765 = vsub.s32 0, %v4764
        %v4766 = vrot.slane %v3621, %v4765
        %v4767 = vlaneseq
        %v4768 = vshrl.u32 %v4767, 7
        %v4769 = vsub.s32 0, %v4768
        %v4770 = vrot.slane %v3622, %v4769
        %v4771 = vlaneseq
        %v4772 = vshrl.u32 %v4771, 7
        %v4773 = vsub.s32 0, %v4772
        %v4774 = vrot.slane %v3623, %v4773
        %v4775 = vlaneseq
        %v4776 = vshrl.u32 %v4775, 7
        %v4777 = vsub.s32 0, %v4776
        %v4778 = vrot.slane %v3624, %v4777
        %v4779 = vlaneseq
        %v4780 = vshrl.u32 %v4779, 7
        %v4781 = vsub.s32 0, %v4780
        %v4782 = vrot.slane %v3625, %v4781
        %v4783 = vlaneseq
        %v4784 = vshrl.u32 %v4783, 7
        %v4785 = vsub.s32 0, %v4784
        %v4786 = vrot.slane %v3626, %v4785
        %v4787 = vlaneseq
        %v4788 = vshrl.u32 %v4787, 7
        %v4789 = vsub.s32 0, %v4788
        %v4790 = vrot.slane %v3627, %v4789
        %v4791 = vlaneseq
        %v4792 = vshrl.u32 %v4791, 7
        %v4793 = vsub.s32 0, %v4792
        %v4794 = vrot.slane %v3628, %v4793
        %v4795 = vlaneseq
        %v4796 = vshrl.u32 %v4795, 7
        %v4797 = vsub.s32 0, %v4796
        %v4798 = vrot.slane %v3629, %v4797
        %v4799 = vlaneseq
        %v4800 = vshrl.u32 %v4799, 7
        %v4801 = vsub.s32 0, %v4800
        %v4802 = vrot.slane %v3630, %v4801
        %v4803 = vlaneseq
        %v4804 = vshrl.u32 %v4803, 7
        %v4805 = vsub.s32 0, %v4804
        %v4806 = vrot.slane %v3631, %v4805
        %v4807 = vlaneseq
        %v4808 = vshrl.u32 %v4807, 7
        %v4809 = vsub.s32 0, %v4808
        %v4810 = vrot.slane %v3632, %v4809
        %v4811 = vlaneseq
        %v4812 = vshrl.u32 %v4811, 7
        %v4813 = vsub.s32 0, %v4812
        %v4814 = vrot.slane %v3633, %v4813
        %v4815 = vlaneseq
        %v4816 = vshrl.u32 %v4815, 7
        %v4817 = vsub.s32 0, %v4816
        %v4818 = vrot.slane %v3634, %v4817
        %v4819 = vlaneseq
        %v4820 = vshrl.u32 %v4819, 7
        %v4821 = vsub.s32 0, %v4820
        %v4822 = vrot.slane %v3635, %v4821
        %v4823 = vlaneseq
        %v4824 = vshrl.u32 %v4823, 7
        %v4825 = vsub.s32 0, %v4824
        %v4826 = vrot.slane %v3636, %v4825
        %v4827 = vlaneseq
        %v4828 = vshrl.u32 %v4827, 7
        %v4829 = vsub.s32 0, %v4828
        %v4830 = vrot.slane %v3637, %v4829
        %v4831 = vlaneseq
        %v4832 = vshrl.u32 %v4831, 7
        %v4833 = vsub.s32 0, %v4832
        %v4834 = vrot.slane %v3638, %v4833
        %v4835 = vlaneseq
        %v4836 = vshrl.u32 %v4835, 7
        %v4837 = vsub.s32 0, %v4836
        %v4838 = vrot.slane %v3639, %v4837
        %v4839 = vlaneseq
        %v4840 = vshrl.u32 %v4839, 7
        %v4841 = vsub.s32 0, %v4840
        %v4842 = vrot.slane %v3640, %v4841
        %v4843 = vlaneseq
        %v4844 = vshrl.u32 %v4843, 7
        %v4845 = vsub.s32 0, %v4844
        %v4846 = vrot.slane %v3641, %v4845
        %v4847 = vlaneseq
        %v4848 = vshrl.u32 %v4847, 7
        %v4849 = vsub.s32 0, %v4848
        %v4850 = vrot.slane %v3642, %v4849
        %v4851 = vlaneseq
        %v4852 = vshrl.u32 %v4851, 7
        %v4853 = vsub.s32 0, %v4852
        %v4854 = vrot.slane %v3643, %v4853
        %v4855 = vlaneseq
        %v4856 = vshrl.u32 %v4855, 7
        %v4857 = vsub.s32 0, %v4856
        %v4858 = vrot.slane %v3644, %v4857
        %v4859 = vlaneseq
        %v4860 = vshrl.u32 %v4859, 7
        %v4861 = vsub.s32 0, %v4860
        %v4862 = vrot.slane %v3645, %v4861
        %v4863 = vlaneseq
        %v4864 = vshrl.u32 %v4863, 7
        %v4865 = vsub.s32 0, %v4864
        %v4866 = vrot.slane %v3646, %v4865
        %v4867 = vlaneseq
        %v4868 = vshrl.u32 %v4867, 7
        %v4869 = vsub.s32 0, %v4868
        %v4870 = vrot.slane %v3647, %v4869
        %v4871 = vlaneseq
        %v4872 = vshrl.u32 %v4871, 7
        %v4873 = vsub.s32 0, %v4872
        %v4874 = vrot.slane %v3648, %v4873
        %v4875 = vlaneseq
        %v4876 = vshrl.u32 %v4875, 7
        %v4877 = vsub.s32 0, %v4876
        %v4878 = vrot.slane %v3649, %v4877
        %v4879 = vlaneseq
        %v4880 = vshrl.u32 %v4879, 7
        %v4881 = vsub.s32 0, %v4880
        %v4882 = vrot.slane %v3650, %v4881
        %v4883 = vlaneseq
        %v4884 = vshrl.u32 %v4883, 7
        %v4885 = vsub.s32 0, %v4884
        %v4886 = vrot.slane %v3651, %v4885
        %v4887 = vlaneseq
        %v4888 = vshrl.u32 %v4887, 7
        %v4889 = vsub.s32 0, %v4888
        %v4890 = vrot.slane %v3652, %v4889
        %v4891 = vlaneseq
        %v4892 = vshrl.u32 %v4891, 7
        %v4893 = vsub.s32 0, %v4892
        %v4894 = vrot.slane %v3653, %v4893
        %v4895 = vlaneseq
        %v4896 = vshrl.u32 %v4895, 7
        %v4897 = vsub.s32 0, %v4896
        %v4898 = vrot.slane %v3654, %v4897
        %v4899 = vlaneseq
        %v4900 = vshrl.u32 %v4899, 7
        %v4901 = vsub.s32 0, %v4900
        %v4902 = vrot.slane %v3655, %v4901
        %v4903 = vlaneseq
        %v4904 = vshrl.u32 %v4903, 7
        %v4905 = vsub.s32 0, %v4904
        %v4906 = vrot.slane %v3656, %v4905
        %v4907 = vlaneseq
        %v4908 = vshrl.u32 %v4907, 7
        %v4909 = vsub.s32 0, %v4908
        %v4910 = vrot.slane %v3657, %v4909
        %v4911 = vlaneseq
        %v4912 = vshrl.u32 %v4911, 7
        %v4913 = vsub.s32 0, %v4912
        %v4914 = vrot.slane %v3658, %v4913
        %v4915 = vlaneseq
        %v4916 = vshrl.u32 %v4915, 7
        %v4917 = vsub.s32 0, %v4916
        %v4918 = vrot.slane %v3659, %v4917
        %v4919 = vlaneseq
        %v4920 = vshrl.u32 %v4919, 7
        %v4921 = vsub.s32 0, %v4920
        %v4922 = vrot.slane %v3660, %v4921
        %v4923 = vlaneseq
        %v4924 = vshrl.u32 %v4923, 7
        %v4925 = vsub.s32 0, %v4924
        %v4926 = vrot.slane %v3661, %v4925
        %v4927 = vlaneseq
        %v4928 = vshrl.u32 %v4927, 7
        %v4929 = vsub.s32 0, %v4928
        %v4930 = vrot.slane %v3662, %v4929
        %v4931 = vlaneseq
        %v4932 = vshrl.u32 %v4931, 7
        %v4933 = vsub.s32 0, %v4932
        %v4934 = vrot.slane %v3663, %v4933
        %v4935 = vlaneseq
        %v4936 = vshrl.u32 %v4935, 7
        %v4937 = vsub.s32 0, %v4936
        %v4938 = vrot.slane %v3664, %v4937
        %v4939 = vlaneseq
        %v4940 = vshrl.u32 %v4939, 7
        %v4941 = vsub.s32 0, %v4940
        %v4942 = vrot.slane %v3665, %v4941
        %v4943 = vlaneseq
        %v4944 = vshrl.u32 %v4943, 7
        %v4945 = vsub.s32 0, %v4944
        %v4946 = vrot.slane %v3666, %v4945
        %vm4947 = vcmask 1041409
        %v4948 = vsel %vm4947, %v3930, %v3926
        %vm4949 = vcmask 1042434
        %v4950 = vsel %vm4949, %v3934, %v4948
        %vm4951 = vcmask 1043459
        %v4952 = vsel %vm4951, %v3938, %v4950
        %vm4953 = vcmask 1044484
        %v4954 = vsel %vm4953, %v3942, %v4952
        %vm4955 = vcmask 1045509
        %v4956 = vsel %vm4955, %v3946, %v4954
        %vm4957 = vcmask 1046534
        %v4958 = vsel %vm4957, %v3950, %v4956
        %vm4959 = vcmask 1047559
        %v4960 = vsel %vm4959, %v3954, %v4958
        %v4961 = vsel %vm4947, %v3962, %v3958
        %v4962 = vsel %vm4949, %v3966, %v4961
        %v4963 = vsel %vm4951, %v3970, %v4962
        %v4964 = vsel %vm4953, %v3974, %v4963
        %v4965 = vsel %vm4955, %v3978, %v4964
        %v4966 = vsel %vm4957, %v3982, %v4965
        %v4967 = vsel %vm4959, %v3986, %v4966
        %v4968 = vsel %vm4947, %v3994, %v3990
        %v4969 = vsel %vm4949, %v3998, %v4968
        %v4970 = vsel %vm4951, %v4002, %v4969
        %v4971 = vsel %vm4953, %v4006, %v4970
        %v4972 = vsel %vm4955, %v4010, %v4971
        %v4973 = vsel %vm4957, %v4014, %v4972
        %v4974 = vsel %vm4959, %v4018, %v4973
        %v4975 = vsel %vm4947, %v4026, %v4022
        %v4976 = vsel %vm4949, %v4030, %v4975
        %v4977 = vsel %vm4951, %v4034, %v4976
        %v4978 = vsel %vm4953, %v4038, %v4977
        %v4979 = vsel %vm4955, %v4042, %v4978
        %v4980 = vsel %vm4957, %v4046, %v4979
        %v4981 = vsel %vm4959, %v4050, %v4980
        %v4982 = vsel %vm4947, %v4058, %v4054
        %v4983 = vsel %vm4949, %v4062, %v4982
        %v4984 = vsel %vm4951, %v4066, %v4983
        %v4985 = vsel %vm4953, %v4070, %v4984
        %v4986 = vsel %vm4955, %v4074, %v4985
        %v4987 = vsel %vm4957, %v4078, %v4986
        %v4988 = vsel %vm4959, %v4082, %v4987
        %v4989 = vsel %vm4947, %v4090, %v4086
        %v4990 = vsel %vm4949, %v4094, %v4989
        %v4991 = vsel %vm4951, %v4098, %v4990
        %v4992 = vsel %vm4953, %v4102, %v4991
        %v4993 = vsel %vm4955, %v4106, %v4992
        %v4994 = vsel %vm4957, %v4110, %v4993
        %v4995 = vsel %vm4959, %v4114, %v4994
        %v4996 = vsel %vm4947, %v4122, %v4118
        %v4997 = vsel %vm4949, %v4126, %v4996
        %v4998 = vsel %vm4951, %v4130, %v4997
        %v4999 = vsel %vm4953, %v4134, %v4998
        %v5000 = vsel %vm4955, %v4138, %v4999
        %v5001 = vsel %vm4957, %v4142, %v5000
        %v5002 = vsel %vm4959, %v4146, %v5001
        %v5003 = vsel %vm4947, %v4154, %v4150
        %v5004 = vsel %vm4949, %v4158, %v5003
        %v5005 = vsel %vm4951, %v4162, %v5004
        %v5006 = vsel %vm4953, %v4166, %v5005
        %v5007 = vsel %vm4955, %v4170, %v5006
        %v5008 = vsel %vm4957, %v4174, %v5007
        %v5009 = vsel %vm4959, %v4178, %v5008
        %v5010 = vsel %vm4947, %v4186, %v4182
        %v5011 = vsel %vm4949, %v4190, %v5010
        %v5012 = vsel %vm4951, %v4194, %v5011
        %v5013 = vsel %vm4953, %v4198, %v5012
        %v5014 = vsel %vm4955, %v4202, %v5013
        %v5015 = vsel %vm4957, %v4206, %v5014
        %v5016 = vsel %vm4959, %v4210, %v5015
        %v5017 = vsel %vm4947, %v4218, %v4214
        %v5018 = vsel %vm4949, %v4222, %v5017
        %v5019 = vsel %vm4951, %v4226, %v5018
        %v5020 = vsel %vm4953, %v4230, %v5019
        %v5021 = vsel %vm4955, %v4234, %v5020
        %v5022 = vsel %vm4957, %v4238, %v5021
        %v5023 = vsel %vm4959, %v4242, %v5022
        %v5024 = vsel %vm4947, %v4250, %v4246
        %v5025 = vsel %vm4949, %v4254, %v5024
        %v5026 = vsel %vm4951, %v4258, %v5025
        %v5027 = vsel %vm4953, %v4262, %v5026
        %v5028 = vsel %vm4955, %v4266, %v5027
        %v5029 = vsel %vm4957, %v4270, %v5028
        %v5030 = vsel %vm4959, %v4274, %v5029
        %v5031 = vsel %vm4947, %v4282, %v4278
        %v5032 = vsel %vm4949, %v4286, %v5031
        %v5033 = vsel %vm4951, %v4290, %v5032
        %v5034 = vsel %vm4953, %v4294, %v5033
        %v5035 = vsel %vm4955, %v4298, %v5034
        %v5036 = vsel %vm4957, %v4302, %v5035
        %v5037 = vsel %vm4959, %v4306, %v5036
        %v5038 = vsel %vm4947, %v4314, %v4310
        %v5039 = vsel %vm4949, %v4318, %v5038
        %v5040 = vsel %vm4951, %v4322, %v5039
        %v5041 = vsel %vm4953, %v4326, %v5040
        %v5042 = vsel %vm4955, %v4330, %v5041
        %v5043 = vsel %vm4957, %v4334, %v5042
        %v5044 = vsel %vm4959, %v4338, %v5043
        %v5045 = vsel %vm4947, %v4346, %v4342
        %v5046 = vsel %vm4949, %v4350, %v5045
        %v5047 = vsel %vm4951, %v4354, %v5046
        %v5048 = vsel %vm4953, %v4358, %v5047
        %v5049 = vsel %vm4955, %v4362, %v5048
        %v5050 = vsel %vm4957, %v4366, %v5049
        %v5051 = vsel %vm4959, %v4370, %v5050
        %v5052 = vsel %vm4947, %v4378, %v4374
        %v5053 = vsel %vm4949, %v4382, %v5052
        %v5054 = vsel %vm4951, %v4386, %v5053
        %v5055 = vsel %vm4953, %v4390, %v5054
        %v5056 = vsel %vm4955, %v4394, %v5055
        %v5057 = vsel %vm4957, %v4398, %v5056
        %v5058 = vsel %vm4959, %v4402, %v5057
        %v5059 = vsel %vm4947, %v4410, %v4406
        %v5060 = vsel %vm4949, %v4414, %v5059
        %v5061 = vsel %vm4951, %v4418, %v5060
        %v5062 = vsel %vm4953, %v4422, %v5061
        %v5063 = vsel %vm4955, %v4426, %v5062
        %v5064 = vsel %vm4957, %v4430, %v5063
        %v5065 = vsel %vm4959, %v4434, %v5064
        %v5066 = vsel %vm4947, %v4442, %v4438
        %v5067 = vsel %vm4949, %v4446, %v5066
        %v5068 = vsel %vm4951, %v4450, %v5067
        %v5069 = vsel %vm4953, %v4454, %v5068
        %v5070 = vsel %vm4955, %v4458, %v5069
        %v5071 = vsel %vm4957, %v4462, %v5070
        %v5072 = vsel %vm4959, %v4466, %v5071
        %v5073 = vsel %vm4947, %v4474, %v4470
        %v5074 = vsel %vm4949, %v4478, %v5073
        %v5075 = vsel %vm4951, %v4482, %v5074
        %v5076 = vsel %vm4953, %v4486, %v5075
        %v5077 = vsel %vm4955, %v4490, %v5076
        %v5078 = vsel %vm4957, %v4494, %v5077
        %v5079 = vsel %vm4959, %v4498, %v5078
        %v5080 = vsel %vm4947, %v4506, %v4502
        %v5081 = vsel %vm4949, %v4510, %v5080
        %v5082 = vsel %vm4951, %v4514, %v5081
        %v5083 = vsel %vm4953, %v4518, %v5082
        %v5084 = vsel %vm4955, %v4522, %v5083
        %v5085 = vsel %vm4957, %v4526, %v5084
        %v5086 = vsel %vm4959, %v4530, %v5085
        %v5087 = vsel %vm4947, %v4538, %v4534
        %v5088 = vsel %vm4949, %v4542, %v5087
        %v5089 = vsel %vm4951, %v4546, %v5088
        %v5090 = vsel %vm4953, %v4550, %v5089
        %v5091 = vsel %vm4955, %v4554, %v5090
        %v5092 = vsel %vm4957, %v4558, %v5091
        %v5093 = vsel %vm4959, %v4562, %v5092
        %v5094 = vsel %vm4947, %v4570, %v4566
        %v5095 = vsel %vm4949, %v4574, %v5094
        %v5096 = vsel %vm4951, %v4578, %v5095
        %v5097 = vsel %vm4953, %v4582, %v5096
        %v5098 = vsel %vm4955, %v4586, %v5097
        %v5099 = vsel %vm4957, %v4590, %v5098
        %v5100 = vsel %vm4959, %v4594, %v5099
        %v5101 = vsel %vm4947, %v4602, %v4598
        %v5102 = vsel %vm4949, %v4606, %v5101
        %v5103 = vsel %vm4951, %v4610, %v5102
        %v5104 = vsel %vm4953, %v4614, %v5103
        %v5105 = vsel %vm4955, %v4618, %v5104
        %v5106 = vsel %vm4957, %v4622, %v5105
        %v5107 = vsel %vm4959, %v4626, %v5106
        %v5108 = vsel %vm4947, %v4634, %v4630
        %v5109 = vsel %vm4949, %v4638, %v5108
        %v5110 = vsel %vm4951, %v4642, %v5109
        %v5111 = vsel %vm4953, %v4646, %v5110
        %v5112 = vsel %vm4955, %v4650, %v5111
        %v5113 = vsel %vm4957, %v4654, %v5112
        %v5114 = vsel %vm4959, %v4658, %v5113
        %v5115 = vsel %vm4947, %v4666, %v4662
        %v5116 = vsel %vm4949, %v4670, %v5115
        %v5117 = vsel %vm4951, %v4674, %v5116
        %v5118 = vsel %vm4953, %v4678, %v5117
        %v5119 = vsel %vm4955, %v4682, %v5118
        %v5120 = vsel %vm4957, %v4686, %v5119
        %v5121 = vsel %vm4959, %v4690, %v5120
        %v5122 = vsel %vm4947, %v4698, %v4694
        %v5123 = vsel %vm4949, %v4702, %v5122
        %v5124 = vsel %vm4951, %v4706, %v5123
        %v5125 = vsel %vm4953, %v4710, %v5124
        %v5126 = vsel %vm4955, %v4714, %v5125
        %v5127 = vsel %vm4957, %v4718, %v5126
        %v5128 = vsel %vm4959, %v4722, %v5127
        %v5129 = vsel %vm4947, %v4730, %v4726
        %v5130 = vsel %vm4949, %v4734, %v5129
        %v5131 = vsel %vm4951, %v4738, %v5130
        %v5132 = vsel %vm4953, %v4742, %v5131
        %v5133 = vsel %vm4955, %v4746, %v5132
        %v5134 = vsel %vm4957, %v4750, %v5133
        %v5135 = vsel %vm4959, %v4754, %v5134
        %v5136 = vsel %vm4947, %v4762, %v4758
        %v5137 = vsel %vm4949, %v4766, %v5136
        %v5138 = vsel %vm4951, %v4770, %v5137
        %v5139 = vsel %vm4953, %v4774, %v5138
        %v5140 = vsel %vm4955, %v4778, %v5139
        %v5141 = vsel %vm4957, %v4782, %v5140
        %v5142 = vsel %vm4959, %v4786, %v5141
        %v5143 = vsel %vm4947, %v4794, %v4790
        %v5144 = vsel %vm4949, %v4798, %v5143
        %v5145 = vsel %vm4951, %v4802, %v5144
        %v5146 = vsel %vm4953, %v4806, %v5145
        %v5147 = vsel %vm4955, %v4810, %v5146
        %v5148 = vsel %vm4957, %v4814, %v5147
        %v5149 = vsel %vm4959, %v4818, %v5148
        %v5150 = vsel %vm4947, %v4826, %v4822
        %v5151 = vsel %vm4949, %v4830, %v5150
        %v5152 = vsel %vm4951, %v4834, %v5151
        %v5153 = vsel %vm4953, %v4838, %v5152
        %v5154 = vsel %vm4955, %v4842, %v5153
        %v5155 = vsel %vm4957, %v4846, %v5154
        %v5156 = vsel %vm4959, %v4850, %v5155
        %v5157 = vsel %vm4947, %v4858, %v4854
        %v5158 = vsel %vm4949, %v4862, %v5157
        %v5159 = vsel %vm4951, %v4866, %v5158
        %v5160 = vsel %vm4953, %v4870, %v5159
        %v5161 = vsel %vm4955, %v4874, %v5160
        %v5162 = vsel %vm4957, %v4878, %v5161
        %v5163 = vsel %vm4959, %v4882, %v5162
        %v5164 = vsel %vm4947, %v4890, %v4886
        %v5165 = vsel %vm4949, %v4894, %v5164
        %v5166 = vsel %vm4951, %v4898, %v5165
        %v5167 = vsel %vm4953, %v4902, %v5166
        %v5168 = vsel %vm4955, %v4906, %v5167
        %v5169 = vsel %vm4957, %v4910, %v5168
        %v5170 = vsel %vm4959, %v4914, %v5169
        %v5171 = vsel %vm4947, %v4922, %v4918
        %v5172 = vsel %vm4949, %v4926, %v5171
        %v5173 = vsel %vm4951, %v4930, %v5172
        %v5174 = vsel %vm4953, %v4934, %v5173
        %v5175 = vsel %vm4955, %v4938, %v5174
        %v5176 = vsel %vm4957, %v4942, %v5175
        %v5177 = vsel %vm4959, %v4946, %v5176
        %vm5210 = vcmask 64512
        %5211 = vst.msk [vmem:[%s185] sm:$0xff] %vm5210, %v4960
        %5212 = vst.msk [vmem:[%s185 + $0x8] sm:$0xff] %vm5210, %v4967
        %5213 = vst.msk [vmem:[%s185 + $0x10] sm:$0xff] %vm5210, %v4974
        %5214 = vst.msk [vmem:[%s185 + $0x18] sm:$0xff] %vm5210, %v4981
        %5215 = vst.msk [vmem:[%s185 + $0x20] sm:$0xff] %vm5210, %v4988
        %5216 = vst.msk [vmem:[%s185 + $0x28] sm:$0xff] %vm5210, %v4995
        %5217 = vst.msk [vmem:[%s185 + $0x30] sm:$0xff] %vm5210, %v5002
        %5218 = vst.msk [vmem:[%s185 + $0x38] sm:$0xff] %vm5210, %v5009
        %5219 = vst.msk [vmem:[%s185 + $0x40] sm:$0xff] %vm5210, %v5016
        %5220 = vst.msk [vmem:[%s185 + $0x48] sm:$0xff] %vm5210, %v5023
        %5221 = vst.msk [vmem:[%s185 + $0x50] sm:$0xff] %vm5210, %v5030
        %5222 = vst.msk [vmem:[%s185 + $0x58] sm:$0xff] %vm5210, %v5037
        %5223 = vst.msk [vmem:[%s185 + $0x60] sm:$0xff] %vm5210, %v5044
        %5224 = vst.msk [vmem:[%s185 + $0x68] sm:$0xff] %vm5210, %v5051
        %5225 = vst.msk [vmem:[%s185 + $0x70] sm:$0xff] %vm5210, %v5058
        %5226 = vst.msk [vmem:[%s185 + $0x78] sm:$0xff] %vm5210, %v5065
        %5227 = vst.msk [vmem:[%s185 + $0x80] sm:$0xff] %vm5210, %v5072
        %5228 = vst.msk [vmem:[%s185 + $0x88] sm:$0xff] %vm5210, %v5079
        %5229 = vst.msk [vmem:[%s185 + $0x90] sm:$0xff] %vm5210, %v5086
        %5230 = vst.msk [vmem:[%s185 + $0x98] sm:$0xff] %vm5210, %v5093
        %5231 = vst.msk [vmem:[%s185 + $0xa0] sm:$0xff] %vm5210, %v5100
        %5232 = vst.msk [vmem:[%s185 + $0xa8] sm:$0xff] %vm5210, %v5107
        %5233 = vst.msk [vmem:[%s185 + $0xb0] sm:$0xff] %vm5210, %v5114
        %5234 = vst.msk [vmem:[%s185 + $0xb8] sm:$0xff] %vm5210, %v5121
        %5235 = vst.msk [vmem:[%s185 + $0xc0] sm:$0xff] %vm5210, %v5128
        %5236 = vst.msk [vmem:[%s185 + $0xc8] sm:$0xff] %vm5210, %v5135
        %5237 = vst.msk [vmem:[%s185 + $0xd0] sm:$0xff] %vm5210, %v5142
        %5238 = vst.msk [vmem:[%s185 + $0xd8] sm:$0xff] %vm5210, %v5149
        %5239 = vst.msk [vmem:[%s185 + $0xe0] sm:$0xff] %vm5210, %v5156
        %5240 = vst.msk [vmem:[%s185 + $0xe8] sm:$0xff] %vm5210, %v5163
        %5241 = vst.msk [vmem:[%s185 + $0xf0] sm:$0xff] %vm5210, %v5170
        %5242 = vst.msk [vmem:[%s185 + $0xf8] sm:$0xff] %vm5210, %v5177
        %s5243 = smul.u32 32, %s15
        %p5244 = scmp.lt.s32.totalorder %s5243, 1023
        %s5245 = scalar_select %p5244, %s5243, 1023
        %s5246 = smul.addr %s5245, 8
        %s5247 = scalar_lea.vmem %s3, %s5246
        // Predicated region
        $region37: #{image_encoder_forward.4} parent=31 // pred_check
          %p5248 = pneg %p101
        $region38: #{image_encoder_forward.4} parent=31 // pred_check_branch
          %5250 = sbr.rel (%p5248) target = $region40
        $region39: #{image_encoder_forward.4} parent=31 // pred_region
          %s5251 = smul.u32 32, %s15
        $region40: #{image_encoder_forward.4} parent=31 // pred_fallthru
          _
      $region32: #{image_encoder_forward.4} parent=5 // pred_fallthru
        _
      %p5252 = scmp.le.s32.totalorder 2, %s10
      // Predicated region
      $region41: #{image_encoder_forward.4} parent=5 // pred_check
        %p5253 = pneg %p5252
      $region42: #{image_encoder_forward.4} parent=5 // pred_check_branch
        %5255 = sbr.rel (%p5253) target = $region44
      $region43: #{image_encoder_forward.4} parent=5 // pred_region
        %s5256 = ssub.s32 %s10, 2
        // Predicated region
        $region45: #{image_encoder_forward.4} parent=43 // pred_check
          %p5257 = pneg %p107
        $region46: #{image_encoder_forward.4} parent=43 // pred_check_branch
          %5259 = sbr.rel (%p5257) target = $region48
        $region47: #{image_encoder_forward.4} parent=43 // pred_region
          %s5260 = smul.u32 32, %s16
          %p5261 = scmp.lt.s32.totalorder %s5260, 1023
          %s5262 = scalar_select %p5261, %s5260, 1023
          %s5263 = smul.addr %s5262, 8
          %s5264 = scalar_lea.vmem %s3, %s5263
        $region48: #{image_encoder_forward.4} parent=43 // pred_fallthru
          _
      $region44: #{image_encoder_forward.4} parent=5 // pred_fallthru
        _
    $region6: #{image_encoder_forward.4} parent=1 // loop_footer
      %s14 = sadd.s32 1, %s10
    $region7: #{image_encoder_forward.4} parent=1 // loop_footer_branch
      %9 = sbr.rel target = $region3
    $region8: #{image_encoder_forward.4} parent=1 // loop_exit
      _
    %5265 = vsyncpa [#allocation3], 1
    %s5266 = scalar_lea.sflag [#allocation3], 1
    %5267 = vsyncpa %s5266, 1

// kernel: image_encoder_forward.5
$region0: #{image_encoder_forward.5}
  #allocation0 [shape = 'u32[]', space=smem, size = 0x4, offset = 0x4, fixed_abs, tag = 'smem constant byte address 0x4 - core index']
  #allocation1 [shape = 'u32[144,128]{1,0:T(1,128)}', space=vmem, size = 0x12000, scoped, tag = 'internal scratch']
  %s0 = inlined_call_operand.vmem [shape: f32[2048,128], index: 0, kind: input, shape index: {}]
  %s1 = inlined_call_operand.vmem [shape: f32[128,16], index: 1, kind: input, shape index: {}]
  %s2 = inlined_call_operand.vmem [shape: f32[1,16], index: 2, kind: input, shape index: {}]
  %s3 = inlined_call_operand.vmem [shape: f32[512,16], index: 3, kind: output, shape index: {}]
  %s4 = sld [smem:[#allocation0]]
  $region45: #{image_encoder_forward.5} parent=0
    _
  %s6 = ssub.s32 1, %s4
  %s7 = scalar_select 0, %s6, %s4
  loop: start=0, step=1, limit=4
  $region2: #{image_encoder_forward.5} parent=0 // loop_pre_header
    _
  $region3: #{image_encoder_forward.5} parent=0 // loop_header
    %s9 = sphi 0, %s13
    %p10 = scmp.ge.s32.totalorder %s9, 4
    %s19 = sphi 0, %s21
    %s22 = sphi 0, %s19
    %s23 = sphi 0, %s22
    %s39 = sphi 0, %s23
    %s43 = sphi 0, %s43
    %s45 = sphi 0, %s43
    %s46 = sphi 0, %s45
    %s60 = sphi 0, %s46
    %s64 = sphi 0, %s64
    %s66 = sphi 0, %s64
    %s67 = sphi 0, %s66
    %s81 = sphi 0, %s67
    %s87 = sphi 0, %s89
    %s90 = sphi 0, %s87
    %s91 = sphi 0, %s90
    %s107 = sphi 0, %s91
  $region4: #{image_encoder_forward.5} parent=0 // loop_header_branch
    %12 = sbr.rel (%p10) target = $region8
  $region5: #{image_encoder_forward.5} parent=0 // loop_body
    %s14 = ssub.s32 %s9, 1
    %s15 = ssub.s32 %s9, 2
    %s16 = sadd.s32 %s9, 1
    %s17 = ssub.s32 %s9, %s16
    %p18 = scmp.eq.s32.totalorder %s17, 0
    %s20 = sadd.s32 %s19, 1
    %s21 = scalar_select %p18, %s19, %s20
    %p24 = pneg %p18
    %p25 = scmp.eq.s32.totalorder %s9, 1
    %p26 = por %p24, %p25
    %p27 = scmp.ne.s32.totalorder %s19, %s22
    %p28 = scmp.eq.s32.totalorder %s9, 0
    %p29 = por %p27, %p28
    %p30 = scmp.ne.s32.totalorder %s19, %s22
    %p31 = scmp.eq.s32.totalorder %s14, 1
    %p32 = por %p30, %p31
    %p33 = scmp.ne.s32.totalorder %s22, %s23
    %p34 = scmp.eq.s32.totalorder %s14, 0
    %p35 = por %p33, %p34
    %p36 = scmp.ne.s32.totalorder %s22, %s23
    %p37 = scmp.eq.s32.totalorder %s15, 1
    %p38 = por %p36, %p37
    %p40 = scmp.ne.s32.totalorder %s23, %s39
    %p41 = scmp.eq.s32.totalorder %s15, 0
    %p42 = por %p40, %p41
    %s44 = sadd.s32 %s43, 1
    %p47 = scmp.eq.s32.totalorder %s9, 1
    %p48 = scmp.ne.s32.totalorder %s43, %s45
    %p49 = scmp.eq.s32.totalorder %s9, 0
    %p50 = por %p48, %p49
    %p51 = scmp.ne.s32.totalorder %s43, %s45
    %p52 = scmp.eq.s32.totalorder %s14, 1
    %p53 = por %p51, %p52
    %p54 = scmp.ne.s32.totalorder %s45, %s46
    %p55 = scmp.eq.s32.totalorder %s14, 0
    %p56 = por %p54, %p55
    %p57 = scmp.ne.s32.totalorder %s45, %s46
    %p58 = scmp.eq.s32.totalorder %s15, 1
    %p59 = por %p57, %p58
    %p61 = scmp.ne.s32.totalorder %s46, %s60
    %p62 = scmp.eq.s32.totalorder %s15, 0
    %p63 = por %p61, %p62
    %s65 = sadd.s32 %s64, 1
    %p68 = scmp.eq.s32.totalorder %s9, 1
    %p69 = scmp.ne.s32.totalorder %s64, %s66
    %p70 = scmp.eq.s32.totalorder %s9, 0
    %p71 = por %p69, %p70
    %p72 = scmp.ne.s32.totalorder %s64, %s66
    %p73 = scmp.eq.s32.totalorder %s14, 1
    %p74 = por %p72, %p73
    %p75 = scmp.ne.s32.totalorder %s66, %s67
    %p76 = scmp.eq.s32.totalorder %s14, 0
    %p77 = por %p75, %p76
    %p78 = scmp.ne.s32.totalorder %s66, %s67
    %p79 = scmp.eq.s32.totalorder %s15, 1
    %p80 = por %p78, %p79
    %p82 = scmp.ne.s32.totalorder %s67, %s81
    %p83 = scmp.eq.s32.totalorder %s15, 0
    %p84 = por %p82, %p83
    %s85 = ssub.s32 %s9, %s16
    %p86 = scmp.eq.s32.totalorder %s85, 0
    %s88 = sadd.s32 %s87, 1
    %s89 = scalar_select %p86, %s87, %s88
    %p92 = pneg %p86
    %p93 = scmp.eq.s32.totalorder %s9, 1
    %p94 = por %p92, %p93
    %p95 = scmp.ne.s32.totalorder %s87, %s90
    %p96 = scmp.eq.s32.totalorder %s9, 0
    %p97 = por %p95, %p96
    %p98 = scmp.ne.s32.totalorder %s87, %s90
    %p99 = scmp.eq.s32.totalorder %s14, 1
    %p100 = por %p98, %p99
    %p101 = scmp.ne.s32.totalorder %s90, %s91
    %p102 = scmp.eq.s32.totalorder %s14, 0
    %p103 = por %p101, %p102
    %p104 = scmp.ne.s32.totalorder %s90, %s91
    %p105 = scmp.eq.s32.totalorder %s15, 1
    %p106 = por %p104, %p105
    %p108 = scmp.ne.s32.totalorder %s91, %s107
    %p109 = scmp.eq.s32.totalorder %s15, 0
    %p110 = por %p108, %p109
    %p111 = scmp.le.s32.totalorder 1, %s9
    %p112 = scmp.lt.s32.totalorder %s9, 3
    %p113 = pnand %p111, %p112
    %p114 = pneg %p113
    // Predicated region
    $region9: #{image_encoder_forward.5} parent=5 // pred_check
      _
    $region10: #{image_encoder_forward.5} parent=5 // pred_check_branch
      %116 = sbr.rel (%p113) target = $region12
    $region11: #{image_encoder_forward.5} parent=5 // pred_region
      %s117 = ssub.s32 %s9, 1
      // Predicated region
      $region13: #{image_encoder_forward.5} parent=11 // pred_check
        %p118 = pneg %p56
      $region14: #{image_encoder_forward.5} parent=11 // pred_check_branch
        %120 = sbr.rel (%p118) target = $region16
      $region15: #{image_encoder_forward.5} parent=11 // pred_region
        _
      $region16: #{image_encoder_forward.5} parent=11 // pred_fallthru
        _
      // Predicated region
      $region17: #{image_encoder_forward.5} parent=11 // pred_check
        %p121 = pneg %p77
      $region18: #{image_encoder_forward.5} parent=11 // pred_check_branch
        %123 = sbr.rel (%p121) target = $region20
      $region19: #{image_encoder_forward.5} parent=11 // pred_region
        _
      $region20: #{image_encoder_forward.5} parent=11 // pred_fallthru
        _
    $region12: #{image_encoder_forward.5} parent=5 // pred_fallthru
      _
    %p124 = scmp.lt.s32.totalorder %s9, 2
    // Predicated region
    $region21: #{image_encoder_forward.5} parent=5 // pred_check
      %p125 = pneg %p124
    $region22: #{image_encoder_forward.5} parent=5 // pred_check_branch
      %127 = sbr.rel (%p125) target = $region24
    $region23: #{image_encoder_forward.5} parent=5 // pred_region
      // Predicated region
      $region25: #{image_encoder_forward.5} parent=23 // pred_check
        %p128 = pneg %p29
      $region26: #{image_encoder_forward.5} parent=23 // pred_check_branch
        %130 = sbr.rel (%p128) target = $region28
      $region27: #{image_encoder_forward.5} parent=23 // pred_region
        %s131 = smul.u32 128, %s9
        %p132 = scmp.lt.s32.totalorder %s131, 255
        %s133 = scalar_select %p132, %s131, 255
        %s134 = smul.addr %s133, 8
        %s135 = scalar_lea.vmem %s0, %s134
        %s136 = smul.u32 128, %s9
      $region28: #{image_encoder_forward.5} parent=23 // pred_fallthru
        _
    $region24: #{image_encoder_forward.5} parent=5 // pred_fallthru
      _
    %p137 = scmp.le.s32.totalorder 1, %s9
    %p138 = scmp.lt.s32.totalorder %s9, 3
    %p139 = pnand %p137, %p138
    %p140 = pneg %p139
    // Predicated region
    $region29: #{image_encoder_forward.5} parent=5 // pred_check
      _
    $region30: #{image_encoder_forward.5} parent=5 // pred_check_branch
      %142 = sbr.rel (%p139) target = $region32
    $region31: #{image_encoder_forward.5} parent=5 // pred_region
      %s143 = ssub.s32 %s9, 1
      %s144 = smul.u32 128, %s14
      %p145 = scmp.lt.s32.totalorder %s144, 255
      %s146 = scalar_select %p145, %s144, 255
      %s147 = smul.addr %s146, 8
      %s148 = scalar_lea.vmem %s0, %s147
      %p149 = pneg %p35
      %p150 = pneg %p32
      %p151 = pneg %p56
      %p152 = pneg %p53
      %p153 = pneg %p77
      %p154 = pneg %p74
      %p155 = pneg %p103
      %p156 = pneg %p100
      %s157 = smul.u32 32, %s14
      %p158 = scmp.lt.s32.totalorder %s157, 63
      %s159 = scalar_select %p158, %s157, 63
      %s160 = smul.addr %s159, 8
      %s161 = scalar_lea.vmem %s3, %s160
      %s162 = smul.u32 128, %s14
      %p163 = scmp.lt.s32.totalorder %s162, 255
      %s164 = scalar_select %p163, %s162, 255
      %s165 = smul.addr %s164, 8
      %s166 = scalar_lea.vmem %s0, %s165
      %s167 = smul.u32 128, %s14
      %s168 = smul.u32 32, %s14
      %p169 = scmp.lt.s32.totalorder %s168, 63
      %s170 = scalar_select %p169, %s168, 63
      %s171 = smul.addr %s170, 8
      %s172 = scalar_lea.vmem %s3, %s171
      %s173 = smul.u32 32, %s14
      %v174 = vld [vmem:[%s166] sm:$0xff]
      %v175 = vld [vmem:[%s166 + $0x8] sm:$0xff]
      %v176 = vld [vmem:[%s166 + $0x10] sm:$0xff]
      %v177 = vld [vmem:[%s166 + $0x18] sm:$0xff]
      %v178 = vld [vmem:[%s166 + $0x20] sm:$0xff]
      %v179 = vld [vmem:[%s166 + $0x28] sm:$0xff]
      %v180 = vld [vmem:[%s166 + $0x30] sm:$0xff]
      %v181 = vld [vmem:[%s166 + $0x38] sm:$0xff]
      %v182 = vld [vmem:[%s166 + $0x40] sm:$0xff]
      %v183 = vld [vmem:[%s166 + $0x48] sm:$0xff]
      %v184 = vld [vmem:[%s166 + $0x50] sm:$0xff]
      %v185 = vld [vmem:[%s166 + $0x58] sm:$0xff]
      %v186 = vld [vmem:[%s166 + $0x60] sm:$0xff]
      %v187 = vld [vmem:[%s166 + $0x68] sm:$0xff]
      %v188 = vld [vmem:[%s166 + $0x70] sm:$0xff]
      %v189 = vld [vmem:[%s166 + $0x78] sm:$0xff]
      %v190 = vld [vmem:[%s166 + $0x80] sm:$0xff]
      %v191 = vld [vmem:[%s166 + $0x88] sm:$0xff]
      %v192 = vld [vmem:[%s166 + $0x90] sm:$0xff]
      %v193 = vld [vmem:[%s166 + $0x98] sm:$0xff]
      %v194 = vld [vmem:[%s166 + $0xa0] sm:$0xff]
      %v195 = vld [vmem:[%s166 + $0xa8] sm:$0xff]
      %v196 = vld [vmem:[%s166 + $0xb0] sm:$0xff]
      %v197 = vld [vmem:[%s166 + $0xb8] sm:$0xff]
      %v198 = vld [vmem:[%s166 + $0xc0] sm:$0xff]
      %v199 = vld [vmem:[%s166 + $0xc8] sm:$0xff]
      %v200 = vld [vmem:[%s166 + $0xd0] sm:$0xff]
      %v201 = vld [vmem:[%s166 + $0xd8] sm:$0xff]
      %v202 = vld [vmem:[%s166 + $0xe0] sm:$0xff]
      %v203 = vld [vmem:[%s166 + $0xe8] sm:$0xff]
      %v204 = vld [vmem:[%s166 + $0xf0] sm:$0xff]
      %v205 = vld [vmem:[%s166 + $0xf8] sm:$0xff]
      %v206 = vld [vmem:[%s166 + $0x100] sm:$0xff]
      %v207 = vld [vmem:[%s166 + $0x108] sm:$0xff]
      %v208 = vld [vmem:[%s166 + $0x110] sm:$0xff]
      %v209 = vld [vmem:[%s166 + $0x118] sm:$0xff]
      %v210 = vld [vmem:[%s166 + $0x120] sm:$0xff]
      %v211 = vld [vmem:[%s166 + $0x128] sm:$0xff]
      %v212 = vld [vmem:[%s166 + $0x130] sm:$0xff]
      %v213 = vld [vmem:[%s166 + $0x138] sm:$0xff]
      %v214 = vld [vmem:[%s166 + $0x140] sm:$0xff]
      %v215 = vld [vmem:[%s166 + $0x148] sm:$0xff]
      %v216 = vld [vmem:[%s166 + $0x150] sm:$0xff]
      %v217 = vld [vmem:[%s166 + $0x158] sm:$0xff]
      %v218 = vld [vmem:[%s166 + $0x160] sm:$0xff]
      %v219 = vld [vmem:[%s166 + $0x168] sm:$0xff]
      %v220 = vld [vmem:[%s166 + $0x170] sm:$0xff]
      %v221 = vld [vmem:[%s166 + $0x178] sm:$0xff]
      %v222 = vld [vmem:[%s166 + $0x180] sm:$0xff]
      %v223 = vld [vmem:[%s166 + $0x188] sm:$0xff]
      %v224 = vld [vmem:[%s166 + $0x190] sm:$0xff]
      %v225 = vld [vmem:[%s166 + $0x198] sm:$0xff]
      %v226 = vld [vmem:[%s166 + $0x1a0] sm:$0xff]
      %v227 = vld [vmem:[%s166 + $0x1a8] sm:$0xff]
      %v228 = vld [vmem:[%s166 + $0x1b0] sm:$0xff]
      %v229 = vld [vmem:[%s166 + $0x1b8] sm:$0xff]
      %v230 = vld [vmem:[%s166 + $0x1c0] sm:$0xff]
      %v231 = vld [vmem:[%s166 + $0x1c8] sm:$0xff]
      %v232 = vld [vmem:[%s166 + $0x1d0] sm:$0xff]
      %v233 = vld [vmem:[%s166 + $0x1d8] sm:$0xff]
      %v234 = vld [vmem:[%s166 + $0x1e0] sm:$0xff]
      %v235 = vld [vmem:[%s166 + $0x1e8] sm:$0xff]
      %v236 = vld [vmem:[%s166 + $0x1f0] sm:$0xff]
      %v237 = vld [vmem:[%s166 + $0x1f8] sm:$0xff]
      %v238 = vld [vmem:[%s166 + $0x200] sm:$0xff]
      %v239 = vld [vmem:[%s166 + $0x208] sm:$0xff]
      %v240 = vld [vmem:[%s166 + $0x210] sm:$0xff]
      %v241 = vld [vmem:[%s166 + $0x218] sm:$0xff]
      %v242 = vld [vmem:[%s166 + $0x220] sm:$0xff]
      %v243 = vld [vmem:[%s166 + $0x228] sm:$0xff]
      %v244 = vld [vmem:[%s166 + $0x230] sm:$0xff]
      %v245 = vld [vmem:[%s166 + $0x238] sm:$0xff]
      %v246 = vld [vmem:[%s166 + $0x240] sm:$0xff]
      %v247 = vld [vmem:[%s166 + $0x248] sm:$0xff]
      %v248 = vld [vmem:[%s166 + $0x250] sm:$0xff]
      %v249 = vld [vmem:[%s166 + $0x258] sm:$0xff]
      %v250 = vld [vmem:[%s166 + $0x260] sm:$0xff]
      %v251 = vld [vmem:[%s166 + $0x268] sm:$0xff]
      %v252 = vld [vmem:[%s166 + $0x270] sm:$0xff]
      %v253 = vld [vmem:[%s166 + $0x278] sm:$0xff]
      %v254 = vld [vmem:[%s166 + $0x280] sm:$0xff]
      %v255 = vld [vmem:[%s166 + $0x288] sm:$0xff]
      %v256 = vld [vmem:[%s166 + $0x290] sm:$0xff]
      %v257 = vld [vmem:[%s166 + $0x298] sm:$0xff]
      %v258 = vld [vmem:[%s166 + $0x2a0] sm:$0xff]
      %v259 = vld [vmem:[%s166 + $0x2a8] sm:$0xff]
      %v260 = vld [vmem:[%s166 + $0x2b0] sm:$0xff]
      %v261 = vld [vmem:[%s166 + $0x2b8] sm:$0xff]
      %v262 = vld [vmem:[%s166 + $0x2c0] sm:$0xff]
      %v263 = vld [vmem:[%s166 + $0x2c8] sm:$0xff]
      %v264 = vld [vmem:[%s166 + $0x2d0] sm:$0xff]
      %v265 = vld [vmem:[%s166 + $0x2d8] sm:$0xff]
      %v266 = vld [vmem:[%s166 + $0x2e0] sm:$0xff]
      %v267 = vld [vmem:[%s166 + $0x2e8] sm:$0xff]
      %v268 = vld [vmem:[%s166 + $0x2f0] sm:$0xff]
      %v269 = vld [vmem:[%s166 + $0x2f8] sm:$0xff]
      %v270 = vld [vmem:[%s166 + $0x300] sm:$0xff]
      %v271 = vld [vmem:[%s166 + $0x308] sm:$0xff]
      %v272 = vld [vmem:[%s166 + $0x310] sm:$0xff]
      %v273 = vld [vmem:[%s166 + $0x318] sm:$0xff]
      %v274 = vld [vmem:[%s166 + $0x320] sm:$0xff]
      %v275 = vld [vmem:[%s166 + $0x328] sm:$0xff]
      %v276 = vld [vmem:[%s166 + $0x330] sm:$0xff]
      %v277 = vld [vmem:[%s166 + $0x338] sm:$0xff]
      %v278 = vld [vmem:[%s166 + $0x340] sm:$0xff]
      %v279 = vld [vmem:[%s166 + $0x348] sm:$0xff]
      %v280 = vld [vmem:[%s166 + $0x350] sm:$0xff]
      %v281 = vld [vmem:[%s166 + $0x358] sm:$0xff]
      %v282 = vld [vmem:[%s166 + $0x360] sm:$0xff]
      %v283 = vld [vmem:[%s166 + $0x368] sm:$0xff]
      %v284 = vld [vmem:[%s166 + $0x370] sm:$0xff]
      %v285 = vld [vmem:[%s166 + $0x378] sm:$0xff]
      %v286 = vld [vmem:[%s166 + $0x380] sm:$0xff]
      %v287 = vld [vmem:[%s166 + $0x388] sm:$0xff]
      %v288 = vld [vmem:[%s166 + $0x390] sm:$0xff]
      %v289 = vld [vmem:[%s166 + $0x398] sm:$0xff]
      %v290 = vld [vmem:[%s166 + $0x3a0] sm:$0xff]
      %v291 = vld [vmem:[%s166 + $0x3a8] sm:$0xff]
      %v292 = vld [vmem:[%s166 + $0x3b0] sm:$0xff]
      %v293 = vld [vmem:[%s166 + $0x3b8] sm:$0xff]
      %v294 = vld [vmem:[%s166 + $0x3c0] sm:$0xff]
      %v295 = vld [vmem:[%s166 + $0x3c8] sm:$0xff]
      %v296 = vld [vmem:[%s166 + $0x3d0] sm:$0xff]
      %v297 = vld [vmem:[%s166 + $0x3d8] sm:$0xff]
      %v298 = vld [vmem:[%s166 + $0x3e0] sm:$0xff]
      %v299 = vld [vmem:[%s166 + $0x3e8] sm:$0xff]
      %v300 = vld [vmem:[%s166 + $0x3f0] sm:$0xff]
      %v301 = vld [vmem:[%s166 + $0x3f8] sm:$0xff]
      %v302 = vld [vmem:[%s1] sm:$0xff]
      %v303 = vld [vmem:[%s1 + $0x8] sm:$0xff]
      %v304 = vld [vmem:[%s1 + $0x10] sm:$0xff]
      %v305 = vld [vmem:[%s1 + $0x18] sm:$0xff]
      %v306 = vld [vmem:[%s1 + $0x20] sm:$0xff]
      %v307 = vld [vmem:[%s1 + $0x28] sm:$0xff]
      %v308 = vld [vmem:[%s1 + $0x30] sm:$0xff]
      %v309 = vld [vmem:[%s1 + $0x38] sm:$0xff]
      %v310 = vld [vmem:[%s1 + $0x40] sm:$0xff]
      %v311 = vld [vmem:[%s1 + $0x48] sm:$0xff]
      %v312 = vld [vmem:[%s1 + $0x50] sm:$0xff]
      %v313 = vld [vmem:[%s1 + $0x58] sm:$0xff]
      %v314 = vld [vmem:[%s1 + $0x60] sm:$0xff]
      %v315 = vld [vmem:[%s1 + $0x68] sm:$0xff]
      %v316 = vld [vmem:[%s1 + $0x70] sm:$0xff]
      %v317 = vld [vmem:[%s1 + $0x78] sm:$0xff]
      %v318 = vld [vmem:[%s2] sm:$0x1]
      %v320 = vlaneseq
      %v321 = vshrl.u32 %v320, 7
      %v322 = vsub.s32 0, %v321
      %v323 = vrot.slane %v318, %v322
      %325 = vmatprep.subr.mxu0 0.0
      %326 = vmatpush1.msra.mxu0 %v302
      %327 = vmatprep.subr.mxu0 0.0
      %328 = vmatpush1.msra.mxu0 %v303
      %329 = vmatprep.subr.mxu0 0.0
      %330 = vmatpush1.msra.mxu0 %v304
      %331 = vmatprep.subr.mxu0 0.0
      %332 = vmatpush1.msra.mxu0 %v305
      %333 = vmatprep.subr.mxu0 0.0
      %334 = vmatpush1.msra.mxu0 %v306
      %335 = vmatprep.subr.mxu0 0.0
      %336 = vmatpush1.msra.mxu0 %v307
      %337 = vmatprep.subr.mxu0 0.0
      %338 = vmatpush1.msra.mxu0 %v308
      %339 = vmatprep.subr.mxu0 0.0
      %340 = vmatpush1.msra.mxu0 %v309
      %341 = vmatprep.subr.mxu0 0.0
      %342 = vmatpush1.msra.mxu0 %v310
      %343 = vmatprep.subr.mxu0 0.0
      %344 = vmatpush1.msra.mxu0 %v311
      %345 = vmatprep.subr.mxu0 0.0
      %346 = vmatpush1.msra.mxu0 %v312
      %347 = vmatprep.subr.mxu0 0.0
      %348 = vmatpush1.msra.mxu0 %v313
      %349 = vmatprep.subr.mxu0 0.0
      %350 = vmatpush1.msra.mxu0 %v314
      %351 = vmatprep.subr.mxu0 0.0
      %352 = vmatpush1.msra.mxu0 %v315
      %353 = vmatprep.subr.mxu0 0.0
      %354 = vmatpush1.msra.mxu0 %v316
      %355 = vmatprep.subr.mxu0 0.0
      %356 = vmatpush1.msra.mxu0 %v317
      %357 = vmatprep.subr.mxu0 0.0
      %358 = vmatpush1.msra.mxu0 0.0
      %359 = vmatprep.subr.mxu0 0.0
      %360 = vmatpush1.msra.mxu0 0.0
      %361 = vmatprep.subr.mxu0 0.0
      %362 = vmatpush1.msra.mxu0 0.0
      %363 = vmatprep.subr.mxu0 0.0
      %364 = vmatpush1.msra.mxu0 0.0
      %365 = vmatprep.subr.mxu0 0.0
      %366 = vmatpush1.msra.mxu0 0.0
      %367 = vmatprep.subr.mxu0 0.0
      %368 = vmatpush1.msra.mxu0 0.0
      %369 = vmatprep.subr.mxu0 0.0
      %370 = vmatpush1.msra.mxu0 0.0
      %371 = vmatprep.subr.mxu0 0.0
      %372 = vmatpush1.msra.mxu0 0.0
      %373 = vmatprep.subr.mxu0 0.0
      %374 = vmatpush1.msra.mxu0 0.0
      %375 = vmatprep.subr.mxu0 0.0
      %376 = vmatpush1.msra.mxu0 0.0
      %377 = vmatprep.subr.mxu0 0.0
      %378 = vmatpush1.msra.mxu0 0.0
      %379 = vmatprep.subr.mxu0 0.0
      %380 = vmatpush1.msra.mxu0 0.0
      %381 = vmatprep.subr.mxu0 0.0
      %382 = vmatpush1.msra.mxu0 0.0
      %383 = vmatprep.subr.mxu0 0.0
      %384 = vmatpush1.msra.mxu0 0.0
      %385 = vmatprep.subr.mxu0 0.0
      %386 = vmatpush1.msra.mxu0 0.0
      %387 = vmatprep.subr.mxu0 0.0
      %388 = vmatpush1.msra.mxu0 0.0
      %389 = vmatprep.mubr.f32.mxu0 0.0
      %390 = vmatmul.mubr.f32.gmra.mrb[0].mxu0 %v174
      %v391 = vpop.f32.mrb[0].mxu0
      %v392 = vadd.f32 %v323, %v391
      %v393 = vpop.f32.mrb[0].mxu0
      %394 = vmatprep.mubr.f32.mxu0 0.0
      %395 = vmatmul.mubr.f32.gmra.mrb[0].mxu0 %v175
      %v396 = vpop.f32.mrb[0].mxu0
      %v397 = vadd.f32 %v323, %v396
      %v398 = vpop.f32.mrb[0].mxu0
      %399 = vmatprep.mubr.f32.mxu0 0.0
      %400 = vmatmul.mubr.f32.gmra.mrb[0].mxu0 %v176
      %v401 = vpop.f32.mrb[0].mxu0
      %v402 = vadd.f32 %v323, %v401
      %v403 = vpop.f32.mrb[0].mxu0
      %404 = vmatprep.mubr.f32.mxu0 0.0
      %405 = vmatmul.mubr.f32.gmra.mrb[0].mxu0 %v177
      %v406 = vpop.f32.mrb[0].mxu0
      %v407 = vadd.f32 %v323, %v406
      %v408 = vpop.f32.mrb[0].mxu0
      %409 = vmatprep.mubr.f32.mxu0 0.0
      %410 = vmatmul.mubr.f32.gmra.mrb[0].mxu0 %v178
      %v411 = vpop.f32.mrb[0].mxu0
      %v412 = vadd.f32 %v323, %v411
      %v413 = vpop.f32.mrb[0].mxu0
      %414 = vmatprep.mubr.f32.mxu0 0.0
      %415 = vmatmul.mubr.f32.gmra.mrb[0].mxu0 %v179
      %v416 = vpop.f32.mrb[0].mxu0
      %v417 = vadd.f32 %v323, %v416
      %v418 = vpop.f32.mrb[0].mxu0
      %419 = vmatprep.mubr.f32.mxu0 0.0
      %420 = vmatmul.mubr.f32.gmra.mrb[0].mxu0 %v180
      %v421 = vpop.f32.mrb[0].mxu0
      %v422 = vadd.f32 %v323, %v421
      %v423 = vpop.f32.mrb[0].mxu0
      %424 = vmatprep.mubr.f32.mxu0 0.0
      %425 = vmatmul.mubr.f32.gmra.mrb[0].mxu0 %v181
      %v426 = vpop.f32.mrb[0].mxu0
      %v427 = vadd.f32 %v323, %v426
      %v428 = vpop.f32.mrb[0].mxu0
      %429 = vmatprep.mubr.f32.mxu0 0.0
      %430 = vmatmul.mubr.f32.gmra.mrb[0].mxu0 %v182
      %v431 = vpop.f32.mrb[0].mxu0
      %v432 = vadd.f32 %v323, %v431
      %v433 = vpop.f32.mrb[0].mxu0
      %434 = vmatprep.mubr.f32.mxu0 0.0
      %435 = vmatmul.mubr.f32.gmra.mrb[0].mxu0 %v183
      %v436 = vpop.f32.mrb[0].mxu0
      %v437 = vadd.f32 %v323, %v436
      %v438 = vpop.f32.mrb[0].mxu0
      %439 = vmatprep.mubr.f32.mxu0 0.0
      %440 = vmatmul.mubr.f32.gmra.mrb[0].mxu0 %v184
      %v441 = vpop.f32.mrb[0].mxu0
      %v442 = vadd.f32 %v323, %v441
      %v443 = vpop.f32.mrb[0].mxu0
      %444 = vmatprep.mubr.f32.mxu0 0.0
      %445 = vmatmul.mubr.f32.gmra.mrb[0].mxu0 %v185
      %v446 = vpop.f32.mrb[0].mxu0
      %v447 = vadd.f32 %v323, %v446
      %v448 = vpop.f32.mrb[0].mxu0
      %449 = vmatprep.mubr.f32.mxu0 0.0
      %450 = vmatmul.mubr.f32.gmra.mrb[0].mxu0 %v186
      %v451 = vpop.f32.mrb[0].mxu0
      %v452 = vadd.f32 %v323, %v451
      %v453 = vpop.f32.mrb[0].mxu0
      %454 = vmatprep.mubr.f32.mxu0 0.0
      %455 = vmatmul.mubr.f32.gmra.mrb[0].mxu0 %v187
      %v456 = vpop.f32.mrb[0].mxu0
      %v457 = vadd.f32 %v323, %v456
      %v458 = vpop.f32.mrb[0].mxu0
      %459 = vmatprep.mubr.f32.mxu0 0.0
      %460 = vmatmul.mubr.f32.gmra.mrb[0].mxu0 %v188
      %v461 = vpop.f32.mrb[0].mxu0
      %v462 = vadd.f32 %v323, %v461
      %v463 = vpop.f32.mrb[0].mxu0
      %464 = vmatprep.mubr.f32.mxu0 0.0
      %465 = vmatmul.mubr.f32.gmra.mrb[0].mxu0 %v189
      %v466 = vpop.f32.mrb[0].mxu0
      %v467 = vadd.f32 %v323, %v466
      %v468 = vpop.f32.mrb[0].mxu0
      %469 = vmatprep.mubr.f32.mxu0 0.0
      %470 = vmatmul.mubr.f32.gmra.mrb[0].mxu0 %v190
      %v471 = vpop.f32.mrb[0].mxu0
      %v472 = vadd.f32 %v323, %v471
      %v473 = vpop.f32.mrb[0].mxu0
      %474 = vmatprep.mubr.f32.mxu0 0.0
      %475 = vmatmul.mubr.f32.gmra.mrb[0].mxu0 %v191
      %v476 = vpop.f32.mrb[0].mxu0
      %v477 = vadd.f32 %v323, %v476
      %v478 = vpop.f32.mrb[0].mxu0
      %479 = vmatprep.mubr.f32.mxu0 0.0
      %480 = vmatmul.mubr.f32.gmra.mrb[0].mxu0 %v192
      %v481 = vpop.f32.mrb[0].mxu0
      %v482 = vadd.f32 %v323, %v481
      %v483 = vpop.f32.mrb[0].mxu0
      %484 = vmatprep.mubr.f32.mxu0 0.0
      %485 = vmatmul.mubr.f32.gmra.mrb[0].mxu0 %v193
      %v486 = vpop.f32.mrb[0].mxu0
      %v487 = vadd.f32 %v323, %v486
      %v488 = vpop.f32.mrb[0].mxu0
      %489 = vmatprep.mubr.f32.mxu0 0.0
      %490 = vmatmul.mubr.f32.gmra.mrb[0].mxu0 %v194
      %v491 = vpop.f32.mrb[0].mxu0
      %v492 = vadd.f32 %v323, %v491
      %v493 = vpop.f32.mrb[0].mxu0
      %494 = vmatprep.mubr.f32.mxu0 0.0
      %495 = vmatmul.mubr.f32.gmra.mrb[0].mxu0 %v195
      %v496 = vpop.f32.mrb[0].mxu0
      %v497 = vadd.f32 %v323, %v496
      %v498 = vpop.f32.mrb[0].mxu0
      %499 = vmatprep.mubr.f32.mxu0 0.0
      %500 = vmatmul.mubr.f32.gmra.mrb[0].mxu0 %v196
      %v501 = vpop.f32.mrb[0].mxu0
      %v502 = vadd.f32 %v323, %v501
      %v503 = vpop.f32.mrb[0].mxu0
      %504 = vmatprep.mubr.f32.mxu0 0.0
      %505 = vmatmul.mubr.f32.gmra.mrb[0].mxu0 %v197
      %v506 = vpop.f32.mrb[0].mxu0
      %v507 = vadd.f32 %v323, %v506
      %v508 = vpop.f32.mrb[0].mxu0
      %509 = vmatprep.mubr.f32.mxu0 0.0
      %510 = vmatmul.mubr.f32.gmra.mrb[0].mxu0 %v198
      %v511 = vpop.f32.mrb[0].mxu0
      %v512 = vadd.f32 %v323, %v511
      %v513 = vpop.f32.mrb[0].mxu0
      %514 = vmatprep.mubr.f32.mxu0 0.0
      %515 = vmatmul.mubr.f32.gmra.mrb[0].mxu0 %v199
      %v516 = vpop.f32.mrb[0].mxu0
      %v517 = vadd.f32 %v323, %v516
      %v518 = vpop.f32.mrb[0].mxu0
      %519 = vmatprep.mubr.f32.mxu0 0.0
      %520 = vmatmul.mubr.f32.gmra.mrb[0].mxu0 %v200
      %v521 = vpop.f32.mrb[0].mxu0
      %v522 = vadd.f32 %v323, %v521
      %v523 = vpop.f32.mrb[0].mxu0
      %524 = vmatprep.mubr.f32.mxu0 0.0
      %525 = vmatmul.mubr.f32.gmra.mrb[0].mxu0 %v201
      %v526 = vpop.f32.mrb[0].mxu0
      %v527 = vadd.f32 %v323, %v526
      %v528 = vpop.f32.mrb[0].mxu0
      %529 = vmatprep.mubr.f32.mxu0 0.0
      %530 = vmatmul.mubr.f32.gmra.mrb[0].mxu0 %v202
      %v531 = vpop.f32.mrb[0].mxu0
      %v532 = vadd.f32 %v323, %v531
      %v533 = vpop.f32.mrb[0].mxu0
      %534 = vmatprep.mubr.f32.mxu0 0.0
      %535 = vmatmul.mubr.f32.gmra.mrb[0].mxu0 %v203
      %v536 = vpop.f32.mrb[0].mxu0
      %v537 = vadd.f32 %v323, %v536
      %v538 = vpop.f32.mrb[0].mxu0
      %539 = vmatprep.mubr.f32.mxu0 0.0
      %540 = vmatmul.mubr.f32.gmra.mrb[0].mxu0 %v204
      %v541 = vpop.f32.mrb[0].mxu0
      %v542 = vadd.f32 %v323, %v541
      %v543 = vpop.f32.mrb[0].mxu0
      %544 = vmatprep.mubr.f32.mxu0 0.0
      %545 = vmatmul.mubr.f32.gmra.mrb[0].mxu0 %v205
      %v546 = vpop.f32.mrb[0].mxu0
      %v547 = vadd.f32 %v323, %v546
      %v548 = vpop.f32.mrb[0].mxu0
      %549 = vmatprep.mubr.f32.mxu0 0.0
      %550 = vmatmul.mubr.f32.gmra.mrb[0].mxu0 %v206
      %v551 = vpop.f32.mrb[0].mxu0
      %v552 = vadd.f32 %v323, %v551
      %v553 = vpop.f32.mrb[0].mxu0
      %554 = vmatprep.mubr.f32.mxu0 0.0
      %555 = vmatmul.mubr.f32.gmra.mrb[0].mxu0 %v207
      %v556 = vpop.f32.mrb[0].mxu0
      %v557 = vadd.f32 %v323, %v556
      %v558 = vpop.f32.mrb[0].mxu0
      %559 = vmatprep.mubr.f32.mxu0 0.0
      %560 = vmatmul.mubr.f32.gmra.mrb[0].mxu0 %v208
      %v561 = vpop.f32.mrb[0].mxu0
      %v562 = vadd.f32 %v323, %v561
      %v563 = vpop.f32.mrb[0].mxu0
      %564 = vmatprep.mubr.f32.mxu0 0.0
      %565 = vmatmul.mubr.f32.gmra.mrb[0].mxu0 %v209
      %v566 = vpop.f32.mrb[0].mxu0
      %v567 = vadd.f32 %v323, %v566
      %v568 = vpop.f32.mrb[0].mxu0
      %569 = vmatprep.mubr.f32.mxu0 0.0
      %570 = vmatmul.mubr.f32.gmra.mrb[0].mxu0 %v210
      %v571 = vpop.f32.mrb[0].mxu0
      %v572 = vadd.f32 %v323, %v571
      %v573 = vpop.f32.mrb[0].mxu0
      %574 = vmatprep.mubr.f32.mxu0 0.0
      %575 = vmatmul.mubr.f32.gmra.mrb[0].mxu0 %v211
      %v576 = vpop.f32.mrb[0].mxu0
      %v577 = vadd.f32 %v323, %v576
      %v578 = vpop.f32.mrb[0].mxu0
      %579 = vmatprep.mubr.f32.mxu0 0.0
      %580 = vmatmul.mubr.f32.gmra.mrb[0].mxu0 %v212
      %v581 = vpop.f32.mrb[0].mxu0
      %v582 = vadd.f32 %v323, %v581
      %v583 = vpop.f32.mrb[0].mxu0
      %584 = vmatprep.mubr.f32.mxu0 0.0
      %585 = vmatmul.mubr.f32.gmra.mrb[0].mxu0 %v213
      %v586 = vpop.f32.mrb[0].mxu0
      %v587 = vadd.f32 %v323, %v586
      %v588 = vpop.f32.mrb[0].mxu0
      %589 = vmatprep.mubr.f32.mxu0 0.0
      %590 = vmatmul.mubr.f32.gmra.mrb[0].mxu0 %v214
      %v591 = vpop.f32.mrb[0].mxu0
      %v592 = vadd.f32 %v323, %v591
      %v593 = vpop.f32.mrb[0].mxu0
      %594 = vmatprep.mubr.f32.mxu0 0.0
      %595 = vmatmul.mubr.f32.gmra.mrb[0].mxu0 %v215
      %v596 = vpop.f32.mrb[0].mxu0
      %v597 = vadd.f32 %v323, %v596
      %v598 = vpop.f32.mrb[0].mxu0
      %599 = vmatprep.mubr.f32.mxu0 0.0
      %600 = vmatmul.mubr.f32.gmra.mrb[0].mxu0 %v216
      %v601 = vpop.f32.mrb[0].mxu0
      %v602 = vadd.f32 %v323, %v601
      %v603 = vpop.f32.mrb[0].mxu0
      %604 = vmatprep.mubr.f32.mxu0 0.0
      %605 = vmatmul.mubr.f32.gmra.mrb[0].mxu0 %v217
      %v606 = vpop.f32.mrb[0].mxu0
      %v607 = vadd.f32 %v323, %v606
      %v608 = vpop.f32.mrb[0].mxu0
      %609 = vmatprep.mubr.f32.mxu0 0.0
      %610 = vmatmul.mubr.f32.gmra.mrb[0].mxu0 %v218
      %v611 = vpop.f32.mrb[0].mxu0
      %v612 = vadd.f32 %v323, %v611
      %v613 = vpop.f32.mrb[0].mxu0
      %614 = vmatprep.mubr.f32.mxu0 0.0
      %615 = vmatmul.mubr.f32.gmra.mrb[0].mxu0 %v219
      %v616 = vpop.f32.mrb[0].mxu0
      %v617 = vadd.f32 %v323, %v616
      %v618 = vpop.f32.mrb[0].mxu0
      %619 = vmatprep.mubr.f32.mxu0 0.0
      %620 = vmatmul.mubr.f32.gmra.mrb[0].mxu0 %v220
      %v621 = vpop.f32.mrb[0].mxu0
      %v622 = vadd.f32 %v323, %v621
      %v623 = vpop.f32.mrb[0].mxu0
      %624 = vmatprep.mubr.f32.mxu0 0.0
      %625 = vmatmul.mubr.f32.gmra.mrb[0].mxu0 %v221
      %v626 = vpop.f32.mrb[0].mxu0
      %v627 = vadd.f32 %v323, %v626
      %v628 = vpop.f32.mrb[0].mxu0
      %629 = vmatprep.mubr.f32.mxu0 0.0
      %630 = vmatmul.mubr.f32.gmra.mrb[0].mxu0 %v222
      %v631 = vpop.f32.mrb[0].mxu0
      %v632 = vadd.f32 %v323, %v631
      %v633 = vpop.f32.mrb[0].mxu0
      %634 = vmatprep.mubr.f32.mxu0 0.0
      %635 = vmatmul.mubr.f32.gmra.mrb[0].mxu0 %v223
      %v636 = vpop.f32.mrb[0].mxu0
      %v637 = vadd.f32 %v323, %v636
      %v638 = vpop.f32.mrb[0].mxu0
      %639 = vmatprep.mubr.f32.mxu0 0.0
      %640 = vmatmul.mubr.f32.gmra.mrb[0].mxu0 %v224
      %v641 = vpop.f32.mrb[0].mxu0
      %v642 = vadd.f32 %v323, %v641
      %v643 = vpop.f32.mrb[0].mxu0
      %644 = vmatprep.mubr.f32.mxu0 0.0
      %645 = vmatmul.mubr.f32.gmra.mrb[0].mxu0 %v225
      %v646 = vpop.f32.mrb[0].mxu0
      %v647 = vadd.f32 %v323, %v646
      %v648 = vpop.f32.mrb[0].mxu0
      %649 = vmatprep.mubr.f32.mxu0 0.0
      %650 = vmatmul.mubr.f32.gmra.mrb[0].mxu0 %v226
      %v651 = vpop.f32.mrb[0].mxu0
      %v652 = vadd.f32 %v323, %v651
      %v653 = vpop.f32.mrb[0].mxu0
      %654 = vmatprep.mubr.f32.mxu0 0.0
      %655 = vmatmul.mubr.f32.gmra.mrb[0].mxu0 %v227
      %v656 = vpop.f32.mrb[0].mxu0
      %v657 = vadd.f32 %v323, %v656
      %v658 = vpop.f32.mrb[0].mxu0
      %659 = vmatprep.mubr.f32.mxu0 0.0
      %660 = vmatmul.mubr.f32.gmra.mrb[0].mxu0 %v228
      %v661 = vpop.f32.mrb[0].mxu0
      %v662 = vadd.f32 %v323, %v661
      %v663 = vpop.f32.mrb[0].mxu0
      %664 = vmatprep.mubr.f32.mxu0 0.0
      %665 = vmatmul.mubr.f32.gmra.mrb[0].mxu0 %v229
      %v666 = vpop.f32.mrb[0].mxu0
      %v667 = vadd.f32 %v323, %v666
      %v668 = vpop.f32.mrb[0].mxu0
      %669 = vmatprep.mubr.f32.mxu0 0.0
      %670 = vmatmul.mubr.f32.gmra.mrb[0].mxu0 %v230
      %v671 = vpop.f32.mrb[0].mxu0
      %v672 = vadd.f32 %v323, %v671
      %v673 = vpop.f32.mrb[0].mxu0
      %674 = vmatprep.mubr.f32.mxu0 0.0
      %675 = vmatmul.mubr.f32.gmra.mrb[0].mxu0 %v231
      %v676 = vpop.f32.mrb[0].mxu0
      %v677 = vadd.f32 %v323, %v676
      %v678 = vpop.f32.mrb[0].mxu0
      %679 = vmatprep.mubr.f32.mxu0 0.0
      %680 = vmatmul.mubr.f32.gmra.mrb[0].mxu0 %v232
      %v681 = vpop.f32.mrb[0].mxu0
      %v682 = vadd.f32 %v323, %v681
      %v683 = vpop.f32.mrb[0].mxu0
      %684 = vmatprep.mubr.f32.mxu0 0.0
      %685 = vmatmul.mubr.f32.gmra.mrb[0].mxu0 %v233
      %v686 = vpop.f32.mrb[0].mxu0
      %v687 = vadd.f32 %v323, %v686
      %v688 = vpop.f32.mrb[0].mxu0
      %689 = vmatprep.mubr.f32.mxu0 0.0
      %690 = vmatmul.mubr.f32.gmra.mrb[0].mxu0 %v234
      %v691 = vpop.f32.mrb[0].mxu0
      %v692 = vadd.f32 %v323, %v691
      %v693 = vpop.f32.mrb[0].mxu0
      %694 = vmatprep.mubr.f32.mxu0 0.0
      %695 = vmatmul.mubr.f32.gmra.mrb[0].mxu0 %v235
      %v696 = vpop.f32.mrb[0].mxu0
      %v697 = vadd.f32 %v323, %v696
      %v698 = vpop.f32.mrb[0].mxu0
      %699 = vmatprep.mubr.f32.mxu0 0.0
      %700 = vmatmul.mubr.f32.gmra.mrb[0].mxu0 %v236
      %v701 = vpop.f32.mrb[0].mxu0
      %v702 = vadd.f32 %v323, %v701
      %v703 = vpop.f32.mrb[0].mxu0
      %704 = vmatprep.mubr.f32.mxu0 0.0
      %705 = vmatmul.mubr.f32.gmra.mrb[0].mxu0 %v237
      %v706 = vpop.f32.mrb[0].mxu0
      %v707 = vadd.f32 %v323, %v706
      %v708 = vpop.f32.mrb[0].mxu0
      %709 = vmatprep.mubr.f32.mxu0 0.0
      %710 = vmatmul.mubr.f32.gmra.mrb[0].mxu0 %v238
      %v711 = vpop.f32.mrb[0].mxu0
      %v712 = vadd.f32 %v323, %v711
      %v713 = vpop.f32.mrb[0].mxu0
      %714 = vmatprep.mubr.f32.mxu0 0.0
      %715 = vmatmul.mubr.f32.gmra.mrb[0].mxu0 %v239
      %v716 = vpop.f32.mrb[0].mxu0
      %v717 = vadd.f32 %v323, %v716
      %v718 = vpop.f32.mrb[0].mxu0
      %719 = vmatprep.mubr.f32.mxu0 0.0
      %720 = vmatmul.mubr.f32.gmra.mrb[0].mxu0 %v240
      %v721 = vpop.f32.mrb[0].mxu0
      %v722 = vadd.f32 %v323, %v721
      %v723 = vpop.f32.mrb[0].mxu0
      %724 = vmatprep.mubr.f32.mxu0 0.0
      %725 = vmatmul.mubr.f32.gmra.mrb[0].mxu0 %v241
      %v726 = vpop.f32.mrb[0].mxu0
      %v727 = vadd.f32 %v323, %v726
      %v728 = vpop.f32.mrb[0].mxu0
      %729 = vmatprep.mubr.f32.mxu0 0.0
      %730 = vmatmul.mubr.f32.gmra.mrb[0].mxu0 %v242
      %v731 = vpop.f32.mrb[0].mxu0
      %v732 = vadd.f32 %v323, %v731
      %v733 = vpop.f32.mrb[0].mxu0
      %734 = vmatprep.mubr.f32.mxu0 0.0
      %735 = vmatmul.mubr.f32.gmra.mrb[0].mxu0 %v243
      %v736 = vpop.f32.mrb[0].mxu0
      %v737 = vadd.f32 %v323, %v736
      %v738 = vpop.f32.mrb[0].mxu0
      %739 = vmatprep.mubr.f32.mxu0 0.0
      %740 = vmatmul.mubr.f32.gmra.mrb[0].mxu0 %v244
      %v741 = vpop.f32.mrb[0].mxu0
      %v742 = vadd.f32 %v323, %v741
      %v743 = vpop.f32.mrb[0].mxu0
      %744 = vmatprep.mubr.f32.mxu0 0.0
      %745 = vmatmul.mubr.f32.gmra.mrb[0].mxu0 %v245
      %v746 = vpop.f32.mrb[0].mxu0
      %v747 = vadd.f32 %v323, %v746
      %v748 = vpop.f32.mrb[0].mxu0
      %749 = vmatprep.mubr.f32.mxu0 0.0
      %750 = vmatmul.mubr.f32.gmra.mrb[0].mxu0 %v246
      %v751 = vpop.f32.mrb[0].mxu0
      %v752 = vadd.f32 %v323, %v751
      %v753 = vpop.f32.mrb[0].mxu0
      %754 = vmatprep.mubr.f32.mxu0 0.0
      %755 = vmatmul.mubr.f32.gmra.mrb[0].mxu0 %v247
      %v756 = vpop.f32.mrb[0].mxu0
      %v757 = vadd.f32 %v323, %v756
      %v758 = vpop.f32.mrb[0].mxu0
      %759 = vmatprep.mubr.f32.mxu0 0.0
      %760 = vmatmul.mubr.f32.gmra.mrb[0].mxu0 %v248
      %v761 = vpop.f32.mrb[0].mxu0
      %v762 = vadd.f32 %v323, %v761
      %v763 = vpop.f32.mrb[0].mxu0
      %764 = vmatprep.mubr.f32.mxu0 0.0
      %765 = vmatmul.mubr.f32.gmra.mrb[0].mxu0 %v249
      %v766 = vpop.f32.mrb[0].mxu0
      %v767 = vadd.f32 %v323, %v766
      %v768 = vpop.f32.mrb[0].mxu0
      %769 = vmatprep.mubr.f32.mxu0 0.0
      %770 = vmatmul.mubr.f32.gmra.mrb[0].mxu0 %v250
      %v771 = vpop.f32.mrb[0].mxu0
      %v772 = vadd.f32 %v323, %v771
      %v773 = vpop.f32.mrb[0].mxu0
      %774 = vmatprep.mubr.f32.mxu0 0.0
      %775 = vmatmul.mubr.f32.gmra.mrb[0].mxu0 %v251
      %v776 = vpop.f32.mrb[0].mxu0
      %v777 = vadd.f32 %v323, %v776
      %v778 = vpop.f32.mrb[0].mxu0
      %779 = vmatprep.mubr.f32.mxu0 0.0
      %780 = vmatmul.mubr.f32.gmra.mrb[0].mxu0 %v252
      %v781 = vpop.f32.mrb[0].mxu0
      %v782 = vadd.f32 %v323, %v781
      %v783 = vpop.f32.mrb[0].mxu0
      %784 = vmatprep.mubr.f32.mxu0 0.0
      %785 = vmatmul.mubr.f32.gmra.mrb[0].mxu0 %v253
      %v786 = vpop.f32.mrb[0].mxu0
      %v787 = vadd.f32 %v323, %v786
      %v788 = vpop.f32.mrb[0].mxu0
      %789 = vmatprep.mubr.f32.mxu0 0.0
      %790 = vmatmul.mubr.f32.gmra.mrb[0].mxu0 %v254
      %v791 = vpop.f32.mrb[0].mxu0
      %v792 = vadd.f32 %v323, %v791
      %v793 = vpop.f32.mrb[0].mxu0
      %794 = vmatprep.mubr.f32.mxu0 0.0
      %795 = vmatmul.mubr.f32.gmra.mrb[0].mxu0 %v255
      %v796 = vpop.f32.mrb[0].mxu0
      %v797 = vadd.f32 %v323, %v796
      %v798 = vpop.f32.mrb[0].mxu0
      %799 = vmatprep.mubr.f32.mxu0 0.0
      %800 = vmatmul.mubr.f32.gmra.mrb[0].mxu0 %v256
      %v801 = vpop.f32.mrb[0].mxu0
      %v802 = vadd.f32 %v323, %v801
      %v803 = vpop.f32.mrb[0].mxu0
      %804 = vmatprep.mubr.f32.mxu0 0.0
      %805 = vmatmul.mubr.f32.gmra.mrb[0].mxu0 %v257
      %v806 = vpop.f32.mrb[0].mxu0
      %v807 = vadd.f32 %v323, %v806
      %v808 = vpop.f32.mrb[0].mxu0
      %809 = vmatprep.mubr.f32.mxu0 0.0
      %810 = vmatmul.mubr.f32.gmra.mrb[0].mxu0 %v258
      %v811 = vpop.f32.mrb[0].mxu0
      %v812 = vadd.f32 %v323, %v811
      %v813 = vpop.f32.mrb[0].mxu0
      %814 = vmatprep.mubr.f32.mxu0 0.0
      %815 = vmatmul.mubr.f32.gmra.mrb[0].mxu0 %v259
      %v816 = vpop.f32.mrb[0].mxu0
      %v817 = vadd.f32 %v323, %v816
      %v818 = vpop.f32.mrb[0].mxu0
      %819 = vmatprep.mubr.f32.mxu0 0.0
      %820 = vmatmul.mubr.f32.gmra.mrb[0].mxu0 %v260
      %v821 = vpop.f32.mrb[0].mxu0
      %v822 = vadd.f32 %v323, %v821
      %v823 = vpop.f32.mrb[0].mxu0
      %824 = vmatprep.mubr.f32.mxu0 0.0
      %825 = vmatmul.mubr.f32.gmra.mrb[0].mxu0 %v261
      %v826 = vpop.f32.mrb[0].mxu0
      %v827 = vadd.f32 %v323, %v826
      %v828 = vpop.f32.mrb[0].mxu0
      %829 = vmatprep.mubr.f32.mxu0 0.0
      %830 = vmatmul.mubr.f32.gmra.mrb[0].mxu0 %v262
      %v831 = vpop.f32.mrb[0].mxu0
      %v832 = vadd.f32 %v323, %v831
      %v833 = vpop.f32.mrb[0].mxu0
      %834 = vmatprep.mubr.f32.mxu0 0.0
      %835 = vmatmul.mubr.f32.gmra.mrb[0].mxu0 %v263
      %v836 = vpop.f32.mrb[0].mxu0
      %v837 = vadd.f32 %v323, %v836
      %v838 = vpop.f32.mrb[0].mxu0
      %839 = vmatprep.mubr.f32.mxu0 0.0
      %840 = vmatmul.mubr.f32.gmra.mrb[0].mxu0 %v264
      %v841 = vpop.f32.mrb[0].mxu0
      %v842 = vadd.f32 %v323, %v841
      %v843 = vpop.f32.mrb[0].mxu0
      %844 = vmatprep.mubr.f32.mxu0 0.0
      %845 = vmatmul.mubr.f32.gmra.mrb[0].mxu0 %v265
      %v846 = vpop.f32.mrb[0].mxu0
      %v847 = vadd.f32 %v323, %v846
      %v848 = vpop.f32.mrb[0].mxu0
      %849 = vmatprep.mubr.f32.mxu0 0.0
      %850 = vmatmul.mubr.f32.gmra.mrb[0].mxu0 %v266
      %v851 = vpop.f32.mrb[0].mxu0
      %v852 = vadd.f32 %v323, %v851
      %v853 = vpop.f32.mrb[0].mxu0
      %854 = vmatprep.mubr.f32.mxu0 0.0
      %855 = vmatmul.mubr.f32.gmra.mrb[0].mxu0 %v267
      %v856 = vpop.f32.mrb[0].mxu0
      %v857 = vadd.f32 %v323, %v856
      %v858 = vpop.f32.mrb[0].mxu0
      %859 = vmatprep.mubr.f32.mxu0 0.0
      %860 = vmatmul.mubr.f32.gmra.mrb[0].mxu0 %v268
      %v861 = vpop.f32.mrb[0].mxu0
      %v862 = vadd.f32 %v323, %v861
      %v863 = vpop.f32.mrb[0].mxu0
      %864 = vmatprep.mubr.f32.mxu0 0.0
      %865 = vmatmul.mubr.f32.gmra.mrb[0].mxu0 %v269
      %v866 = vpop.f32.mrb[0].mxu0
      %v867 = vadd.f32 %v323, %v866
      %v868 = vpop.f32.mrb[0].mxu0
      %869 = vmatprep.mubr.f32.mxu0 0.0
      %870 = vmatmul.mubr.f32.gmra.mrb[0].mxu0 %v270
      %v871 = vpop.f32.mrb[0].mxu0
      %v872 = vadd.f32 %v323, %v871
      %v873 = vpop.f32.mrb[0].mxu0
      %874 = vmatprep.mubr.f32.mxu0 0.0
      %875 = vmatmul.mubr.f32.gmra.mrb[0].mxu0 %v271
      %v876 = vpop.f32.mrb[0].mxu0
      %v877 = vadd.f32 %v323, %v876
      %v878 = vpop.f32.mrb[0].mxu0
      %879 = vmatprep.mubr.f32.mxu0 0.0
      %880 = vmatmul.mubr.f32.gmra.mrb[0].mxu0 %v272
      %v881 = vpop.f32.mrb[0].mxu0
      %v882 = vadd.f32 %v323, %v881
      %v883 = vpop.f32.mrb[0].mxu0
      %884 = vmatprep.mubr.f32.mxu0 0.0
      %885 = vmatmul.mubr.f32.gmra.mrb[0].mxu0 %v273
      %v886 = vpop.f32.mrb[0].mxu0
      %v887 = vadd.f32 %v323, %v886
      %v888 = vpop.f32.mrb[0].mxu0
      %889 = vmatprep.mubr.f32.mxu0 0.0
      %890 = vmatmul.mubr.f32.gmra.mrb[0].mxu0 %v274
      %v891 = vpop.f32.mrb[0].mxu0
      %v892 = vadd.f32 %v323, %v891
      %v893 = vpop.f32.mrb[0].mxu0
      %894 = vmatprep.mubr.f32.mxu0 0.0
      %895 = vmatmul.mubr.f32.gmra.mrb[0].mxu0 %v275
      %v896 = vpop.f32.mrb[0].mxu0
      %v897 = vadd.f32 %v323, %v896
      %v898 = vpop.f32.mrb[0].mxu0
      %899 = vmatprep.mubr.f32.mxu0 0.0
      %900 = vmatmul.mubr.f32.gmra.mrb[0].mxu0 %v276
      %v901 = vpop.f32.mrb[0].mxu0
      %v902 = vadd.f32 %v323, %v901
      %v903 = vpop.f32.mrb[0].mxu0
      %904 = vmatprep.mubr.f32.mxu0 0.0
      %905 = vmatmul.mubr.f32.gmra.mrb[0].mxu0 %v277
      %v906 = vpop.f32.mrb[0].mxu0
      %v907 = vadd.f32 %v323, %v906
      %v908 = vpop.f32.mrb[0].mxu0
      %909 = vmatprep.mubr.f32.mxu0 0.0
      %910 = vmatmul.mubr.f32.gmra.mrb[0].mxu0 %v278
      %v911 = vpop.f32.mrb[0].mxu0
      %v912 = vadd.f32 %v323, %v911
      %v913 = vpop.f32.mrb[0].mxu0
      %914 = vmatprep.mubr.f32.mxu0 0.0
      %915 = vmatmul.mubr.f32.gmra.mrb[0].mxu0 %v279
      %v916 = vpop.f32.mrb[0].mxu0
      %v917 = vadd.f32 %v323, %v916
      %v918 = vpop.f32.mrb[0].mxu0
      %919 = vmatprep.mubr.f32.mxu0 0.0
      %920 = vmatmul.mubr.f32.gmra.mrb[0].mxu0 %v280
      %v921 = vpop.f32.mrb[0].mxu0
      %v922 = vadd.f32 %v323, %v921
      %v923 = vpop.f32.mrb[0].mxu0
      %924 = vmatprep.mubr.f32.mxu0 0.0
      %925 = vmatmul.mubr.f32.gmra.mrb[0].mxu0 %v281
      %v926 = vpop.f32.mrb[0].mxu0
      %v927 = vadd.f32 %v323, %v926
      %v928 = vpop.f32.mrb[0].mxu0
      %929 = vmatprep.mubr.f32.mxu0 0.0
      %930 = vmatmul.mubr.f32.gmra.mrb[0].mxu0 %v282
      %v931 = vpop.f32.mrb[0].mxu0
      %v932 = vadd.f32 %v323, %v931
      %v933 = vpop.f32.mrb[0].mxu0
      %934 = vmatprep.mubr.f32.mxu0 0.0
      %935 = vmatmul.mubr.f32.gmra.mrb[0].mxu0 %v283
      %v936 = vpop.f32.mrb[0].mxu0
      %v937 = vadd.f32 %v323, %v936
      %v938 = vpop.f32.mrb[0].mxu0
      %939 = vmatprep.mubr.f32.mxu0 0.0
      %940 = vmatmul.mubr.f32.gmra.mrb[0].mxu0 %v284
      %v941 = vpop.f32.mrb[0].mxu0
      %v942 = vadd.f32 %v323, %v941
      %v943 = vpop.f32.mrb[0].mxu0
      %944 = vmatprep.mubr.f32.mxu0 0.0
      %945 = vmatmul.mubr.f32.gmra.mrb[0].mxu0 %v285
      %v946 = vpop.f32.mrb[0].mxu0
      %v947 = vadd.f32 %v323, %v946
      %v948 = vpop.f32.mrb[0].mxu0
      %949 = vmatprep.mubr.f32.mxu0 0.0
      %950 = vmatmul.mubr.f32.gmra.mrb[0].mxu0 %v286
      %v951 = vpop.f32.mrb[0].mxu0
      %v952 = vadd.f32 %v323, %v951
      %v953 = vpop.f32.mrb[0].mxu0
      %954 = vmatprep.mubr.f32.mxu0 0.0
      %955 = vmatmul.mubr.f32.gmra.mrb[0].mxu0 %v287
      %v956 = vpop.f32.mrb[0].mxu0
      %v957 = vadd.f32 %v323, %v956
      %v958 = vpop.f32.mrb[0].mxu0
      %959 = vmatprep.mubr.f32.mxu0 0.0
      %960 = vmatmul.mubr.f32.gmra.mrb[0].mxu0 %v288
      %v961 = vpop.f32.mrb[0].mxu0
      %v962 = vadd.f32 %v323, %v961
      %v963 = vpop.f32.mrb[0].mxu0
      %964 = vmatprep.mubr.f32.mxu0 0.0
      %965 = vmatmul.mubr.f32.gmra.mrb[0].mxu0 %v289
      %v966 = vpop.f32.mrb[0].mxu0
      %v967 = vadd.f32 %v323, %v966
      %v968 = vpop.f32.mrb[0].mxu0
      %969 = vmatprep.mubr.f32.mxu0 0.0
      %970 = vmatmul.mubr.f32.gmra.mrb[0].mxu0 %v290
      %v971 = vpop.f32.mrb[0].mxu0
      %v972 = vadd.f32 %v323, %v971
      %v973 = vpop.f32.mrb[0].mxu0
      %974 = vmatprep.mubr.f32.mxu0 0.0
      %975 = vmatmul.mubr.f32.gmra.mrb[0].mxu0 %v291
      %v976 = vpop.f32.mrb[0].mxu0
      %v977 = vadd.f32 %v323, %v976
      %v978 = vpop.f32.mrb[0].mxu0
      %979 = vmatprep.mubr.f32.mxu0 0.0
      %980 = vmatmul.mubr.f32.gmra.mrb[0].mxu0 %v292
      %v981 = vpop.f32.mrb[0].mxu0
      %v982 = vadd.f32 %v323, %v981
      %v983 = vpop.f32.mrb[0].mxu0
      %984 = vmatprep.mubr.f32.mxu0 0.0
      %985 = vmatmul.mubr.f32.gmra.mrb[0].mxu0 %v293
      %v986 = vpop.f32.mrb[0].mxu0
      %v987 = vadd.f32 %v323, %v986
      %v988 = vpop.f32.mrb[0].mxu0
      %989 = vmatprep.mubr.f32.mxu0 0.0
      %990 = vmatmul.mubr.f32.gmra.mrb[0].mxu0 %v294
      %v991 = vpop.f32.mrb[0].mxu0
      %v992 = vadd.f32 %v323, %v991
      %v993 = vpop.f32.mrb[0].mxu0
      %994 = vmatprep.mubr.f32.mxu0 0.0
      %995 = vmatmul.mubr.f32.gmra.mrb[0].mxu0 %v295
      %v996 = vpop.f32.mrb[0].mxu0
      %v997 = vadd.f32 %v323, %v996
      %v998 = vpop.f32.mrb[0].mxu0
      %999 = vmatprep.mubr.f32.mxu0 0.0
      %1000 = vmatmul.mubr.f32.gmra.mrb[0].mxu0 %v296
      %v1001 = vpop.f32.mrb[0].mxu0
      %v1002 = vadd.f32 %v323, %v1001
      %v1003 = vpop.f32.mrb[0].mxu0
      %1004 = vmatprep.mubr.f32.mxu0 0.0
      %1005 = vmatmul.mubr.f32.gmra.mrb[0].mxu0 %v297
      %v1006 = vpop.f32.mrb[0].mxu0
      %v1007 = vadd.f32 %v323, %v1006
      %v1008 = vpop.f32.mrb[0].mxu0
      %1009 = vmatprep.mubr.f32.mxu0 0.0
      %1010 = vmatmul.mubr.f32.gmra.mrb[0].mxu0 %v298
      %v1011 = vpop.f32.mrb[0].mxu0
      %v1012 = vadd.f32 %v323, %v1011
      %v1013 = vpop.f32.mrb[0].mxu0
      %1014 = vmatprep.mubr.f32.mxu0 0.0
      %1015 = vmatmul.mubr.f32.gmra.mrb[0].mxu0 %v299
      %v1016 = vpop.f32.mrb[0].mxu0
      %v1017 = vadd.f32 %v323, %v1016
      %v1018 = vpop.f32.mrb[0].mxu0
      %1019 = vmatprep.mubr.f32.mxu0 0.0
      %1020 = vmatmul.mubr.f32.gmra.mrb[0].mxu0 %v300
      %v1021 = vpop.f32.mrb[0].mxu0
      %v1022 = vadd.f32 %v323, %v1021
      %v1023 = vpop.f32.mrb[0].mxu0
      %1024 = vmatprep.mubr.f32.mxu0 0.0
      %1025 = vmatmul.mubr.f32.gmra.mrb[0].mxu0 %v301
      %v1026 = vpop.f32.mrb[0].mxu0
      %v1027 = vadd.f32 %v323, %v1026
      %v1028 = vpop.f32.mrb[0].mxu0
      %1029 = vdwg.mxu0
      %v1030 = vmax.f32 %v392, 0.0
      %v1031 = vmax.f32 %v397, 0.0
      %v1032 = vmax.f32 %v402, 0.0
      %v1033 = vmax.f32 %v407, 0.0
      %v1034 = vmax.f32 %v412, 0.0
      %v1035 = vmax.f32 %v417, 0.0
      %v1036 = vmax.f32 %v422, 0.0
      %v1037 = vmax.f32 %v427, 0.0
      %v1038 = vmax.f32 %v432, 0.0
      %v1039 = vmax.f32 %v437, 0.0
      %v1040 = vmax.f32 %v442, 0.0
      %v1041 = vmax.f32 %v447, 0.0
      %v1042 = vmax.f32 %v452, 0.0
      %v1043 = vmax.f32 %v457, 0.0
      %v1044 = vmax.f32 %v462, 0.0
      %v1045 = vmax.f32 %v467, 0.0
      %v1046 = vmax.f32 %v472, 0.0
      %v1047 = vmax.f32 %v477, 0.0
      %v1048 = vmax.f32 %v482, 0.0
      %v1049 = vmax.f32 %v487, 0.0
      %v1050 = vmax.f32 %v492, 0.0
      %v1051 = vmax.f32 %v497, 0.0
      %v1052 = vmax.f32 %v502, 0.0
      %v1053 = vmax.f32 %v507, 0.0
      %v1054 = vmax.f32 %v512, 0.0
      %v1055 = vmax.f32 %v517, 0.0
      %v1056 = vmax.f32 %v522, 0.0
      %v1057 = vmax.f32 %v527, 0.0
      %v1058 = vmax.f32 %v532, 0.0
      %v1059 = vmax.f32 %v537, 0.0
      %v1060 = vmax.f32 %v542, 0.0
      %v1061 = vmax.f32 %v547, 0.0
      %v1062 = vmax.f32 %v552, 0.0
      %v1063 = vmax.f32 %v557, 0.0
      %v1064 = vmax.f32 %v562, 0.0
      %v1065 = vmax.f32 %v567, 0.0
      %v1066 = vmax.f32 %v572, 0.0
      %v1067 = vmax.f32 %v577, 0.0
      %v1068 = vmax.f32 %v582, 0.0
      %v1069 = vmax.f32 %v587, 0.0
      %v1070 = vmax.f32 %v592, 0.0
      %v1071 = vmax.f32 %v597, 0.0
      %v1072 = vmax.f32 %v602, 0.0
      %v1073 = vmax.f32 %v607, 0.0
      %v1074 = vmax.f32 %v612, 0.0
      %v1075 = vmax.f32 %v617, 0.0
      %v1076 = vmax.f32 %v622, 0.0
      %v1077 = vmax.f32 %v627, 0.0
      %v1078 = vmax.f32 %v632, 0.0
      %v1079 = vmax.f32 %v637, 0.0
      %v1080 = vmax.f32 %v642, 0.0
      %v1081 = vmax.f32 %v647, 0.0
      %v1082 = vmax.f32 %v652, 0.0
      %v1083 = vmax.f32 %v657, 0.0
      %v1084 = vmax.f32 %v662, 0.0
      %v1085 = vmax.f32 %v667, 0.0
      %v1086 = vmax.f32 %v672, 0.0
      %v1087 = vmax.f32 %v677, 0.0
      %v1088 = vmax.f32 %v682, 0.0
      %v1089 = vmax.f32 %v687, 0.0
      %v1090 = vmax.f32 %v692, 0.0
      %v1091 = vmax.f32 %v697, 0.0
      %v1092 = vmax.f32 %v702, 0.0
      %v1093 = vmax.f32 %v707, 0.0
      %v1094 = vmax.f32 %v712, 0.0
      %v1095 = vmax.f32 %v717, 0.0
      %v1096 = vmax.f32 %v722, 0.0
      %v1097 = vmax.f32 %v727, 0.0
      %v1098 = vmax.f32 %v732, 0.0
      %v1099 = vmax.f32 %v737, 0.0
      %v1100 = vmax.f32 %v742, 0.0
      %v1101 = vmax.f32 %v747, 0.0
      %v1102 = vmax.f32 %v752, 0.0
      %v1103 = vmax.f32 %v757, 0.0
      %v1104 = vmax.f32 %v762, 0.0
      %v1105 = vmax.f32 %v767, 0.0
      %v1106 = vmax.f32 %v772, 0.0
      %v1107 = vmax.f32 %v777, 0.0
      %v1108 = vmax.f32 %v782, 0.0
      %v1109 = vmax.f32 %v787, 0.0
      %v1110 = vmax.f32 %v792, 0.0
      %v1111 = vmax.f32 %v797, 0.0
      %v1112 = vmax.f32 %v802, 0.0
      %v1113 = vmax.f32 %v807, 0.0
      %v1114 = vmax.f32 %v812, 0.0
      %v1115 = vmax.f32 %v817, 0.0
      %v1116 = vmax.f32 %v822, 0.0
      %v1117 = vmax.f32 %v827, 0.0
      %v1118 = vmax.f32 %v832, 0.0
      %v1119 = vmax.f32 %v837, 0.0
      %v1120 = vmax.f32 %v842, 0.0
      %v1121 = vmax.f32 %v847, 0.0
      %v1122 = vmax.f32 %v852, 0.0
      %v1123 = vmax.f32 %v857, 0.0
      %v1124 = vmax.f32 %v862, 0.0
      %v1125 = vmax.f32 %v867, 0.0
      %v1126 = vmax.f32 %v872, 0.0
      %v1127 = vmax.f32 %v877, 0.0
      %v1128 = vmax.f32 %v882, 0.0
      %v1129 = vmax.f32 %v887, 0.0
      %v1130 = vmax.f32 %v892, 0.0
      %v1131 = vmax.f32 %v897, 0.0
      %v1132 = vmax.f32 %v902, 0.0
      %v1133 = vmax.f32 %v907, 0.0
      %v1134 = vmax.f32 %v912, 0.0
      %v1135 = vmax.f32 %v917, 0.0
      %v1136 = vmax.f32 %v922, 0.0
      %v1137 = vmax.f32 %v927, 0.0
      %v1138 = vmax.f32 %v932, 0.0
      %v1139 = vmax.f32 %v937, 0.0
      %v1140 = vmax.f32 %v942, 0.0
      %v1141 = vmax.f32 %v947, 0.0
      %v1142 = vmax.f32 %v952, 0.0
      %v1143 = vmax.f32 %v957, 0.0
      %v1144 = vmax.f32 %v962, 0.0
      %v1145 = vmax.f32 %v967, 0.0
      %v1146 = vmax.f32 %v972, 0.0
      %v1147 = vmax.f32 %v977, 0.0
      %v1148 = vmax.f32 %v982, 0.0
      %v1149 = vmax.f32 %v987, 0.0
      %v1150 = vmax.f32 %v992, 0.0
      %v1151 = vmax.f32 %v997, 0.0
      %v1152 = vmax.f32 %v1002, 0.0
      %v1153 = vmax.f32 %v1007, 0.0
      %v1154 = vmax.f32 %v1012, 0.0
      %v1155 = vmax.f32 %v1017, 0.0
      %v1156 = vmax.f32 %v1022, 0.0
      %v1157 = vmax.f32 %v1027, 0.0
      %v1158 = vmax.f32 %v1030, %v1034
      %v1159 = vmax.f32 %v1031, %v1035
      %v1160 = vmax.f32 %v1032, %v1036
      %v1161 = vmax.f32 %v1033, %v1037
      %v1162 = vmax.f32 %v1038, %v1042
      %v1163 = vmax.f32 %v1039, %v1043
      %v1164 = vmax.f32 %v1040, %v1044
      %v1165 = vmax.f32 %v1041, %v1045
      %v1166 = vmax.f32 %v1046, %v1050
      %v1167 = vmax.f32 %v1047, %v1051
      %v1168 = vmax.f32 %v1048, %v1052
      %v1169 = vmax.f32 %v1049, %v1053
      %v1170 = vmax.f32 %v1054, %v1058
      %v1171 = vmax.f32 %v1055, %v1059
      %v1172 = vmax.f32 %v1056, %v1060
      %v1173 = vmax.f32 %v1057, %v1061
      %v1174 = vmax.f32 %v1062, %v1066
      %v1175 = vmax.f32 %v1063, %v1067
      %v1176 = vmax.f32 %v1064, %v1068
      %v1177 = vmax.f32 %v1065, %v1069
      %v1178 = vmax.f32 %v1070, %v1074
      %v1179 = vmax.f32 %v1071, %v1075
      %v1180 = vmax.f32 %v1072, %v1076
      %v1181 = vmax.f32 %v1073, %v1077
      %v1182 = vmax.f32 %v1078, %v1082
      %v1183 = vmax.f32 %v1079, %v1083
      %v1184 = vmax.f32 %v1080, %v1084
      %v1185 = vmax.f32 %v1081, %v1085
      %v1186 = vmax.f32 %v1086, %v1090
      %v1187 = vmax.f32 %v1087, %v1091
      %v1188 = vmax.f32 %v1088, %v1092
      %v1189 = vmax.f32 %v1089, %v1093
      %v1190 = vmax.f32 %v1094, %v1098
      %v1191 = vmax.f32 %v1095, %v1099
      %v1192 = vmax.f32 %v1096, %v1100
      %v1193 = vmax.f32 %v1097, %v1101
      %v1194 = vmax.f32 %v1102, %v1106
      %v1195 = vmax.f32 %v1103, %v1107
      %v1196 = vmax.f32 %v1104, %v1108
      %v1197 = vmax.f32 %v1105, %v1109
      %v1198 = vmax.f32 %v1110, %v1114
      %v1199 = vmax.f32 %v1111, %v1115
      %v1200 = vmax.f32 %v1112, %v1116
      %v1201 = vmax.f32 %v1113, %v1117
      %v1202 = vmax.f32 %v1118, %v1122
      %v1203 = vmax.f32 %v1119, %v1123
      %v1204 = vmax.f32 %v1120, %v1124
      %v1205 = vmax.f32 %v1121, %v1125
      %v1206 = vmax.f32 %v1126, %v1130
      %v1207 = vmax.f32 %v1127, %v1131
      %v1208 = vmax.f32 %v1128, %v1132
      %v1209 = vmax.f32 %v1129, %v1133
      %v1210 = vmax.f32 %v1134, %v1138
      %v1211 = vmax.f32 %v1135, %v1139
      %v1212 = vmax.f32 %v1136, %v1140
      %v1213 = vmax.f32 %v1137, %v1141
      %v1214 = vmax.f32 %v1142, %v1146
      %v1215 = vmax.f32 %v1143, %v1147
      %v1216 = vmax.f32 %v1144, %v1148
      %v1217 = vmax.f32 %v1145, %v1149
      %v1218 = vmax.f32 %v1150, %v1154
      %v1219 = vmax.f32 %v1151, %v1155
      %v1220 = vmax.f32 %v1152, %v1156
      %v1221 = vmax.f32 %v1153, %v1157
      %v1286 = vcombine.high %v1158, %v1158
      %v1288 = vunpack.c.l.s4 1983009808
      %v1289 = vunpack.c.0.s8 %v1288
      %v1290 = vlaneseq
      %v1291 = vshrl.u32 %v1290, 7
      %v1292 = vsub.s32 %v1289, %v1291
      %v1293 = vrot.slane %v1158, %v1292
      %v1295 = vunpack.c.l.s4 1983009808
      %v1296 = vunpack.c.0.s8 %v1295
      %v1297 = vlaneseq
      %v1298 = vshrl.u32 %v1297, 7
      %v1299 = vsub.s32 %v1296, %v1298
      %v1300 = vrot.slane %v1286, %v1299
      %v1301 = vcombine.high %v1293, %v1293
      %v1302 = vcombine.high %v1300, %v1300
      %v1303 = vcombine.high %v1159, %v1159
      %v1305 = vunpack.c.l.s4 1983009808
      %v1306 = vunpack.c.0.s8 %v1305
      %v1307 = vlaneseq
      %v1308 = vshrl.u32 %v1307, 7
      %v1309 = vsub.s32 %v1306, %v1308
      %v1310 = vrot.slane %v1159, %v1309
      %v1312 = vunpack.c.l.s4 1983009808
      %v1313 = vunpack.c.0.s8 %v1312
      %v1314 = vlaneseq
      %v1315 = vshrl.u32 %v1314, 7
      %v1316 = vsub.s32 %v1313, %v1315
      %v1317 = vrot.slane %v1303, %v1316
      %v1318 = vcombine.high %v1310, %v1310
      %v1319 = vcombine.high %v1317, %v1317
      %v1320 = vcombine.high %v1160, %v1160
      %v1322 = vunpack.c.l.s4 1983009808
      %v1323 = vunpack.c.0.s8 %v1322
      %v1324 = vlaneseq
      %v1325 = vshrl.u32 %v1324, 7
      %v1326 = vsub.s32 %v1323, %v1325
      %v1327 = vrot.slane %v1160, %v1326
      %v1329 = vunpack.c.l.s4 1983009808
      %v1330 = vunpack.c.0.s8 %v1329
      %v1331 = vlaneseq
      %v1332 = vshrl.u32 %v1331, 7
      %v1333 = vsub.s32 %v1330, %v1332
      %v1334 = vrot.slane %v1320, %v1333
      %v1335 = vcombine.high %v1327, %v1327
      %v1336 = vcombine.high %v1334, %v1334
      %v1337 = vcombine.high %v1161, %v1161
      %v1339 = vunpack.c.l.s4 1983009808
      %v1340 = vunpack.c.0.s8 %v1339
      %v1341 = vlaneseq
      %v1342 = vshrl.u32 %v1341, 7
      %v1343 = vsub.s32 %v1340, %v1342
      %v1344 = vrot.slane %v1161, %v1343
      %v1346 = vunpack.c.l.s4 1983009808
      %v1347 = vunpack.c.0.s8 %v1346
      %v1348 = vlaneseq
      %v1349 = vshrl.u32 %v1348, 7
      %v1350 = vsub.s32 %v1347, %v1349
      %v1351 = vrot.slane %v1337, %v1350
      %v1352 = vcombine.high %v1344, %v1344
      %v1353 = vcombine.high %v1351, %v1351
      %v1354 = vcombine.high %v1162, %v1162
      %v1356 = vunpack.c.l.s4 1983009808
      %v1357 = vunpack.c.0.s8 %v1356
      %v1358 = vlaneseq
      %v1359 = vshrl.u32 %v1358, 7
      %v1360 = vsub.s32 %v1357, %v1359
      %v1361 = vrot.slane %v1162, %v1360
      %v1363 = vunpack.c.l.s4 1983009808
      %v1364 = vunpack.c.0.s8 %v1363
      %v1365 = vlaneseq
      %v1366 = vshrl.u32 %v1365, 7
      %v1367 = vsub.s32 %v1364, %v1366
      %v1368 = vrot.slane %v1354, %v1367
      %v1369 = vcombine.high %v1361, %v1361
      %v1370 = vcombine.high %v1368, %v1368
      %v1371 = vcombine.high %v1163, %v1163
      %v1373 = vunpack.c.l.s4 1983009808
      %v1374 = vunpack.c.0.s8 %v1373
      %v1375 = vlaneseq
      %v1376 = vshrl.u32 %v1375, 7
      %v1377 = vsub.s32 %v1374, %v1376
      %v1378 = vrot.slane %v1163, %v1377
      %v1380 = vunpack.c.l.s4 1983009808
      %v1381 = vunpack.c.0.s8 %v1380
      %v1382 = vlaneseq
      %v1383 = vshrl.u32 %v1382, 7
      %v1384 = vsub.s32 %v1381, %v1383
      %v1385 = vrot.slane %v1371, %v1384
      %v1386 = vcombine.high %v1378, %v1378
      %v1387 = vcombine.high %v1385, %v1385
      %v1388 = vcombine.high %v1164, %v1164
      %v1390 = vunpack.c.l.s4 1983009808
      %v1391 = vunpack.c.0.s8 %v1390
      %v1392 = vlaneseq
      %v1393 = vshrl.u32 %v1392, 7
      %v1394 = vsub.s32 %v1391, %v1393
      %v1395 = vrot.slane %v1164, %v1394
      %v1397 = vunpack.c.l.s4 1983009808
      %v1398 = vunpack.c.0.s8 %v1397
      %v1399 = vlaneseq
      %v1400 = vshrl.u32 %v1399, 7
      %v1401 = vsub.s32 %v1398, %v1400
      %v1402 = vrot.slane %v1388, %v1401
      %v1403 = vcombine.high %v1395, %v1395
      %v1404 = vcombine.high %v1402, %v1402
      %v1405 = vcombine.high %v1165, %v1165
      %v1407 = vunpack.c.l.s4 1983009808
      %v1408 = vunpack.c.0.s8 %v1407
      %v1409 = vlaneseq
      %v1410 = vshrl.u32 %v1409, 7
      %v1411 = vsub.s32 %v1408, %v1410
      %v1412 = vrot.slane %v1165, %v1411
      %v1414 = vunpack.c.l.s4 1983009808
      %v1415 = vunpack.c.0.s8 %v1414
      %v1416 = vlaneseq
      %v1417 = vshrl.u32 %v1416, 7
      %v1418 = vsub.s32 %v1415, %v1417
      %v1419 = vrot.slane %v1405, %v1418
      %v1420 = vcombine.high %v1412, %v1412
      %v1421 = vcombine.high %v1419, %v1419
      %v1422 = vcombine.high %v1166, %v1166
      %v1424 = vunpack.c.l.s4 1983009808
      %v1425 = vunpack.c.0.s8 %v1424
      %v1426 = vlaneseq
      %v1427 = vshrl.u32 %v1426, 7
      %v1428 = vsub.s32 %v1425, %v1427
      %v1429 = vrot.slane %v1166, %v1428
      %v1431 = vunpack.c.l.s4 1983009808
      %v1432 = vunpack.c.0.s8 %v1431
      %v1433 = vlaneseq
      %v1434 = vshrl.u32 %v1433, 7
      %v1435 = vsub.s32 %v1432, %v1434
      %v1436 = vrot.slane %v1422, %v1435
      %v1437 = vcombine.high %v1429, %v1429
      %v1438 = vcombine.high %v1436, %v1436
      %v1439 = vcombine.high %v1167, %v1167
      %v1441 = vunpack.c.l.s4 1983009808
      %v1442 = vunpack.c.0.s8 %v1441
      %v1443 = vlaneseq
      %v1444 = vshrl.u32 %v1443, 7
      %v1445 = vsub.s32 %v1442, %v1444
      %v1446 = vrot.slane %v1167, %v1445
      %v1448 = vunpack.c.l.s4 1983009808
      %v1449 = vunpack.c.0.s8 %v1448
      %v1450 = vlaneseq
      %v1451 = vshrl.u32 %v1450, 7
      %v1452 = vsub.s32 %v1449, %v1451
      %v1453 = vrot.slane %v1439, %v1452
      %v1454 = vcombine.high %v1446, %v1446
      %v1455 = vcombine.high %v1453, %v1453
      %v1456 = vcombine.high %v1168, %v1168
      %v1458 = vunpack.c.l.s4 1983009808
      %v1459 = vunpack.c.0.s8 %v1458
      %v1460 = vlaneseq
      %v1461 = vshrl.u32 %v1460, 7
      %v1462 = vsub.s32 %v1459, %v1461
      %v1463 = vrot.slane %v1168, %v1462
      %v1465 = vunpack.c.l.s4 1983009808
      %v1466 = vunpack.c.0.s8 %v1465
      %v1467 = vlaneseq
      %v1468 = vshrl.u32 %v1467, 7
      %v1469 = vsub.s32 %v1466, %v1468
      %v1470 = vrot.slane %v1456, %v1469
      %v1471 = vcombine.high %v1463, %v1463
      %v1472 = vcombine.high %v1470, %v1470
      %v1473 = vcombine.high %v1169, %v1169
      %v1475 = vunpack.c.l.s4 1983009808
      %v1476 = vunpack.c.0.s8 %v1475
      %v1477 = vlaneseq
      %v1478 = vshrl.u32 %v1477, 7
      %v1479 = vsub.s32 %v1476, %v1478
      %v1480 = vrot.slane %v1169, %v1479
      %v1482 = vunpack.c.l.s4 1983009808
      %v1483 = vunpack.c.0.s8 %v1482
      %v1484 = vlaneseq
      %v1485 = vshrl.u32 %v1484, 7
      %v1486 = vsub.s32 %v1483, %v1485
      %v1487 = vrot.slane %v1473, %v1486
      %v1488 = vcombine.high %v1480, %v1480
      %v1489 = vcombine.high %v1487, %v1487
      %v1490 = vcombine.high %v1170, %v1170
      %v1492 = vunpack.c.l.s4 1983009808
      %v1493 = vunpack.c.0.s8 %v1492
      %v1494 = vlaneseq
      %v1495 = vshrl.u32 %v1494, 7
      %v1496 = vsub.s32 %v1493, %v1495
      %v1497 = vrot.slane %v1170, %v1496
      %v1499 = vunpack.c.l.s4 1983009808
      %v1500 = vunpack.c.0.s8 %v1499
      %v1501 = vlaneseq
      %v1502 = vshrl.u32 %v1501, 7
      %v1503 = vsub.s32 %v1500, %v1502
      %v1504 = vrot.slane %v1490, %v1503
      %v1505 = vcombine.high %v1497, %v1497
      %v1506 = vcombine.high %v1504, %v1504
      %v1507 = vcombine.high %v1171, %v1171
      %v1509 = vunpack.c.l.s4 1983009808
      %v1510 = vunpack.c.0.s8 %v1509
      %v1511 = vlaneseq
      %v1512 = vshrl.u32 %v1511, 7
      %v1513 = vsub.s32 %v1510, %v1512
      %v1514 = vrot.slane %v1171, %v1513
      %v1516 = vunpack.c.l.s4 1983009808
      %v1517 = vunpack.c.0.s8 %v1516
      %v1518 = vlaneseq
      %v1519 = vshrl.u32 %v1518, 7
      %v1520 = vsub.s32 %v1517, %v1519
      %v1521 = vrot.slane %v1507, %v1520
      %v1522 = vcombine.high %v1514, %v1514
      %v1523 = vcombine.high %v1521, %v1521
      %v1524 = vcombine.high %v1172, %v1172
      %v1526 = vunpack.c.l.s4 1983009808
      %v1527 = vunpack.c.0.s8 %v1526
      %v1528 = vlaneseq
      %v1529 = vshrl.u32 %v1528, 7
      %v1530 = vsub.s32 %v1527, %v1529
      %v1531 = vrot.slane %v1172, %v1530
      %v1533 = vunpack.c.l.s4 1983009808
      %v1534 = vunpack.c.0.s8 %v1533
      %v1535 = vlaneseq
      %v1536 = vshrl.u32 %v1535, 7
      %v1537 = vsub.s32 %v1534, %v1536
      %v1538 = vrot.slane %v1524, %v1537
      %v1539 = vcombine.high %v1531, %v1531
      %v1540 = vcombine.high %v1538, %v1538
      %v1541 = vcombine.high %v1173, %v1173
      %v1543 = vunpack.c.l.s4 1983009808
      %v1544 = vunpack.c.0.s8 %v1543
      %v1545 = vlaneseq
      %v1546 = vshrl.u32 %v1545, 7
      %v1547 = vsub.s32 %v1544, %v1546
      %v1548 = vrot.slane %v1173, %v1547
      %v1550 = vunpack.c.l.s4 1983009808
      %v1551 = vunpack.c.0.s8 %v1550
      %v1552 = vlaneseq
      %v1553 = vshrl.u32 %v1552, 7
      %v1554 = vsub.s32 %v1551, %v1553
      %v1555 = vrot.slane %v1541, %v1554
      %v1556 = vcombine.high %v1548, %v1548
      %v1557 = vcombine.high %v1555, %v1555
      %v1558 = vcombine.high %v1174, %v1174
      %v1560 = vunpack.c.l.s4 1983009808
      %v1561 = vunpack.c.0.s8 %v1560
      %v1562 = vlaneseq
      %v1563 = vshrl.u32 %v1562, 7
      %v1564 = vsub.s32 %v1561, %v1563
      %v1565 = vrot.slane %v1174, %v1564
      %v1567 = vunpack.c.l.s4 1983009808
      %v1568 = vunpack.c.0.s8 %v1567
      %v1569 = vlaneseq
      %v1570 = vshrl.u32 %v1569, 7
      %v1571 = vsub.s32 %v1568, %v1570
      %v1572 = vrot.slane %v1558, %v1571
      %v1573 = vcombine.high %v1565, %v1565
      %v1574 = vcombine.high %v1572, %v1572
      %v1575 = vcombine.high %v1175, %v1175
      %v1577 = vunpack.c.l.s4 1983009808
      %v1578 = vunpack.c.0.s8 %v1577
      %v1579 = vlaneseq
      %v1580 = vshrl.u32 %v1579, 7
      %v1581 = vsub.s32 %v1578, %v1580
      %v1582 = vrot.slane %v1175, %v1581
      %v1584 = vunpack.c.l.s4 1983009808
      %v1585 = vunpack.c.0.s8 %v1584
      %v1586 = vlaneseq
      %v1587 = vshrl.u32 %v1586, 7
      %v1588 = vsub.s32 %v1585, %v1587
      %v1589 = vrot.slane %v1575, %v1588
      %v1590 = vcombine.high %v1582, %v1582
      %v1591 = vcombine.high %v1589, %v1589
      %v1592 = vcombine.high %v1176, %v1176
      %v1594 = vunpack.c.l.s4 1983009808
      %v1595 = vunpack.c.0.s8 %v1594
      %v1596 = vlaneseq
      %v1597 = vshrl.u32 %v1596, 7
      %v1598 = vsub.s32 %v1595, %v1597
      %v1599 = vrot.slane %v1176, %v1598
      %v1601 = vunpack.c.l.s4 1983009808
      %v1602 = vunpack.c.0.s8 %v1601
      %v1603 = vlaneseq
      %v1604 = vshrl.u32 %v1603, 7
      %v1605 = vsub.s32 %v1602, %v1604
      %v1606 = vrot.slane %v1592, %v1605
      %v1607 = vcombine.high %v1599, %v1599
      %v1608 = vcombine.high %v1606, %v1606
      %v1609 = vcombine.high %v1177, %v1177
      %v1611 = vunpack.c.l.s4 1983009808
      %v1612 = vunpack.c.0.s8 %v1611
      %v1613 = vlaneseq
      %v1614 = vshrl.u32 %v1613, 7
      %v1615 = vsub.s32 %v1612, %v1614
      %v1616 = vrot.slane %v1177, %v1615
      %v1618 = vunpack.c.l.s4 1983009808
      %v1619 = vunpack.c.0.s8 %v1618
      %v1620 = vlaneseq
      %v1621 = vshrl.u32 %v1620, 7
      %v1622 = vsub.s32 %v1619, %v1621
      %v1623 = vrot.slane %v1609, %v1622
      %v1624 = vcombine.high %v1616, %v1616
      %v1625 = vcombine.high %v1623, %v1623
      %v1626 = vcombine.high %v1178, %v1178
      %v1628 = vunpack.c.l.s4 1983009808
      %v1629 = vunpack.c.0.s8 %v1628
      %v1630 = vlaneseq
      %v1631 = vshrl.u32 %v1630, 7
      %v1632 = vsub.s32 %v1629, %v1631
      %v1633 = vrot.slane %v1178, %v1632
      %v1635 = vunpack.c.l.s4 1983009808
      %v1636 = vunpack.c.0.s8 %v1635
      %v1637 = vlaneseq
      %v1638 = vshrl.u32 %v1637, 7
      %v1639 = vsub.s32 %v1636, %v1638
      %v1640 = vrot.slane %v1626, %v1639
      %v1641 = vcombine.high %v1633, %v1633
      %v1642 = vcombine.high %v1640, %v1640
      %v1643 = vcombine.high %v1179, %v1179
      %v1645 = vunpack.c.l.s4 1983009808
      %v1646 = vunpack.c.0.s8 %v1645
      %v1647 = vlaneseq
      %v1648 = vshrl.u32 %v1647, 7
      %v1649 = vsub.s32 %v1646, %v1648
      %v1650 = vrot.slane %v1179, %v1649
      %v1652 = vunpack.c.l.s4 1983009808
      %v1653 = vunpack.c.0.s8 %v1652
      %v1654 = vlaneseq
      %v1655 = vshrl.u32 %v1654, 7
      %v1656 = vsub.s32 %v1653, %v1655
      %v1657 = vrot.slane %v1643, %v1656
      %v1658 = vcombine.high %v1650, %v1650
      %v1659 = vcombine.high %v1657, %v1657
      %v1660 = vcombine.high %v1180, %v1180
      %v1662 = vunpack.c.l.s4 1983009808
      %v1663 = vunpack.c.0.s8 %v1662
      %v1664 = vlaneseq
      %v1665 = vshrl.u32 %v1664, 7
      %v1666 = vsub.s32 %v1663, %v1665
      %v1667 = vrot.slane %v1180, %v1666
      %v1669 = vunpack.c.l.s4 1983009808
      %v1670 = vunpack.c.0.s8 %v1669
      %v1671 = vlaneseq
      %v1672 = vshrl.u32 %v1671, 7
      %v1673 = vsub.s32 %v1670, %v1672
      %v1674 = vrot.slane %v1660, %v1673
      %v1675 = vcombine.high %v1667, %v1667
      %v1676 = vcombine.high %v1674, %v1674
      %v1677 = vcombine.high %v1181, %v1181
      %v1679 = vunpack.c.l.s4 1983009808
      %v1680 = vunpack.c.0.s8 %v1679
      %v1681 = vlaneseq
      %v1682 = vshrl.u32 %v1681, 7
      %v1683 = vsub.s32 %v1680, %v1682
      %v1684 = vrot.slane %v1181, %v1683
      %v1686 = vunpack.c.l.s4 1983009808
      %v1687 = vunpack.c.0.s8 %v1686
      %v1688 = vlaneseq
      %v1689 = vshrl.u32 %v1688, 7
      %v1690 = vsub.s32 %v1687, %v1689
      %v1691 = vrot.slane %v1677, %v1690
      %v1692 = vcombine.high %v1684, %v1684
      %v1693 = vcombine.high %v1691, %v1691
      %v1694 = vcombine.high %v1182, %v1182
      %v1696 = vunpack.c.l.s4 1983009808
      %v1697 = vunpack.c.0.s8 %v1696
      %v1698 = vlaneseq
      %v1699 = vshrl.u32 %v1698, 7
      %v1700 = vsub.s32 %v1697, %v1699
      %v1701 = vrot.slane %v1182, %v1700
      %v1703 = vunpack.c.l.s4 1983009808
      %v1704 = vunpack.c.0.s8 %v1703
      %v1705 = vlaneseq
      %v1706 = vshrl.u32 %v1705, 7
      %v1707 = vsub.s32 %v1704, %v1706
      %v1708 = vrot.slane %v1694, %v1707
      %v1709 = vcombine.high %v1701, %v1701
      %v1710 = vcombine.high %v1708, %v1708
      %v1711 = vcombine.high %v1183, %v1183
      %v1713 = vunpack.c.l.s4 1983009808
      %v1714 = vunpack.c.0.s8 %v1713
      %v1715 = vlaneseq
      %v1716 = vshrl.u32 %v1715, 7
      %v1717 = vsub.s32 %v1714, %v1716
      %v1718 = vrot.slane %v1183, %v1717
      %v1720 = vunpack.c.l.s4 1983009808
      %v1721 = vunpack.c.0.s8 %v1720
      %v1722 = vlaneseq
      %v1723 = vshrl.u32 %v1722, 7
      %v1724 = vsub.s32 %v1721, %v1723
      %v1725 = vrot.slane %v1711, %v1724
      %v1726 = vcombine.high %v1718, %v1718
      %v1727 = vcombine.high %v1725, %v1725
      %v1728 = vcombine.high %v1184, %v1184
      %v1730 = vunpack.c.l.s4 1983009808
      %v1731 = vunpack.c.0.s8 %v1730
      %v1732 = vlaneseq
      %v1733 = vshrl.u32 %v1732, 7
      %v1734 = vsub.s32 %v1731, %v1733
      %v1735 = vrot.slane %v1184, %v1734
      %v1737 = vunpack.c.l.s4 1983009808
      %v1738 = vunpack.c.0.s8 %v1737
      %v1739 = vlaneseq
      %v1740 = vshrl.u32 %v1739, 7
      %v1741 = vsub.s32 %v1738, %v1740
      %v1742 = vrot.slane %v1728, %v1741
      %v1743 = vcombine.high %v1735, %v1735
      %v1744 = vcombine.high %v1742, %v1742
      %v1745 = vcombine.high %v1185, %v1185
      %v1747 = vunpack.c.l.s4 1983009808
      %v1748 = vunpack.c.0.s8 %v1747
      %v1749 = vlaneseq
      %v1750 = vshrl.u32 %v1749, 7
      %v1751 = vsub.s32 %v1748, %v1750
      %v1752 = vrot.slane %v1185, %v1751
      %v1754 = vunpack.c.l.s4 1983009808
      %v1755 = vunpack.c.0.s8 %v1754
      %v1756 = vlaneseq
      %v1757 = vshrl.u32 %v1756, 7
      %v1758 = vsub.s32 %v1755, %v1757
      %v1759 = vrot.slane %v1745, %v1758
      %v1760 = vcombine.high %v1752, %v1752
      %v1761 = vcombine.high %v1759, %v1759
      %v1762 = vcombine.high %v1186, %v1186
      %v1764 = vunpack.c.l.s4 1983009808
      %v1765 = vunpack.c.0.s8 %v1764
      %v1766 = vlaneseq
      %v1767 = vshrl.u32 %v1766, 7
      %v1768 = vsub.s32 %v1765, %v1767
      %v1769 = vrot.slane %v1186, %v1768
      %v1771 = vunpack.c.l.s4 1983009808
      %v1772 = vunpack.c.0.s8 %v1771
      %v1773 = vlaneseq
      %v1774 = vshrl.u32 %v1773, 7
      %v1775 = vsub.s32 %v1772, %v1774
      %v1776 = vrot.slane %v1762, %v1775
      %v1777 = vcombine.high %v1769, %v1769
      %v1778 = vcombine.high %v1776, %v1776
      %v1779 = vcombine.high %v1187, %v1187
      %v1781 = vunpack.c.l.s4 1983009808
      %v1782 = vunpack.c.0.s8 %v1781
      %v1783 = vlaneseq
      %v1784 = vshrl.u32 %v1783, 7
      %v1785 = vsub.s32 %v1782, %v1784
      %v1786 = vrot.slane %v1187, %v1785
      %v1788 = vunpack.c.l.s4 1983009808
      %v1789 = vunpack.c.0.s8 %v1788
      %v1790 = vlaneseq
      %v1791 = vshrl.u32 %v1790, 7
      %v1792 = vsub.s32 %v1789, %v1791
      %v1793 = vrot.slane %v1779, %v1792
      %v1794 = vcombine.high %v1786, %v1786
      %v1795 = vcombine.high %v1793, %v1793
      %v1796 = vcombine.high %v1188, %v1188
      %v1798 = vunpack.c.l.s4 1983009808
      %v1799 = vunpack.c.0.s8 %v1798
      %v1800 = vlaneseq
      %v1801 = vshrl.u32 %v1800, 7
      %v1802 = vsub.s32 %v1799, %v1801
      %v1803 = vrot.slane %v1188, %v1802
      %v1805 = vunpack.c.l.s4 1983009808
      %v1806 = vunpack.c.0.s8 %v1805
      %v1807 = vlaneseq
      %v1808 = vshrl.u32 %v1807, 7
      %v1809 = vsub.s32 %v1806, %v1808
      %v1810 = vrot.slane %v1796, %v1809
      %v1811 = vcombine.high %v1803, %v1803
      %v1812 = vcombine.high %v1810, %v1810
      %v1813 = vcombine.high %v1189, %v1189
      %v1815 = vunpack.c.l.s4 1983009808
      %v1816 = vunpack.c.0.s8 %v1815
      %v1817 = vlaneseq
      %v1818 = vshrl.u32 %v1817, 7
      %v1819 = vsub.s32 %v1816, %v1818
      %v1820 = vrot.slane %v1189, %v1819
      %v1822 = vunpack.c.l.s4 1983009808
      %v1823 = vunpack.c.0.s8 %v1822
      %v1824 = vlaneseq
      %v1825 = vshrl.u32 %v1824, 7
      %v1826 = vsub.s32 %v1823, %v1825
      %v1827 = vrot.slane %v1813, %v1826
      %v1828 = vcombine.high %v1820, %v1820
      %v1829 = vcombine.high %v1827, %v1827
      %v1830 = vcombine.high %v1190, %v1190
      %v1832 = vunpack.c.l.s4 1983009808
      %v1833 = vunpack.c.0.s8 %v1832
      %v1834 = vlaneseq
      %v1835 = vshrl.u32 %v1834, 7
      %v1836 = vsub.s32 %v1833, %v1835
      %v1837 = vrot.slane %v1190, %v1836
      %v1839 = vunpack.c.l.s4 1983009808
      %v1840 = vunpack.c.0.s8 %v1839
      %v1841 = vlaneseq
      %v1842 = vshrl.u32 %v1841, 7
      %v1843 = vsub.s32 %v1840, %v1842
      %v1844 = vrot.slane %v1830, %v1843
      %v1845 = vcombine.high %v1837, %v1837
      %v1846 = vcombine.high %v1844, %v1844
      %v1847 = vcombine.high %v1191, %v1191
      %v1849 = vunpack.c.l.s4 1983009808
      %v1850 = vunpack.c.0.s8 %v1849
      %v1851 = vlaneseq
      %v1852 = vshrl.u32 %v1851, 7
      %v1853 = vsub.s32 %v1850, %v1852
      %v1854 = vrot.slane %v1191, %v1853
      %v1856 = vunpack.c.l.s4 1983009808
      %v1857 = vunpack.c.0.s8 %v1856
      %v1858 = vlaneseq
      %v1859 = vshrl.u32 %v1858, 7
      %v1860 = vsub.s32 %v1857, %v1859
      %v1861 = vrot.slane %v1847, %v1860
      %v1862 = vcombine.high %v1854, %v1854
      %v1863 = vcombine.high %v1861, %v1861
      %v1864 = vcombine.high %v1192, %v1192
      %v1866 = vunpack.c.l.s4 1983009808
      %v1867 = vunpack.c.0.s8 %v1866
      %v1868 = vlaneseq
      %v1869 = vshrl.u32 %v1868, 7
      %v1870 = vsub.s32 %v1867, %v1869
      %v1871 = vrot.slane %v1192, %v1870
      %v1873 = vunpack.c.l.s4 1983009808
      %v1874 = vunpack.c.0.s8 %v1873
      %v1875 = vlaneseq
      %v1876 = vshrl.u32 %v1875, 7
      %v1877 = vsub.s32 %v1874, %v1876
      %v1878 = vrot.slane %v1864, %v1877
      %v1879 = vcombine.high %v1871, %v1871
      %v1880 = vcombine.high %v1878, %v1878
      %v1881 = vcombine.high %v1193, %v1193
      %v1883 = vunpack.c.l.s4 1983009808
      %v1884 = vunpack.c.0.s8 %v1883
      %v1885 = vlaneseq
      %v1886 = vshrl.u32 %v1885, 7
      %v1887 = vsub.s32 %v1884, %v1886
      %v1888 = vrot.slane %v1193, %v1887
      %v1890 = vunpack.c.l.s4 1983009808
      %v1891 = vunpack.c.0.s8 %v1890
      %v1892 = vlaneseq
      %v1893 = vshrl.u32 %v1892, 7
      %v1894 = vsub.s32 %v1891, %v1893
      %v1895 = vrot.slane %v1881, %v1894
      %v1896 = vcombine.high %v1888, %v1888
      %v1897 = vcombine.high %v1895, %v1895
      %v1898 = vcombine.high %v1194, %v1194
      %v1900 = vunpack.c.l.s4 1983009808
      %v1901 = vunpack.c.0.s8 %v1900
      %v1902 = vlaneseq
      %v1903 = vshrl.u32 %v1902, 7
      %v1904 = vsub.s32 %v1901, %v1903
      %v1905 = vrot.slane %v1194, %v1904
      %v1907 = vunpack.c.l.s4 1983009808
      %v1908 = vunpack.c.0.s8 %v1907
      %v1909 = vlaneseq
      %v1910 = vshrl.u32 %v1909, 7
      %v1911 = vsub.s32 %v1908, %v1910
      %v1912 = vrot.slane %v1898, %v1911
      %v1913 = vcombine.high %v1905, %v1905
      %v1914 = vcombine.high %v1912, %v1912
      %v1915 = vcombine.high %v1195, %v1195
      %v1917 = vunpack.c.l.s4 1983009808
      %v1918 = vunpack.c.0.s8 %v1917
      %v1919 = vlaneseq
      %v1920 = vshrl.u32 %v1919, 7
      %v1921 = vsub.s32 %v1918, %v1920
      %v1922 = vrot.slane %v1195, %v1921
      %v1924 = vunpack.c.l.s4 1983009808
      %v1925 = vunpack.c.0.s8 %v1924
      %v1926 = vlaneseq
      %v1927 = vshrl.u32 %v1926, 7
      %v1928 = vsub.s32 %v1925, %v1927
      %v1929 = vrot.slane %v1915, %v1928
      %v1930 = vcombine.high %v1922, %v1922
      %v1931 = vcombine.high %v1929, %v1929
      %v1932 = vcombine.high %v1196, %v1196
      %v1934 = vunpack.c.l.s4 1983009808
      %v1935 = vunpack.c.0.s8 %v1934
      %v1936 = vlaneseq
      %v1937 = vshrl.u32 %v1936, 7
      %v1938 = vsub.s32 %v1935, %v1937
      %v1939 = vrot.slane %v1196, %v1938
      %v1941 = vunpack.c.l.s4 1983009808
      %v1942 = vunpack.c.0.s8 %v1941
      %v1943 = vlaneseq
      %v1944 = vshrl.u32 %v1943, 7
      %v1945 = vsub.s32 %v1942, %v1944
      %v1946 = vrot.slane %v1932, %v1945
      %v1947 = vcombine.high %v1939, %v1939
      %v1948 = vcombine.high %v1946, %v1946
      %v1949 = vcombine.high %v1197, %v1197
      %v1951 = vunpack.c.l.s4 1983009808
      %v1952 = vunpack.c.0.s8 %v1951
      %v1953 = vlaneseq
      %v1954 = vshrl.u32 %v1953, 7
      %v1955 = vsub.s32 %v1952, %v1954
      %v1956 = vrot.slane %v1197, %v1955
      %v1958 = vunpack.c.l.s4 1983009808
      %v1959 = vunpack.c.0.s8 %v1958
      %v1960 = vlaneseq
      %v1961 = vshrl.u32 %v1960, 7
      %v1962 = vsub.s32 %v1959, %v1961
      %v1963 = vrot.slane %v1949, %v1962
      %v1964 = vcombine.high %v1956, %v1956
      %v1965 = vcombine.high %v1963, %v1963
      %v1966 = vcombine.high %v1198, %v1198
      %v1968 = vunpack.c.l.s4 1983009808
      %v1969 = vunpack.c.0.s8 %v1968
      %v1970 = vlaneseq
      %v1971 = vshrl.u32 %v1970, 7
      %v1972 = vsub.s32 %v1969, %v1971
      %v1973 = vrot.slane %v1198, %v1972
      %v1975 = vunpack.c.l.s4 1983009808
      %v1976 = vunpack.c.0.s8 %v1975
      %v1977 = vlaneseq
      %v1978 = vshrl.u32 %v1977, 7
      %v1979 = vsub.s32 %v1976, %v1978
      %v1980 = vrot.slane %v1966, %v1979
      %v1981 = vcombine.high %v1973, %v1973
      %v1982 = vcombine.high %v1980, %v1980
      %v1983 = vcombine.high %v1199, %v1199
      %v1985 = vunpack.c.l.s4 1983009808
      %v1986 = vunpack.c.0.s8 %v1985
      %v1987 = vlaneseq
      %v1988 = vshrl.u32 %v1987, 7
      %v1989 = vsub.s32 %v1986, %v1988
      %v1990 = vrot.slane %v1199, %v1989
      %v1992 = vunpack.c.l.s4 1983009808
      %v1993 = vunpack.c.0.s8 %v1992
      %v1994 = vlaneseq
      %v1995 = vshrl.u32 %v1994, 7
      %v1996 = vsub.s32 %v1993, %v1995
      %v1997 = vrot.slane %v1983, %v1996
      %v1998 = vcombine.high %v1990, %v1990
      %v1999 = vcombine.high %v1997, %v1997
      %v2000 = vcombine.high %v1200, %v1200
      %v2002 = vunpack.c.l.s4 1983009808
      %v2003 = vunpack.c.0.s8 %v2002
      %v2004 = vlaneseq
      %v2005 = vshrl.u32 %v2004, 7
      %v2006 = vsub.s32 %v2003, %v2005
      %v2007 = vrot.slane %v1200, %v2006
      %v2009 = vunpack.c.l.s4 1983009808
      %v2010 = vunpack.c.0.s8 %v2009
      %v2011 = vlaneseq
      %v2012 = vshrl.u32 %v2011, 7
      %v2013 = vsub.s32 %v2010, %v2012
      %v2014 = vrot.slane %v2000, %v2013
      %v2015 = vcombine.high %v2007, %v2007
      %v2016 = vcombine.high %v2014, %v2014
      %v2017 = vcombine.high %v1201, %v1201
      %v2019 = vunpack.c.l.s4 1983009808
      %v2020 = vunpack.c.0.s8 %v2019
      %v2021 = vlaneseq
      %v2022 = vshrl.u32 %v2021, 7
      %v2023 = vsub.s32 %v2020, %v2022
      %v2024 = vrot.slane %v1201, %v2023
      %v2026 = vunpack.c.l.s4 1983009808
      %v2027 = vunpack.c.0.s8 %v2026
      %v2028 = vlaneseq
      %v2029 = vshrl.u32 %v2028, 7
      %v2030 = vsub.s32 %v2027, %v2029
      %v2031 = vrot.slane %v2017, %v2030
      %v2032 = vcombine.high %v2024, %v2024
      %v2033 = vcombine.high %v2031, %v2031
      %v2034 = vcombine.high %v1202, %v1202
      %v2036 = vunpack.c.l.s4 1983009808
      %v2037 = vunpack.c.0.s8 %v2036
      %v2038 = vlaneseq
      %v2039 = vshrl.u32 %v2038, 7
      %v2040 = vsub.s32 %v2037, %v2039
      %v2041 = vrot.slane %v1202, %v2040
      %v2043 = vunpack.c.l.s4 1983009808
      %v2044 = vunpack.c.0.s8 %v2043
      %v2045 = vlaneseq
      %v2046 = vshrl.u32 %v2045, 7
      %v2047 = vsub.s32 %v2044, %v2046
      %v2048 = vrot.slane %v2034, %v2047
      %v2049 = vcombine.high %v2041, %v2041
      %v2050 = vcombine.high %v2048, %v2048
      %v2051 = vcombine.high %v1203, %v1203
      %v2053 = vunpack.c.l.s4 1983009808
      %v2054 = vunpack.c.0.s8 %v2053
      %v2055 = vlaneseq
      %v2056 = vshrl.u32 %v2055, 7
      %v2057 = vsub.s32 %v2054, %v2056
      %v2058 = vrot.slane %v1203, %v2057
      %v2060 = vunpack.c.l.s4 1983009808
      %v2061 = vunpack.c.0.s8 %v2060
      %v2062 = vlaneseq
      %v2063 = vshrl.u32 %v2062, 7
      %v2064 = vsub.s32 %v2061, %v2063
      %v2065 = vrot.slane %v2051, %v2064
      %v2066 = vcombine.high %v2058, %v2058
      %v2067 = vcombine.high %v2065, %v2065
      %v2068 = vcombine.high %v1204, %v1204
      %v2070 = vunpack.c.l.s4 1983009808
      %v2071 = vunpack.c.0.s8 %v2070
      %v2072 = vlaneseq
      %v2073 = vshrl.u32 %v2072, 7
      %v2074 = vsub.s32 %v2071, %v2073
      %v2075 = vrot.slane %v1204, %v2074
      %v2077 = vunpack.c.l.s4 1983009808
      %v2078 = vunpack.c.0.s8 %v2077
      %v2079 = vlaneseq
      %v2080 = vshrl.u32 %v2079, 7
      %v2081 = vsub.s32 %v2078, %v2080
      %v2082 = vrot.slane %v2068, %v2081
      %v2083 = vcombine.high %v2075, %v2075
      %v2084 = vcombine.high %v2082, %v2082
      %v2085 = vcombine.high %v1205, %v1205
      %v2087 = vunpack.c.l.s4 1983009808
      %v2088 = vunpack.c.0.s8 %v2087
      %v2089 = vlaneseq
      %v2090 = vshrl.u32 %v2089, 7
      %v2091 = vsub.s32 %v2088, %v2090
      %v2092 = vrot.slane %v1205, %v2091
      %v2094 = vunpack.c.l.s4 1983009808
      %v2095 = vunpack.c.0.s8 %v2094
      %v2096 = vlaneseq
      %v2097 = vshrl.u32 %v2096, 7
      %v2098 = vsub.s32 %v2095, %v2097
      %v2099 = vrot.slane %v2085, %v2098
      %v2100 = vcombine.high %v2092, %v2092
      %v2101 = vcombine.high %v2099, %v2099
      %v2102 = vcombine.high %v1206, %v1206
      %v2104 = vunpack.c.l.s4 1983009808
      %v2105 = vunpack.c.0.s8 %v2104
      %v2106 = vlaneseq
      %v2107 = vshrl.u32 %v2106, 7
      %v2108 = vsub.s32 %v2105, %v2107
      %v2109 = vrot.slane %v1206, %v2108
      %v2111 = vunpack.c.l.s4 1983009808
      %v2112 = vunpack.c.0.s8 %v2111
      %v2113 = vlaneseq
      %v2114 = vshrl.u32 %v2113, 7
      %v2115 = vsub.s32 %v2112, %v2114
      %v2116 = vrot.slane %v2102, %v2115
      %v2117 = vcombine.high %v2109, %v2109
      %v2118 = vcombine.high %v2116, %v2116
      %v2119 = vcombine.high %v1207, %v1207
      %v2121 = vunpack.c.l.s4 1983009808
      %v2122 = vunpack.c.0.s8 %v2121
      %v2123 = vlaneseq
      %v2124 = vshrl.u32 %v2123, 7
      %v2125 = vsub.s32 %v2122, %v2124
      %v2126 = vrot.slane %v1207, %v2125
      %v2128 = vunpack.c.l.s4 1983009808
      %v2129 = vunpack.c.0.s8 %v2128
      %v2130 = vlaneseq
      %v2131 = vshrl.u32 %v2130, 7
      %v2132 = vsub.s32 %v2129, %v2131
      %v2133 = vrot.slane %v2119, %v2132
      %v2134 = vcombine.high %v2126, %v2126
      %v2135 = vcombine.high %v2133, %v2133
      %v2136 = vcombine.high %v1208, %v1208
      %v2138 = vunpack.c.l.s4 1983009808
      %v2139 = vunpack.c.0.s8 %v2138
      %v2140 = vlaneseq
      %v2141 = vshrl.u32 %v2140, 7
      %v2142 = vsub.s32 %v2139, %v2141
      %v2143 = vrot.slane %v1208, %v2142
      %v2145 = vunpack.c.l.s4 1983009808
      %v2146 = vunpack.c.0.s8 %v2145
      %v2147 = vlaneseq
      %v2148 = vshrl.u32 %v2147, 7
      %v2149 = vsub.s32 %v2146, %v2148
      %v2150 = vrot.slane %v2136, %v2149
      %v2151 = vcombine.high %v2143, %v2143
      %v2152 = vcombine.high %v2150, %v2150
      %v2153 = vcombine.high %v1209, %v1209
      %v2155 = vunpack.c.l.s4 1983009808
      %v2156 = vunpack.c.0.s8 %v2155
      %v2157 = vlaneseq
      %v2158 = vshrl.u32 %v2157, 7
      %v2159 = vsub.s32 %v2156, %v2158
      %v2160 = vrot.slane %v1209, %v2159
      %v2162 = vunpack.c.l.s4 1983009808
      %v2163 = vunpack.c.0.s8 %v2162
      %v2164 = vlaneseq
      %v2165 = vshrl.u32 %v2164, 7
      %v2166 = vsub.s32 %v2163, %v2165
      %v2167 = vrot.slane %v2153, %v2166
      %v2168 = vcombine.high %v2160, %v2160
      %v2169 = vcombine.high %v2167, %v2167
      %v2170 = vcombine.high %v1210, %v1210
      %v2172 = vunpack.c.l.s4 1983009808
      %v2173 = vunpack.c.0.s8 %v2172
      %v2174 = vlaneseq
      %v2175 = vshrl.u32 %v2174, 7
      %v2176 = vsub.s32 %v2173, %v2175
      %v2177 = vrot.slane %v1210, %v2176
      %v2179 = vunpack.c.l.s4 1983009808
      %v2180 = vunpack.c.0.s8 %v2179
      %v2181 = vlaneseq
      %v2182 = vshrl.u32 %v2181, 7
      %v2183 = vsub.s32 %v2180, %v2182
      %v2184 = vrot.slane %v2170, %v2183
      %v2185 = vcombine.high %v2177, %v2177
      %v2186 = vcombine.high %v2184, %v2184
      %v2187 = vcombine.high %v1211, %v1211
      %v2189 = vunpack.c.l.s4 1983009808
      %v2190 = vunpack.c.0.s8 %v2189
      %v2191 = vlaneseq
      %v2192 = vshrl.u32 %v2191, 7
      %v2193 = vsub.s32 %v2190, %v2192
      %v2194 = vrot.slane %v1211, %v2193
      %v2196 = vunpack.c.l.s4 1983009808
      %v2197 = vunpack.c.0.s8 %v2196
      %v2198 = vlaneseq
      %v2199 = vshrl.u32 %v2198, 7
      %v2200 = vsub.s32 %v2197, %v2199
      %v2201 = vrot.slane %v2187, %v2200
      %v2202 = vcombine.high %v2194, %v2194
      %v2203 = vcombine.high %v2201, %v2201
      %v2204 = vcombine.high %v1212, %v1212
      %v2206 = vunpack.c.l.s4 1983009808
      %v2207 = vunpack.c.0.s8 %v2206
      %v2208 = vlaneseq
      %v2209 = vshrl.u32 %v2208, 7
      %v2210 = vsub.s32 %v2207, %v2209
      %v2211 = vrot.slane %v1212, %v2210
      %v2213 = vunpack.c.l.s4 1983009808
      %v2214 = vunpack.c.0.s8 %v2213
      %v2215 = vlaneseq
      %v2216 = vshrl.u32 %v2215, 7
      %v2217 = vsub.s32 %v2214, %v2216
      %v2218 = vrot.slane %v2204, %v2217
      %v2219 = vcombine.high %v2211, %v2211
      %v2220 = vcombine.high %v2218, %v2218
      %v2221 = vcombine.high %v1213, %v1213
      %v2223 = vunpack.c.l.s4 1983009808
      %v2224 = vunpack.c.0.s8 %v2223
      %v2225 = vlaneseq
      %v2226 = vshrl.u32 %v2225, 7
      %v2227 = vsub.s32 %v2224, %v2226
      %v2228 = vrot.slane %v1213, %v2227
      %v2230 = vunpack.c.l.s4 1983009808
      %v2231 = vunpack.c.0.s8 %v2230
      %v2232 = vlaneseq
      %v2233 = vshrl.u32 %v2232, 7
      %v2234 = vsub.s32 %v2231, %v2233
      %v2235 = vrot.slane %v2221, %v2234
      %v2236 = vcombine.high %v2228, %v2228
      %v2237 = vcombine.high %v2235, %v2235
      %v2238 = vcombine.high %v1214, %v1214
      %v2240 = vunpack.c.l.s4 1983009808
      %v2241 = vunpack.c.0.s8 %v2240
      %v2242 = vlaneseq
      %v2243 = vshrl.u32 %v2242, 7
      %v2244 = vsub.s32 %v2241, %v2243
      %v2245 = vrot.slane %v1214, %v2244
      %v2247 = vunpack.c.l.s4 1983009808
      %v2248 = vunpack.c.0.s8 %v2247
      %v2249 = vlaneseq
      %v2250 = vshrl.u32 %v2249, 7
      %v2251 = vsub.s32 %v2248, %v2250
      %v2252 = vrot.slane %v2238, %v2251
      %v2253 = vcombine.high %v2245, %v2245
      %v2254 = vcombine.high %v2252, %v2252
      %v2255 = vcombine.high %v1215, %v1215
      %v2257 = vunpack.c.l.s4 1983009808
      %v2258 = vunpack.c.0.s8 %v2257
      %v2259 = vlaneseq
      %v2260 = vshrl.u32 %v2259, 7
      %v2261 = vsub.s32 %v2258, %v2260
      %v2262 = vrot.slane %v1215, %v2261
      %v2264 = vunpack.c.l.s4 1983009808
      %v2265 = vunpack.c.0.s8 %v2264
      %v2266 = vlaneseq
      %v2267 = vshrl.u32 %v2266, 7
      %v2268 = vsub.s32 %v2265, %v2267
      %v2269 = vrot.slane %v2255, %v2268
      %v2270 = vcombine.high %v2262, %v2262
      %v2271 = vcombine.high %v2269, %v2269
      %v2272 = vcombine.high %v1216, %v1216
      %v2274 = vunpack.c.l.s4 1983009808
      %v2275 = vunpack.c.0.s8 %v2274
      %v2276 = vlaneseq
      %v2277 = vshrl.u32 %v2276, 7
      %v2278 = vsub.s32 %v2275, %v2277
      %v2279 = vrot.slane %v1216, %v2278
      %v2281 = vunpack.c.l.s4 1983009808
      %v2282 = vunpack.c.0.s8 %v2281
      %v2283 = vlaneseq
      %v2284 = vshrl.u32 %v2283, 7
      %v2285 = vsub.s32 %v2282, %v2284
      %v2286 = vrot.slane %v2272, %v2285
      %v2287 = vcombine.high %v2279, %v2279
      %v2288 = vcombine.high %v2286, %v2286
      %v2289 = vcombine.high %v1217, %v1217
      %v2291 = vunpack.c.l.s4 1983009808
      %v2292 = vunpack.c.0.s8 %v2291
      %v2293 = vlaneseq
      %v2294 = vshrl.u32 %v2293, 7
      %v2295 = vsub.s32 %v2292, %v2294
      %v2296 = vrot.slane %v1217, %v2295
      %v2298 = vunpack.c.l.s4 1983009808
      %v2299 = vunpack.c.0.s8 %v2298
      %v2300 = vlaneseq
      %v2301 = vshrl.u32 %v2300, 7
      %v2302 = vsub.s32 %v2299, %v2301
      %v2303 = vrot.slane %v2289, %v2302
      %v2304 = vcombine.high %v2296, %v2296
      %v2305 = vcombine.high %v2303, %v2303
      %v2306 = vcombine.high %v1218, %v1218
      %v2308 = vunpack.c.l.s4 1983009808
      %v2309 = vunpack.c.0.s8 %v2308
      %v2310 = vlaneseq
      %v2311 = vshrl.u32 %v2310, 7
      %v2312 = vsub.s32 %v2309, %v2311
      %v2313 = vrot.slane %v1218, %v2312
      %v2315 = vunpack.c.l.s4 1983009808
      %v2316 = vunpack.c.0.s8 %v2315
      %v2317 = vlaneseq
      %v2318 = vshrl.u32 %v2317, 7
      %v2319 = vsub.s32 %v2316, %v2318
      %v2320 = vrot.slane %v2306, %v2319
      %v2321 = vcombine.high %v2313, %v2313
      %v2322 = vcombine.high %v2320, %v2320
      %v2323 = vcombine.high %v1219, %v1219
      %v2325 = vunpack.c.l.s4 1983009808
      %v2326 = vunpack.c.0.s8 %v2325
      %v2327 = vlaneseq
      %v2328 = vshrl.u32 %v2327, 7
      %v2329 = vsub.s32 %v2326, %v2328
      %v2330 = vrot.slane %v1219, %v2329
      %v2332 = vunpack.c.l.s4 1983009808
      %v2333 = vunpack.c.0.s8 %v2332
      %v2334 = vlaneseq
      %v2335 = vshrl.u32 %v2334, 7
      %v2336 = vsub.s32 %v2333, %v2335
      %v2337 = vrot.slane %v2323, %v2336
      %v2338 = vcombine.high %v2330, %v2330
      %v2339 = vcombine.high %v2337, %v2337
      %v2340 = vcombine.high %v1220, %v1220
      %v2342 = vunpack.c.l.s4 1983009808
      %v2343 = vunpack.c.0.s8 %v2342
      %v2344 = vlaneseq
      %v2345 = vshrl.u32 %v2344, 7
      %v2346 = vsub.s32 %v2343, %v2345
      %v2347 = vrot.slane %v1220, %v2346
      %v2349 = vunpack.c.l.s4 1983009808
      %v2350 = vunpack.c.0.s8 %v2349
      %v2351 = vlaneseq
      %v2352 = vshrl.u32 %v2351, 7
      %v2353 = vsub.s32 %v2350, %v2352
      %v2354 = vrot.slane %v2340, %v2353
      %v2355 = vcombine.high %v2347, %v2347
      %v2356 = vcombine.high %v2354, %v2354
      %v2357 = vcombine.high %v1221, %v1221
      %v2359 = vunpack.c.l.s4 1983009808
      %v2360 = vunpack.c.0.s8 %v2359
      %v2361 = vlaneseq
      %v2362 = vshrl.u32 %v2361, 7
      %v2363 = vsub.s32 %v2360, %v2362
      %v2364 = vrot.slane %v1221, %v2363
      %v2366 = vunpack.c.l.s4 1983009808
      %v2367 = vunpack.c.0.s8 %v2366
      %v2368 = vlaneseq
      %v2369 = vshrl.u32 %v2368, 7
      %v2370 = vsub.s32 %v2367, %v2369
      %v2371 = vrot.slane %v2357, %v2370
      %v2372 = vcombine.high %v2364, %v2364
      %v2373 = vcombine.high %v2371, %v2371
      %v2630 = vrot.slane %v1293, 7
      %v2631 = vrot.slane %v2630, 2
      %v2632 = vrot.slane %v1301, 7
      %v2633 = vrot.slane %v2632, 2
      %v2634 = vrot.slane %v1300, 7
      %v2635 = vrot.slane %v2634, 2
      %v2636 = vrot.slane %v1302, 7
      %v2637 = vrot.slane %v2636, 2
      %v2638 = vrot.slane %v1310, 7
      %v2639 = vrot.slane %v2638, 2
      %v2640 = vrot.slane %v1318, 7
      %v2641 = vrot.slane %v2640, 2
      %v2642 = vrot.slane %v1317, 7
      %v2643 = vrot.slane %v2642, 2
      %v2644 = vrot.slane %v1319, 7
      %v2645 = vrot.slane %v2644, 2
      %v2646 = vrot.slane %v1327, 7
      %v2647 = vrot.slane %v2646, 2
      %v2648 = vrot.slane %v1335, 7
      %v2649 = vrot.slane %v2648, 2
      %v2650 = vrot.slane %v1334, 7
      %v2651 = vrot.slane %v2650, 2
      %v2652 = vrot.slane %v1336, 7
      %v2653 = vrot.slane %v2652, 2
      %v2654 = vrot.slane %v1344, 7
      %v2655 = vrot.slane %v2654, 2
      %v2656 = vrot.slane %v1352, 7
      %v2657 = vrot.slane %v2656, 2
      %v2658 = vrot.slane %v1351, 7
      %v2659 = vrot.slane %v2658, 2
      %v2660 = vrot.slane %v1353, 7
      %v2661 = vrot.slane %v2660, 2
      %v2662 = vrot.slane %v1361, 7
      %v2663 = vrot.slane %v2662, 2
      %v2664 = vrot.slane %v1369, 7
      %v2665 = vrot.slane %v2664, 2
      %v2666 = vrot.slane %v1368, 7
      %v2667 = vrot.slane %v2666, 2
      %v2668 = vrot.slane %v1370, 7
      %v2669 = vrot.slane %v2668, 2
      %v2670 = vrot.slane %v1378, 7
      %v2671 = vrot.slane %v2670, 2
      %v2672 = vrot.slane %v1386, 7
      %v2673 = vrot.slane %v2672, 2
      %v2674 = vrot.slane %v1385, 7
      %v2675 = vrot.slane %v2674, 2
      %v2676 = vrot.slane %v1387, 7
      %v2677 = vrot.slane %v2676, 2
      %v2678 = vrot.slane %v1395, 7
      %v2679 = vrot.slane %v2678, 2
      %v2680 = vrot.slane %v1403, 7
      %v2681 = vrot.slane %v2680, 2
      %v2682 = vrot.slane %v1402, 7
      %v2683 = vrot.slane %v2682, 2
      %v2684 = vrot.slane %v1404, 7
      %v2685 = vrot.slane %v2684, 2
      %v2686 = vrot.slane %v1412, 7
      %v2687 = vrot.slane %v2686, 2
      %v2688 = vrot.slane %v1420, 7
      %v2689 = vrot.slane %v2688, 2
      %v2690 = vrot.slane %v1419, 7
      %v2691 = vrot.slane %v2690, 2
      %v2692 = vrot.slane %v1421, 7
      %v2693 = vrot.slane %v2692, 2
      %v2694 = vrot.slane %v1429, 7
      %v2695 = vrot.slane %v2694, 2
      %v2696 = vrot.slane %v1437, 7
      %v2697 = vrot.slane %v2696, 2
      %v2698 = vrot.slane %v1436, 7
      %v2699 = vrot.slane %v2698, 2
      %v2700 = vrot.slane %v1438, 7
      %v2701 = vrot.slane %v2700, 2
      %v2702 = vrot.slane %v1446, 7
      %v2703 = vrot.slane %v2702, 2
      %v2704 = vrot.slane %v1454, 7
      %v2705 = vrot.slane %v2704, 2
      %v2706 = vrot.slane %v1453, 7
      %v2707 = vrot.slane %v2706, 2
      %v2708 = vrot.slane %v1455, 7
      %v2709 = vrot.slane %v2708, 2
      %v2710 = vrot.slane %v1463, 7
      %v2711 = vrot.slane %v2710, 2
      %v2712 = vrot.slane %v1471, 7
      %v2713 = vrot.slane %v2712, 2
      %v2714 = vrot.slane %v1470, 7
      %v2715 = vrot.slane %v2714, 2
      %v2716 = vrot.slane %v1472, 7
      %v2717 = vrot.slane %v2716, 2
      %v2718 = vrot.slane %v1480, 7
      %v2719 = vrot.slane %v2718, 2
      %v2720 = vrot.slane %v1488, 7
      %v2721 = vrot.slane %v2720, 2
      %v2722 = vrot.slane %v1487, 7
      %v2723 = vrot.slane %v2722, 2
      %v2724 = vrot.slane %v1489, 7
      %v2725 = vrot.slane %v2724, 2
      %v2726 = vrot.slane %v1497, 7
      %v2727 = vrot.slane %v2726, 2
      %v2728 = vrot.slane %v1505, 7
      %v2729 = vrot.slane %v2728, 2
      %v2730 = vrot.slane %v1504, 7
      %v2731 = vrot.slane %v2730, 2
      %v2732 = vrot.slane %v1506, 7
      %v2733 = vrot.slane %v2732, 2
      %v2734 = vrot.slane %v1514, 7
      %v2735 = vrot.slane %v2734, 2
      %v2736 = vrot.slane %v1522, 7
      %v2737 = vrot.slane %v2736, 2
      %v2738 = vrot.slane %v1521, 7
      %v2739 = vrot.slane %v2738, 2
      %v2740 = vrot.slane %v1523, 7
      %v2741 = vrot.slane %v2740, 2
      %v2742 = vrot.slane %v1531, 7
      %v2743 = vrot.slane %v2742, 2
      %v2744 = vrot.slane %v1539, 7
      %v2745 = vrot.slane %v2744, 2
      %v2746 = vrot.slane %v1538, 7
      %v2747 = vrot.slane %v2746, 2
      %v2748 = vrot.slane %v1540, 7
      %v2749 = vrot.slane %v2748, 2
      %v2750 = vrot.slane %v1548, 7
      %v2751 = vrot.slane %v2750, 2
      %v2752 = vrot.slane %v1556, 7
      %v2753 = vrot.slane %v2752, 2
      %v2754 = vrot.slane %v1555, 7
      %v2755 = vrot.slane %v2754, 2
      %v2756 = vrot.slane %v1557, 7
      %v2757 = vrot.slane %v2756, 2
      %v2758 = vrot.slane %v1565, 7
      %v2759 = vrot.slane %v2758, 2
      %v2760 = vrot.slane %v1573, 7
      %v2761 = vrot.slane %v2760, 2
      %v2762 = vrot.slane %v1572, 7
      %v2763 = vrot.slane %v2762, 2
      %v2764 = vrot.slane %v1574, 7
      %v2765 = vrot.slane %v2764, 2
      %v2766 = vrot.slane %v1582, 7
      %v2767 = vrot.slane %v2766, 2
      %v2768 = vrot.slane %v1590, 7
      %v2769 = vrot.slane %v2768, 2
      %v2770 = vrot.slane %v1589, 7
      %v2771 = vrot.slane %v2770, 2
      %v2772 = vrot.slane %v1591, 7
      %v2773 = vrot.slane %v2772, 2
      %v2774 = vrot.slane %v1599, 7
      %v2775 = vrot.slane %v2774, 2
      %v2776 = vrot.slane %v1607, 7
      %v2777 = vrot.slane %v2776, 2
      %v2778 = vrot.slane %v1606, 7
      %v2779 = vrot.slane %v2778, 2
      %v2780 = vrot.slane %v1608, 7
      %v2781 = vrot.slane %v2780, 2
      %v2782 = vrot.slane %v1616, 7
      %v2783 = vrot.slane %v2782, 2
      %v2784 = vrot.slane %v1624, 7
      %v2785 = vrot.slane %v2784, 2
      %v2786 = vrot.slane %v1623, 7
      %v2787 = vrot.slane %v2786, 2
      %v2788 = vrot.slane %v1625, 7
      %v2789 = vrot.slane %v2788, 2
      %v2790 = vrot.slane %v1633, 7
      %v2791 = vrot.slane %v2790, 2
      %v2792 = vrot.slane %v1641, 7
      %v2793 = vrot.slane %v2792, 2
      %v2794 = vrot.slane %v1640, 7
      %v2795 = vrot.slane %v2794, 2
      %v2796 = vrot.slane %v1642, 7
      %v2797 = vrot.slane %v2796, 2
      %v2798 = vrot.slane %v1650, 7
      %v2799 = vrot.slane %v2798, 2
      %v2800 = vrot.slane %v1658, 7
      %v2801 = vrot.slane %v2800, 2
      %v2802 = vrot.slane %v1657, 7
      %v2803 = vrot.slane %v2802, 2
      %v2804 = vrot.slane %v1659, 7
      %v2805 = vrot.slane %v2804, 2
      %v2806 = vrot.slane %v1667, 7
      %v2807 = vrot.slane %v2806, 2
      %v2808 = vrot.slane %v1675, 7
      %v2809 = vrot.slane %v2808, 2
      %v2810 = vrot.slane %v1674, 7
      %v2811 = vrot.slane %v2810, 2
      %v2812 = vrot.slane %v1676, 7
      %v2813 = vrot.slane %v2812, 2
      %v2814 = vrot.slane %v1684, 7
      %v2815 = vrot.slane %v2814, 2
      %v2816 = vrot.slane %v1692, 7
      %v2817 = vrot.slane %v2816, 2
      %v2818 = vrot.slane %v1691, 7
      %v2819 = vrot.slane %v2818, 2
      %v2820 = vrot.slane %v1693, 7
      %v2821 = vrot.slane %v2820, 2
      %v2822 = vrot.slane %v1701, 7
      %v2823 = vrot.slane %v2822, 2
      %v2824 = vrot.slane %v1709, 7
      %v2825 = vrot.slane %v2824, 2
      %v2826 = vrot.slane %v1708, 7
      %v2827 = vrot.slane %v2826, 2
      %v2828 = vrot.slane %v1710, 7
      %v2829 = vrot.slane %v2828, 2
      %v2830 = vrot.slane %v1718, 7
      %v2831 = vrot.slane %v2830, 2
      %v2832 = vrot.slane %v1726, 7
      %v2833 = vrot.slane %v2832, 2
      %v2834 = vrot.slane %v1725, 7
      %v2835 = vrot.slane %v2834, 2
      %v2836 = vrot.slane %v1727, 7
      %v2837 = vrot.slane %v2836, 2
      %v2838 = vrot.slane %v1735, 7
      %v2839 = vrot.slane %v2838, 2
      %v2840 = vrot.slane %v1743, 7
      %v2841 = vrot.slane %v2840, 2
      %v2842 = vrot.slane %v1742, 7
      %v2843 = vrot.slane %v2842, 2
      %v2844 = vrot.slane %v1744, 7
      %v2845 = vrot.slane %v2844, 2
      %v2846 = vrot.slane %v1752, 7
      %v2847 = vrot.slane %v2846, 2
      %v2848 = vrot.slane %v1760, 7
      %v2849 = vrot.slane %v2848, 2
      %v2850 = vrot.slane %v1759, 7
      %v2851 = vrot.slane %v2850, 2
      %v2852 = vrot.slane %v1761, 7
      %v2853 = vrot.slane %v2852, 2
      %v2854 = vrot.slane %v1769, 7
      %v2855 = vrot.slane %v2854, 2
      %v2856 = vrot.slane %v1777, 7
      %v2857 = vrot.slane %v2856, 2
      %v2858 = vrot.slane %v1776, 7
      %v2859 = vrot.slane %v2858, 2
      %v2860 = vrot.slane %v1778, 7
      %v2861 = vrot.slane %v2860, 2
      %v2862 = vrot.slane %v1786, 7
      %v2863 = vrot.slane %v2862, 2
      %v2864 = vrot.slane %v1794, 7
      %v2865 = vrot.slane %v2864, 2
      %v2866 = vrot.slane %v1793, 7
      %v2867 = vrot.slane %v2866, 2
      %v2868 = vrot.slane %v1795, 7
      %v2869 = vrot.slane %v2868, 2
      %v2870 = vrot.slane %v1803, 7
      %v2871 = vrot.slane %v2870, 2
      %v2872 = vrot.slane %v1811, 7
      %v2873 = vrot.slane %v2872, 2
      %v2874 = vrot.slane %v1810, 7
      %v2875 = vrot.slane %v2874, 2
      %v2876 = vrot.slane %v1812, 7
      %v2877 = vrot.slane %v2876, 2
      %v2878 = vrot.slane %v1820, 7
      %v2879 = vrot.slane %v2878, 2
      %v2880 = vrot.slane %v1828, 7
      %v2881 = vrot.slane %v2880, 2
      %v2882 = vrot.slane %v1827, 7
      %v2883 = vrot.slane %v2882, 2
      %v2884 = vrot.slane %v1829, 7
      %v2885 = vrot.slane %v2884, 2
      %v2886 = vrot.slane %v1837, 7
      %v2887 = vrot.slane %v2886, 2
      %v2888 = vrot.slane %v1845, 7
      %v2889 = vrot.slane %v2888, 2
      %v2890 = vrot.slane %v1844, 7
      %v2891 = vrot.slane %v2890, 2
      %v2892 = vrot.slane %v1846, 7
      %v2893 = vrot.slane %v2892, 2
      %v2894 = vrot.slane %v1854, 7
      %v2895 = vrot.slane %v2894, 2
      %v2896 = vrot.slane %v1862, 7
      %v2897 = vrot.slane %v2896, 2
      %v2898 = vrot.slane %v1861, 7
      %v2899 = vrot.slane %v2898, 2
      %v2900 = vrot.slane %v1863, 7
      %v2901 = vrot.slane %v2900, 2
      %v2902 = vrot.slane %v1871, 7
      %v2903 = vrot.slane %v2902, 2
      %v2904 = vrot.slane %v1879, 7
      %v2905 = vrot.slane %v2904, 2
      %v2906 = vrot.slane %v1878, 7
      %v2907 = vrot.slane %v2906, 2
      %v2908 = vrot.slane %v1880, 7
      %v2909 = vrot.slane %v2908, 2
      %v2910 = vrot.slane %v1888, 7
      %v2911 = vrot.slane %v2910, 2
      %v2912 = vrot.slane %v1896, 7
      %v2913 = vrot.slane %v2912, 2
      %v2914 = vrot.slane %v1895, 7
      %v2915 = vrot.slane %v2914, 2
      %v2916 = vrot.slane %v1897, 7
      %v2917 = vrot.slane %v2916, 2
      %v2918 = vrot.slane %v1905, 7
      %v2919 = vrot.slane %v2918, 2
      %v2920 = vrot.slane %v1913, 7
      %v2921 = vrot.slane %v2920, 2
      %v2922 = vrot.slane %v1912, 7
      %v2923 = vrot.slane %v2922, 2
      %v2924 = vrot.slane %v1914, 7
      %v2925 = vrot.slane %v2924, 2
      %v2926 = vrot.slane %v1922, 7
      %v2927 = vrot.slane %v2926, 2
      %v2928 = vrot.slane %v1930, 7
      %v2929 = vrot.slane %v2928, 2
      %v2930 = vrot.slane %v1929, 7
      %v2931 = vrot.slane %v2930, 2
      %v2932 = vrot.slane %v1931, 7
      %v2933 = vrot.slane %v2932, 2
      %v2934 = vrot.slane %v1939, 7
      %v2935 = vrot.slane %v2934, 2
      %v2936 = vrot.slane %v1947, 7
      %v2937 = vrot.slane %v2936, 2
      %v2938 = vrot.slane %v1946, 7
      %v2939 = vrot.slane %v2938, 2
      %v2940 = vrot.slane %v1948, 7
      %v2941 = vrot.slane %v2940, 2
      %v2942 = vrot.slane %v1956, 7
      %v2943 = vrot.slane %v2942, 2
      %v2944 = vrot.slane %v1964, 7
      %v2945 = vrot.slane %v2944, 2
      %v2946 = vrot.slane %v1963, 7
      %v2947 = vrot.slane %v2946, 2
      %v2948 = vrot.slane %v1965, 7
      %v2949 = vrot.slane %v2948, 2
      %v2950 = vrot.slane %v1973, 7
      %v2951 = vrot.slane %v2950, 2
      %v2952 = vrot.slane %v1981, 7
      %v2953 = vrot.slane %v2952, 2
      %v2954 = vrot.slane %v1980, 7
      %v2955 = vrot.slane %v2954, 2
      %v2956 = vrot.slane %v1982, 7
      %v2957 = vrot.slane %v2956, 2
      %v2958 = vrot.slane %v1990, 7
      %v2959 = vrot.slane %v2958, 2
      %v2960 = vrot.slane %v1998, 7
      %v2961 = vrot.slane %v2960, 2
      %v2962 = vrot.slane %v1997, 7
      %v2963 = vrot.slane %v2962, 2
      %v2964 = vrot.slane %v1999, 7
      %v2965 = vrot.slane %v2964, 2
      %v2966 = vrot.slane %v2007, 7
      %v2967 = vrot.slane %v2966, 2
      %v2968 = vrot.slane %v2015, 7
      %v2969 = vrot.slane %v2968, 2
      %v2970 = vrot.slane %v2014, 7
      %v2971 = vrot.slane %v2970, 2
      %v2972 = vrot.slane %v2016, 7
      %v2973 = vrot.slane %v2972, 2
      %v2974 = vrot.slane %v2024, 7
      %v2975 = vrot.slane %v2974, 2
      %v2976 = vrot.slane %v2032, 7
      %v2977 = vrot.slane %v2976, 2
      %v2978 = vrot.slane %v2031, 7
      %v2979 = vrot.slane %v2978, 2
      %v2980 = vrot.slane %v2033, 7
      %v2981 = vrot.slane %v2980, 2
      %v2982 = vrot.slane %v2041, 7
      %v2983 = vrot.slane %v2982, 2
      %v2984 = vrot.slane %v2049, 7
      %v2985 = vrot.slane %v2984, 2
      %v2986 = vrot.slane %v2048, 7
      %v2987 = vrot.slane %v2986, 2
      %v2988 = vrot.slane %v2050, 7
      %v2989 = vrot.slane %v2988, 2
      %v2990 = vrot.slane %v2058, 7
      %v2991 = vrot.slane %v2990, 2
      %v2992 = vrot.slane %v2066, 7
      %v2993 = vrot.slane %v2992, 2
      %v2994 = vrot.slane %v2065, 7
      %v2995 = vrot.slane %v2994, 2
      %v2996 = vrot.slane %v2067, 7
      %v2997 = vrot.slane %v2996, 2
      %v2998 = vrot.slane %v2075, 7
      %v2999 = vrot.slane %v2998, 2
      %v3000 = vrot.slane %v2083, 7
      %v3001 = vrot.slane %v3000, 2
      %v3002 = vrot.slane %v2082, 7
      %v3003 = vrot.slane %v3002, 2
      %v3004 = vrot.slane %v2084, 7
      %v3005 = vrot.slane %v3004, 2
      %v3006 = vrot.slane %v2092, 7
      %v3007 = vrot.slane %v3006, 2
      %v3008 = vrot.slane %v2100, 7
      %v3009 = vrot.slane %v3008, 2
      %v3010 = vrot.slane %v2099, 7
      %v3011 = vrot.slane %v3010, 2
      %v3012 = vrot.slane %v2101, 7
      %v3013 = vrot.slane %v3012, 2
      %v3014 = vrot.slane %v2109, 7
      %v3015 = vrot.slane %v3014, 2
      %v3016 = vrot.slane %v2117, 7
      %v3017 = vrot.slane %v3016, 2
      %v3018 = vrot.slane %v2116, 7
      %v3019 = vrot.slane %v3018, 2
      %v3020 = vrot.slane %v2118, 7
      %v3021 = vrot.slane %v3020, 2
      %v3022 = vrot.slane %v2126, 7
      %v3023 = vrot.slane %v3022, 2
      %v3024 = vrot.slane %v2134, 7
      %v3025 = vrot.slane %v3024, 2
      %v3026 = vrot.slane %v2133, 7
      %v3027 = vrot.slane %v3026, 2
      %v3028 = vrot.slane %v2135, 7
      %v3029 = vrot.slane %v3028, 2
      %v3030 = vrot.slane %v2143, 7
      %v3031 = vrot.slane %v3030, 2
      %v3032 = vrot.slane %v2151, 7
      %v3033 = vrot.slane %v3032, 2
      %v3034 = vrot.slane %v2150, 7
      %v3035 = vrot.slane %v3034, 2
      %v3036 = vrot.slane %v2152, 7
      %v3037 = vrot.slane %v3036, 2
      %v3038 = vrot.slane %v2160, 7
      %v3039 = vrot.slane %v3038, 2
      %v3040 = vrot.slane %v2168, 7
      %v3041 = vrot.slane %v3040, 2
      %v3042 = vrot.slane %v2167, 7
      %v3043 = vrot.slane %v3042, 2
      %v3044 = vrot.slane %v2169, 7
      %v3045 = vrot.slane %v3044, 2
      %v3046 = vrot.slane %v2177, 7
      %v3047 = vrot.slane %v3046, 2
      %v3048 = vrot.slane %v2185, 7
      %v3049 = vrot.slane %v3048, 2
      %v3050 = vrot.slane %v2184, 7
      %v3051 = vrot.slane %v3050, 2
      %v3052 = vrot.slane %v2186, 7
      %v3053 = vrot.slane %v3052, 2
      %v3054 = vrot.slane %v2194, 7
      %v3055 = vrot.slane %v3054, 2
      %v3056 = vrot.slane %v2202, 7
      %v3057 = vrot.slane %v3056, 2
      %v3058 = vrot.slane %v2201, 7
      %v3059 = vrot.slane %v3058, 2
      %v3060 = vrot.slane %v2203, 7
      %v3061 = vrot.slane %v3060, 2
      %v3062 = vrot.slane %v2211, 7
      %v3063 = vrot.slane %v3062, 2
      %v3064 = vrot.slane %v2219, 7
      %v3065 = vrot.slane %v3064, 2
      %v3066 = vrot.slane %v2218, 7
      %v3067 = vrot.slane %v3066, 2
      %v3068 = vrot.slane %v2220, 7
      %v3069 = vrot.slane %v3068, 2
      %v3070 = vrot.slane %v2228, 7
      %v3071 = vrot.slane %v3070, 2
      %v3072 = vrot.slane %v2236, 7
      %v3073 = vrot.slane %v3072, 2
      %v3074 = vrot.slane %v2235, 7
      %v3075 = vrot.slane %v3074, 2
      %v3076 = vrot.slane %v2237, 7
      %v3077 = vrot.slane %v3076, 2
      %v3078 = vrot.slane %v2245, 7
      %v3079 = vrot.slane %v3078, 2
      %v3080 = vrot.slane %v2253, 7
      %v3081 = vrot.slane %v3080, 2
      %v3082 = vrot.slane %v2252, 7
      %v3083 = vrot.slane %v3082, 2
      %v3084 = vrot.slane %v2254, 7
      %v3085 = vrot.slane %v3084, 2
      %v3086 = vrot.slane %v2262, 7
      %v3087 = vrot.slane %v3086, 2
      %v3088 = vrot.slane %v2270, 7
      %v3089 = vrot.slane %v3088, 2
      %v3090 = vrot.slane %v2269, 7
      %v3091 = vrot.slane %v3090, 2
      %v3092 = vrot.slane %v2271, 7
      %v3093 = vrot.slane %v3092, 2
      %v3094 = vrot.slane %v2279, 7
      %v3095 = vrot.slane %v3094, 2
      %v3096 = vrot.slane %v2287, 7
      %v3097 = vrot.slane %v3096, 2
      %v3098 = vrot.slane %v2286, 7
      %v3099 = vrot.slane %v3098, 2
      %v3100 = vrot.slane %v2288, 7
      %v3101 = vrot.slane %v3100, 2
      %v3102 = vrot.slane %v2296, 7
      %v3103 = vrot.slane %v3102, 2
      %v3104 = vrot.slane %v2304, 7
      %v3105 = vrot.slane %v3104, 2
      %v3106 = vrot.slane %v2303, 7
      %v3107 = vrot.slane %v3106, 2
      %v3108 = vrot.slane %v2305, 7
      %v3109 = vrot.slane %v3108, 2
      %v3110 = vrot.slane %v2313, 7
      %v3111 = vrot.slane %v3110, 2
      %v3112 = vrot.slane %v2321, 7
      %v3113 = vrot.slane %v3112, 2
      %v3114 = vrot.slane %v2320, 7
      %v3115 = vrot.slane %v3114, 2
      %v3116 = vrot.slane %v2322, 7
      %v3117 = vrot.slane %v3116, 2
      %v3118 = vrot.slane %v2330, 7
      %v3119 = vrot.slane %v3118, 2
      %v3120 = vrot.slane %v2338, 7
      %v3121 = vrot.slane %v3120, 2
      %v3122 = vrot.slane %v2337, 7
      %v3123 = vrot.slane %v3122, 2
      %v3124 = vrot.slane %v2339, 7
      %v3125 = vrot.slane %v3124, 2
      %v3126 = vrot.slane %v2347, 7
      %v3127 = vrot.slane %v3126, 2
      %v3128 = vrot.slane %v2355, 7
      %v3129 = vrot.slane %v3128, 2
      %v3130 = vrot.slane %v2354, 7
      %v3131 = vrot.slane %v3130, 2
      %v3132 = vrot.slane %v2356, 7
      %v3133 = vrot.slane %v3132, 2
      %v3134 = vrot.slane %v2364, 7
      %v3135 = vrot.slane %v3134, 2
      %v3136 = vrot.slane %v2372, 7
      %v3137 = vrot.slane %v3136, 2
      %v3138 = vrot.slane %v2371, 7
      %v3139 = vrot.slane %v3138, 2
      %v3140 = vrot.slane %v2373, 7
      %v3141 = vrot.slane %v3140, 2
      %v3398 = vmax.f32 %v1293, %v2631
      %v3399 = vmax.f32 %v1301, %v2633
      %v3400 = vmax.f32 %v1300, %v2635
      %v3401 = vmax.f32 %v1302, %v2637
      %v3402 = vmax.f32 %v1310, %v2639
      %v3403 = vmax.f32 %v1318, %v2641
      %v3404 = vmax.f32 %v1317, %v2643
      %v3405 = vmax.f32 %v1319, %v2645
      %v3406 = vmax.f32 %v1327, %v2647
      %v3407 = vmax.f32 %v1335, %v2649
      %v3408 = vmax.f32 %v1334, %v2651
      %v3409 = vmax.f32 %v1336, %v2653
      %v3410 = vmax.f32 %v1344, %v2655
      %v3411 = vmax.f32 %v1352, %v2657
      %v3412 = vmax.f32 %v1351, %v2659
      %v3413 = vmax.f32 %v1353, %v2661
      %v3414 = vmax.f32 %v1361, %v2663
      %v3415 = vmax.f32 %v1369, %v2665
      %v3416 = vmax.f32 %v1368, %v2667
      %v3417 = vmax.f32 %v1370, %v2669
      %v3418 = vmax.f32 %v1378, %v2671
      %v3419 = vmax.f32 %v1386, %v2673
      %v3420 = vmax.f32 %v1385, %v2675
      %v3421 = vmax.f32 %v1387, %v2677
      %v3422 = vmax.f32 %v1395, %v2679
      %v3423 = vmax.f32 %v1403, %v2681
      %v3424 = vmax.f32 %v1402, %v2683
      %v3425 = vmax.f32 %v1404, %v2685
      %v3426 = vmax.f32 %v1412, %v2687
      %v3427 = vmax.f32 %v1420, %v2689
      %v3428 = vmax.f32 %v1419, %v2691
      %v3429 = vmax.f32 %v1421, %v2693
      %v3430 = vmax.f32 %v1429, %v2695
      %v3431 = vmax.f32 %v1437, %v2697
      %v3432 = vmax.f32 %v1436, %v2699
      %v3433 = vmax.f32 %v1438, %v2701
      %v3434 = vmax.f32 %v1446, %v2703
      %v3435 = vmax.f32 %v1454, %v2705
      %v3436 = vmax.f32 %v1453, %v2707
      %v3437 = vmax.f32 %v1455, %v2709
      %v3438 = vmax.f32 %v1463, %v2711
      %v3439 = vmax.f32 %v1471, %v2713
      %v3440 = vmax.f32 %v1470, %v2715
      %v3441 = vmax.f32 %v1472, %v2717
      %v3442 = vmax.f32 %v1480, %v2719
      %v3443 = vmax.f32 %v1488, %v2721
      %v3444 = vmax.f32 %v1487, %v2723
      %v3445 = vmax.f32 %v1489, %v2725
      %v3446 = vmax.f32 %v1497, %v2727
      %v3447 = vmax.f32 %v1505, %v2729
      %v3448 = vmax.f32 %v1504, %v2731
      %v3449 = vmax.f32 %v1506, %v2733
      %v3450 = vmax.f32 %v1514, %v2735
      %v3451 = vmax.f32 %v1522, %v2737
      %v3452 = vmax.f32 %v1521, %v2739
      %v3453 = vmax.f32 %v1523, %v2741
      %v3454 = vmax.f32 %v1531, %v2743
      %v3455 = vmax.f32 %v1539, %v2745
      %v3456 = vmax.f32 %v1538, %v2747
      %v3457 = vmax.f32 %v1540, %v2749
      %v3458 = vmax.f32 %v1548, %v2751
      %v3459 = vmax.f32 %v1556, %v2753
      %v3460 = vmax.f32 %v1555, %v2755
      %v3461 = vmax.f32 %v1557, %v2757
      %v3462 = vmax.f32 %v1565, %v2759
      %v3463 = vmax.f32 %v1573, %v2761
      %v3464 = vmax.f32 %v1572, %v2763
      %v3465 = vmax.f32 %v1574, %v2765
      %v3466 = vmax.f32 %v1582, %v2767
      %v3467 = vmax.f32 %v1590, %v2769
      %v3468 = vmax.f32 %v1589, %v2771
      %v3469 = vmax.f32 %v1591, %v2773
      %v3470 = vmax.f32 %v1599, %v2775
      %v3471 = vmax.f32 %v1607, %v2777
      %v3472 = vmax.f32 %v1606, %v2779
      %v3473 = vmax.f32 %v1608, %v2781
      %v3474 = vmax.f32 %v1616, %v2783
      %v3475 = vmax.f32 %v1624, %v2785
      %v3476 = vmax.f32 %v1623, %v2787
      %v3477 = vmax.f32 %v1625, %v2789
      %v3478 = vmax.f32 %v1633, %v2791
      %v3479 = vmax.f32 %v1641, %v2793
      %v3480 = vmax.f32 %v1640, %v2795
      %v3481 = vmax.f32 %v1642, %v2797
      %v3482 = vmax.f32 %v1650, %v2799
      %v3483 = vmax.f32 %v1658, %v2801
      %v3484 = vmax.f32 %v1657, %v2803
      %v3485 = vmax.f32 %v1659, %v2805
      %v3486 = vmax.f32 %v1667, %v2807
      %v3487 = vmax.f32 %v1675, %v2809
      %v3488 = vmax.f32 %v1674, %v2811
      %v3489 = vmax.f32 %v1676, %v2813
      %v3490 = vmax.f32 %v1684, %v2815
      %v3491 = vmax.f32 %v1692, %v2817
      %v3492 = vmax.f32 %v1691, %v2819
      %v3493 = vmax.f32 %v1693, %v2821
      %v3494 = vmax.f32 %v1701, %v2823
      %v3495 = vmax.f32 %v1709, %v2825
      %v3496 = vmax.f32 %v1708, %v2827
      %v3497 = vmax.f32 %v1710, %v2829
      %v3498 = vmax.f32 %v1718, %v2831
      %v3499 = vmax.f32 %v1726, %v2833
      %v3500 = vmax.f32 %v1725, %v2835
      %v3501 = vmax.f32 %v1727, %v2837
      %v3502 = vmax.f32 %v1735, %v2839
      %v3503 = vmax.f32 %v1743, %v2841
      %v3504 = vmax.f32 %v1742, %v2843
      %v3505 = vmax.f32 %v1744, %v2845
      %v3506 = vmax.f32 %v1752, %v2847
      %v3507 = vmax.f32 %v1760, %v2849
      %v3508 = vmax.f32 %v1759, %v2851
      %v3509 = vmax.f32 %v1761, %v2853
      %v3510 = vmax.f32 %v1769, %v2855
      %v3511 = vmax.f32 %v1777, %v2857
      %v3512 = vmax.f32 %v1776, %v2859
      %v3513 = vmax.f32 %v1778, %v2861
      %v3514 = vmax.f32 %v1786, %v2863
      %v3515 = vmax.f32 %v1794, %v2865
      %v3516 = vmax.f32 %v1793, %v2867
      %v3517 = vmax.f32 %v1795, %v2869
      %v3518 = vmax.f32 %v1803, %v2871
      %v3519 = vmax.f32 %v1811, %v2873
      %v3520 = vmax.f32 %v1810, %v2875
      %v3521 = vmax.f32 %v1812, %v2877
      %v3522 = vmax.f32 %v1820, %v2879
      %v3523 = vmax.f32 %v1828, %v2881
      %v3524 = vmax.f32 %v1827, %v2883
      %v3525 = vmax.f32 %v1829, %v2885
      %v3526 = vmax.f32 %v1837, %v2887
      %v3527 = vmax.f32 %v1845, %v2889
      %v3528 = vmax.f32 %v1844, %v2891
      %v3529 = vmax.f32 %v1846, %v2893
      %v3530 = vmax.f32 %v1854, %v2895
      %v3531 = vmax.f32 %v1862, %v2897
      %v3532 = vmax.f32 %v1861, %v2899
      %v3533 = vmax.f32 %v1863, %v2901
      %v3534 = vmax.f32 %v1871, %v2903
      %v3535 = vmax.f32 %v1879, %v2905
      %v3536 = vmax.f32 %v1878, %v2907
      %v3537 = vmax.f32 %v1880, %v2909
      %v3538 = vmax.f32 %v1888, %v2911
      %v3539 = vmax.f32 %v1896, %v2913
      %v3540 = vmax.f32 %v1895, %v2915
      %v3541 = vmax.f32 %v1897, %v2917
      %v3542 = vmax.f32 %v1905, %v2919
      %v3543 = vmax.f32 %v1913, %v2921
      %v3544 = vmax.f32 %v1912, %v2923
      %v3545 = vmax.f32 %v1914, %v2925
      %v3546 = vmax.f32 %v1922, %v2927
      %v3547 = vmax.f32 %v1930, %v2929
      %v3548 = vmax.f32 %v1929, %v2931
      %v3549 = vmax.f32 %v1931, %v2933
      %v3550 = vmax.f32 %v1939, %v2935
      %v3551 = vmax.f32 %v1947, %v2937
      %v3552 = vmax.f32 %v1946, %v2939
      %v3553 = vmax.f32 %v1948, %v2941
      %v3554 = vmax.f32 %v1956, %v2943
      %v3555 = vmax.f32 %v1964, %v2945
      %v3556 = vmax.f32 %v1963, %v2947
      %v3557 = vmax.f32 %v1965, %v2949
      %v3558 = vmax.f32 %v1973, %v2951
      %v3559 = vmax.f32 %v1981, %v2953
      %v3560 = vmax.f32 %v1980, %v2955
      %v3561 = vmax.f32 %v1982, %v2957
      %v3562 = vmax.f32 %v1990, %v2959
      %v3563 = vmax.f32 %v1998, %v2961
      %v3564 = vmax.f32 %v1997, %v2963
      %v3565 = vmax.f32 %v1999, %v2965
      %v3566 = vmax.f32 %v2007, %v2967
      %v3567 = vmax.f32 %v2015, %v2969
      %v3568 = vmax.f32 %v2014, %v2971
      %v3569 = vmax.f32 %v2016, %v2973
      %v3570 = vmax.f32 %v2024, %v2975
      %v3571 = vmax.f32 %v2032, %v2977
      %v3572 = vmax.f32 %v2031, %v2979
      %v3573 = vmax.f32 %v2033, %v2981
      %v3574 = vmax.f32 %v2041, %v2983
      %v3575 = vmax.f32 %v2049, %v2985
      %v3576 = vmax.f32 %v2048, %v2987
      %v3577 = vmax.f32 %v2050, %v2989
      %v3578 = vmax.f32 %v2058, %v2991
      %v3579 = vmax.f32 %v2066, %v2993
      %v3580 = vmax.f32 %v2065, %v2995
      %v3581 = vmax.f32 %v2067, %v2997
      %v3582 = vmax.f32 %v2075, %v2999
      %v3583 = vmax.f32 %v2083, %v3001
      %v3584 = vmax.f32 %v2082, %v3003
      %v3585 = vmax.f32 %v2084, %v3005
      %v3586 = vmax.f32 %v2092, %v3007
      %v3587 = vmax.f32 %v2100, %v3009
      %v3588 = vmax.f32 %v2099, %v3011
      %v3589 = vmax.f32 %v2101, %v3013
      %v3590 = vmax.f32 %v2109, %v3015
      %v3591 = vmax.f32 %v2117, %v3017
      %v3592 = vmax.f32 %v2116, %v3019
      %v3593 = vmax.f32 %v2118, %v3021
      %v3594 = vmax.f32 %v2126, %v3023
      %v3595 = vmax.f32 %v2134, %v3025
      %v3596 = vmax.f32 %v2133, %v3027
      %v3597 = vmax.f32 %v2135, %v3029
      %v3598 = vmax.f32 %v2143, %v3031
      %v3599 = vmax.f32 %v2151, %v3033
      %v3600 = vmax.f32 %v2150, %v3035
      %v3601 = vmax.f32 %v2152, %v3037
      %v3602 = vmax.f32 %v2160, %v3039
      %v3603 = vmax.f32 %v2168, %v3041
      %v3604 = vmax.f32 %v2167, %v3043
      %v3605 = vmax.f32 %v2169, %v3045
      %v3606 = vmax.f32 %v2177, %v3047
      %v3607 = vmax.f32 %v2185, %v3049
      %v3608 = vmax.f32 %v2184, %v3051
      %v3609 = vmax.f32 %v2186, %v3053
      %v3610 = vmax.f32 %v2194, %v3055
      %v3611 = vmax.f32 %v2202, %v3057
      %v3612 = vmax.f32 %v2201, %v3059
      %v3613 = vmax.f32 %v2203, %v3061
      %v3614 = vmax.f32 %v2211, %v3063
      %v3615 = vmax.f32 %v2219, %v3065
      %v3616 = vmax.f32 %v2218, %v3067
      %v3617 = vmax.f32 %v2220, %v3069
      %v3618 = vmax.f32 %v2228, %v3071
      %v3619 = vmax.f32 %v2236, %v3073
      %v3620 = vmax.f32 %v2235, %v3075
      %v3621 = vmax.f32 %v2237, %v3077
      %v3622 = vmax.f32 %v2245, %v3079
      %v3623 = vmax.f32 %v2253, %v3081
      %v3624 = vmax.f32 %v2252, %v3083
      %v3625 = vmax.f32 %v2254, %v3085
      %v3626 = vmax.f32 %v2262, %v3087
      %v3627 = vmax.f32 %v2270, %v3089
      %v3628 = vmax.f32 %v2269, %v3091
      %v3629 = vmax.f32 %v2271, %v3093
      %v3630 = vmax.f32 %v2279, %v3095
      %v3631 = vmax.f32 %v2287, %v3097
      %v3632 = vmax.f32 %v2286, %v3099
      %v3633 = vmax.f32 %v2288, %v3101
      %v3634 = vmax.f32 %v2296, %v3103
      %v3635 = vmax.f32 %v2304, %v3105
      %v3636 = vmax.f32 %v2303, %v3107
      %v3637 = vmax.f32 %v2305, %v3109
      %v3638 = vmax.f32 %v2313, %v3111
      %v3639 = vmax.f32 %v2321, %v3113
      %v3640 = vmax.f32 %v2320, %v3115
      %v3641 = vmax.f32 %v2322, %v3117
      %v3642 = vmax.f32 %v2330, %v3119
      %v3643 = vmax.f32 %v2338, %v3121
      %v3644 = vmax.f32 %v2337, %v3123
      %v3645 = vmax.f32 %v2339, %v3125
      %v3646 = vmax.f32 %v2347, %v3127
      %v3647 = vmax.f32 %v2355, %v3129
      %v3648 = vmax.f32 %v2354, %v3131
      %v3649 = vmax.f32 %v2356, %v3133
      %v3650 = vmax.f32 %v2364, %v3135
      %v3651 = vmax.f32 %v2372, %v3137
      %v3652 = vmax.f32 %v2371, %v3139
      %v3653 = vmax.f32 %v2373, %v3141
      %v3910 = vlaneseq
      %v3911 = vshrl.u32 %v3910, 7
      %v3912 = vsub.s32 0, %v3911
      %v3913 = vrot.slane %v3398, %v3912
      %v3914 = vlaneseq
      %v3915 = vshrl.u32 %v3914, 7
      %v3916 = vsub.s32 0, %v3915
      %v3917 = vrot.slane %v3399, %v3916
      %v3918 = vlaneseq
      %v3919 = vshrl.u32 %v3918, 7
      %v3920 = vsub.s32 0, %v3919
      %v3921 = vrot.slane %v3400, %v3920
      %v3922 = vlaneseq
      %v3923 = vshrl.u32 %v3922, 7
      %v3924 = vsub.s32 0, %v3923
      %v3925 = vrot.slane %v3401, %v3924
      %v3926 = vlaneseq
      %v3927 = vshrl.u32 %v3926, 7
      %v3928 = vsub.s32 0, %v3927
      %v3929 = vrot.slane %v3402, %v3928
      %v3930 = vlaneseq
      %v3931 = vshrl.u32 %v3930, 7
      %v3932 = vsub.s32 0, %v3931
      %v3933 = vrot.slane %v3403, %v3932
      %v3934 = vlaneseq
      %v3935 = vshrl.u32 %v3934, 7
      %v3936 = vsub.s32 0, %v3935
      %v3937 = vrot.slane %v3404, %v3936
      %v3938 = vlaneseq
      %v3939 = vshrl.u32 %v3938, 7
      %v3940 = vsub.s32 0, %v3939
      %v3941 = vrot.slane %v3405, %v3940
      %v3942 = vlaneseq
      %v3943 = vshrl.u32 %v3942, 7
      %v3944 = vsub.s32 0, %v3943
      %v3945 = vrot.slane %v3406, %v3944
      %v3946 = vlaneseq
      %v3947 = vshrl.u32 %v3946, 7
      %v3948 = vsub.s32 0, %v3947
      %v3949 = vrot.slane %v3407, %v3948
      %v3950 = vlaneseq
      %v3951 = vshrl.u32 %v3950, 7
      %v3952 = vsub.s32 0, %v3951
      %v3953 = vrot.slane %v3408, %v3952
      %v3954 = vlaneseq
      %v3955 = vshrl.u32 %v3954, 7
      %v3956 = vsub.s32 0, %v3955
      %v3957 = vrot.slane %v3409, %v3956
      %v3958 = vlaneseq
      %v3959 = vshrl.u32 %v3958, 7
      %v3960 = vsub.s32 0, %v3959
      %v3961 = vrot.slane %v3410, %v3960
      %v3962 = vlaneseq
      %v3963 = vshrl.u32 %v3962, 7
      %v3964 = vsub.s32 0, %v3963
      %v3965 = vrot.slane %v3411, %v3964
      %v3966 = vlaneseq
      %v3967 = vshrl.u32 %v3966, 7
      %v3968 = vsub.s32 0, %v3967
      %v3969 = vrot.slane %v3412, %v3968
      %v3970 = vlaneseq
      %v3971 = vshrl.u32 %v3970, 7
      %v3972 = vsub.s32 0, %v3971
      %v3973 = vrot.slane %v3413, %v3972
      %v3974 = vlaneseq
      %v3975 = vshrl.u32 %v3974, 7
      %v3976 = vsub.s32 0, %v3975
      %v3977 = vrot.slane %v3414, %v3976
      %v3978 = vlaneseq
      %v3979 = vshrl.u32 %v3978, 7
      %v3980 = vsub.s32 0, %v3979
      %v3981 = vrot.slane %v3415, %v3980
      %v3982 = vlaneseq
      %v3983 = vshrl.u32 %v3982, 7
      %v3984 = vsub.s32 0, %v3983
      %v3985 = vrot.slane %v3416, %v3984
      %v3986 = vlaneseq
      %v3987 = vshrl.u32 %v3986, 7
      %v3988 = vsub.s32 0, %v3987
      %v3989 = vrot.slane %v3417, %v3988
      %v3990 = vlaneseq
      %v3991 = vshrl.u32 %v3990, 7
      %v3992 = vsub.s32 0, %v3991
      %v3993 = vrot.slane %v3418, %v3992
      %v3994 = vlaneseq
      %v3995 = vshrl.u32 %v3994, 7
      %v3996 = vsub.s32 0, %v3995
      %v3997 = vrot.slane %v3419, %v3996
      %v3998 = vlaneseq
      %v3999 = vshrl.u32 %v3998, 7
      %v4000 = vsub.s32 0, %v3999
      %v4001 = vrot.slane %v3420, %v4000
      %v4002 = vlaneseq
      %v4003 = vshrl.u32 %v4002, 7
      %v4004 = vsub.s32 0, %v4003
      %v4005 = vrot.slane %v3421, %v4004
      %v4006 = vlaneseq
      %v4007 = vshrl.u32 %v4006, 7
      %v4008 = vsub.s32 0, %v4007
      %v4009 = vrot.slane %v3422, %v4008
      %v4010 = vlaneseq
      %v4011 = vshrl.u32 %v4010, 7
      %v4012 = vsub.s32 0, %v4011
      %v4013 = vrot.slane %v3423, %v4012
      %v4014 = vlaneseq
      %v4015 = vshrl.u32 %v4014, 7
      %v4016 = vsub.s32 0, %v4015
      %v4017 = vrot.slane %v3424, %v4016
      %v4018 = vlaneseq
      %v4019 = vshrl.u32 %v4018, 7
      %v4020 = vsub.s32 0, %v4019
      %v4021 = vrot.slane %v3425, %v4020
      %v4022 = vlaneseq
      %v4023 = vshrl.u32 %v4022, 7
      %v4024 = vsub.s32 0, %v4023
      %v4025 = vrot.slane %v3426, %v4024
      %v4026 = vlaneseq
      %v4027 = vshrl.u32 %v4026, 7
      %v4028 = vsub.s32 0, %v4027
      %v4029 = vrot.slane %v3427, %v4028
      %v4030 = vlaneseq
      %v4031 = vshrl.u32 %v4030, 7
      %v4032 = vsub.s32 0, %v4031
      %v4033 = vrot.slane %v3428, %v4032
      %v4034 = vlaneseq
      %v4035 = vshrl.u32 %v4034, 7
      %v4036 = vsub.s32 0, %v4035
      %v4037 = vrot.slane %v3429, %v4036
      %v4038 = vlaneseq
      %v4039 = vshrl.u32 %v4038, 7
      %v4040 = vsub.s32 0, %v4039
      %v4041 = vrot.slane %v3430, %v4040
      %v4042 = vlaneseq
      %v4043 = vshrl.u32 %v4042, 7
      %v4044 = vsub.s32 0, %v4043
      %v4045 = vrot.slane %v3431, %v4044
      %v4046 = vlaneseq
      %v4047 = vshrl.u32 %v4046, 7
      %v4048 = vsub.s32 0, %v4047
      %v4049 = vrot.slane %v3432, %v4048
      %v4050 = vlaneseq
      %v4051 = vshrl.u32 %v4050, 7
      %v4052 = vsub.s32 0, %v4051
      %v4053 = vrot.slane %v3433, %v4052
      %v4054 = vlaneseq
      %v4055 = vshrl.u32 %v4054, 7
      %v4056 = vsub.s32 0, %v4055
      %v4057 = vrot.slane %v3434, %v4056
      %v4058 = vlaneseq
      %v4059 = vshrl.u32 %v4058, 7
      %v4060 = vsub.s32 0, %v4059
      %v4061 = vrot.slane %v3435, %v4060
      %v4062 = vlaneseq
      %v4063 = vshrl.u32 %v4062, 7
      %v4064 = vsub.s32 0, %v4063
      %v4065 = vrot.slane %v3436, %v4064
      %v4066 = vlaneseq
      %v4067 = vshrl.u32 %v4066, 7
      %v4068 = vsub.s32 0, %v4067
      %v4069 = vrot.slane %v3437, %v4068
      %v4070 = vlaneseq
      %v4071 = vshrl.u32 %v4070, 7
      %v4072 = vsub.s32 0, %v4071
      %v4073 = vrot.slane %v3438, %v4072
      %v4074 = vlaneseq
      %v4075 = vshrl.u32 %v4074, 7
      %v4076 = vsub.s32 0, %v4075
      %v4077 = vrot.slane %v3439, %v4076
      %v4078 = vlaneseq
      %v4079 = vshrl.u32 %v4078, 7
      %v4080 = vsub.s32 0, %v4079
      %v4081 = vrot.slane %v3440, %v4080
      %v4082 = vlaneseq
      %v4083 = vshrl.u32 %v4082, 7
      %v4084 = vsub.s32 0, %v4083
      %v4085 = vrot.slane %v3441, %v4084
      %v4086 = vlaneseq
      %v4087 = vshrl.u32 %v4086, 7
      %v4088 = vsub.s32 0, %v4087
      %v4089 = vrot.slane %v3442, %v4088
      %v4090 = vlaneseq
      %v4091 = vshrl.u32 %v4090, 7
      %v4092 = vsub.s32 0, %v4091
      %v4093 = vrot.slane %v3443, %v4092
      %v4094 = vlaneseq
      %v4095 = vshrl.u32 %v4094, 7
      %v4096 = vsub.s32 0, %v4095
      %v4097 = vrot.slane %v3444, %v4096
      %v4098 = vlaneseq
      %v4099 = vshrl.u32 %v4098, 7
      %v4100 = vsub.s32 0, %v4099
      %v4101 = vrot.slane %v3445, %v4100
      %v4102 = vlaneseq
      %v4103 = vshrl.u32 %v4102, 7
      %v4104 = vsub.s32 0, %v4103
      %v4105 = vrot.slane %v3446, %v4104
      %v4106 = vlaneseq
      %v4107 = vshrl.u32 %v4106, 7
      %v4108 = vsub.s32 0, %v4107
      %v4109 = vrot.slane %v3447, %v4108
      %v4110 = vlaneseq
      %v4111 = vshrl.u32 %v4110, 7
      %v4112 = vsub.s32 0, %v4111
      %v4113 = vrot.slane %v3448, %v4112
      %v4114 = vlaneseq
      %v4115 = vshrl.u32 %v4114, 7
      %v4116 = vsub.s32 0, %v4115
      %v4117 = vrot.slane %v3449, %v4116
      %v4118 = vlaneseq
      %v4119 = vshrl.u32 %v4118, 7
      %v4120 = vsub.s32 0, %v4119
      %v4121 = vrot.slane %v3450, %v4120
      %v4122 = vlaneseq
      %v4123 = vshrl.u32 %v4122, 7
      %v4124 = vsub.s32 0, %v4123
      %v4125 = vrot.slane %v3451, %v4124
      %v4126 = vlaneseq
      %v4127 = vshrl.u32 %v4126, 7
      %v4128 = vsub.s32 0, %v4127
      %v4129 = vrot.slane %v3452, %v4128
      %v4130 = vlaneseq
      %v4131 = vshrl.u32 %v4130, 7
      %v4132 = vsub.s32 0, %v4131
      %v4133 = vrot.slane %v3453, %v4132
      %v4134 = vlaneseq
      %v4135 = vshrl.u32 %v4134, 7
      %v4136 = vsub.s32 0, %v4135
      %v4137 = vrot.slane %v3454, %v4136
      %v4138 = vlaneseq
      %v4139 = vshrl.u32 %v4138, 7
      %v4140 = vsub.s32 0, %v4139
      %v4141 = vrot.slane %v3455, %v4140
      %v4142 = vlaneseq
      %v4143 = vshrl.u32 %v4142, 7
      %v4144 = vsub.s32 0, %v4143
      %v4145 = vrot.slane %v3456, %v4144
      %v4146 = vlaneseq
      %v4147 = vshrl.u32 %v4146, 7
      %v4148 = vsub.s32 0, %v4147
      %v4149 = vrot.slane %v3457, %v4148
      %v4150 = vlaneseq
      %v4151 = vshrl.u32 %v4150, 7
      %v4152 = vsub.s32 0, %v4151
      %v4153 = vrot.slane %v3458, %v4152
      %v4154 = vlaneseq
      %v4155 = vshrl.u32 %v4154, 7
      %v4156 = vsub.s32 0, %v4155
      %v4157 = vrot.slane %v3459, %v4156
      %v4158 = vlaneseq
      %v4159 = vshrl.u32 %v4158, 7
      %v4160 = vsub.s32 0, %v4159
      %v4161 = vrot.slane %v3460, %v4160
      %v4162 = vlaneseq
      %v4163 = vshrl.u32 %v4162, 7
      %v4164 = vsub.s32 0, %v4163
      %v4165 = vrot.slane %v3461, %v4164
      %v4166 = vlaneseq
      %v4167 = vshrl.u32 %v4166, 7
      %v4168 = vsub.s32 0, %v4167
      %v4169 = vrot.slane %v3462, %v4168
      %v4170 = vlaneseq
      %v4171 = vshrl.u32 %v4170, 7
      %v4172 = vsub.s32 0, %v4171
      %v4173 = vrot.slane %v3463, %v4172
      %v4174 = vlaneseq
      %v4175 = vshrl.u32 %v4174, 7
      %v4176 = vsub.s32 0, %v4175
      %v4177 = vrot.slane %v3464, %v4176
      %v4178 = vlaneseq
      %v4179 = vshrl.u32 %v4178, 7
      %v4180 = vsub.s32 0, %v4179
      %v4181 = vrot.slane %v3465, %v4180
      %v4182 = vlaneseq
      %v4183 = vshrl.u32 %v4182, 7
      %v4184 = vsub.s32 0, %v4183
      %v4185 = vrot.slane %v3466, %v4184
      %v4186 = vlaneseq
      %v4187 = vshrl.u32 %v4186, 7
      %v4188 = vsub.s32 0, %v4187
      %v4189 = vrot.slane %v3467, %v4188
      %v4190 = vlaneseq
      %v4191 = vshrl.u32 %v4190, 7
      %v4192 = vsub.s32 0, %v4191
      %v4193 = vrot.slane %v3468, %v4192
      %v4194 = vlaneseq
      %v4195 = vshrl.u32 %v4194, 7
      %v4196 = vsub.s32 0, %v4195
      %v4197 = vrot.slane %v3469, %v4196
      %v4198 = vlaneseq
      %v4199 = vshrl.u32 %v4198, 7
      %v4200 = vsub.s32 0, %v4199
      %v4201 = vrot.slane %v3470, %v4200
      %v4202 = vlaneseq
      %v4203 = vshrl.u32 %v4202, 7
      %v4204 = vsub.s32 0, %v4203
      %v4205 = vrot.slane %v3471, %v4204
      %v4206 = vlaneseq
      %v4207 = vshrl.u32 %v4206, 7
      %v4208 = vsub.s32 0, %v4207
      %v4209 = vrot.slane %v3472, %v4208
      %v4210 = vlaneseq
      %v4211 = vshrl.u32 %v4210, 7
      %v4212 = vsub.s32 0, %v4211
      %v4213 = vrot.slane %v3473, %v4212
      %v4214 = vlaneseq
      %v4215 = vshrl.u32 %v4214, 7
      %v4216 = vsub.s32 0, %v4215
      %v4217 = vrot.slane %v3474, %v4216
      %v4218 = vlaneseq
      %v4219 = vshrl.u32 %v4218, 7
      %v4220 = vsub.s32 0, %v4219
      %v4221 = vrot.slane %v3475, %v4220
      %v4222 = vlaneseq
      %v4223 = vshrl.u32 %v4222, 7
      %v4224 = vsub.s32 0, %v4223
      %v4225 = vrot.slane %v3476, %v4224
      %v4226 = vlaneseq
      %v4227 = vshrl.u32 %v4226, 7
      %v4228 = vsub.s32 0, %v4227
      %v4229 = vrot.slane %v3477, %v4228
      %v4230 = vlaneseq
      %v4231 = vshrl.u32 %v4230, 7
      %v4232 = vsub.s32 0, %v4231
      %v4233 = vrot.slane %v3478, %v4232
      %v4234 = vlaneseq
      %v4235 = vshrl.u32 %v4234, 7
      %v4236 = vsub.s32 0, %v4235
      %v4237 = vrot.slane %v3479, %v4236
      %v4238 = vlaneseq
      %v4239 = vshrl.u32 %v4238, 7
      %v4240 = vsub.s32 0, %v4239
      %v4241 = vrot.slane %v3480, %v4240
      %v4242 = vlaneseq
      %v4243 = vshrl.u32 %v4242, 7
      %v4244 = vsub.s32 0, %v4243
      %v4245 = vrot.slane %v3481, %v4244
      %v4246 = vlaneseq
      %v4247 = vshrl.u32 %v4246, 7
      %v4248 = vsub.s32 0, %v4247
      %v4249 = vrot.slane %v3482, %v4248
      %v4250 = vlaneseq
      %v4251 = vshrl.u32 %v4250, 7
      %v4252 = vsub.s32 0, %v4251
      %v4253 = vrot.slane %v3483, %v4252
      %v4254 = vlaneseq
      %v4255 = vshrl.u32 %v4254, 7
      %v4256 = vsub.s32 0, %v4255
      %v4257 = vrot.slane %v3484, %v4256
      %v4258 = vlaneseq
      %v4259 = vshrl.u32 %v4258, 7
      %v4260 = vsub.s32 0, %v4259
      %v4261 = vrot.slane %v3485, %v4260
      %v4262 = vlaneseq
      %v4263 = vshrl.u32 %v4262, 7
      %v4264 = vsub.s32 0, %v4263
      %v4265 = vrot.slane %v3486, %v4264
      %v4266 = vlaneseq
      %v4267 = vshrl.u32 %v4266, 7
      %v4268 = vsub.s32 0, %v4267
      %v4269 = vrot.slane %v3487, %v4268
      %v4270 = vlaneseq
      %v4271 = vshrl.u32 %v4270, 7
      %v4272 = vsub.s32 0, %v4271
      %v4273 = vrot.slane %v3488, %v4272
      %v4274 = vlaneseq
      %v4275 = vshrl.u32 %v4274, 7
      %v4276 = vsub.s32 0, %v4275
      %v4277 = vrot.slane %v3489, %v4276
      %v4278 = vlaneseq
      %v4279 = vshrl.u32 %v4278, 7
      %v4280 = vsub.s32 0, %v4279
      %v4281 = vrot.slane %v3490, %v4280
      %v4282 = vlaneseq
      %v4283 = vshrl.u32 %v4282, 7
      %v4284 = vsub.s32 0, %v4283
      %v4285 = vrot.slane %v3491, %v4284
      %v4286 = vlaneseq
      %v4287 = vshrl.u32 %v4286, 7
      %v4288 = vsub.s32 0, %v4287
      %v4289 = vrot.slane %v3492, %v4288
      %v4290 = vlaneseq
      %v4291 = vshrl.u32 %v4290, 7
      %v4292 = vsub.s32 0, %v4291
      %v4293 = vrot.slane %v3493, %v4292
      %v4294 = vlaneseq
      %v4295 = vshrl.u32 %v4294, 7
      %v4296 = vsub.s32 0, %v4295
      %v4297 = vrot.slane %v3494, %v4296
      %v4298 = vlaneseq
      %v4299 = vshrl.u32 %v4298, 7
      %v4300 = vsub.s32 0, %v4299
      %v4301 = vrot.slane %v3495, %v4300
      %v4302 = vlaneseq
      %v4303 = vshrl.u32 %v4302, 7
      %v4304 = vsub.s32 0, %v4303
      %v4305 = vrot.slane %v3496, %v4304
      %v4306 = vlaneseq
      %v4307 = vshrl.u32 %v4306, 7
      %v4308 = vsub.s32 0, %v4307
      %v4309 = vrot.slane %v3497, %v4308
      %v4310 = vlaneseq
      %v4311 = vshrl.u32 %v4310, 7
      %v4312 = vsub.s32 0, %v4311
      %v4313 = vrot.slane %v3498, %v4312
      %v4314 = vlaneseq
      %v4315 = vshrl.u32 %v4314, 7
      %v4316 = vsub.s32 0, %v4315
      %v4317 = vrot.slane %v3499, %v4316
      %v4318 = vlaneseq
      %v4319 = vshrl.u32 %v4318, 7
      %v4320 = vsub.s32 0, %v4319
      %v4321 = vrot.slane %v3500, %v4320
      %v4322 = vlaneseq
      %v4323 = vshrl.u32 %v4322, 7
      %v4324 = vsub.s32 0, %v4323
      %v4325 = vrot.slane %v3501, %v4324
      %v4326 = vlaneseq
      %v4327 = vshrl.u32 %v4326, 7
      %v4328 = vsub.s32 0, %v4327
      %v4329 = vrot.slane %v3502, %v4328
      %v4330 = vlaneseq
      %v4331 = vshrl.u32 %v4330, 7
      %v4332 = vsub.s32 0, %v4331
      %v4333 = vrot.slane %v3503, %v4332
      %v4334 = vlaneseq
      %v4335 = vshrl.u32 %v4334, 7
      %v4336 = vsub.s32 0, %v4335
      %v4337 = vrot.slane %v3504, %v4336
      %v4338 = vlaneseq
      %v4339 = vshrl.u32 %v4338, 7
      %v4340 = vsub.s32 0, %v4339
      %v4341 = vrot.slane %v3505, %v4340
      %v4342 = vlaneseq
      %v4343 = vshrl.u32 %v4342, 7
      %v4344 = vsub.s32 0, %v4343
      %v4345 = vrot.slane %v3506, %v4344
      %v4346 = vlaneseq
      %v4347 = vshrl.u32 %v4346, 7
      %v4348 = vsub.s32 0, %v4347
      %v4349 = vrot.slane %v3507, %v4348
      %v4350 = vlaneseq
      %v4351 = vshrl.u32 %v4350, 7
      %v4352 = vsub.s32 0, %v4351
      %v4353 = vrot.slane %v3508, %v4352
      %v4354 = vlaneseq
      %v4355 = vshrl.u32 %v4354, 7
      %v4356 = vsub.s32 0, %v4355
      %v4357 = vrot.slane %v3509, %v4356
      %v4358 = vlaneseq
      %v4359 = vshrl.u32 %v4358, 7
      %v4360 = vsub.s32 0, %v4359
      %v4361 = vrot.slane %v3510, %v4360
      %v4362 = vlaneseq
      %v4363 = vshrl.u32 %v4362, 7
      %v4364 = vsub.s32 0, %v4363
      %v4365 = vrot.slane %v3511, %v4364
      %v4366 = vlaneseq
      %v4367 = vshrl.u32 %v4366, 7
      %v4368 = vsub.s32 0, %v4367
      %v4369 = vrot.slane %v3512, %v4368
      %v4370 = vlaneseq
      %v4371 = vshrl.u32 %v4370, 7
      %v4372 = vsub.s32 0, %v4371
      %v4373 = vrot.slane %v3513, %v4372
      %v4374 = vlaneseq
      %v4375 = vshrl.u32 %v4374, 7
      %v4376 = vsub.s32 0, %v4375
      %v4377 = vrot.slane %v3514, %v4376
      %v4378 = vlaneseq
      %v4379 = vshrl.u32 %v4378, 7
      %v4380 = vsub.s32 0, %v4379
      %v4381 = vrot.slane %v3515, %v4380
      %v4382 = vlaneseq
      %v4383 = vshrl.u32 %v4382, 7
      %v4384 = vsub.s32 0, %v4383
      %v4385 = vrot.slane %v3516, %v4384
      %v4386 = vlaneseq
      %v4387 = vshrl.u32 %v4386, 7
      %v4388 = vsub.s32 0, %v4387
      %v4389 = vrot.slane %v3517, %v4388
      %v4390 = vlaneseq
      %v4391 = vshrl.u32 %v4390, 7
      %v4392 = vsub.s32 0, %v4391
      %v4393 = vrot.slane %v3518, %v4392
      %v4394 = vlaneseq
      %v4395 = vshrl.u32 %v4394, 7
      %v4396 = vsub.s32 0, %v4395
      %v4397 = vrot.slane %v3519, %v4396
      %v4398 = vlaneseq
      %v4399 = vshrl.u32 %v4398, 7
      %v4400 = vsub.s32 0, %v4399
      %v4401 = vrot.slane %v3520, %v4400
      %v4402 = vlaneseq
      %v4403 = vshrl.u32 %v4402, 7
      %v4404 = vsub.s32 0, %v4403
      %v4405 = vrot.slane %v3521, %v4404
      %v4406 = vlaneseq
      %v4407 = vshrl.u32 %v4406, 7
      %v4408 = vsub.s32 0, %v4407
      %v4409 = vrot.slane %v3522, %v4408
      %v4410 = vlaneseq
      %v4411 = vshrl.u32 %v4410, 7
      %v4412 = vsub.s32 0, %v4411
      %v4413 = vrot.slane %v3523, %v4412
      %v4414 = vlaneseq
      %v4415 = vshrl.u32 %v4414, 7
      %v4416 = vsub.s32 0, %v4415
      %v4417 = vrot.slane %v3524, %v4416
      %v4418 = vlaneseq
      %v4419 = vshrl.u32 %v4418, 7
      %v4420 = vsub.s32 0, %v4419
      %v4421 = vrot.slane %v3525, %v4420
      %v4422 = vlaneseq
      %v4423 = vshrl.u32 %v4422, 7
      %v4424 = vsub.s32 0, %v4423
      %v4425 = vrot.slane %v3526, %v4424
      %v4426 = vlaneseq
      %v4427 = vshrl.u32 %v4426, 7
      %v4428 = vsub.s32 0, %v4427
      %v4429 = vrot.slane %v3527, %v4428
      %v4430 = vlaneseq
      %v4431 = vshrl.u32 %v4430, 7
      %v4432 = vsub.s32 0, %v4431
      %v4433 = vrot.slane %v3528, %v4432
      %v4434 = vlaneseq
      %v4435 = vshrl.u32 %v4434, 7
      %v4436 = vsub.s32 0, %v4435
      %v4437 = vrot.slane %v3529, %v4436
      %v4438 = vlaneseq
      %v4439 = vshrl.u32 %v4438, 7
      %v4440 = vsub.s32 0, %v4439
      %v4441 = vrot.slane %v3530, %v4440
      %v4442 = vlaneseq
      %v4443 = vshrl.u32 %v4442, 7
      %v4444 = vsub.s32 0, %v4443
      %v4445 = vrot.slane %v3531, %v4444
      %v4446 = vlaneseq
      %v4447 = vshrl.u32 %v4446, 7
      %v4448 = vsub.s32 0, %v4447
      %v4449 = vrot.slane %v3532, %v4448
      %v4450 = vlaneseq
      %v4451 = vshrl.u32 %v4450, 7
      %v4452 = vsub.s32 0, %v4451
      %v4453 = vrot.slane %v3533, %v4452
      %v4454 = vlaneseq
      %v4455 = vshrl.u32 %v4454, 7
      %v4456 = vsub.s32 0, %v4455
      %v4457 = vrot.slane %v3534, %v4456
      %v4458 = vlaneseq
      %v4459 = vshrl.u32 %v4458, 7
      %v4460 = vsub.s32 0, %v4459
      %v4461 = vrot.slane %v3535, %v4460
      %v4462 = vlaneseq
      %v4463 = vshrl.u32 %v4462, 7
      %v4464 = vsub.s32 0, %v4463
      %v4465 = vrot.slane %v3536, %v4464
      %v4466 = vlaneseq
      %v4467 = vshrl.u32 %v4466, 7
      %v4468 = vsub.s32 0, %v4467
      %v4469 = vrot.slane %v3537, %v4468
      %v4470 = vlaneseq
      %v4471 = vshrl.u32 %v4470, 7
      %v4472 = vsub.s32 0, %v4471
      %v4473 = vrot.slane %v3538, %v4472
      %v4474 = vlaneseq
      %v4475 = vshrl.u32 %v4474, 7
      %v4476 = vsub.s32 0, %v4475
      %v4477 = vrot.slane %v3539, %v4476
      %v4478 = vlaneseq
      %v4479 = vshrl.u32 %v4478, 7
      %v4480 = vsub.s32 0, %v4479
      %v4481 = vrot.slane %v3540, %v4480
      %v4482 = vlaneseq
      %v4483 = vshrl.u32 %v4482, 7
      %v4484 = vsub.s32 0, %v4483
      %v4485 = vrot.slane %v3541, %v4484
      %v4486 = vlaneseq
      %v4487 = vshrl.u32 %v4486, 7
      %v4488 = vsub.s32 0, %v4487
      %v4489 = vrot.slane %v3542, %v4488
      %v4490 = vlaneseq
      %v4491 = vshrl.u32 %v4490, 7
      %v4492 = vsub.s32 0, %v4491
      %v4493 = vrot.slane %v3543, %v4492
      %v4494 = vlaneseq
      %v4495 = vshrl.u32 %v4494, 7
      %v4496 = vsub.s32 0, %v4495
      %v4497 = vrot.slane %v3544, %v4496
      %v4498 = vlaneseq
      %v4499 = vshrl.u32 %v4498, 7
      %v4500 = vsub.s32 0, %v4499
      %v4501 = vrot.slane %v3545, %v4500
      %v4502 = vlaneseq
      %v4503 = vshrl.u32 %v4502, 7
      %v4504 = vsub.s32 0, %v4503
      %v4505 = vrot.slane %v3546, %v4504
      %v4506 = vlaneseq
      %v4507 = vshrl.u32 %v4506, 7
      %v4508 = vsub.s32 0, %v4507
      %v4509 = vrot.slane %v3547, %v4508
      %v4510 = vlaneseq
      %v4511 = vshrl.u32 %v4510, 7
      %v4512 = vsub.s32 0, %v4511
      %v4513 = vrot.slane %v3548, %v4512
      %v4514 = vlaneseq
      %v4515 = vshrl.u32 %v4514, 7
      %v4516 = vsub.s32 0, %v4515
      %v4517 = vrot.slane %v3549, %v4516
      %v4518 = vlaneseq
      %v4519 = vshrl.u32 %v4518, 7
      %v4520 = vsub.s32 0, %v4519
      %v4521 = vrot.slane %v3550, %v4520
      %v4522 = vlaneseq
      %v4523 = vshrl.u32 %v4522, 7
      %v4524 = vsub.s32 0, %v4523
      %v4525 = vrot.slane %v3551, %v4524
      %v4526 = vlaneseq
      %v4527 = vshrl.u32 %v4526, 7
      %v4528 = vsub.s32 0, %v4527
      %v4529 = vrot.slane %v3552, %v4528
      %v4530 = vlaneseq
      %v4531 = vshrl.u32 %v4530, 7
      %v4532 = vsub.s32 0, %v4531
      %v4533 = vrot.slane %v3553, %v4532
      %v4534 = vlaneseq
      %v4535 = vshrl.u32 %v4534, 7
      %v4536 = vsub.s32 0, %v4535
      %v4537 = vrot.slane %v3554, %v4536
      %v4538 = vlaneseq
      %v4539 = vshrl.u32 %v4538, 7
      %v4540 = vsub.s32 0, %v4539
      %v4541 = vrot.slane %v3555, %v4540
      %v4542 = vlaneseq
      %v4543 = vshrl.u32 %v4542, 7
      %v4544 = vsub.s32 0, %v4543
      %v4545 = vrot.slane %v3556, %v4544
      %v4546 = vlaneseq
      %v4547 = vshrl.u32 %v4546, 7
      %v4548 = vsub.s32 0, %v4547
      %v4549 = vrot.slane %v3557, %v4548
      %v4550 = vlaneseq
      %v4551 = vshrl.u32 %v4550, 7
      %v4552 = vsub.s32 0, %v4551
      %v4553 = vrot.slane %v3558, %v4552
      %v4554 = vlaneseq
      %v4555 = vshrl.u32 %v4554, 7
      %v4556 = vsub.s32 0, %v4555
      %v4557 = vrot.slane %v3559, %v4556
      %v4558 = vlaneseq
      %v4559 = vshrl.u32 %v4558, 7
      %v4560 = vsub.s32 0, %v4559
      %v4561 = vrot.slane %v3560, %v4560
      %v4562 = vlaneseq
      %v4563 = vshrl.u32 %v4562, 7
      %v4564 = vsub.s32 0, %v4563
      %v4565 = vrot.slane %v3561, %v4564
      %v4566 = vlaneseq
      %v4567 = vshrl.u32 %v4566, 7
      %v4568 = vsub.s32 0, %v4567
      %v4569 = vrot.slane %v3562, %v4568
      %v4570 = vlaneseq
      %v4571 = vshrl.u32 %v4570, 7
      %v4572 = vsub.s32 0, %v4571
      %v4573 = vrot.slane %v3563, %v4572
      %v4574 = vlaneseq
      %v4575 = vshrl.u32 %v4574, 7
      %v4576 = vsub.s32 0, %v4575
      %v4577 = vrot.slane %v3564, %v4576
      %v4578 = vlaneseq
      %v4579 = vshrl.u32 %v4578, 7
      %v4580 = vsub.s32 0, %v4579
      %v4581 = vrot.slane %v3565, %v4580
      %v4582 = vlaneseq
      %v4583 = vshrl.u32 %v4582, 7
      %v4584 = vsub.s32 0, %v4583
      %v4585 = vrot.slane %v3566, %v4584
      %v4586 = vlaneseq
      %v4587 = vshrl.u32 %v4586, 7
      %v4588 = vsub.s32 0, %v4587
      %v4589 = vrot.slane %v3567, %v4588
      %v4590 = vlaneseq
      %v4591 = vshrl.u32 %v4590, 7
      %v4592 = vsub.s32 0, %v4591
      %v4593 = vrot.slane %v3568, %v4592
      %v4594 = vlaneseq
      %v4595 = vshrl.u32 %v4594, 7
      %v4596 = vsub.s32 0, %v4595
      %v4597 = vrot.slane %v3569, %v4596
      %v4598 = vlaneseq
      %v4599 = vshrl.u32 %v4598, 7
      %v4600 = vsub.s32 0, %v4599
      %v4601 = vrot.slane %v3570, %v4600
      %v4602 = vlaneseq
      %v4603 = vshrl.u32 %v4602, 7
      %v4604 = vsub.s32 0, %v4603
      %v4605 = vrot.slane %v3571, %v4604
      %v4606 = vlaneseq
      %v4607 = vshrl.u32 %v4606, 7
      %v4608 = vsub.s32 0, %v4607
      %v4609 = vrot.slane %v3572, %v4608
      %v4610 = vlaneseq
      %v4611 = vshrl.u32 %v4610, 7
      %v4612 = vsub.s32 0, %v4611
      %v4613 = vrot.slane %v3573, %v4612
      %v4614 = vlaneseq
      %v4615 = vshrl.u32 %v4614, 7
      %v4616 = vsub.s32 0, %v4615
      %v4617 = vrot.slane %v3574, %v4616
      %v4618 = vlaneseq
      %v4619 = vshrl.u32 %v4618, 7
      %v4620 = vsub.s32 0, %v4619
      %v4621 = vrot.slane %v3575, %v4620
      %v4622 = vlaneseq
      %v4623 = vshrl.u32 %v4622, 7
      %v4624 = vsub.s32 0, %v4623
      %v4625 = vrot.slane %v3576, %v4624
      %v4626 = vlaneseq
      %v4627 = vshrl.u32 %v4626, 7
      %v4628 = vsub.s32 0, %v4627
      %v4629 = vrot.slane %v3577, %v4628
      %v4630 = vlaneseq
      %v4631 = vshrl.u32 %v4630, 7
      %v4632 = vsub.s32 0, %v4631
      %v4633 = vrot.slane %v3578, %v4632
      %v4634 = vlaneseq
      %v4635 = vshrl.u32 %v4634, 7
      %v4636 = vsub.s32 0, %v4635
      %v4637 = vrot.slane %v3579, %v4636
      %v4638 = vlaneseq
      %v4639 = vshrl.u32 %v4638, 7
      %v4640 = vsub.s32 0, %v4639
      %v4641 = vrot.slane %v3580, %v4640
      %v4642 = vlaneseq
      %v4643 = vshrl.u32 %v4642, 7
      %v4644 = vsub.s32 0, %v4643
      %v4645 = vrot.slane %v3581, %v4644
      %v4646 = vlaneseq
      %v4647 = vshrl.u32 %v4646, 7
      %v4648 = vsub.s32 0, %v4647
      %v4649 = vrot.slane %v3582, %v4648
      %v4650 = vlaneseq
      %v4651 = vshrl.u32 %v4650, 7
      %v4652 = vsub.s32 0, %v4651
      %v4653 = vrot.slane %v3583, %v4652
      %v4654 = vlaneseq
      %v4655 = vshrl.u32 %v4654, 7
      %v4656 = vsub.s32 0, %v4655
      %v4657 = vrot.slane %v3584, %v4656
      %v4658 = vlaneseq
      %v4659 = vshrl.u32 %v4658, 7
      %v4660 = vsub.s32 0, %v4659
      %v4661 = vrot.slane %v3585, %v4660
      %v4662 = vlaneseq
      %v4663 = vshrl.u32 %v4662, 7
      %v4664 = vsub.s32 0, %v4663
      %v4665 = vrot.slane %v3586, %v4664
      %v4666 = vlaneseq
      %v4667 = vshrl.u32 %v4666, 7
      %v4668 = vsub.s32 0, %v4667
      %v4669 = vrot.slane %v3587, %v4668
      %v4670 = vlaneseq
      %v4671 = vshrl.u32 %v4670, 7
      %v4672 = vsub.s32 0, %v4671
      %v4673 = vrot.slane %v3588, %v4672
      %v4674 = vlaneseq
      %v4675 = vshrl.u32 %v4674, 7
      %v4676 = vsub.s32 0, %v4675
      %v4677 = vrot.slane %v3589, %v4676
      %v4678 = vlaneseq
      %v4679 = vshrl.u32 %v4678, 7
      %v4680 = vsub.s32 0, %v4679
      %v4681 = vrot.slane %v3590, %v4680
      %v4682 = vlaneseq
      %v4683 = vshrl.u32 %v4682, 7
      %v4684 = vsub.s32 0, %v4683
      %v4685 = vrot.slane %v3591, %v4684
      %v4686 = vlaneseq
      %v4687 = vshrl.u32 %v4686, 7
      %v4688 = vsub.s32 0, %v4687
      %v4689 = vrot.slane %v3592, %v4688
      %v4690 = vlaneseq
      %v4691 = vshrl.u32 %v4690, 7
      %v4692 = vsub.s32 0, %v4691
      %v4693 = vrot.slane %v3593, %v4692
      %v4694 = vlaneseq
      %v4695 = vshrl.u32 %v4694, 7
      %v4696 = vsub.s32 0, %v4695
      %v4697 = vrot.slane %v3594, %v4696
      %v4698 = vlaneseq
      %v4699 = vshrl.u32 %v4698, 7
      %v4700 = vsub.s32 0, %v4699
      %v4701 = vrot.slane %v3595, %v4700
      %v4702 = vlaneseq
      %v4703 = vshrl.u32 %v4702, 7
      %v4704 = vsub.s32 0, %v4703
      %v4705 = vrot.slane %v3596, %v4704
      %v4706 = vlaneseq
      %v4707 = vshrl.u32 %v4706, 7
      %v4708 = vsub.s32 0, %v4707
      %v4709 = vrot.slane %v3597, %v4708
      %v4710 = vlaneseq
      %v4711 = vshrl.u32 %v4710, 7
      %v4712 = vsub.s32 0, %v4711
      %v4713 = vrot.slane %v3598, %v4712
      %v4714 = vlaneseq
      %v4715 = vshrl.u32 %v4714, 7
      %v4716 = vsub.s32 0, %v4715
      %v4717 = vrot.slane %v3599, %v4716
      %v4718 = vlaneseq
      %v4719 = vshrl.u32 %v4718, 7
      %v4720 = vsub.s32 0, %v4719
      %v4721 = vrot.slane %v3600, %v4720
      %v4722 = vlaneseq
      %v4723 = vshrl.u32 %v4722, 7
      %v4724 = vsub.s32 0, %v4723
      %v4725 = vrot.slane %v3601, %v4724
      %v4726 = vlaneseq
      %v4727 = vshrl.u32 %v4726, 7
      %v4728 = vsub.s32 0, %v4727
      %v4729 = vrot.slane %v3602, %v4728
      %v4730 = vlaneseq
      %v4731 = vshrl.u32 %v4730, 7
      %v4732 = vsub.s32 0, %v4731
      %v4733 = vrot.slane %v3603, %v4732
      %v4734 = vlaneseq
      %v4735 = vshrl.u32 %v4734, 7
      %v4736 = vsub.s32 0, %v4735
      %v4737 = vrot.slane %v3604, %v4736
      %v4738 = vlaneseq
      %v4739 = vshrl.u32 %v4738, 7
      %v4740 = vsub.s32 0, %v4739
      %v4741 = vrot.slane %v3605, %v4740
      %v4742 = vlaneseq
      %v4743 = vshrl.u32 %v4742, 7
      %v4744 = vsub.s32 0, %v4743
      %v4745 = vrot.slane %v3606, %v4744
      %v4746 = vlaneseq
      %v4747 = vshrl.u32 %v4746, 7
      %v4748 = vsub.s32 0, %v4747
      %v4749 = vrot.slane %v3607, %v4748
      %v4750 = vlaneseq
      %v4751 = vshrl.u32 %v4750, 7
      %v4752 = vsub.s32 0, %v4751
      %v4753 = vrot.slane %v3608, %v4752
      %v4754 = vlaneseq
      %v4755 = vshrl.u32 %v4754, 7
      %v4756 = vsub.s32 0, %v4755
      %v4757 = vrot.slane %v3609, %v4756
      %v4758 = vlaneseq
      %v4759 = vshrl.u32 %v4758, 7
      %v4760 = vsub.s32 0, %v4759
      %v4761 = vrot.slane %v3610, %v4760
      %v4762 = vlaneseq
      %v4763 = vshrl.u32 %v4762, 7
      %v4764 = vsub.s32 0, %v4763
      %v4765 = vrot.slane %v3611, %v4764
      %v4766 = vlaneseq
      %v4767 = vshrl.u32 %v4766, 7
      %v4768 = vsub.s32 0, %v4767
      %v4769 = vrot.slane %v3612, %v4768
      %v4770 = vlaneseq
      %v4771 = vshrl.u32 %v4770, 7
      %v4772 = vsub.s32 0, %v4771
      %v4773 = vrot.slane %v3613, %v4772
      %v4774 = vlaneseq
      %v4775 = vshrl.u32 %v4774, 7
      %v4776 = vsub.s32 0, %v4775
      %v4777 = vrot.slane %v3614, %v4776
      %v4778 = vlaneseq
      %v4779 = vshrl.u32 %v4778, 7
      %v4780 = vsub.s32 0, %v4779
      %v4781 = vrot.slane %v3615, %v4780
      %v4782 = vlaneseq
      %v4783 = vshrl.u32 %v4782, 7
      %v4784 = vsub.s32 0, %v4783
      %v4785 = vrot.slane %v3616, %v4784
      %v4786 = vlaneseq
      %v4787 = vshrl.u32 %v4786, 7
      %v4788 = vsub.s32 0, %v4787
      %v4789 = vrot.slane %v3617, %v4788
      %v4790 = vlaneseq
      %v4791 = vshrl.u32 %v4790, 7
      %v4792 = vsub.s32 0, %v4791
      %v4793 = vrot.slane %v3618, %v4792
      %v4794 = vlaneseq
      %v4795 = vshrl.u32 %v4794, 7
      %v4796 = vsub.s32 0, %v4795
      %v4797 = vrot.slane %v3619, %v4796
      %v4798 = vlaneseq
      %v4799 = vshrl.u32 %v4798, 7
      %v4800 = vsub.s32 0, %v4799
      %v4801 = vrot.slane %v3620, %v4800
      %v4802 = vlaneseq
      %v4803 = vshrl.u32 %v4802, 7
      %v4804 = vsub.s32 0, %v4803
      %v4805 = vrot.slane %v3621, %v4804
      %v4806 = vlaneseq
      %v4807 = vshrl.u32 %v4806, 7
      %v4808 = vsub.s32 0, %v4807
      %v4809 = vrot.slane %v3622, %v4808
      %v4810 = vlaneseq
      %v4811 = vshrl.u32 %v4810, 7
      %v4812 = vsub.s32 0, %v4811
      %v4813 = vrot.slane %v3623, %v4812
      %v4814 = vlaneseq
      %v4815 = vshrl.u32 %v4814, 7
      %v4816 = vsub.s32 0, %v4815
      %v4817 = vrot.slane %v3624, %v4816
      %v4818 = vlaneseq
      %v4819 = vshrl.u32 %v4818, 7
      %v4820 = vsub.s32 0, %v4819
      %v4821 = vrot.slane %v3625, %v4820
      %v4822 = vlaneseq
      %v4823 = vshrl.u32 %v4822, 7
      %v4824 = vsub.s32 0, %v4823
      %v4825 = vrot.slane %v3626, %v4824
      %v4826 = vlaneseq
      %v4827 = vshrl.u32 %v4826, 7
      %v4828 = vsub.s32 0, %v4827
      %v4829 = vrot.slane %v3627, %v4828
      %v4830 = vlaneseq
      %v4831 = vshrl.u32 %v4830, 7
      %v4832 = vsub.s32 0, %v4831
      %v4833 = vrot.slane %v3628, %v4832
      %v4834 = vlaneseq
      %v4835 = vshrl.u32 %v4834, 7
      %v4836 = vsub.s32 0, %v4835
      %v4837 = vrot.slane %v3629, %v4836
      %v4838 = vlaneseq
      %v4839 = vshrl.u32 %v4838, 7
      %v4840 = vsub.s32 0, %v4839
      %v4841 = vrot.slane %v3630, %v4840
      %v4842 = vlaneseq
      %v4843 = vshrl.u32 %v4842, 7
      %v4844 = vsub.s32 0, %v4843
      %v4845 = vrot.slane %v3631, %v4844
      %v4846 = vlaneseq
      %v4847 = vshrl.u32 %v4846, 7
      %v4848 = vsub.s32 0, %v4847
      %v4849 = vrot.slane %v3632, %v4848
      %v4850 = vlaneseq
      %v4851 = vshrl.u32 %v4850, 7
      %v4852 = vsub.s32 0, %v4851
      %v4853 = vrot.slane %v3633, %v4852
      %v4854 = vlaneseq
      %v4855 = vshrl.u32 %v4854, 7
      %v4856 = vsub.s32 0, %v4855
      %v4857 = vrot.slane %v3634, %v4856
      %v4858 = vlaneseq
      %v4859 = vshrl.u32 %v4858, 7
      %v4860 = vsub.s32 0, %v4859
      %v4861 = vrot.slane %v3635, %v4860
      %v4862 = vlaneseq
      %v4863 = vshrl.u32 %v4862, 7
      %v4864 = vsub.s32 0, %v4863
      %v4865 = vrot.slane %v3636, %v4864
      %v4866 = vlaneseq
      %v4867 = vshrl.u32 %v4866, 7
      %v4868 = vsub.s32 0, %v4867
      %v4869 = vrot.slane %v3637, %v4868
      %v4870 = vlaneseq
      %v4871 = vshrl.u32 %v4870, 7
      %v4872 = vsub.s32 0, %v4871
      %v4873 = vrot.slane %v3638, %v4872
      %v4874 = vlaneseq
      %v4875 = vshrl.u32 %v4874, 7
      %v4876 = vsub.s32 0, %v4875
      %v4877 = vrot.slane %v3639, %v4876
      %v4878 = vlaneseq
      %v4879 = vshrl.u32 %v4878, 7
      %v4880 = vsub.s32 0, %v4879
      %v4881 = vrot.slane %v3640, %v4880
      %v4882 = vlaneseq
      %v4883 = vshrl.u32 %v4882, 7
      %v4884 = vsub.s32 0, %v4883
      %v4885 = vrot.slane %v3641, %v4884
      %v4886 = vlaneseq
      %v4887 = vshrl.u32 %v4886, 7
      %v4888 = vsub.s32 0, %v4887
      %v4889 = vrot.slane %v3642, %v4888
      %v4890 = vlaneseq
      %v4891 = vshrl.u32 %v4890, 7
      %v4892 = vsub.s32 0, %v4891
      %v4893 = vrot.slane %v3643, %v4892
      %v4894 = vlaneseq
      %v4895 = vshrl.u32 %v4894, 7
      %v4896 = vsub.s32 0, %v4895
      %v4897 = vrot.slane %v3644, %v4896
      %v4898 = vlaneseq
      %v4899 = vshrl.u32 %v4898, 7
      %v4900 = vsub.s32 0, %v4899
      %v4901 = vrot.slane %v3645, %v4900
      %v4902 = vlaneseq
      %v4903 = vshrl.u32 %v4902, 7
      %v4904 = vsub.s32 0, %v4903
      %v4905 = vrot.slane %v3646, %v4904
      %v4906 = vlaneseq
      %v4907 = vshrl.u32 %v4906, 7
      %v4908 = vsub.s32 0, %v4907
      %v4909 = vrot.slane %v3647, %v4908
      %v4910 = vlaneseq
      %v4911 = vshrl.u32 %v4910, 7
      %v4912 = vsub.s32 0, %v4911
      %v4913 = vrot.slane %v3648, %v4912
      %v4914 = vlaneseq
      %v4915 = vshrl.u32 %v4914, 7
      %v4916 = vsub.s32 0, %v4915
      %v4917 = vrot.slane %v3649, %v4916
      %v4918 = vlaneseq
      %v4919 = vshrl.u32 %v4918, 7
      %v4920 = vsub.s32 0, %v4919
      %v4921 = vrot.slane %v3650, %v4920
      %v4922 = vlaneseq
      %v4923 = vshrl.u32 %v4922, 7
      %v4924 = vsub.s32 0, %v4923
      %v4925 = vrot.slane %v3651, %v4924
      %v4926 = vlaneseq
      %v4927 = vshrl.u32 %v4926, 7
      %v4928 = vsub.s32 0, %v4927
      %v4929 = vrot.slane %v3652, %v4928
      %v4930 = vlaneseq
      %v4931 = vshrl.u32 %v4930, 7
      %v4932 = vsub.s32 0, %v4931
      %v4933 = vrot.slane %v3653, %v4932
      %vm4934 = vcmask 1041409
      %v4935 = vsel %vm4934, %v3917, %v3913
      %vm4936 = vcmask 1042434
      %v4937 = vsel %vm4936, %v3921, %v4935
      %vm4938 = vcmask 1043459
      %v4939 = vsel %vm4938, %v3925, %v4937
      %vm4940 = vcmask 1044484
      %v4941 = vsel %vm4940, %v3929, %v4939
      %vm4942 = vcmask 1045509
      %v4943 = vsel %vm4942, %v3933, %v4941
      %vm4944 = vcmask 1046534
      %v4945 = vsel %vm4944, %v3937, %v4943
      %vm4946 = vcmask 1047559
      %v4947 = vsel %vm4946, %v3941, %v4945
      %v4948 = vsel %vm4934, %v3949, %v3945
      %v4949 = vsel %vm4936, %v3953, %v4948
      %v4950 = vsel %vm4938, %v3957, %v4949
      %v4951 = vsel %vm4940, %v3961, %v4950
      %v4952 = vsel %vm4942, %v3965, %v4951
      %v4953 = vsel %vm4944, %v3969, %v4952
      %v4954 = vsel %vm4946, %v3973, %v4953
      %v4955 = vsel %vm4934, %v3981, %v3977
      %v4956 = vsel %vm4936, %v3985, %v4955
      %v4957 = vsel %vm4938, %v3989, %v4956
      %v4958 = vsel %vm4940, %v3993, %v4957
      %v4959 = vsel %vm4942, %v3997, %v4958
      %v4960 = vsel %vm4944, %v4001, %v4959
      %v4961 = vsel %vm4946, %v4005, %v4960
      %v4962 = vsel %vm4934, %v4013, %v4009
      %v4963 = vsel %vm4936, %v4017, %v4962
      %v4964 = vsel %vm4938, %v4021, %v4963
      %v4965 = vsel %vm4940, %v4025, %v4964
      %v4966 = vsel %vm4942, %v4029, %v4965
      %v4967 = vsel %vm4944, %v4033, %v4966
      %v4968 = vsel %vm4946, %v4037, %v4967
      %v4969 = vsel %vm4934, %v4045, %v4041
      %v4970 = vsel %vm4936, %v4049, %v4969
      %v4971 = vsel %vm4938, %v4053, %v4970
      %v4972 = vsel %vm4940, %v4057, %v4971
      %v4973 = vsel %vm4942, %v4061, %v4972
      %v4974 = vsel %vm4944, %v4065, %v4973
      %v4975 = vsel %vm4946, %v4069, %v4974
      %v4976 = vsel %vm4934, %v4077, %v4073
      %v4977 = vsel %vm4936, %v4081, %v4976
      %v4978 = vsel %vm4938, %v4085, %v4977
      %v4979 = vsel %vm4940, %v4089, %v4978
      %v4980 = vsel %vm4942, %v4093, %v4979
      %v4981 = vsel %vm4944, %v4097, %v4980
      %v4982 = vsel %vm4946, %v4101, %v4981
      %v4983 = vsel %vm4934, %v4109, %v4105
      %v4984 = vsel %vm4936, %v4113, %v4983
      %v4985 = vsel %vm4938, %v4117, %v4984
      %v4986 = vsel %vm4940, %v4121, %v4985
      %v4987 = vsel %vm4942, %v4125, %v4986
      %v4988 = vsel %vm4944, %v4129, %v4987
      %v4989 = vsel %vm4946, %v4133, %v4988
      %v4990 = vsel %vm4934, %v4141, %v4137
      %v4991 = vsel %vm4936, %v4145, %v4990
      %v4992 = vsel %vm4938, %v4149, %v4991
      %v4993 = vsel %vm4940, %v4153, %v4992
      %v4994 = vsel %vm4942, %v4157, %v4993
      %v4995 = vsel %vm4944, %v4161, %v4994
      %v4996 = vsel %vm4946, %v4165, %v4995
      %v4997 = vsel %vm4934, %v4173, %v4169
      %v4998 = vsel %vm4936, %v4177, %v4997
      %v4999 = vsel %vm4938, %v4181, %v4998
      %v5000 = vsel %vm4940, %v4185, %v4999
      %v5001 = vsel %vm4942, %v4189, %v5000
      %v5002 = vsel %vm4944, %v4193, %v5001
      %v5003 = vsel %vm4946, %v4197, %v5002
      %v5004 = vsel %vm4934, %v4205, %v4201
      %v5005 = vsel %vm4936, %v4209, %v5004
      %v5006 = vsel %vm4938, %v4213, %v5005
      %v5007 = vsel %vm4940, %v4217, %v5006
      %v5008 = vsel %vm4942, %v4221, %v5007
      %v5009 = vsel %vm4944, %v4225, %v5008
      %v5010 = vsel %vm4946, %v4229, %v5009
      %v5011 = vsel %vm4934, %v4237, %v4233
      %v5012 = vsel %vm4936, %v4241, %v5011
      %v5013 = vsel %vm4938, %v4245, %v5012
      %v5014 = vsel %vm4940, %v4249, %v5013
      %v5015 = vsel %vm4942, %v4253, %v5014
      %v5016 = vsel %vm4944, %v4257, %v5015
      %v5017 = vsel %vm4946, %v4261, %v5016
      %v5018 = vsel %vm4934, %v4269, %v4265
      %v5019 = vsel %vm4936, %v4273, %v5018
      %v5020 = vsel %vm4938, %v4277, %v5019
      %v5021 = vsel %vm4940, %v4281, %v5020
      %v5022 = vsel %vm4942, %v4285, %v5021
      %v5023 = vsel %vm4944, %v4289, %v5022
      %v5024 = vsel %vm4946, %v4293, %v5023
      %v5025 = vsel %vm4934, %v4301, %v4297
      %v5026 = vsel %vm4936, %v4305, %v5025
      %v5027 = vsel %vm4938, %v4309, %v5026
      %v5028 = vsel %vm4940, %v4313, %v5027
      %v5029 = vsel %vm4942, %v4317, %v5028
      %v5030 = vsel %vm4944, %v4321, %v5029
      %v5031 = vsel %vm4946, %v4325, %v5030
      %v5032 = vsel %vm4934, %v4333, %v4329
      %v5033 = vsel %vm4936, %v4337, %v5032
      %v5034 = vsel %vm4938, %v4341, %v5033
      %v5035 = vsel %vm4940, %v4345, %v5034
      %v5036 = vsel %vm4942, %v4349, %v5035
      %v5037 = vsel %vm4944, %v4353, %v5036
      %v5038 = vsel %vm4946, %v4357, %v5037
      %v5039 = vsel %vm4934, %v4365, %v4361
      %v5040 = vsel %vm4936, %v4369, %v5039
      %v5041 = vsel %vm4938, %v4373, %v5040
      %v5042 = vsel %vm4940, %v4377, %v5041
      %v5043 = vsel %vm4942, %v4381, %v5042
      %v5044 = vsel %vm4944, %v4385, %v5043
      %v5045 = vsel %vm4946, %v4389, %v5044
      %v5046 = vsel %vm4934, %v4397, %v4393
      %v5047 = vsel %vm4936, %v4401, %v5046
      %v5048 = vsel %vm4938, %v4405, %v5047
      %v5049 = vsel %vm4940, %v4409, %v5048
      %v5050 = vsel %vm4942, %v4413, %v5049
      %v5051 = vsel %vm4944, %v4417, %v5050
      %v5052 = vsel %vm4946, %v4421, %v5051
      %v5053 = vsel %vm4934, %v4429, %v4425
      %v5054 = vsel %vm4936, %v4433, %v5053
      %v5055 = vsel %vm4938, %v4437, %v5054
      %v5056 = vsel %vm4940, %v4441, %v5055
      %v5057 = vsel %vm4942, %v4445, %v5056
      %v5058 = vsel %vm4944, %v4449, %v5057
      %v5059 = vsel %vm4946, %v4453, %v5058
      %v5060 = vsel %vm4934, %v4461, %v4457
      %v5061 = vsel %vm4936, %v4465, %v5060
      %v5062 = vsel %vm4938, %v4469, %v5061
      %v5063 = vsel %vm4940, %v4473, %v5062
      %v5064 = vsel %vm4942, %v4477, %v5063
      %v5065 = vsel %vm4944, %v4481, %v5064
      %v5066 = vsel %vm4946, %v4485, %v5065
      %v5067 = vsel %vm4934, %v4493, %v4489
      %v5068 = vsel %vm4936, %v4497, %v5067
      %v5069 = vsel %vm4938, %v4501, %v5068
      %v5070 = vsel %vm4940, %v4505, %v5069
      %v5071 = vsel %vm4942, %v4509, %v5070
      %v5072 = vsel %vm4944, %v4513, %v5071
      %v5073 = vsel %vm4946, %v4517, %v5072
      %v5074 = vsel %vm4934, %v4525, %v4521
      %v5075 = vsel %vm4936, %v4529, %v5074
      %v5076 = vsel %vm4938, %v4533, %v5075
      %v5077 = vsel %vm4940, %v4537, %v5076
      %v5078 = vsel %vm4942, %v4541, %v5077
      %v5079 = vsel %vm4944, %v4545, %v5078
      %v5080 = vsel %vm4946, %v4549, %v5079
      %v5081 = vsel %vm4934, %v4557, %v4553
      %v5082 = vsel %vm4936, %v4561, %v5081
      %v5083 = vsel %vm4938, %v4565, %v5082
      %v5084 = vsel %vm4940, %v4569, %v5083
      %v5085 = vsel %vm4942, %v4573, %v5084
      %v5086 = vsel %vm4944, %v4577, %v5085
      %v5087 = vsel %vm4946, %v4581, %v5086
      %v5088 = vsel %vm4934, %v4589, %v4585
      %v5089 = vsel %vm4936, %v4593, %v5088
      %v5090 = vsel %vm4938, %v4597, %v5089
      %v5091 = vsel %vm4940, %v4601, %v5090
      %v5092 = vsel %vm4942, %v4605, %v5091
      %v5093 = vsel %vm4944, %v4609, %v5092
      %v5094 = vsel %vm4946, %v4613, %v5093
      %v5095 = vsel %vm4934, %v4621, %v4617
      %v5096 = vsel %vm4936, %v4625, %v5095
      %v5097 = vsel %vm4938, %v4629, %v5096
      %v5098 = vsel %vm4940, %v4633, %v5097
      %v5099 = vsel %vm4942, %v4637, %v5098
      %v5100 = vsel %vm4944, %v4641, %v5099
      %v5101 = vsel %vm4946, %v4645, %v5100
      %v5102 = vsel %vm4934, %v4653, %v4649
      %v5103 = vsel %vm4936, %v4657, %v5102
      %v5104 = vsel %vm4938, %v4661, %v5103
      %v5105 = vsel %vm4940, %v4665, %v5104
      %v5106 = vsel %vm4942, %v4669, %v5105
      %v5107 = vsel %vm4944, %v4673, %v5106
      %v5108 = vsel %vm4946, %v4677, %v5107
      %v5109 = vsel %vm4934, %v4685, %v4681
      %v5110 = vsel %vm4936, %v4689, %v5109
      %v5111 = vsel %vm4938, %v4693, %v5110
      %v5112 = vsel %vm4940, %v4697, %v5111
      %v5113 = vsel %vm4942, %v4701, %v5112
      %v5114 = vsel %vm4944, %v4705, %v5113
      %v5115 = vsel %vm4946, %v4709, %v5114
      %v5116 = vsel %vm4934, %v4717, %v4713
      %v5117 = vsel %vm4936, %v4721, %v5116
      %v5118 = vsel %vm4938, %v4725, %v5117
      %v5119 = vsel %vm4940, %v4729, %v5118
      %v5120 = vsel %vm4942, %v4733, %v5119
      %v5121 = vsel %vm4944, %v4737, %v5120
      %v5122 = vsel %vm4946, %v4741, %v5121
      %v5123 = vsel %vm4934, %v4749, %v4745
      %v5124 = vsel %vm4936, %v4753, %v5123
      %v5125 = vsel %vm4938, %v4757, %v5124
      %v5126 = vsel %vm4940, %v4761, %v5125
      %v5127 = vsel %vm4942, %v4765, %v5126
      %v5128 = vsel %vm4944, %v4769, %v5127
      %v5129 = vsel %vm4946, %v4773, %v5128
      %v5130 = vsel %vm4934, %v4781, %v4777
      %v5131 = vsel %vm4936, %v4785, %v5130
      %v5132 = vsel %vm4938, %v4789, %v5131
      %v5133 = vsel %vm4940, %v4793, %v5132
      %v5134 = vsel %vm4942, %v4797, %v5133
      %v5135 = vsel %vm4944, %v4801, %v5134
      %v5136 = vsel %vm4946, %v4805, %v5135
      %v5137 = vsel %vm4934, %v4813, %v4809
      %v5138 = vsel %vm4936, %v4817, %v5137
      %v5139 = vsel %vm4938, %v4821, %v5138
      %v5140 = vsel %vm4940, %v4825, %v5139
      %v5141 = vsel %vm4942, %v4829, %v5140
      %v5142 = vsel %vm4944, %v4833, %v5141
      %v5143 = vsel %vm4946, %v4837, %v5142
      %v5144 = vsel %vm4934, %v4845, %v4841
      %v5145 = vsel %vm4936, %v4849, %v5144
      %v5146 = vsel %vm4938, %v4853, %v5145
      %v5147 = vsel %vm4940, %v4857, %v5146
      %v5148 = vsel %vm4942, %v4861, %v5147
      %v5149 = vsel %vm4944, %v4865, %v5148
      %v5150 = vsel %vm4946, %v4869, %v5149
      %v5151 = vsel %vm4934, %v4877, %v4873
      %v5152 = vsel %vm4936, %v4881, %v5151
      %v5153 = vsel %vm4938, %v4885, %v5152
      %v5154 = vsel %vm4940, %v4889, %v5153
      %v5155 = vsel %vm4942, %v4893, %v5154
      %v5156 = vsel %vm4944, %v4897, %v5155
      %v5157 = vsel %vm4946, %v4901, %v5156
      %v5158 = vsel %vm4934, %v4909, %v4905
      %v5159 = vsel %vm4936, %v4913, %v5158
      %v5160 = vsel %vm4938, %v4917, %v5159
      %v5161 = vsel %vm4940, %v4921, %v5160
      %v5162 = vsel %vm4942, %v4925, %v5161
      %v5163 = vsel %vm4944, %v4929, %v5162
      %v5164 = vsel %vm4946, %v4933, %v5163
      %vm5197 = vcmask 130048
      %5198 = vst.msk [vmem:[%s172] sm:$0xff] %vm5197, %v4947
      %5199 = vst.msk [vmem:[%s172 + $0x8] sm:$0xff] %vm5197, %v4954
      %5200 = vst.msk [vmem:[%s172 + $0x10] sm:$0xff] %vm5197, %v4961
      %5201 = vst.msk [vmem:[%s172 + $0x18] sm:$0xff] %vm5197, %v4968
      %5202 = vst.msk [vmem:[%s172 + $0x20] sm:$0xff] %vm5197, %v4975
      %5203 = vst.msk [vmem:[%s172 + $0x28] sm:$0xff] %vm5197, %v4982
      %5204 = vst.msk [vmem:[%s172 + $0x30] sm:$0xff] %vm5197, %v4989
      %5205 = vst.msk [vmem:[%s172 + $0x38] sm:$0xff] %vm5197, %v4996
      %5206 = vst.msk [vmem:[%s172 + $0x40] sm:$0xff] %vm5197, %v5003
      %5207 = vst.msk [vmem:[%s172 + $0x48] sm:$0xff] %vm5197, %v5010
      %5208 = vst.msk [vmem:[%s172 + $0x50] sm:$0xff] %vm5197, %v5017
      %5209 = vst.msk [vmem:[%s172 + $0x58] sm:$0xff] %vm5197, %v5024
      %5210 = vst.msk [vmem:[%s172 + $0x60] sm:$0xff] %vm5197, %v5031
      %5211 = vst.msk [vmem:[%s172 + $0x68] sm:$0xff] %vm5197, %v5038
      %5212 = vst.msk [vmem:[%s172 + $0x70] sm:$0xff] %vm5197, %v5045
      %5213 = vst.msk [vmem:[%s172 + $0x78] sm:$0xff] %vm5197, %v5052
      %5214 = vst.msk [vmem:[%s172 + $0x80] sm:$0xff] %vm5197, %v5059
      %5215 = vst.msk [vmem:[%s172 + $0x88] sm:$0xff] %vm5197, %v5066
      %5216 = vst.msk [vmem:[%s172 + $0x90] sm:$0xff] %vm5197, %v5073
      %5217 = vst.msk [vmem:[%s172 + $0x98] sm:$0xff] %vm5197, %v5080
      %5218 = vst.msk [vmem:[%s172 + $0xa0] sm:$0xff] %vm5197, %v5087
      %5219 = vst.msk [vmem:[%s172 + $0xa8] sm:$0xff] %vm5197, %v5094
      %5220 = vst.msk [vmem:[%s172 + $0xb0] sm:$0xff] %vm5197, %v5101
      %5221 = vst.msk [vmem:[%s172 + $0xb8] sm:$0xff] %vm5197, %v5108
      %5222 = vst.msk [vmem:[%s172 + $0xc0] sm:$0xff] %vm5197, %v5115
      %5223 = vst.msk [vmem:[%s172 + $0xc8] sm:$0xff] %vm5197, %v5122
      %5224 = vst.msk [vmem:[%s172 + $0xd0] sm:$0xff] %vm5197, %v5129
      %5225 = vst.msk [vmem:[%s172 + $0xd8] sm:$0xff] %vm5197, %v5136
      %5226 = vst.msk [vmem:[%s172 + $0xe0] sm:$0xff] %vm5197, %v5143
      %5227 = vst.msk [vmem:[%s172 + $0xe8] sm:$0xff] %vm5197, %v5150
      %5228 = vst.msk [vmem:[%s172 + $0xf0] sm:$0xff] %vm5197, %v5157
      %5229 = vst.msk [vmem:[%s172 + $0xf8] sm:$0xff] %vm5197, %v5164
      %s5230 = smul.u32 32, %s14
      %p5231 = scmp.lt.s32.totalorder %s5230, 63
      %s5232 = scalar_select %p5231, %s5230, 63
      %s5233 = smul.addr %s5232, 8
      %s5234 = scalar_lea.vmem %s3, %s5233
      // Predicated region
      $region33: #{image_encoder_forward.5} parent=31 // pred_check
        %p5235 = pneg %p100
      $region34: #{image_encoder_forward.5} parent=31 // pred_check_branch
        %5237 = sbr.rel (%p5235) target = $region36
      $region35: #{image_encoder_forward.5} parent=31 // pred_region
        %s5238 = smul.u32 32, %s14
      $region36: #{image_encoder_forward.5} parent=31 // pred_fallthru
        _
    $region32: #{image_encoder_forward.5} parent=5 // pred_fallthru
      _
    %p5239 = scmp.le.s32.totalorder 2, %s9
    // Predicated region
    $region37: #{image_encoder_forward.5} parent=5 // pred_check
      %p5240 = pneg %p5239
    $region38: #{image_encoder_forward.5} parent=5 // pred_check_branch
      %5242 = sbr.rel (%p5240) target = $region40
    $region39: #{image_encoder_forward.5} parent=5 // pred_region
      %s5243 = ssub.s32 %s9, 2
      // Predicated region
      $region41: #{image_encoder_forward.5} parent=39 // pred_check
        %p5244 = pneg %p106
      $region42: #{image_encoder_forward.5} parent=39 // pred_check_branch
        %5246 = sbr.rel (%p5244) target = $region44
      $region43: #{image_encoder_forward.5} parent=39 // pred_region
        %s5247 = smul.u32 32, %s15
        %p5248 = scmp.lt.s32.totalorder %s5247, 63
        %s5249 = scalar_select %p5248, %s5247, 63
        %s5250 = smul.addr %s5249, 8
        %s5251 = scalar_lea.vmem %s3, %s5250
      $region44: #{image_encoder_forward.5} parent=39 // pred_fallthru
        _
    $region40: #{image_encoder_forward.5} parent=5 // pred_fallthru
      _
  $region6: #{image_encoder_forward.5} parent=0 // loop_footer
    %s13 = sadd.s32 1, %s9
  $region7: #{image_encoder_forward.5} parent=0 // loop_footer_branch
    %8 = sbr.rel target = $region3
  $region8: #{image_encoder_forward.5} parent=0 // loop_exit
    _

// kernel: image_encoder_forward.6
$region0: #{image_encoder_forward.6}
  #allocation0 [shape = 'u32[]', space=smem, size = 0x4, offset = 0x4, fixed_abs, tag = 'smem constant byte address 0x4 - core index']
  #allocation1 [shape = 'u32[144,128]{1,0:T(1,128)}', space=vmem, size = 0x12000, scoped, tag = 'internal scratch']
  %s0 = inlined_call_operand.vmem [shape: f32[128,256], index: 0, kind: input, shape index: {}]
  %s1 = inlined_call_operand.vmem [shape: f32[256,32], index: 1, kind: input, shape index: {}]
  %s2 = inlined_call_operand.vmem [shape: f32[1,32], index: 2, kind: input, shape index: {}]
  %s3 = inlined_call_operand.vmem [shape: f32[32,32], index: 3, kind: output, shape index: {}]
  %s4 = sld [smem:[#allocation0]]
  $region45: #{image_encoder_forward.6} parent=0
    _
  %s6 = ssub.s32 1, %s4
  %s7 = scalar_select 0, %s6, %s4
  loop: start=0, step=1, limit=4
  $region2: #{image_encoder_forward.6} parent=0 // loop_pre_header
    _
  $region3: #{image_encoder_forward.6} parent=0 // loop_header
    %s9 = sphi 0, %s13
    %p10 = scmp.ge.s32.totalorder %s9, 4
    %s19 = sphi 0, %s21
    %s22 = sphi 0, %s19
    %s23 = sphi 0, %s22
    %s39 = sphi 0, %s23
    %s43 = sphi 0, %s43
    %s45 = sphi 0, %s43
    %s46 = sphi 0, %s45
    %s60 = sphi 0, %s46
    %s64 = sphi 0, %s64
    %s66 = sphi 0, %s64
    %s67 = sphi 0, %s66
    %s81 = sphi 0, %s67
    %s87 = sphi 0, %s89
    %s90 = sphi 0, %s87
    %s91 = sphi 0, %s90
    %s107 = sphi 0, %s91
  $region4: #{image_encoder_forward.6} parent=0 // loop_header_branch
    %12 = sbr.rel (%p10) target = $region8
  $region5: #{image_encoder_forward.6} parent=0 // loop_body
    %s14 = ssub.s32 %s9, 1
    %s15 = ssub.s32 %s9, 2
    %s16 = sadd.s32 %s9, 1
    %s17 = ssub.s32 %s9, %s16
    %p18 = scmp.eq.s32.totalorder %s17, 0
    %s20 = sadd.s32 %s19, 1
    %s21 = scalar_select %p18, %s19, %s20
    %p24 = pneg %p18
    %p25 = scmp.eq.s32.totalorder %s9, 1
    %p26 = por %p24, %p25
    %p27 = scmp.ne.s32.totalorder %s19, %s22
    %p28 = scmp.eq.s32.totalorder %s9, 0
    %p29 = por %p27, %p28
    %p30 = scmp.ne.s32.totalorder %s19, %s22
    %p31 = scmp.eq.s32.totalorder %s14, 1
    %p32 = por %p30, %p31
    %p33 = scmp.ne.s32.totalorder %s22, %s23
    %p34 = scmp.eq.s32.totalorder %s14, 0
    %p35 = por %p33, %p34
    %p36 = scmp.ne.s32.totalorder %s22, %s23
    %p37 = scmp.eq.s32.totalorder %s15, 1
    %p38 = por %p36, %p37
    %p40 = scmp.ne.s32.totalorder %s23, %s39
    %p41 = scmp.eq.s32.totalorder %s15, 0
    %p42 = por %p40, %p41
    %s44 = sadd.s32 %s43, 1
    %p47 = scmp.eq.s32.totalorder %s9, 1
    %p48 = scmp.ne.s32.totalorder %s43, %s45
    %p49 = scmp.eq.s32.totalorder %s9, 0
    %p50 = por %p48, %p49
    %p51 = scmp.ne.s32.totalorder %s43, %s45
    %p52 = scmp.eq.s32.totalorder %s14, 1
    %p53 = por %p51, %p52
    %p54 = scmp.ne.s32.totalorder %s45, %s46
    %p55 = scmp.eq.s32.totalorder %s14, 0
    %p56 = por %p54, %p55
    %p57 = scmp.ne.s32.totalorder %s45, %s46
    %p58 = scmp.eq.s32.totalorder %s15, 1
    %p59 = por %p57, %p58
    %p61 = scmp.ne.s32.totalorder %s46, %s60
    %p62 = scmp.eq.s32.totalorder %s15, 0
    %p63 = por %p61, %p62
    %s65 = sadd.s32 %s64, 1
    %p68 = scmp.eq.s32.totalorder %s9, 1
    %p69 = scmp.ne.s32.totalorder %s64, %s66
    %p70 = scmp.eq.s32.totalorder %s9, 0
    %p71 = por %p69, %p70
    %p72 = scmp.ne.s32.totalorder %s64, %s66
    %p73 = scmp.eq.s32.totalorder %s14, 1
    %p74 = por %p72, %p73
    %p75 = scmp.ne.s32.totalorder %s66, %s67
    %p76 = scmp.eq.s32.totalorder %s14, 0
    %p77 = por %p75, %p76
    %p78 = scmp.ne.s32.totalorder %s66, %s67
    %p79 = scmp.eq.s32.totalorder %s15, 1
    %p80 = por %p78, %p79
    %p82 = scmp.ne.s32.totalorder %s67, %s81
    %p83 = scmp.eq.s32.totalorder %s15, 0
    %p84 = por %p82, %p83
    %s85 = ssub.s32 %s9, %s16
    %p86 = scmp.eq.s32.totalorder %s85, 0
    %s88 = sadd.s32 %s87, 1
    %s89 = scalar_select %p86, %s87, %s88
    %p92 = pneg %p86
    %p93 = scmp.eq.s32.totalorder %s9, 1
    %p94 = por %p92, %p93
    %p95 = scmp.ne.s32.totalorder %s87, %s90
    %p96 = scmp.eq.s32.totalorder %s9, 0
    %p97 = por %p95, %p96
    %p98 = scmp.ne.s32.totalorder %s87, %s90
    %p99 = scmp.eq.s32.totalorder %s14, 1
    %p100 = por %p98, %p99
    %p101 = scmp.ne.s32.totalorder %s90, %s91
    %p102 = scmp.eq.s32.totalorder %s14, 0
    %p103 = por %p101, %p102
    %p104 = scmp.ne.s32.totalorder %s90, %s91
    %p105 = scmp.eq.s32.totalorder %s15, 1
    %p106 = por %p104, %p105
    %p108 = scmp.ne.s32.totalorder %s91, %s107
    %p109 = scmp.eq.s32.totalorder %s15, 0
    %p110 = por %p108, %p109
    %p111 = scmp.le.s32.totalorder 1, %s9
    %p112 = scmp.lt.s32.totalorder %s9, 3
    %p113 = pnand %p111, %p112
    %p114 = pneg %p113
    // Predicated region
    $region9: #{image_encoder_forward.6} parent=5 // pred_check
      _
    $region10: #{image_encoder_forward.6} parent=5 // pred_check_branch
      %116 = sbr.rel (%p113) target = $region12
    $region11: #{image_encoder_forward.6} parent=5 // pred_region
      %s117 = ssub.s32 %s9, 1
      // Predicated region
      $region13: #{image_encoder_forward.6} parent=11 // pred_check
        %p118 = pneg %p56
      $region14: #{image_encoder_forward.6} parent=11 // pred_check_branch
        %120 = sbr.rel (%p118) target = $region16
      $region15: #{image_encoder_forward.6} parent=11 // pred_region
        _
      $region16: #{image_encoder_forward.6} parent=11 // pred_fallthru
        _
      // Predicated region
      $region17: #{image_encoder_forward.6} parent=11 // pred_check
        %p121 = pneg %p77
      $region18: #{image_encoder_forward.6} parent=11 // pred_check_branch
        %123 = sbr.rel (%p121) target = $region20
      $region19: #{image_encoder_forward.6} parent=11 // pred_region
        _
      $region20: #{image_encoder_forward.6} parent=11 // pred_fallthru
        _
    $region12: #{image_encoder_forward.6} parent=5 // pred_fallthru
      _
    %p124 = scmp.lt.s32.totalorder %s9, 2
    // Predicated region
    $region21: #{image_encoder_forward.6} parent=5 // pred_check
      %p125 = pneg %p124
    $region22: #{image_encoder_forward.6} parent=5 // pred_check_branch
      %127 = sbr.rel (%p125) target = $region24
    $region23: #{image_encoder_forward.6} parent=5 // pred_region
      // Predicated region
      $region25: #{image_encoder_forward.6} parent=23 // pred_check
        %p128 = pneg %p29
      $region26: #{image_encoder_forward.6} parent=23 // pred_check_branch
        %130 = sbr.rel (%p128) target = $region28
      $region27: #{image_encoder_forward.6} parent=23 // pred_region
        %s131 = smul.u32 8, %s9
        %p132 = scmp.lt.s32.totalorder %s131, 15
        %s133 = scalar_select %p132, %s131, 15
        %s134 = smul.addr %s133, 2
        %s135 = smul.addr %s134, 8
        %s136 = scalar_lea.vmem %s0, %s135
        %s137 = smul.u32 8, %s9
      $region28: #{image_encoder_forward.6} parent=23 // pred_fallthru
        _
    $region24: #{image_encoder_forward.6} parent=5 // pred_fallthru
      _
    %p138 = scmp.le.s32.totalorder 1, %s9
    %p139 = scmp.lt.s32.totalorder %s9, 3
    %p140 = pnand %p138, %p139
    %p141 = pneg %p140
    // Predicated region
    $region29: #{image_encoder_forward.6} parent=5 // pred_check
      _
    $region30: #{image_encoder_forward.6} parent=5 // pred_check_branch
      %143 = sbr.rel (%p140) target = $region32
    $region31: #{image_encoder_forward.6} parent=5 // pred_region
      %s144 = ssub.s32 %s9, 1
      %s145 = smul.u32 8, %s14
      %p146 = scmp.lt.s32.totalorder %s145, 15
      %s147 = scalar_select %p146, %s145, 15
      %s148 = smul.addr %s147, 2
      %s149 = smul.addr %s148, 8
      %s150 = scalar_lea.vmem %s0, %s149
      %p151 = pneg %p35
      %p152 = pneg %p32
      %p153 = pneg %p56
      %p154 = pneg %p53
      %p155 = pneg %p77
      %p156 = pneg %p74
      %p157 = pneg %p103
      %p158 = pneg %p100
      %s159 = smul.u32 2, %s14
      %p160 = scmp.lt.s32.totalorder %s159, 3
      %s161 = scalar_select %p160, %s159, 3
      %s162 = smul.addr %s161, 8
      %s163 = scalar_lea.vmem %s3, %s162
      %s164 = smul.u32 8, %s14
      %p165 = scmp.lt.s32.totalorder %s164, 15
      %s166 = scalar_select %p165, %s164, 15
      %s167 = smul.addr %s166, 2
      %s168 = smul.addr %s167, 8
      %s169 = scalar_lea.vmem %s0, %s168
      %s170 = smul.u32 8, %s14
      %s171 = smul.u32 2, %s14
      %p172 = scmp.lt.s32.totalorder %s171, 3
      %s173 = scalar_select %p172, %s171, 3
      %s174 = smul.addr %s173, 8
      %s175 = scalar_lea.vmem %s3, %s174
      %s176 = smul.u32 2, %s14
      %v177 = vld [vmem:[%s169] sm:$0xff]
      %v178 = vld [vmem:[%s169 + $0x8] sm:$0xff]
      %v179 = vld [vmem:[%s169 + $0x10] sm:$0xff]
      %v180 = vld [vmem:[%s169 + $0x18] sm:$0xff]
      %v181 = vld [vmem:[%s169 + $0x20] sm:$0xff]
      %v182 = vld [vmem:[%s169 + $0x28] sm:$0xff]
      %v183 = vld [vmem:[%s169 + $0x30] sm:$0xff]
      %v184 = vld [vmem:[%s169 + $0x38] sm:$0xff]
      %v185 = vld [vmem:[%s169 + $0x40] sm:$0xff]
      %v186 = vld [vmem:[%s169 + $0x48] sm:$0xff]
      %v187 = vld [vmem:[%s169 + $0x50] sm:$0xff]
      %v188 = vld [vmem:[%s169 + $0x58] sm:$0xff]
      %v189 = vld [vmem:[%s169 + $0x60] sm:$0xff]
      %v190 = vld [vmem:[%s169 + $0x68] sm:$0xff]
      %v191 = vld [vmem:[%s169 + $0x70] sm:$0xff]
      %v192 = vld [vmem:[%s169 + $0x78] sm:$0xff]
      %v193 = vld [vmem:[%s1] sm:$0xff]
      %v194 = vld [vmem:[%s1 + $0x8] sm:$0xff]
      %v195 = vld [vmem:[%s1 + $0x10] sm:$0xff]
      %v196 = vld [vmem:[%s1 + $0x18] sm:$0xff]
      %v197 = vld [vmem:[%s1 + $0x20] sm:$0xff]
      %v198 = vld [vmem:[%s1 + $0x28] sm:$0xff]
      %v199 = vld [vmem:[%s1 + $0x30] sm:$0xff]
      %v200 = vld [vmem:[%s1 + $0x38] sm:$0xff]
      %v201 = vld [vmem:[%s1 + $0x40] sm:$0xff]
      %v202 = vld [vmem:[%s1 + $0x48] sm:$0xff]
      %v203 = vld [vmem:[%s1 + $0x50] sm:$0xff]
      %v204 = vld [vmem:[%s1 + $0x58] sm:$0xff]
      %v205 = vld [vmem:[%s1 + $0x60] sm:$0xff]
      %v206 = vld [vmem:[%s1 + $0x68] sm:$0xff]
      %v207 = vld [vmem:[%s1 + $0x70] sm:$0xff]
      %v208 = vld [vmem:[%s1 + $0x78] sm:$0xff]
      %v209 = vld [vmem:[%s1 + $0x80] sm:$0xff]
      %v210 = vld [vmem:[%s1 + $0x88] sm:$0xff]
      %v211 = vld [vmem:[%s1 + $0x90] sm:$0xff]
      %v212 = vld [vmem:[%s1 + $0x98] sm:$0xff]
      %v213 = vld [vmem:[%s1 + $0xa0] sm:$0xff]
      %v214 = vld [vmem:[%s1 + $0xa8] sm:$0xff]
      %v215 = vld [vmem:[%s1 + $0xb0] sm:$0xff]
      %v216 = vld [vmem:[%s1 + $0xb8] sm:$0xff]
      %v217 = vld [vmem:[%s1 + $0xc0] sm:$0xff]
      %v218 = vld [vmem:[%s1 + $0xc8] sm:$0xff]
      %v219 = vld [vmem:[%s1 + $0xd0] sm:$0xff]
      %v220 = vld [vmem:[%s1 + $0xd8] sm:$0xff]
      %v221 = vld [vmem:[%s1 + $0xe0] sm:$0xff]
      %v222 = vld [vmem:[%s1 + $0xe8] sm:$0xff]
      %v223 = vld [vmem:[%s1 + $0xf0] sm:$0xff]
      %v224 = vld [vmem:[%s1 + $0xf8] sm:$0xff]
      %v225 = vld [vmem:[%s2] sm:$0x1]
      %v227 = vlaneseq
      %v228 = vshrl.u32 %v227, 7
      %v229 = vsub.s32 0, %v228
      %v230 = vrot.slane %v225, %v229
      %232 = vmatprep.subr.mxu0 0.0
      %233 = vmatpush1.msra.mxu0 %v193
      %234 = vmatprep.subr.mxu0 0.0
      %235 = vmatpush1.msra.mxu0 %v194
      %236 = vmatprep.subr.mxu0 0.0
      %237 = vmatpush1.msra.mxu0 %v195
      %238 = vmatprep.subr.mxu0 0.0
      %239 = vmatpush1.msra.mxu0 %v196
      %240 = vmatprep.subr.mxu0 0.0
      %241 = vmatpush1.msra.mxu0 %v197
      %242 = vmatprep.subr.mxu0 0.0
      %243 = vmatpush1.msra.mxu0 %v198
      %244 = vmatprep.subr.mxu0 0.0
      %245 = vmatpush1.msra.mxu0 %v199
      %246 = vmatprep.subr.mxu0 0.0
      %247 = vmatpush1.msra.mxu0 %v200
      %248 = vmatprep.subr.mxu0 0.0
      %249 = vmatpush1.msra.mxu0 %v201
      %250 = vmatprep.subr.mxu0 0.0
      %251 = vmatpush1.msra.mxu0 %v202
      %252 = vmatprep.subr.mxu0 0.0
      %253 = vmatpush1.msra.mxu0 %v203
      %254 = vmatprep.subr.mxu0 0.0
      %255 = vmatpush1.msra.mxu0 %v204
      %256 = vmatprep.subr.mxu0 0.0
      %257 = vmatpush1.msra.mxu0 %v205
      %258 = vmatprep.subr.mxu0 0.0
      %259 = vmatpush1.msra.mxu0 %v206
      %260 = vmatprep.subr.mxu0 0.0
      %261 = vmatpush1.msra.mxu0 %v207
      %262 = vmatprep.subr.mxu0 0.0
      %263 = vmatpush1.msra.mxu0 %v208
      %264 = vmatprep.subr.mxu0 0.0
      %265 = vmatpush1.msra.mxu0 %v209
      %266 = vmatprep.subr.mxu0 0.0
      %267 = vmatpush1.msra.mxu0 %v210
      %268 = vmatprep.subr.mxu0 0.0
      %269 = vmatpush1.msra.mxu0 %v211
      %270 = vmatprep.subr.mxu0 0.0
      %271 = vmatpush1.msra.mxu0 %v212
      %272 = vmatprep.subr.mxu0 0.0
      %273 = vmatpush1.msra.mxu0 %v213
      %274 = vmatprep.subr.mxu0 0.0
      %275 = vmatpush1.msra.mxu0 %v214
      %276 = vmatprep.subr.mxu0 0.0
      %277 = vmatpush1.msra.mxu0 %v215
      %278 = vmatprep.subr.mxu0 0.0
      %279 = vmatpush1.msra.mxu0 %v216
      %280 = vmatprep.subr.mxu0 0.0
      %281 = vmatpush1.msra.mxu0 %v217
      %282 = vmatprep.subr.mxu0 0.0
      %283 = vmatpush1.msra.mxu0 %v218
      %284 = vmatprep.subr.mxu0 0.0
      %285 = vmatpush1.msra.mxu0 %v219
      %286 = vmatprep.subr.mxu0 0.0
      %287 = vmatpush1.msra.mxu0 %v220
      %288 = vmatprep.subr.mxu0 0.0
      %289 = vmatpush1.msra.mxu0 %v221
      %290 = vmatprep.subr.mxu0 0.0
      %291 = vmatpush1.msra.mxu0 %v222
      %292 = vmatprep.subr.mxu0 0.0
      %293 = vmatpush1.msra.mxu0 %v223
      %294 = vmatprep.subr.mxu0 0.0
      %295 = vmatpush1.msra.mxu0 %v224
      %296 = vmatprep.mubr.f32.mxu0 %v178
      %297 = vmatmul.mubr.f32.gmra.mrb[0].mxu0 %v177
      %v298 = vpop.f32.mrb[0].mxu0
      %v299 = vadd.f32 %v230, %v298
      %v300 = vpop.f32.mrb[0].mxu0
      %301 = vmatprep.mubr.f32.mxu0 %v180
      %302 = vmatmul.mubr.f32.gmra.mrb[0].mxu0 %v179
      %v303 = vpop.f32.mrb[0].mxu0
      %v304 = vadd.f32 %v230, %v303
      %v305 = vpop.f32.mrb[0].mxu0
      %306 = vmatprep.mubr.f32.mxu0 %v182
      %307 = vmatmul.mubr.f32.gmra.mrb[0].mxu0 %v181
      %v308 = vpop.f32.mrb[0].mxu0
      %v309 = vadd.f32 %v230, %v308
      %v310 = vpop.f32.mrb[0].mxu0
      %311 = vmatprep.mubr.f32.mxu0 %v184
      %312 = vmatmul.mubr.f32.gmra.mrb[0].mxu0 %v183
      %v313 = vpop.f32.mrb[0].mxu0
      %v314 = vadd.f32 %v230, %v313
      %v315 = vpop.f32.mrb[0].mxu0
      %316 = vmatprep.mubr.f32.mxu0 %v186
      %317 = vmatmul.mubr.f32.gmra.mrb[0].mxu0 %v185
      %v318 = vpop.f32.mrb[0].mxu0
      %v319 = vadd.f32 %v230, %v318
      %v320 = vpop.f32.mrb[0].mxu0
      %321 = vmatprep.mubr.f32.mxu0 %v188
      %322 = vmatmul.mubr.f32.gmra.mrb[0].mxu0 %v187
      %v323 = vpop.f32.mrb[0].mxu0
      %v324 = vadd.f32 %v230, %v323
      %v325 = vpop.f32.mrb[0].mxu0
      %326 = vmatprep.mubr.f32.mxu0 %v190
      %327 = vmatmul.mubr.f32.gmra.mrb[0].mxu0 %v189
      %v328 = vpop.f32.mrb[0].mxu0
      %v329 = vadd.f32 %v230, %v328
      %v330 = vpop.f32.mrb[0].mxu0
      %331 = vmatprep.mubr.f32.mxu0 %v192
      %332 = vmatmul.mubr.f32.gmra.mrb[0].mxu0 %v191
      %v333 = vpop.f32.mrb[0].mxu0
      %v334 = vadd.f32 %v230, %v333
      %v335 = vpop.f32.mrb[0].mxu0
      %336 = vdwg.mxu0
      %v337 = vmax.f32 %v299, 0.0
      %v338 = vmax.f32 %v304, 0.0
      %v339 = vmax.f32 %v309, 0.0
      %v340 = vmax.f32 %v314, 0.0
      %v341 = vmax.f32 %v319, 0.0
      %v342 = vmax.f32 %v324, 0.0
      %v343 = vmax.f32 %v329, 0.0
      %v344 = vmax.f32 %v334, 0.0
      %v345 = vmax.f32 %v337, %v338
      %v346 = vmax.f32 %v339, %v340
      %v347 = vmax.f32 %v341, %v342
      %v348 = vmax.f32 %v343, %v344
      %v353 = vcombine.high %v345, %v345
      %v355 = vunpack.c.l.s4 1983009808
      %v356 = vunpack.c.0.s8 %v355
      %v357 = vlaneseq
      %v358 = vshrl.u32 %v357, 7
      %v359 = vsub.s32 %v356, %v358
      %v360 = vrot.slane %v345, %v359
      %v362 = vunpack.c.l.s4 1983009808
      %v363 = vunpack.c.0.s8 %v362
      %v364 = vlaneseq
      %v365 = vshrl.u32 %v364, 7
      %v366 = vsub.s32 %v363, %v365
      %v367 = vrot.slane %v353, %v366
      %v368 = vcombine.high %v360, %v360
      %v369 = vcombine.high %v367, %v367
      %v370 = vcombine.high %v346, %v346
      %v372 = vunpack.c.l.s4 1983009808
      %v373 = vunpack.c.0.s8 %v372
      %v374 = vlaneseq
      %v375 = vshrl.u32 %v374, 7
      %v376 = vsub.s32 %v373, %v375
      %v377 = vrot.slane %v346, %v376
      %v379 = vunpack.c.l.s4 1983009808
      %v380 = vunpack.c.0.s8 %v379
      %v381 = vlaneseq
      %v382 = vshrl.u32 %v381, 7
      %v383 = vsub.s32 %v380, %v382
      %v384 = vrot.slane %v370, %v383
      %v385 = vcombine.high %v377, %v377
      %v386 = vcombine.high %v384, %v384
      %v387 = vcombine.high %v347, %v347
      %v389 = vunpack.c.l.s4 1983009808
      %v390 = vunpack.c.0.s8 %v389
      %v391 = vlaneseq
      %v392 = vshrl.u32 %v391, 7
      %v393 = vsub.s32 %v390, %v392
      %v394 = vrot.slane %v347, %v393
      %v396 = vunpack.c.l.s4 1983009808
      %v397 = vunpack.c.0.s8 %v396
      %v398 = vlaneseq
      %v399 = vshrl.u32 %v398, 7
      %v400 = vsub.s32 %v397, %v399
      %v401 = vrot.slane %v387, %v400
      %v402 = vcombine.high %v394, %v394
      %v403 = vcombine.high %v401, %v401
      %v404 = vcombine.high %v348, %v348
      %v406 = vunpack.c.l.s4 1983009808
      %v407 = vunpack.c.0.s8 %v406
      %v408 = vlaneseq
      %v409 = vshrl.u32 %v408, 7
      %v410 = vsub.s32 %v407, %v409
      %v411 = vrot.slane %v348, %v410
      %v413 = vunpack.c.l.s4 1983009808
      %v414 = vunpack.c.0.s8 %v413
      %v415 = vlaneseq
      %v416 = vshrl.u32 %v415, 7
      %v417 = vsub.s32 %v414, %v416
      %v418 = vrot.slane %v404, %v417
      %v419 = vcombine.high %v411, %v411
      %v420 = vcombine.high %v418, %v418
      %v437 = vrot.slane %v360, 7
      %v438 = vrot.slane %v437, 2
      %v439 = vrot.slane %v368, 7
      %v440 = vrot.slane %v439, 2
      %v441 = vrot.slane %v367, 7
      %v442 = vrot.slane %v441, 2
      %v443 = vrot.slane %v369, 7
      %v444 = vrot.slane %v443, 2
      %v445 = vrot.slane %v377, 7
      %v446 = vrot.slane %v445, 2
      %v447 = vrot.slane %v385, 7
      %v448 = vrot.slane %v447, 2
      %v449 = vrot.slane %v384, 7
      %v450 = vrot.slane %v449, 2
      %v451 = vrot.slane %v386, 7
      %v452 = vrot.slane %v451, 2
      %v453 = vrot.slane %v394, 7
      %v454 = vrot.slane %v453, 2
      %v455 = vrot.slane %v402, 7
      %v456 = vrot.slane %v455, 2
      %v457 = vrot.slane %v401, 7
      %v458 = vrot.slane %v457, 2
      %v459 = vrot.slane %v403, 7
      %v460 = vrot.slane %v459, 2
      %v461 = vrot.slane %v411, 7
      %v462 = vrot.slane %v461, 2
      %v463 = vrot.slane %v419, 7
      %v464 = vrot.slane %v463, 2
      %v465 = vrot.slane %v418, 7
      %v466 = vrot.slane %v465, 2
      %v467 = vrot.slane %v420, 7
      %v468 = vrot.slane %v467, 2
      %v485 = vmax.f32 %v360, %v438
      %v486 = vmax.f32 %v368, %v440
      %v487 = vmax.f32 %v367, %v442
      %v488 = vmax.f32 %v369, %v444
      %v489 = vmax.f32 %v377, %v446
      %v490 = vmax.f32 %v385, %v448
      %v491 = vmax.f32 %v384, %v450
      %v492 = vmax.f32 %v386, %v452
      %v493 = vmax.f32 %v394, %v454
      %v494 = vmax.f32 %v402, %v456
      %v495 = vmax.f32 %v401, %v458
      %v496 = vmax.f32 %v403, %v460
      %v497 = vmax.f32 %v411, %v462
      %v498 = vmax.f32 %v419, %v464
      %v499 = vmax.f32 %v418, %v466
      %v500 = vmax.f32 %v420, %v468
      %v517 = vlaneseq
      %v518 = vshrl.u32 %v517, 7
      %v519 = vsub.s32 0, %v518
      %v520 = vrot.slane %v485, %v519
      %v521 = vlaneseq
      %v522 = vshrl.u32 %v521, 7
      %v523 = vsub.s32 0, %v522
      %v524 = vrot.slane %v486, %v523
      %v525 = vlaneseq
      %v526 = vshrl.u32 %v525, 7
      %v527 = vsub.s32 0, %v526
      %v528 = vrot.slane %v487, %v527
      %v529 = vlaneseq
      %v530 = vshrl.u32 %v529, 7
      %v531 = vsub.s32 0, %v530
      %v532 = vrot.slane %v488, %v531
      %v533 = vlaneseq
      %v534 = vshrl.u32 %v533, 7
      %v535 = vsub.s32 0, %v534
      %v536 = vrot.slane %v489, %v535
      %v537 = vlaneseq
      %v538 = vshrl.u32 %v537, 7
      %v539 = vsub.s32 0, %v538
      %v540 = vrot.slane %v490, %v539
      %v541 = vlaneseq
      %v542 = vshrl.u32 %v541, 7
      %v543 = vsub.s32 0, %v542
      %v544 = vrot.slane %v491, %v543
      %v545 = vlaneseq
      %v546 = vshrl.u32 %v545, 7
      %v547 = vsub.s32 0, %v546
      %v548 = vrot.slane %v492, %v547
      %v549 = vlaneseq
      %v550 = vshrl.u32 %v549, 7
      %v551 = vsub.s32 0, %v550
      %v552 = vrot.slane %v493, %v551
      %v553 = vlaneseq
      %v554 = vshrl.u32 %v553, 7
      %v555 = vsub.s32 0, %v554
      %v556 = vrot.slane %v494, %v555
      %v557 = vlaneseq
      %v558 = vshrl.u32 %v557, 7
      %v559 = vsub.s32 0, %v558
      %v560 = vrot.slane %v495, %v559
      %v561 = vlaneseq
      %v562 = vshrl.u32 %v561, 7
      %v563 = vsub.s32 0, %v562
      %v564 = vrot.slane %v496, %v563
      %v565 = vlaneseq
      %v566 = vshrl.u32 %v565, 7
      %v567 = vsub.s32 0, %v566
      %v568 = vrot.slane %v497, %v567
      %v569 = vlaneseq
      %v570 = vshrl.u32 %v569, 7
      %v571 = vsub.s32 0, %v570
      %v572 = vrot.slane %v498, %v571
      %v573 = vlaneseq
      %v574 = vshrl.u32 %v573, 7
      %v575 = vsub.s32 0, %v574
      %v576 = vrot.slane %v499, %v575
      %v577 = vlaneseq
      %v578 = vshrl.u32 %v577, 7
      %v579 = vsub.s32 0, %v578
      %v580 = vrot.slane %v500, %v579
      %vm581 = vcmask 1041409
      %v582 = vsel %vm581, %v524, %v520
      %vm583 = vcmask 1042434
      %v584 = vsel %vm583, %v528, %v582
      %vm585 = vcmask 1043459
      %v586 = vsel %vm585, %v532, %v584
      %vm587 = vcmask 1044484
      %v588 = vsel %vm587, %v536, %v586
      %vm589 = vcmask 1045509
      %v590 = vsel %vm589, %v540, %v588
      %vm591 = vcmask 1046534
      %v592 = vsel %vm591, %v544, %v590
      %vm593 = vcmask 1047559
      %v594 = vsel %vm593, %v548, %v592
      %v595 = vsel %vm581, %v556, %v552
      %v596 = vsel %vm583, %v560, %v595
      %v597 = vsel %vm585, %v564, %v596
      %v598 = vsel %vm587, %v568, %v597
      %v599 = vsel %vm589, %v572, %v598
      %v600 = vsel %vm591, %v576, %v599
      %v601 = vsel %vm593, %v580, %v600
      %vm604 = vcmask 261120
      %605 = vst.msk [vmem:[%s175] sm:$0xff] %vm604, %v594
      %606 = vst.msk [vmem:[%s175 + $0x8] sm:$0xff] %vm604, %v601
      %s607 = smul.u32 2, %s14
      %p608 = scmp.lt.s32.totalorder %s607, 3
      %s609 = scalar_select %p608, %s607, 3
      %s610 = smul.addr %s609, 8
      %s611 = scalar_lea.vmem %s3, %s610
      // Predicated region
      $region33: #{image_encoder_forward.6} parent=31 // pred_check
        %p612 = pneg %p100
      $region34: #{image_encoder_forward.6} parent=31 // pred_check_branch
        %614 = sbr.rel (%p612) target = $region36
      $region35: #{image_encoder_forward.6} parent=31 // pred_region
        %s615 = smul.u32 2, %s14
      $region36: #{image_encoder_forward.6} parent=31 // pred_fallthru
        _
    $region32: #{image_encoder_forward.6} parent=5 // pred_fallthru
      _
    %p616 = scmp.le.s32.totalorder 2, %s9
    // Predicated region
    $region37: #{image_encoder_forward.6} parent=5 // pred_check
      %p617 = pneg %p616
    $region38: #{image_encoder_forward.6} parent=5 // pred_check_branch
      %619 = sbr.rel (%p617) target = $region40
    $region39: #{image_encoder_forward.6} parent=5 // pred_region
      %s620 = ssub.s32 %s9, 2
      // Predicated region
      $region41: #{image_encoder_forward.6} parent=39 // pred_check
        %p621 = pneg %p106
      $region42: #{image_encoder_forward.6} parent=39 // pred_check_branch
        %623 = sbr.rel (%p621) target = $region44
      $region43: #{image_encoder_forward.6} parent=39 // pred_region
        %s624 = smul.u32 2, %s15
        %p625 = scmp.lt.s32.totalorder %s624, 3
        %s626 = scalar_select %p625, %s624, 3
        %s627 = smul.addr %s626, 8
        %s628 = scalar_lea.vmem %s3, %s627
      $region44: #{image_encoder_forward.6} parent=39 // pred_fallthru
        _
    $region40: #{image_encoder_forward.6} parent=5 // pred_fallthru
      _
  $region6: #{image_encoder_forward.6} parent=0 // loop_footer
    %s13 = sadd.s32 1, %s9
  $region7: #{image_encoder_forward.6} parent=0 // loop_footer_branch
    %8 = sbr.rel target = $region3
  $region8: #{image_encoder_forward.6} parent=0 // loop_exit
    _

// kernel: image_encoder_forward.7
$region0: #{image_encoder_forward.7}
  #allocation0 [shape = 'u32[]', space=smem, size = 0x4, offset = 0x4, fixed_abs, tag = 'smem constant byte address 0x4 - core index']
  #allocation1 [shape = 'u32[144,128]{1,0:T(1,128)}', space=vmem, size = 0x12000, scoped, tag = 'internal scratch']
  %s0 = inlined_call_operand.vmem [shape: f32[8,512], index: 0, kind: input, shape index: {}]
  %s1 = inlined_call_operand.vmem [shape: f32[512,64], index: 1, kind: input, shape index: {}]
  %s2 = inlined_call_operand.vmem [shape: f32[1,64], index: 2, kind: input, shape index: {}]
  %s3 = inlined_call_operand.vmem [shape: f32[64,128], index: 3, kind: input, shape index: {}]
  %s4 = inlined_call_operand.vmem [shape: f32[1,128], index: 4, kind: input, shape index: {}]
  %s5 = inlined_call_operand.hbm [shape: f32[2,128], index: 5, kind: output, shape index: {}]
  %s6 = sld [smem:[#allocation0]]
  $region30: #{image_encoder_forward.7} parent=0
    _
  %s8 = ssub.s32 1, %s6
  %s9 = scalar_select 0, %s8, %s6
  $region1: #{image_encoder_forward.7} parent=0
    #allocation2 [shape = 'u8[1024]{0}', space=vmem, size = 0x400, scoped, tag = 'output window, operand 0, single buffered']
    #allocation3 [shape = 's32[1]{0}', space=sflag, size = 0x4, scoped, tag = 'scoped memory for image_encoder_forward.7']
    %10 = vsyncpa [#allocation3], 0
    // Predicated region
    $region2: #{image_encoder_forward.7} parent=1 // pred_check
      _
    $region3: #{image_encoder_forward.7} parent=1 // pred_check_branch
      %12 = sbr.rel (0) target = $region5
    $region4: #{image_encoder_forward.7} parent=1 // pred_region
      _
    $region5: #{image_encoder_forward.7} parent=1 // pred_fallthru
      _
    // Predicated region
    $region6: #{image_encoder_forward.7} parent=1 // pred_check
      _
    $region7: #{image_encoder_forward.7} parent=1 // pred_check_branch
      %14 = sbr.rel (0) target = $region9
    $region8: #{image_encoder_forward.7} parent=1 // pred_region
      _
    $region9: #{image_encoder_forward.7} parent=1 // pred_fallthru
      _
    // Predicated region
    $region10: #{image_encoder_forward.7} parent=1 // pred_check
      _
    $region11: #{image_encoder_forward.7} parent=1 // pred_check_branch
      %16 = sbr.rel (0) target = $region13
    $region12: #{image_encoder_forward.7} parent=1 // pred_region
      _
    $region13: #{image_encoder_forward.7} parent=1 // pred_fallthru
      _
    // Predicated region
    $region14: #{image_encoder_forward.7} parent=1 // pred_check
      _
    $region15: #{image_encoder_forward.7} parent=1 // pred_check_branch
      %18 = sbr.rel (0) target = $region17
    $region16: #{image_encoder_forward.7} parent=1 // pred_region
      _
    $region17: #{image_encoder_forward.7} parent=1 // pred_fallthru
      _
    // Predicated region
    $region18: #{image_encoder_forward.7} parent=1 // pred_check
      _
    $region19: #{image_encoder_forward.7} parent=1 // pred_check_branch
      %20 = sbr.rel (0) target = $region21
    $region20: #{image_encoder_forward.7} parent=1 // pred_region
      _
    $region21: #{image_encoder_forward.7} parent=1 // pred_fallthru
      _
    %v21 = vld [vmem:[%s0] sm:$0xff]
    %v22 = vld [vmem:[%s0 + $0x8] sm:$0xff]
    %v23 = vld [vmem:[%s0 + $0x10] sm:$0xff]
    %v24 = vld [vmem:[%s0 + $0x18] sm:$0xff]
    %v25 = vld [vmem:[%s1] sm:$0xff]
    %v26 = vld [vmem:[%s1 + $0x8] sm:$0xff]
    %v27 = vld [vmem:[%s1 + $0x10] sm:$0xff]
    %v28 = vld [vmem:[%s1 + $0x18] sm:$0xff]
    %v29 = vld [vmem:[%s1 + $0x20] sm:$0xff]
    %v30 = vld [vmem:[%s1 + $0x28] sm:$0xff]
    %v31 = vld [vmem:[%s1 + $0x30] sm:$0xff]
    %v32 = vld [vmem:[%s1 + $0x38] sm:$0xff]
    %v33 = vld [vmem:[%s1 + $0x40] sm:$0xff]
    %v34 = vld [vmem:[%s1 + $0x48] sm:$0xff]
    %v35 = vld [vmem:[%s1 + $0x50] sm:$0xff]
    %v36 = vld [vmem:[%s1 + $0x58] sm:$0xff]
    %v37 = vld [vmem:[%s1 + $0x60] sm:$0xff]
    %v38 = vld [vmem:[%s1 + $0x68] sm:$0xff]
    %v39 = vld [vmem:[%s1 + $0x70] sm:$0xff]
    %v40 = vld [vmem:[%s1 + $0x78] sm:$0xff]
    %v41 = vld [vmem:[%s1 + $0x80] sm:$0xff]
    %v42 = vld [vmem:[%s1 + $0x88] sm:$0xff]
    %v43 = vld [vmem:[%s1 + $0x90] sm:$0xff]
    %v44 = vld [vmem:[%s1 + $0x98] sm:$0xff]
    %v45 = vld [vmem:[%s1 + $0xa0] sm:$0xff]
    %v46 = vld [vmem:[%s1 + $0xa8] sm:$0xff]
    %v47 = vld [vmem:[%s1 + $0xb0] sm:$0xff]
    %v48 = vld [vmem:[%s1 + $0xb8] sm:$0xff]
    %v49 = vld [vmem:[%s1 + $0xc0] sm:$0xff]
    %v50 = vld [vmem:[%s1 + $0xc8] sm:$0xff]
    %v51 = vld [vmem:[%s1 + $0xd0] sm:$0xff]
    %v52 = vld [vmem:[%s1 + $0xd8] sm:$0xff]
    %v53 = vld [vmem:[%s1 + $0xe0] sm:$0xff]
    %v54 = vld [vmem:[%s1 + $0xe8] sm:$0xff]
    %v55 = vld [vmem:[%s1 + $0xf0] sm:$0xff]
    %v56 = vld [vmem:[%s1 + $0xf8] sm:$0xff]
    %v57 = vld [vmem:[%s1 + $0x100] sm:$0xff]
    %v58 = vld [vmem:[%s1 + $0x108] sm:$0xff]
    %v59 = vld [vmem:[%s1 + $0x110] sm:$0xff]
    %v60 = vld [vmem:[%s1 + $0x118] sm:$0xff]
    %v61 = vld [vmem:[%s1 + $0x120] sm:$0xff]
    %v62 = vld [vmem:[%s1 + $0x128] sm:$0xff]
    %v63 = vld [vmem:[%s1 + $0x130] sm:$0xff]
    %v64 = vld [vmem:[%s1 + $0x138] sm:$0xff]
    %v65 = vld [vmem:[%s1 + $0x140] sm:$0xff]
    %v66 = vld [vmem:[%s1 + $0x148] sm:$0xff]
    %v67 = vld [vmem:[%s1 + $0x150] sm:$0xff]
    %v68 = vld [vmem:[%s1 + $0x158] sm:$0xff]
    %v69 = vld [vmem:[%s1 + $0x160] sm:$0xff]
    %v70 = vld [vmem:[%s1 + $0x168] sm:$0xff]
    %v71 = vld [vmem:[%s1 + $0x170] sm:$0xff]
    %v72 = vld [vmem:[%s1 + $0x178] sm:$0xff]
    %v73 = vld [vmem:[%s1 + $0x180] sm:$0xff]
    %v74 = vld [vmem:[%s1 + $0x188] sm:$0xff]
    %v75 = vld [vmem:[%s1 + $0x190] sm:$0xff]
    %v76 = vld [vmem:[%s1 + $0x198] sm:$0xff]
    %v77 = vld [vmem:[%s1 + $0x1a0] sm:$0xff]
    %v78 = vld [vmem:[%s1 + $0x1a8] sm:$0xff]
    %v79 = vld [vmem:[%s1 + $0x1b0] sm:$0xff]
    %v80 = vld [vmem:[%s1 + $0x1b8] sm:$0xff]
    %v81 = vld [vmem:[%s1 + $0x1c0] sm:$0xff]
    %v82 = vld [vmem:[%s1 + $0x1c8] sm:$0xff]
    %v83 = vld [vmem:[%s1 + $0x1d0] sm:$0xff]
    %v84 = vld [vmem:[%s1 + $0x1d8] sm:$0xff]
    %v85 = vld [vmem:[%s1 + $0x1e0] sm:$0xff]
    %v86 = vld [vmem:[%s1 + $0x1e8] sm:$0xff]
    %v87 = vld [vmem:[%s1 + $0x1f0] sm:$0xff]
    %v88 = vld [vmem:[%s1 + $0x1f8] sm:$0xff]
    %v89 = vld [vmem:[%s2] sm:$0x1]
    %v91 = vlaneseq
    %v92 = vshrl.u32 %v91, 7
    %v93 = vsub.s32 0, %v92
    %v94 = vrot.slane %v89, %v93
    %96 = vmatprep.subr.mxu0 0.0
    %97 = vmatpush1.msra.mxu0 %v25
    %98 = vmatprep.subr.mxu0 0.0
    %99 = vmatpush1.msra.mxu0 %v26
    %100 = vmatprep.subr.mxu0 0.0
    %101 = vmatpush1.msra.mxu0 %v27
    %102 = vmatprep.subr.mxu0 0.0
    %103 = vmatpush1.msra.mxu0 %v28
    %104 = vmatprep.subr.mxu0 0.0
    %105 = vmatpush1.msra.mxu0 %v29
    %106 = vmatprep.subr.mxu0 0.0
    %107 = vmatpush1.msra.mxu0 %v30
    %108 = vmatprep.subr.mxu0 0.0
    %109 = vmatpush1.msra.mxu0 %v31
    %110 = vmatprep.subr.mxu0 0.0
    %111 = vmatpush1.msra.mxu0 %v32
    %112 = vmatprep.subr.mxu0 0.0
    %113 = vmatpush1.msra.mxu0 %v33
    %114 = vmatprep.subr.mxu0 0.0
    %115 = vmatpush1.msra.mxu0 %v34
    %116 = vmatprep.subr.mxu0 0.0
    %117 = vmatpush1.msra.mxu0 %v35
    %118 = vmatprep.subr.mxu0 0.0
    %119 = vmatpush1.msra.mxu0 %v36
    %120 = vmatprep.subr.mxu0 0.0
    %121 = vmatpush1.msra.mxu0 %v37
    %122 = vmatprep.subr.mxu0 0.0
    %123 = vmatpush1.msra.mxu0 %v38
    %124 = vmatprep.subr.mxu0 0.0
    %125 = vmatpush1.msra.mxu0 %v39
    %126 = vmatprep.subr.mxu0 0.0
    %127 = vmatpush1.msra.mxu0 %v40
    %128 = vmatprep.subr.mxu0 0.0
    %129 = vmatpush1.msra.mxu0 %v41
    %130 = vmatprep.subr.mxu0 0.0
    %131 = vmatpush1.msra.mxu0 %v42
    %132 = vmatprep.subr.mxu0 0.0
    %133 = vmatpush1.msra.mxu0 %v43
    %134 = vmatprep.subr.mxu0 0.0
    %135 = vmatpush1.msra.mxu0 %v44
    %136 = vmatprep.subr.mxu0 0.0
    %137 = vmatpush1.msra.mxu0 %v45
    %138 = vmatprep.subr.mxu0 0.0
    %139 = vmatpush1.msra.mxu0 %v46
    %140 = vmatprep.subr.mxu0 0.0
    %141 = vmatpush1.msra.mxu0 %v47
    %142 = vmatprep.subr.mxu0 0.0
    %143 = vmatpush1.msra.mxu0 %v48
    %144 = vmatprep.subr.mxu0 0.0
    %145 = vmatpush1.msra.mxu0 %v49
    %146 = vmatprep.subr.mxu0 0.0
    %147 = vmatpush1.msra.mxu0 %v50
    %148 = vmatprep.subr.mxu0 0.0
    %149 = vmatpush1.msra.mxu0 %v51
    %150 = vmatprep.subr.mxu0 0.0
    %151 = vmatpush1.msra.mxu0 %v52
    %152 = vmatprep.subr.mxu0 0.0
    %153 = vmatpush1.msra.mxu0 %v53
    %154 = vmatprep.subr.mxu0 0.0
    %155 = vmatpush1.msra.mxu0 %v54
    %156 = vmatprep.subr.mxu0 0.0
    %157 = vmatpush1.msra.mxu0 %v55
    %158 = vmatprep.subr.mxu0 0.0
    %159 = vmatpush1.msra.mxu0 %v56
    %160 = vmatprep.mubr.f32.mxu0 %v22
    %161 = vmatmul.mubr.f32.gmra.mrb[0].mxu0 %v21
    %v162 = vpop.f32.mrb[0].mxu0
    %v163 = vadd.f32 %v94, %v162
    %v164 = vpop.f32.mrb[0].mxu0
    %165 = vdwg.mxu0
    %166 = vmatprep.subr.mxu0 0.0
    %167 = vmatpush1.msra.mxu0 %v57
    %168 = vmatprep.subr.mxu0 0.0
    %169 = vmatpush1.msra.mxu0 %v58
    %170 = vmatprep.subr.mxu0 0.0
    %171 = vmatpush1.msra.mxu0 %v59
    %172 = vmatprep.subr.mxu0 0.0
    %173 = vmatpush1.msra.mxu0 %v60
    %174 = vmatprep.subr.mxu0 0.0
    %175 = vmatpush1.msra.mxu0 %v61
    %176 = vmatprep.subr.mxu0 0.0
    %177 = vmatpush1.msra.mxu0 %v62
    %178 = vmatprep.subr.mxu0 0.0
    %179 = vmatpush1.msra.mxu0 %v63
    %180 = vmatprep.subr.mxu0 0.0
    %181 = vmatpush1.msra.mxu0 %v64
    %182 = vmatprep.subr.mxu0 0.0
    %183 = vmatpush1.msra.mxu0 %v65
    %184 = vmatprep.subr.mxu0 0.0
    %185 = vmatpush1.msra.mxu0 %v66
    %186 = vmatprep.subr.mxu0 0.0
    %187 = vmatpush1.msra.mxu0 %v67
    %188 = vmatprep.subr.mxu0 0.0
    %189 = vmatpush1.msra.mxu0 %v68
    %190 = vmatprep.subr.mxu0 0.0
    %191 = vmatpush1.msra.mxu0 %v69
    %192 = vmatprep.subr.mxu0 0.0
    %193 = vmatpush1.msra.mxu0 %v70
    %194 = vmatprep.subr.mxu0 0.0
    %195 = vmatpush1.msra.mxu0 %v71
    %196 = vmatprep.subr.mxu0 0.0
    %197 = vmatpush1.msra.mxu0 %v72
    %198 = vmatprep.subr.mxu0 0.0
    %199 = vmatpush1.msra.mxu0 %v73
    %200 = vmatprep.subr.mxu0 0.0
    %201 = vmatpush1.msra.mxu0 %v74
    %202 = vmatprep.subr.mxu0 0.0
    %203 = vmatpush1.msra.mxu0 %v75
    %204 = vmatprep.subr.mxu0 0.0
    %205 = vmatpush1.msra.mxu0 %v76
    %206 = vmatprep.subr.mxu0 0.0
    %207 = vmatpush1.msra.mxu0 %v77
    %208 = vmatprep.subr.mxu0 0.0
    %209 = vmatpush1.msra.mxu0 %v78
    %210 = vmatprep.subr.mxu0 0.0
    %211 = vmatpush1.msra.mxu0 %v79
    %212 = vmatprep.subr.mxu0 0.0
    %213 = vmatpush1.msra.mxu0 %v80
    %214 = vmatprep.subr.mxu0 0.0
    %215 = vmatpush1.msra.mxu0 %v81
    %216 = vmatprep.subr.mxu0 0.0
    %217 = vmatpush1.msra.mxu0 %v82
    %218 = vmatprep.subr.mxu0 0.0
    %219 = vmatpush1.msra.mxu0 %v83
    %220 = vmatprep.subr.mxu0 0.0
    %221 = vmatpush1.msra.mxu0 %v84
    %222 = vmatprep.subr.mxu0 0.0
    %223 = vmatpush1.msra.mxu0 %v85
    %224 = vmatprep.subr.mxu0 0.0
    %225 = vmatpush1.msra.mxu0 %v86
    %226 = vmatprep.subr.mxu0 0.0
    %227 = vmatpush1.msra.mxu0 %v87
    %228 = vmatprep.subr.mxu0 0.0
    %229 = vmatpush1.msra.mxu0 %v88
    %230 = vmatprep.mubr.f32.mxu0 %v24
    %231 = vmatmul.mubr.f32.gmra.mrb[0].mxu0 %v23
    %v232 = vpop.f32.mrb[0].mxu0
    %v233 = vadd.f32 %v163, %v232
    %v234 = vpop.f32.mrb[0].mxu0
    %235 = vdwg.mxu0
    %v236 = vmax.f32 %v233, 0.0
    %v238 = vcombine.high %v236, %v236
    %v240 = vunpack.c.l.s4 1983009808
    %v241 = vunpack.c.0.s8 %v240
    %v242 = vlaneseq
    %v243 = vshrl.u32 %v242, 7
    %v244 = vsub.s32 %v241, %v243
    %v245 = vrot.slane %v236, %v244
    %v247 = vunpack.c.l.s4 1983009808
    %v248 = vunpack.c.0.s8 %v247
    %v249 = vlaneseq
    %v250 = vshrl.u32 %v249, 7
    %v251 = vsub.s32 %v248, %v250
    %v252 = vrot.slane %v238, %v251
    %v253 = vcombine.high %v245, %v245
    %v254 = vcombine.high %v252, %v252
    %v259 = vmax.f32 %v245, %v253
    %v260 = vmax.f32 %v252, %v254
    %v263 = vrot.slane %v259, 7
    %v264 = vrot.slane %v263, 2
    %v265 = vrot.slane %v260, 7
    %v266 = vrot.slane %v265, 2
    %v269 = vmax.f32 %v259, %v264
    %v270 = vmax.f32 %v260, %v266
    %v271 = vld [vmem:[%s3] sm:$0xff]
    %v272 = vld [vmem:[%s3 + $0x8] sm:$0xff]
    %v273 = vld [vmem:[%s3 + $0x10] sm:$0xff]
    %v274 = vld [vmem:[%s3 + $0x18] sm:$0xff]
    %v275 = vld [vmem:[%s3 + $0x20] sm:$0xff]
    %v276 = vld [vmem:[%s3 + $0x28] sm:$0xff]
    %v277 = vld [vmem:[%s3 + $0x30] sm:$0xff]
    %v278 = vld [vmem:[%s3 + $0x38] sm:$0xff]
    %v279 = vld [vmem:[%s4] sm:$0x1]
    %v281 = vlaneseq
    %v282 = vshrl.u32 %v281, 7
    %v283 = vsub.s32 0, %v282
    %v284 = vrot.slane %v279, %v283
    %v288 = vlaneseq
    %v289 = vshrl.u32 %v288, 7
    %v290 = vsub.s32 0, %v289
    %v291 = vrot.slane %v269, %v290
    %v292 = vlaneseq
    %v293 = vshrl.u32 %v292, 7
    %v294 = vsub.s32 0, %v293
    %v295 = vrot.slane %v270, %v294
    %vm296 = vcmask 1041409
    %v297 = vsel %vm296, %v295, %v291
    %vm298 = vcmask 523264
    %v299 = vsel %vm298, %v297, 0
    %301 = vmatprep.subr.mxu0 0.0
    %302 = vmatpush1.msra.mxu0 %v271
    %303 = vmatprep.subr.mxu0 0.0
    %304 = vmatpush1.msra.mxu0 %v272
    %305 = vmatprep.subr.mxu0 0.0
    %306 = vmatpush1.msra.mxu0 %v273
    %307 = vmatprep.subr.mxu0 0.0
    %308 = vmatpush1.msra.mxu0 %v274
    %309 = vmatprep.subr.mxu0 0.0
    %310 = vmatpush1.msra.mxu0 %v275
    %311 = vmatprep.subr.mxu0 0.0
    %312 = vmatpush1.msra.mxu0 %v276
    %313 = vmatprep.subr.mxu0 0.0
    %314 = vmatpush1.msra.mxu0 %v277
    %315 = vmatprep.subr.mxu0 0.0
    %316 = vmatpush1.msra.mxu0 %v278
    %317 = vmatprep.subr.mxu0 0.0
    %318 = vmatpush1.msra.mxu0 0.0
    %319 = vmatprep.subr.mxu0 0.0
    %320 = vmatpush1.msra.mxu0 0.0
    %321 = vmatprep.subr.mxu0 0.0
    %322 = vmatpush1.msra.mxu0 0.0
    %323 = vmatprep.subr.mxu0 0.0
    %324 = vmatpush1.msra.mxu0 0.0
    %325 = vmatprep.subr.mxu0 0.0
    %326 = vmatpush1.msra.mxu0 0.0
    %327 = vmatprep.subr.mxu0 0.0
    %328 = vmatpush1.msra.mxu0 0.0
    %329 = vmatprep.subr.mxu0 0.0
    %330 = vmatpush1.msra.mxu0 0.0
    %331 = vmatprep.subr.mxu0 0.0
    %332 = vmatpush1.msra.mxu0 0.0
    %333 = vmatprep.subr.mxu0 0.0
    %334 = vmatpush1.msra.mxu0 0.0
    %335 = vmatprep.subr.mxu0 0.0
    %336 = vmatpush1.msra.mxu0 0.0
    %337 = vmatprep.subr.mxu0 0.0
    %338 = vmatpush1.msra.mxu0 0.0
    %339 = vmatprep.subr.mxu0 0.0
    %340 = vmatpush1.msra.mxu0 0.0
    %341 = vmatprep.subr.mxu0 0.0
    %342 = vmatpush1.msra.mxu0 0.0
    %343 = vmatprep.subr.mxu0 0.0
    %344 = vmatpush1.msra.mxu0 0.0
    %345 = vmatprep.subr.mxu0 0.0
    %346 = vmatpush1.msra.mxu0 0.0
    %347 = vmatprep.subr.mxu0 0.0
    %348 = vmatpush1.msra.mxu0 0.0
    %349 = vmatprep.subr.mxu0 0.0
    %350 = vmatpush1.msra.mxu0 0.0
    %351 = vmatprep.subr.mxu0 0.0
    %352 = vmatpush1.msra.mxu0 0.0
    %353 = vmatprep.subr.mxu0 0.0
    %354 = vmatpush1.msra.mxu0 0.0
    %355 = vmatprep.subr.mxu0 0.0
    %356 = vmatpush1.msra.mxu0 0.0
    %357 = vmatprep.subr.mxu0 0.0
    %358 = vmatpush1.msra.mxu0 0.0
    %359 = vmatprep.subr.mxu0 0.0
    %360 = vmatpush1.msra.mxu0 0.0
    %361 = vmatprep.subr.mxu0 0.0
    %362 = vmatpush1.msra.mxu0 0.0
    %363 = vmatprep.subr.mxu0 0.0
    %364 = vmatpush1.msra.mxu0 0.0
    %365 = vmatprep.mubr.f32.mxu0 0.0
    %366 = vmatmul.mubr.f32.gmra.mrb[0].mxu0 %v299
    %v367 = vpop.f32.mrb[0].mxu0
    %v368 = vadd.f32 %v284, %v367
    %v369 = vpop.f32.mrb[0].mxu0
    %370 = vdwg.mxu0
    %v371 = vtanh.pop %v368
    %372 = vst [vmem:[#allocation2] sm:$0x3] %v371
    // Predicated region
    $region22: #{image_encoder_forward.7} parent=1 // pred_check
      _
    $region23: #{image_encoder_forward.7} parent=1 // pred_check_branch
      %374 = sbr.rel (0) target = $region25
    $region24: #{image_encoder_forward.7} parent=1 // pred_region
      %s376 = ssub.s32 32, 32
      %377 = vsyncadd [#allocation3], %s376
      %s379 = sshll.u32 [#allocation2], 4
      %s380 = int_to_ptr.vmem [resolvable:$true] %s379
      %382 = dma.vmem_to_hbm [thread:$0]  %s380, 32, %s5, [#allocation3]
    $region25: #{image_encoder_forward.7} parent=1 // pred_fallthru
      _
    // Predicated region
    $region26: #{image_encoder_forward.7} parent=1 // pred_check
      _
    $region27: #{image_encoder_forward.7} parent=1 // pred_check_branch
      %384 = sbr.rel (0) target = $region29
    $region28: #{image_encoder_forward.7} parent=1 // pred_region
      %385 = dma.done [#allocation3], 32
    $region29: #{image_encoder_forward.7} parent=1 // pred_fallthru
      _
    %386 = vsyncpa [#allocation3], 1

</llo_original>
